<compile_context>
chip_gen: v7x
topology: tpu7x:2x2x1
jax: 0.10.0
libtpu: 0.0.40
codegen_flags: <defaults>
</compile_context>

<pallas_src>
import functools

import jax
import jax.numpy as jnp
from jax.experimental import pallas as pl
from jax.experimental.pallas import tpu as pltpu


def _round_up(x, m):
    return ((x + m - 1) // m) * m


_VMEM_LIMIT = 32 * 1024 * 1024


# ----------------------------------------------------------------------------
# Pallas kernels
# ----------------------------------------------------------------------------
def _gemm_bn_kernel(*refs, relu, has_residual):
    """Single-K-step GEMM: o = epilogue(a @ w) with folded-BN scale/bias,
    optional residual add and optional ReLU fused into the epilogue.
    Grid = (M tiles, N tiles); the full K slab is resident, so there is no
    zero-init pass and no accumulator read-modify-write."""
    if has_residual:
        a_ref, w_ref, sb_ref, r_ref, o_ref = refs
    else:
        a_ref, w_ref, sb_ref, o_ref = refs
        r_ref = None
    y = jnp.dot(a_ref[...], w_ref[...], preferred_element_type=jnp.float32)
    y = y * sb_ref[0:1, :] + sb_ref[1:2, :]
    if has_residual:
        y = y + r_ref[...].astype(jnp.float32)
    if relu:
        y = jnp.maximum(y, 0.0)
    o_ref[...] = y.astype(o_ref.dtype)


def _conv_tapped_kernel(x_ref, w_ref, sb_ref, o_ref, *, offsets, relu):
    """Direct stride-1 conv: taps are handled in-kernel as shifted row windows
    of the flattened (padded-H * padded-W, C_pad) activation, so no im2col
    patch matrix ever hits HBM.  Grid = (batch,)."""
    xb = x_ref[0]                                   # (R, Cp) bf16
    lp = o_ref.shape[1]
    acc = None
    for t, off in enumerate(offsets):               # static unrolled taps
        a = xb[off:off + lp, :]
        d = jnp.dot(a, w_ref[t], preferred_element_type=jnp.float32)
        acc = d if acc is None else acc + d
    y = acc * sb_ref[0:1, :] + sb_ref[1:2, :]
    if relu:
        y = jnp.maximum(y, 0.0)
    o_ref[0] = y.astype(o_ref.dtype)


def _cam_kernel(x_ref, gamma_ref, o_ref, *, c_real):
    """Fused channel attention (YOWO CAM) for one sample, fully in VMEM:
    energy = x^T x -> (rowmax - energy) masked softmax -> attn @ x^T ->
    gamma*out + x.  Grid = (batch,).  Pad channel lanes stay exactly zero."""
    hw, cp = x_ref.shape[1], x_ref.shape[2]
    flat = x_ref[0].astype(jnp.float32)             # (HW, Cp), pad lanes = 0
    flat_t = flat.T                                 # (Cp, HW)
    energy = jnp.dot(flat_t, flat, preferred_element_type=jnp.float32)
    col = jax.lax.broadcasted_iota(jnp.int32, (cp, cp), 1)
    energy_new = jnp.max(energy, axis=-1, keepdims=True) - energy
    energy_new = jnp.where(col < c_real, energy_new, -1e30)   # mask pad cols
    m = jnp.max(energy_new, axis=-1, keepdims=True)
    p = jnp.exp(energy_new - m)
    attn = p * pl.reciprocal(jnp.sum(p, axis=-1, keepdims=True), approx=True)
    out = jnp.dot(attn, flat_t, preferred_element_type=jnp.float32)  # (Cp, HW)
    out_t = out.T                                                    # (HW, Cp)
    lane = jax.lax.broadcasted_iota(jnp.int32, (hw, cp), 1)
    out_t = jnp.where(lane < c_real, out_t, 0.0)    # keep pad lanes exactly 0
    y = flat + gamma_ref[0] * out_t
    o_ref[0] = y.astype(o_ref.dtype)


# ----------------------------------------------------------------------------
# Pallas wrappers
# ----------------------------------------------------------------------------
def _pick_tm(m8):
    """M tile: keep >=2 parallel M blocks whenever M >= 16 (v7x has 2 TCs),
    cap at 256 (MXU-friendly, tiny vs. any VMEM limit)."""
    if m8 >= 512:
        return 256
    if m8 >= 16:
        return _round_up((m8 + 1) // 2, 8)
    return m8


def matmul_bn_pallas(a, w, sb, residual=None, relu=True,
                     out_dtype=jnp.bfloat16):
    """out = epilogue(a @ w).  a: (M, K); w: (K, N_pad) bf16 pre-padded at
    init; sb: (2, N_pad) f32 packed scale/bias; residual: optional (M, N_pad).
    Full-K single-step GEMM; bf16 (or f32) lane-dense output."""
    M, Ka = a.shape
    Kw, N_pad = w.shape
    assert Ka == Kw and Kw % 128 == 0 and N_pad % 128 == 0
    assert Kw <= 2048  # TODO(synk): K-tiled accumulator path for larger K

    a = a.astype(jnp.bfloat16)
    M8 = _round_up(max(M, 8), 8)
    TM = _pick_tm(M8)
    Mp = _round_up(M8, TM)
    if Mp != M:
        a = jnp.pad(a, ((0, Mp - M), (0, 0)))
    TN = 256 if N_pad % 256 == 0 else 128
    grid = (Mp // TM, N_pad // TN)

    in_specs = [
        pl.BlockSpec((TM, Kw), lambda i, j: (i, 0)),
        pl.BlockSpec((Kw, TN), lambda i, j: (0, j)),
        pl.BlockSpec((2, TN), lambda i, j: (0, j)),
    ]
    inputs = [a, w, sb]
    if residual is not None:
        res = residual
        assert res.shape == (M, N_pad)
        if Mp != M:
            res = jnp.pad(res, ((0, Mp - M), (0, 0)))
        in_specs.append(pl.BlockSpec((TM, TN), lambda i, j: (i, j)))
        inputs.append(res)

    out = pl.pallas_call(
        functools.partial(_gemm_bn_kernel, relu=relu,
                          has_residual=residual is not None),
        out_shape=jax.ShapeDtypeStruct((Mp, N_pad), out_dtype),
        grid=grid,
        in_specs=in_specs,
        out_specs=pl.BlockSpec((TM, TN), lambda i, j: (i, j)),
        compiler_params=pltpu.CompilerParams(
            dimension_semantics=("parallel", "parallel"),
            vmem_limit_bytes=_VMEM_LIMIT),
    )(*inputs)
    return out[:M] if Mp != M else out


def conv3x3_s1_bn(x, p, *, relu=True):
    """3x3 / stride 1 / pad 1 conv + folded BN (+ReLU) with in-kernel taps.
    x: (N, H, W, C_pad) bf16 lane-dense.  Returns (N, H, W, N_pad) bf16."""
    N, H, W, Cp = x.shape
    taps, Cw, Np = p['w'].shape
    assert Cw == Cp and taps == 9
    Hp, Wp = H + 2, W + 2
    L = Hp * Wp
    Lp = _round_up(L, 8)
    max_off = 2 * Wp + 2
    R = _round_up(Lp + max_off, 8)
    xp = jnp.pad(x, ((0, 0), (1, 1), (1, 1), (0, 0)))
    xf = jnp.pad(xp.reshape(N, L, Cp), ((0, 0), (0, R - L), (0, 0)))
    offsets = tuple(i * Wp + j for i in range(3) for j in range(3))

    out = pl.pallas_call(
        functools.partial(_conv_tapped_kernel, offsets=offsets, relu=relu),
        out_shape=jax.ShapeDtypeStruct((N, Lp, Np), jnp.bfloat16),
        grid=(N,),
        in_specs=[
            pl.BlockSpec((1, R, Cp), lambda b: (b, 0, 0)),
            pl.BlockSpec((taps, Cp, Np), lambda b: (0, 0, 0)),
            pl.BlockSpec((2, Np), lambda b: (0, 0)),
        ],
        out_specs=pl.BlockSpec((1, Lp, Np), lambda b: (b, 0, 0)),
        compiler_params=pltpu.CompilerParams(
            dimension_semantics=("parallel",),
            vmem_limit_bytes=_VMEM_LIMIT),
    )(xf, p['w'], p['sb'])
    # valid conv outputs live at padded coords (h, w) with h < H, w < W
    return out[:, :L, :].reshape(N, Hp, Wp, Np)[:, :H, :W, :]


def cam_pallas(x, gamma, *, c_real):
    """Fused CAM over the first `c_real` channels of lane-dense x."""
    N, H, W, Cp = x.shape
    HW = H * W
    assert HW % 8 == 0
    xf = x.reshape(N, HW, Cp)
    out = pl.pallas_call(
        functools.partial(_cam_kernel, c_real=c_real),
        out_shape=jax.ShapeDtypeStruct((N, HW, Cp), x.dtype),
        grid=(N,),
        in_specs=[
            pl.BlockSpec((1, HW, Cp), lambda b: (b, 0, 0)),
            pl.BlockSpec(memory_space=pltpu.MemorySpace.SMEM),
        ],
        out_specs=pl.BlockSpec((1, HW, Cp), lambda b: (b, 0, 0)),
        compiler_params=pltpu.CompilerParams(
            dimension_semantics=("parallel",),
            vmem_limit_bytes=_VMEM_LIMIT),
    )(xf, gamma)
    return out.reshape(N, H, W, Cp)


# ----------------------------------------------------------------------------
# XLA glue: im2col for the strided convs (K zero-pad folded into the concat),
# tiny pooling ops kept out of Pallas on purpose (launch overhead > work).
# ----------------------------------------------------------------------------
def _im2col2d(x, k, stride, padding, k_pad):
    N, H, W, C = x.shape
    if padding > 0:
        x = jnp.pad(x, ((0, 0), (padding, padding), (padding, padding), (0, 0)))
    Hp, Wp = x.shape[1], x.shape[2]
    Ho = (Hp - k) // stride + 1
    Wo = (Wp - k) // stride + 1
    cols = []
    for i in range(k):
        for j in range(k):
            cols.append(x[:, i:i + stride * (Ho - 1) + 1:stride,
                             j:j + stride * (Wo - 1) + 1:stride, :])
    k_rows = k * k * C
    if k_pad > k_rows:                              # fold K pad into the concat
        cols.append(jnp.zeros((N, Ho, Wo, k_pad - k_rows), x.dtype))
    patches = jnp.concatenate(cols, axis=-1)
    return patches.reshape(N * Ho * Wo, k_pad), Ho, Wo


def _im2col3d(x, k, st, sh, sw, padding, k_pad):
    N, T, H, W, C = x.shape
    if padding > 0:
        p = padding
        x = jnp.pad(x, ((0, 0), (p, p), (p, p), (p, p), (0, 0)))
    Tp, Hp, Wp = x.shape[1], x.shape[2], x.shape[3]
    To = (Tp - k) // st + 1
    Ho = (Hp - k) // sh + 1
    Wo = (Wp - k) // sw + 1
    cols = []
    for a in range(k):
        for i in range(k):
            for j in range(k):
                cols.append(x[:, a:a + st * (To - 1) + 1:st,
                                 i:i + sh * (Ho - 1) + 1:sh,
                                 j:j + sw * (Wo - 1) + 1:sw, :])
    k_rows = k * k * k * C
    if k_pad > k_rows:
        cols.append(jnp.zeros((N, To, Ho, Wo, k_pad - k_rows), x.dtype))
    patches = jnp.concatenate(cols, axis=-1)
    return patches.reshape(N * To * Ho * Wo, k_pad), To, Ho, Wo


def conv2d_bn_im2col(x, p, *, k, stride, padding, relu=True):
    a, Ho, Wo = _im2col2d(x, k, stride, padding, p['w'].shape[0])
    out = matmul_bn_pallas(a, p['w'], p['sb'], relu=relu)
    return out.reshape(x.shape[0], Ho, Wo, p['w'].shape[1])


def conv3d_bn_im2col(x, p, *, k, stride, padding, relu=True):
    st, sh, sw = stride
    a, To, Ho, Wo = _im2col3d(x, k, st, sh, sw, padding, p['w'].shape[0])
    out = matmul_bn_pallas(a, p['w'], p['sb'], relu=relu)
    return out.reshape(x.shape[0], To, Ho, Wo, p['w'].shape[1])


def conv1x1_bn(x, p, *, relu=True, residual=None):
    """1x1 conv on the lane-dense padded channel layout -> plain GEMM."""
    N, H, W, Cp = x.shape
    a = x.reshape(N * H * W, Cp)
    res = residual.reshape(N * H * W, residual.shape[-1]) \
        if residual is not None else None
    out = matmul_bn_pallas(a, p['w'], p['sb'], residual=res, relu=relu)
    return out.reshape(N, H, W, p['w'].shape[1])


def maxpool2d_3x3_s2(x):
    """3x3 / stride 2 / pad 1 max pool as a 9-tap shifted maximum (no stacked
    copy, no kernel launch -- the data is a few KB)."""
    neg = float(jnp.finfo(x.dtype).min)
    xp = jnp.pad(x, ((0, 0), (1, 1), (1, 1), (0, 0)), constant_values=neg)
    Hp, Wp = xp.shape[1], xp.shape[2]
    Ho = (Hp - 3) // 2 + 1
    Wo = (Wp - 3) // 2 + 1
    out = None
    for i in range(3):
        for j in range(3):
            t = xp[:, i:i + 2 * (Ho - 1) + 1:2, j:j + 2 * (Wo - 1) + 1:2, :]
            out = t if out is None else jnp.maximum(out, t)
    return out


# ----------------------------------------------------------------------------
# Parameters (deterministic synthetic init; weights pre-padded to kernel layouts)
# ----------------------------------------------------------------------------
def _fold_bn(key, c_out):
    kg, kb, km, kv = jax.random.split(key, 4)
    gamma = 1.0 + 0.1 * jax.random.normal(kg, (c_out,), jnp.float32)
    beta = 0.1 * jax.random.normal(kb, (c_out,), jnp.float32)
    mean = 0.1 * jax.random.normal(km, (c_out,), jnp.float32)
    var = 1.0 + 0.1 * jnp.abs(jax.random.normal(kv, (c_out,), jnp.float32))
    scale = gamma / jnp.sqrt(var + 1e-5)
    bias = beta - mean * scale
    return scale, bias


def _make_sb(key, c_out, n_pad, bn, bias):
    if bn:
        scale, b = _fold_bn(key, c_out)
    else:
        scale = jnp.ones((c_out,), jnp.float32)
        b = (0.05 * jax.random.normal(key, (c_out,), jnp.float32)
             if bias else jnp.zeros((c_out,), jnp.float32))
    sb = jnp.zeros((2, n_pad), jnp.float32)          # pads stay exactly zero
    return sb.at[0, :c_out].set(scale).at[1, :c_out].set(b)


def _init_conv_gemm(key, c_in, c_out, taps=1, k_pad=None, bn=True, bias=False):
    """im2col / 1x1 conv weight in GEMM layout (K_pad, N_pad) bf16 + (2,N_pad)
    packed scale/bias.  Zero pad rows/cols keep pad channel lanes exactly 0."""
    kw_, kbn = jax.random.split(key)
    k_rows = taps * c_in
    if k_pad is None:
        k_pad = _round_up(k_rows, 128)
    n_pad = _round_up(c_out, 128)
    w = jax.random.normal(kw_, (k_rows, c_out), jnp.float32) / (k_rows ** 0.5)
    w_mat = jnp.zeros((k_pad, n_pad), jnp.float32).at[:k_rows, :c_out].set(w)
    return {'w': w_mat.astype(jnp.bfloat16),
            'sb': _make_sb(kbn, c_out, n_pad, bn, bias)}


def _init_conv_tapped(key, c_in, c_out, taps=9, bn=True):
    """3x3 stride-1 conv weight as (taps, C_pad, N_pad) bf16 for the in-kernel
    tapped conv."""
    kw_, kbn = jax.random.split(key)
    c_pad = _round_up(c_in, 128)
    n_pad = _round_up(c_out, 128)
    w = jax.random.normal(kw_, (taps, c_in, c_out), jnp.float32) \
        / ((taps * c_in) ** 0.5)
    w_full = jnp.zeros((taps, c_pad, n_pad), jnp.float32) \
        .at[:, :c_in, :c_out].set(w)
    return {'w': w_full.astype(jnp.bfloat16),
            'sb': _make_sb(kbn, c_out, n_pad, bn, bias=False)}


def make_params(key):
    ks = iter(jax.random.split(key, 16))
    p = {}
    # 3D stream (TODO(synk): BackboneI3D topology unavailable; 2-layer stem)
    p['c3d_1'] = _init_conv_gemm(next(ks), 3, 32, taps=27)
    p['c3d_2'] = _init_conv_gemm(next(ks), 32, 64, taps=27)
    # 2D stream (TODO(synk): Backbone2DResNet depth unavailable; stem + 2 blocks)
    p['stem2d'] = _init_conv_gemm(next(ks), 3, 16, taps=49)
    p['b1_down'] = _init_conv_gemm(next(ks), 16, 64, taps=1, k_pad=128)
    p['b1_c1'] = _init_conv_gemm(next(ks), 16, 16, taps=1, k_pad=128)
    p['b1_c2'] = _init_conv_tapped(next(ks), 16, 16)
    p['b1_c3'] = _init_conv_gemm(next(ks), 16, 64, taps=1, k_pad=128)
    p['b2_c1'] = _init_conv_gemm(next(ks), 64, 16, taps=1, k_pad=128)
    p['b2_c2'] = _init_conv_tapped(next(ks), 16, 16)
    p['b2_c3'] = _init_conv_gemm(next(ks), 16, 64, taps=1, k_pad=128)
    # CFAM block (TODO(synk): real widths are 1024/512; scaled down to 128/64)
    p['cf1'] = _init_conv_tapped(next(ks), 128, 128)
    p['cf2'] = _init_conv_tapped(next(ks), 128, 64)
    p['cf3'] = _init_conv_tapped(next(ks), 64, 64)
    p['cf_out'] = _init_conv_gemm(next(ks), 64, 64, taps=1, k_pad=128,
                                  bn=False, bias=True)
    # binary head: Conv2d(out_channels, 2, kernel_size=1, bias=False)
    p['cls'] = _init_conv_gemm(next(ks), 64, 2, taps=1, k_pad=128,
                               bn=False, bias=False)
    p['cam_gamma'] = jnp.full((1,), 0.1, jnp.float32)
    return p


# ----------------------------------------------------------------------------
# TwoStreamVD_Binary_CFam forward (with_roipool=False branch, binary head)
# ----------------------------------------------------------------------------
def two_stream_forward(params, x1, x2):
    """x1: (B, 3, T, H, W) clip (3D stream); x2: (B, 3, H, W) frame (2D stream).
    Returns (B, 2) logits."""
    # -------- 3D stream ----------------------------------------------------
    v = jnp.transpose(x1, (0, 2, 3, 4, 1)).astype(jnp.bfloat16)   # N,T,H,W,C
    v = conv3d_bn_im2col(v, params['c3d_1'], k=3,
                         stride=(1, 2, 2), padding=1)             # (B,8,8,8,.32)
    v = conv3d_bn_im2col(v[..., :32], params['c3d_2'], k=3,
                         stride=(2, 2, 2), padding=1)             # (B,4,4,4,.64)
    # AdaptiveAvgPool3d((1,None,None)) + squeeze -> temporal mean (tiny, XLA)
    x_3d = jnp.mean(v.astype(jnp.float32), axis=1).astype(jnp.bfloat16)

    # -------- 2D stream ----------------------------------------------------
    y = jnp.transpose(x2, (0, 2, 3, 1)).astype(jnp.bfloat16)      # NHWC
    y = conv2d_bn_im2col(y, params['stem2d'], k=7, stride=2, padding=3)
    y = maxpool2d_3x3_s2(y)                                       # (B,4,4,.16)
    # bottleneck 1 (projection shortcut); residual + ReLU fused in conv3 GEMM
    idn = conv1x1_bn(y, params['b1_down'], relu=False)
    out = conv1x1_bn(y, params['b1_c1'])
    out = conv3x3_s1_bn(out, params['b1_c2'])
    y = conv1x1_bn(out, params['b1_c3'], relu=True, residual=idn)
    # bottleneck 2 (identity shortcut)
    out = conv1x1_bn(y, params['b2_c1'])
    out = conv3x3_s1_bn(out, params['b2_c2'])
    x_2d = conv1x1_bn(out, params['b2_c3'], relu=True, residual=y)

    # -------- fuse streams (with_roipool = False branch) --------------------
    # TODO(synk): RoIAlign / SingleRoIExtractor3D (with_roipool=True) path not
    # implemented; temporal_pool + squeeze + channel concat branch is used.
    x = jnp.concatenate([x_3d[..., :64], x_2d[..., :64]], axis=-1)  # (B,4,4,128)

    # -------- CFAM block -----------------------------------------------------
    x = conv3x3_s1_bn(x, params['cf1'])
    x = conv3x3_s1_bn(x, params['cf2'])
    x = cam_pallas(x, params['cam_gamma'], c_real=64)
    x = conv3x3_s1_bn(x, params['cf3'])
    x = conv1x1_bn(x, params['cf_out'], relu=False)   # Dropout2d -> identity

    # -------- head: 1x1 classifier + global avg pool (commuted, both linear) -
    xg = jnp.mean(x.astype(jnp.float32), axis=(1, 2))              # (B, C_pad)
    logits = matmul_bn_pallas(xg, params['cls']['w'], params['cls']['sb'],
                              relu=False, out_dtype=jnp.float32)
    return logits[:, :2]                                           # (B, 2)


# ----------------------------------------------------------------------------
# Demo
# ----------------------------------------------------------------------------
if __name__ == "__main__":
    key = jax.random.PRNGKey(0)
    kp, k1, k2 = jax.random.split(key, 3)

    B, C, T, H, W = 2, 3, 8, 16, 16
    x1 = jax.random.normal(k1, (B, C, T, H, W), jnp.float32)   # 3D stream clip
    x2 = jax.random.normal(k2, (B, C, H, W), jnp.float32)      # 2D stream frame
    params = make_params(kp)

    fwd = jax.jit(two_stream_forward)
    out = fwd(params, x1, x2)
    jax.block_until_ready(out)

    assert out.shape == (B, 2), out.shape
    assert bool(jnp.all(jnp.isfinite(out)))
    print("KERNEL_OK")
</pallas_src>

<mosaic_0001>
module attributes {stable_mosaic.version = 11 : i64} {
  func.func @_gemm_bn_kernel(%arg0: i32, %arg1: i32, %arg2: memref<256x128xbf16, #tpu.memory_space<vmem>>, %arg3: memref<128x128xbf16, #tpu.memory_space<vmem>>, %arg4: memref<2x128xf32, #tpu.memory_space<vmem>>, %arg5: memref<256x128xbf16, #tpu.memory_space<vmem>>) attributes {dimension_semantics = [#tpu.dimension_semantics<parallel>, #tpu.dimension_semantics<parallel>], iteration_bounds = array<i64: 4, 1>, scalar_prefetch = 0 : i64, scratch_operands = 0 : i64, tpu.core_type = #tpu.core_type<tc>, window_params = [{transform_indices = @transform_0, window_bounds = array<i64: 256, 128>}, {transform_indices = @transform_1, window_bounds = array<i64: 128, 128>}, {transform_indices = @transform_2, window_bounds = array<i64: 2, 128>}, {transform_indices = @transform_3, window_bounds = array<i64: 256, 128>}]} {
    %c0 = arith.constant 0 : index
    %c0_0 = arith.constant 0 : index
    %0 = vector.load %arg2[%c0, %c0_0] : memref<256x128xbf16, #tpu.memory_space<vmem>>, vector<256x128xbf16>
    %c0_1 = arith.constant 0 : index
    %c0_2 = arith.constant 0 : index
    %1 = vector.load %arg3[%c0_1, %c0_2] : memref<128x128xbf16, #tpu.memory_space<vmem>>, vector<128x128xbf16>
    %cst = arith.constant dense<0.000000e+00> : vector<256x128xf32>
    %2 = tpu.matmul %0, %1, %cst {dimension_numbers = #tpu.dot_dimension_numbers<[1], [0], [0], [1], [0, 0, 1, 1], [], []>} : vector<256x128xbf16>, vector<128x128xbf16>, vector<256x128xf32> -> vector<256x128xf32>
    %c0_3 = arith.constant 0 : index
    %c0_4 = arith.constant 0 : index
    %3 = vector.load %arg4[%c0_3, %c0_4] : memref<2x128xf32, #tpu.memory_space<vmem>>, vector<1x128xf32>
    %4 = vector.broadcast %3 : vector<1x128xf32> to vector<256x128xf32>
    %5 = arith.mulf %2, %4 : vector<256x128xf32>
    %c1 = arith.constant 1 : index
    %c0_5 = arith.constant 0 : index
    %6 = vector.load %arg4[%c1, %c0_5] : memref<2x128xf32, #tpu.memory_space<vmem>>, vector<1x128xf32>
    %7 = vector.broadcast %6 : vector<1x128xf32> to vector<256x128xf32>
    %8 = arith.addf %5, %7 : vector<256x128xf32>
    %cst_6 = arith.constant 0.000000e+00 : f32
    %9 = vector.broadcast %cst_6 : f32 to vector<256x128xf32>
    %10 = arith.maximumf %8, %9 : vector<256x128xf32>
    %11 = arith.truncf %10 : vector<256x128xf32> to vector<256x128xbf16>
    %c0_7 = arith.constant 0 : index
    %c0_8 = arith.constant 0 : index
    %12 = vector.load %arg5[%c0_7, %c0_8] : memref<256x128xbf16, #tpu.memory_space<vmem>>, vector<256x128xbf16>
    tpu.vector_store %arg5[%c0_7, %c0_8], %11 {strides = array<i32>} : memref<256x128xbf16, #tpu.memory_space<vmem>>, vector<256x128xbf16>,
    return
  }
  func.func @transform_0(%arg0: i32, %arg1: i32) -> (i32, i32) {
    %c0_i32 = arith.constant 0 : i32
    %c0_i32_0 = arith.constant 0 : i32
    return %arg0, %c0_i32 : i32, i32
  }
  func.func @transform_1(%arg0: i32, %arg1: i32) -> (i32, i32) {
    %c0_i32 = arith.constant 0 : i32
    %c0_i32_0 = arith.constant 0 : i32
    return %c0_i32, %arg1 : i32, i32
  }
  func.func @transform_2(%arg0: i32, %arg1: i32) -> (i32, i32) {
    %c0_i32 = arith.constant 0 : i32
    %c0_i32_0 = arith.constant 0 : i32
    return %c0_i32, %arg1 : i32, i32
  }
  func.func @transform_3(%arg0: i32, %arg1: i32) -> (i32, i32) {
    %c0_i32 = arith.constant 0 : i32
    return %arg0, %arg1 : i32, i32
  }
}

module attributes {stable_mosaic.version = 11 : i64} {
  func.func @_gemm_bn_kernel(%arg0: i32, %arg1: i32, %arg2: memref<64x896xbf16, #tpu.memory_space<vmem>>, %arg3: memref<896x128xbf16, #tpu.memory_space<vmem>>, %arg4: memref<2x128xf32, #tpu.memory_space<vmem>>, %arg5: memref<64x128xbf16, #tpu.memory_space<vmem>>) attributes {dimension_semantics = [#tpu.dimension_semantics<parallel>, #tpu.dimension_semantics<parallel>], iteration_bounds = array<i64: 2, 1>, scalar_prefetch = 0 : i64, scratch_operands = 0 : i64, tpu.core_type = #tpu.core_type<tc>, window_params = [{transform_indices = @transform_0, window_bounds = array<i64: 64, 896>}, {transform_indices = @transform_1, window_bounds = array<i64: 896, 128>}, {transform_indices = @transform_2, window_bounds = array<i64: 2, 128>}, {transform_indices = @transform_3, window_bounds = array<i64: 64, 128>}]} {
    %c0 = arith.constant 0 : index
    %c0_0 = arith.constant 0 : index
    %0 = vector.load %arg2[%c0, %c0_0] : memref<64x896xbf16, #tpu.memory_space<vmem>>, vector<64x896xbf16>
    %c0_1 = arith.constant 0 : index
    %c0_2 = arith.constant 0 : index
    %1 = vector.load %arg3[%c0_1, %c0_2] : memref<896x128xbf16, #tpu.memory_space<vmem>>, vector<896x128xbf16>
    %cst = arith.constant dense<0.000000e+00> : vector<64x128xf32>
    %2 = tpu.matmul %0, %1, %cst {dimension_numbers = #tpu.dot_dimension_numbers<[1], [0], [0], [1], [0, 0, 1, 1], [], []>} : vector<64x896xbf16>, vector<896x128xbf16>, vector<64x128xf32> -> vector<64x128xf32>
    %c0_3 = arith.constant 0 : index
    %c0_4 = arith.constant 0 : index
    %3 = vector.load %arg4[%c0_3, %c0_4] : memref<2x128xf32, #tpu.memory_space<vmem>>, vector<1x128xf32>
    %4 = vector.broadcast %3 : vector<1x128xf32> to vector<64x128xf32>
    %5 = arith.mulf %2, %4 : vector<64x128xf32>
    %c1 = arith.constant 1 : index
    %c0_5 = arith.constant 0 : index
    %6 = vector.load %arg4[%c1, %c0_5] : memref<2x128xf32, #tpu.memory_space<vmem>>, vector<1x128xf32>
    %7 = vector.broadcast %6 : vector<1x128xf32> to vector<64x128xf32>
    %8 = arith.addf %5, %7 : vector<64x128xf32>
    %cst_6 = arith.constant 0.000000e+00 : f32
    %9 = vector.broadcast %cst_6 : f32 to vector<64x128xf32>
    %10 = arith.maximumf %8, %9 : vector<64x128xf32>
    %11 = arith.truncf %10 : vector<64x128xf32> to vector<64x128xbf16>
    %c0_7 = arith.constant 0 : index
    %c0_8 = arith.constant 0 : index
    %12 = vector.load %arg5[%c0_7, %c0_8] : memref<64x128xbf16, #tpu.memory_space<vmem>>, vector<64x128xbf16>
    tpu.vector_store %arg5[%c0_7, %c0_8], %11 {strides = array<i32>} : memref<64x128xbf16, #tpu.memory_space<vmem>>, vector<64x128xbf16>,
    return
  }
  func.func @transform_0(%arg0: i32, %arg1: i32) -> (i32, i32) {
    %c0_i32 = arith.constant 0 : i32
    %c0_i32_0 = arith.constant 0 : i32
    return %arg0, %c0_i32 : i32, i32
  }
  func.func @transform_1(%arg0: i32, %arg1: i32) -> (i32, i32) {
    %c0_i32 = arith.constant 0 : i32
    %c0_i32_0 = arith.constant 0 : i32
    return %c0_i32, %arg1 : i32, i32
  }
  func.func @transform_2(%arg0: i32, %arg1: i32) -> (i32, i32) {
    %c0_i32 = arith.constant 0 : i32
    %c0_i32_0 = arith.constant 0 : i32
    return %c0_i32, %arg1 : i32, i32
  }
  func.func @transform_3(%arg0: i32, %arg1: i32) -> (i32, i32) {
    %c0_i32 = arith.constant 0 : i32
    return %arg0, %arg1 : i32, i32
  }
}

module attributes {stable_mosaic.version = 11 : i64} {
  func.func @_gemm_bn_kernel(%arg0: i32, %arg1: i32, %arg2: memref<64x256xbf16, #tpu.memory_space<vmem>>, %arg3: memref<256x128xbf16, #tpu.memory_space<vmem>>, %arg4: memref<2x128xf32, #tpu.memory_space<vmem>>, %arg5: memref<64x128xbf16, #tpu.memory_space<vmem>>) attributes {dimension_semantics = [#tpu.dimension_semantics<parallel>, #tpu.dimension_semantics<parallel>], iteration_bounds = array<i64: 2, 1>, scalar_prefetch = 0 : i64, scratch_operands = 0 : i64, tpu.core_type = #tpu.core_type<tc>, window_params = [{transform_indices = @transform_0, window_bounds = array<i64: 64, 256>}, {transform_indices = @transform_1, window_bounds = array<i64: 256, 128>}, {transform_indices = @transform_2, window_bounds = array<i64: 2, 128>}, {transform_indices = @transform_3, window_bounds = array<i64: 64, 128>}]} {
    %c0 = arith.constant 0 : index
    %c0_0 = arith.constant 0 : index
    %0 = vector.load %arg2[%c0, %c0_0] : memref<64x256xbf16, #tpu.memory_space<vmem>>, vector<64x256xbf16>
    %c0_1 = arith.constant 0 : index
    %c0_2 = arith.constant 0 : index
    %1 = vector.load %arg3[%c0_1, %c0_2] : memref<256x128xbf16, #tpu.memory_space<vmem>>, vector<256x128xbf16>
    %cst = arith.constant dense<0.000000e+00> : vector<64x128xf32>
    %2 = tpu.matmul %0, %1, %cst {dimension_numbers = #tpu.dot_dimension_numbers<[1], [0], [0], [1], [0, 0, 1, 1], [], []>} : vector<64x256xbf16>, vector<256x128xbf16>, vector<64x128xf32> -> vector<64x128xf32>
    %c0_3 = arith.constant 0 : index
    %c0_4 = arith.constant 0 : index
    %3 = vector.load %arg4[%c0_3, %c0_4] : memref<2x128xf32, #tpu.memory_space<vmem>>, vector<1x128xf32>
    %4 = vector.broadcast %3 : vector<1x128xf32> to vector<64x128xf32>
    %5 = arith.mulf %2, %4 : vector<64x128xf32>
    %c1 = arith.constant 1 : index
    %c0_5 = arith.constant 0 : index
    %6 = vector.load %arg4[%c1, %c0_5] : memref<2x128xf32, #tpu.memory_space<vmem>>, vector<1x128xf32>
    %7 = vector.broadcast %6 : vector<1x128xf32> to vector<64x128xf32>
    %8 = arith.addf %5, %7 : vector<64x128xf32>
    %cst_6 = arith.constant 0.000000e+00 : f32
    %9 = vector.broadcast %cst_6 : f32 to vector<64x128xf32>
    %10 = arith.maximumf %8, %9 : vector<64x128xf32>
    %11 = arith.truncf %10 : vector<64x128xf32> to vector<64x128xbf16>
    %c0_7 = arith.constant 0 : index
    %c0_8 = arith.constant 0 : index
    %12 = vector.load %arg5[%c0_7, %c0_8] : memref<64x128xbf16, #tpu.memory_space<vmem>>, vector<64x128xbf16>
    tpu.vector_store %arg5[%c0_7, %c0_8], %11 {strides = array<i32>} : memref<64x128xbf16, #tpu.memory_space<vmem>>, vector<64x128xbf16>,
    return
  }
  func.func @transform_0(%arg0: i32, %arg1: i32) -> (i32, i32) {
    %c0_i32 = arith.constant 0 : i32
    %c0_i32_0 = arith.constant 0 : i32
    return %arg0, %c0_i32 : i32, i32
  }
  func.func @transform_1(%arg0: i32, %arg1: i32) -> (i32, i32) {
    %c0_i32 = arith.constant 0 : i32
    %c0_i32_0 = arith.constant 0 : i32
    return %c0_i32, %arg1 : i32, i32
  }
  func.func @transform_2(%arg0: i32, %arg1: i32) -> (i32, i32) {
    %c0_i32 = arith.constant 0 : i32
    %c0_i32_0 = arith.constant 0 : i32
    return %c0_i32, %arg1 : i32, i32
  }
  func.func @transform_3(%arg0: i32, %arg1: i32) -> (i32, i32) {
    %c0_i32 = arith.constant 0 : i32
    return %arg0, %arg1 : i32, i32
  }
}

module attributes {stable_mosaic.version = 11 : i64} {
  func.func @_gemm_bn_kernel(%arg0: i32, %arg1: i32, %arg2: memref<16x128xbf16, #tpu.memory_space<vmem>>, %arg3: memref<128x128xbf16, #tpu.memory_space<vmem>>, %arg4: memref<2x128xf32, #tpu.memory_space<vmem>>, %arg5: memref<16x128xbf16, #tpu.memory_space<vmem>>) attributes {dimension_semantics = [#tpu.dimension_semantics<parallel>, #tpu.dimension_semantics<parallel>], iteration_bounds = array<i64: 2, 1>, scalar_prefetch = 0 : i64, scratch_operands = 0 : i64, tpu.core_type = #tpu.core_type<tc>, window_params = [{transform_indices = @transform_0, window_bounds = array<i64: 16, 128>}, {transform_indices = @transform_1, window_bounds = array<i64: 128, 128>}, {transform_indices = @transform_2, window_bounds = array<i64: 2, 128>}, {transform_indices = @transform_3, window_bounds = array<i64: 16, 128>}]} {
    %c0 = arith.constant 0 : index
    %c0_0 = arith.constant 0 : index
    %0 = vector.load %arg2[%c0, %c0_0] : memref<16x128xbf16, #tpu.memory_space<vmem>>, vector<16x128xbf16>
    %c0_1 = arith.constant 0 : index
    %c0_2 = arith.constant 0 : index
    %1 = vector.load %arg3[%c0_1, %c0_2] : memref<128x128xbf16, #tpu.memory_space<vmem>>, vector<128x128xbf16>
    %cst = arith.constant dense<0.000000e+00> : vector<16x128xf32>
    %2 = tpu.matmul %0, %1, %cst {dimension_numbers = #tpu.dot_dimension_numbers<[1], [0], [0], [1], [0, 0, 1, 1], [], []>} : vector<16x128xbf16>, vector<128x128xbf16>, vector<16x128xf32> -> vector<16x128xf32>
    %c0_3 = arith.constant 0 : index
    %c0_4 = arith.constant 0 : index
    %3 = vector.load %arg4[%c0_3, %c0_4] : memref<2x128xf32, #tpu.memory_space<vmem>>, vector<1x128xf32>
    %4 = vector.broadcast %3 : vector<1x128xf32> to vector<16x128xf32>
    %5 = arith.mulf %2, %4 : vector<16x128xf32>
    %c1 = arith.constant 1 : index
    %c0_5 = arith.constant 0 : index
    %6 = vector.load %arg4[%c1, %c0_5] : memref<2x128xf32, #tpu.memory_space<vmem>>, vector<1x128xf32>
    %7 = vector.broadcast %6 : vector<1x128xf32> to vector<16x128xf32>
    %8 = arith.addf %5, %7 : vector<16x128xf32>
    %cst_6 = arith.constant 0.000000e+00 : f32
    %9 = vector.broadcast %cst_6 : f32 to vector<16x128xf32>
    %10 = arith.maximumf %8, %9 : vector<16x128xf32>
    %11 = arith.truncf %10 : vector<16x128xf32> to vector<16x128xbf16>
    %c0_7 = arith.constant 0 : index
    %c0_8 = arith.constant 0 : index
    %12 = vector.load %arg5[%c0_7, %c0_8] : memref<16x128xbf16, #tpu.memory_space<vmem>>, vector<16x128xbf16>
    tpu.vector_store %arg5[%c0_7, %c0_8], %11 {strides = array<i32>} : memref<16x128xbf16, #tpu.memory_space<vmem>>, vector<16x128xbf16>,
    return
  }
  func.func @transform_0(%arg0: i32, %arg1: i32) -> (i32, i32) {
    %c0_i32 = arith.constant 0 : i32
    %c0_i32_0 = arith.constant 0 : i32
    return %arg0, %c0_i32 : i32, i32
  }
  func.func @transform_1(%arg0: i32, %arg1: i32) -> (i32, i32) {
    %c0_i32 = arith.constant 0 : i32
    %c0_i32_0 = arith.constant 0 : i32
    return %c0_i32, %arg1 : i32, i32
  }
  func.func @transform_2(%arg0: i32, %arg1: i32) -> (i32, i32) {
    %c0_i32 = arith.constant 0 : i32
    %c0_i32_0 = arith.constant 0 : i32
    return %c0_i32, %arg1 : i32, i32
  }
  func.func @transform_3(%arg0: i32, %arg1: i32) -> (i32, i32) {
    %c0_i32 = arith.constant 0 : i32
    return %arg0, %arg1 : i32, i32
  }
}

module attributes {stable_mosaic.version = 11 : i64} {
  func.func @_gemm_bn_kernel(%arg0: i32, %arg1: i32, %arg2: memref<16x128xbf16, #tpu.memory_space<vmem>>, %arg3: memref<128x128xbf16, #tpu.memory_space<vmem>>, %arg4: memref<2x128xf32, #tpu.memory_space<vmem>>, %arg5: memref<16x128xbf16, #tpu.memory_space<vmem>>) attributes {dimension_semantics = [#tpu.dimension_semantics<parallel>, #tpu.dimension_semantics<parallel>], iteration_bounds = array<i64: 2, 1>, scalar_prefetch = 0 : i64, scratch_operands = 0 : i64, tpu.core_type = #tpu.core_type<tc>, window_params = [{transform_indices = @transform_0, window_bounds = array<i64: 16, 128>}, {transform_indices = @transform_1, window_bounds = array<i64: 128, 128>}, {transform_indices = @transform_2, window_bounds = array<i64: 2, 128>}, {transform_indices = @transform_3, window_bounds = array<i64: 16, 128>}]} {
    %c0 = arith.constant 0 : index
    %c0_0 = arith.constant 0 : index
    %0 = vector.load %arg2[%c0, %c0_0] : memref<16x128xbf16, #tpu.memory_space<vmem>>, vector<16x128xbf16>
    %c0_1 = arith.constant 0 : index
    %c0_2 = arith.constant 0 : index
    %1 = vector.load %arg3[%c0_1, %c0_2] : memref<128x128xbf16, #tpu.memory_space<vmem>>, vector<128x128xbf16>
    %cst = arith.constant dense<0.000000e+00> : vector<16x128xf32>
    %2 = tpu.matmul %0, %1, %cst {dimension_numbers = #tpu.dot_dimension_numbers<[1], [0], [0], [1], [0, 0, 1, 1], [], []>} : vector<16x128xbf16>, vector<128x128xbf16>, vector<16x128xf32> -> vector<16x128xf32>
    %c0_3 = arith.constant 0 : index
    %c0_4 = arith.constant 0 : index
    %3 = vector.load %arg4[%c0_3, %c0_4] : memref<2x128xf32, #tpu.memory_space<vmem>>, vector<1x128xf32>
    %4 = vector.broadcast %3 : vector<1x128xf32> to vector<16x128xf32>
    %5 = arith.mulf %2, %4 : vector<16x128xf32>
    %c1 = arith.constant 1 : index
    %c0_5 = arith.constant 0 : index
    %6 = vector.load %arg4[%c1, %c0_5] : memref<2x128xf32, #tpu.memory_space<vmem>>, vector<1x128xf32>
    %7 = vector.broadcast %6 : vector<1x128xf32> to vector<16x128xf32>
    %8 = arith.addf %5, %7 : vector<16x128xf32>
    %9 = arith.truncf %8 : vector<16x128xf32> to vector<16x128xbf16>
    %c0_6 = arith.constant 0 : index
    %c0_7 = arith.constant 0 : index
    %10 = vector.load %arg5[%c0_6, %c0_7] : memref<16x128xbf16, #tpu.memory_space<vmem>>, vector<16x128xbf16>
    tpu.vector_store %arg5[%c0_6, %c0_7], %9 {strides = array<i32>} : memref<16x128xbf16, #tpu.memory_space<vmem>>, vector<16x128xbf16>,
    return
  }
  func.func @transform_0(%arg0: i32, %arg1: i32) -> (i32, i32) {
    %c0_i32 = arith.constant 0 : i32
    %c0_i32_0 = arith.constant 0 : i32
    return %arg0, %c0_i32 : i32, i32
  }
  func.func @transform_1(%arg0: i32, %arg1: i32) -> (i32, i32) {
    %c0_i32 = arith.constant 0 : i32
    %c0_i32_0 = arith.constant 0 : i32
    return %c0_i32, %arg1 : i32, i32
  }
  func.func @transform_2(%arg0: i32, %arg1: i32) -> (i32, i32) {
    %c0_i32 = arith.constant 0 : i32
    %c0_i32_0 = arith.constant 0 : i32
    return %c0_i32, %arg1 : i32, i32
  }
  func.func @transform_3(%arg0: i32, %arg1: i32) -> (i32, i32) {
    %c0_i32 = arith.constant 0 : i32
    return %arg0, %arg1 : i32, i32
  }
}

module attributes {stable_mosaic.version = 11 : i64} {
  func.func @_conv_tapped_kernel(%arg0: i32, %arg1: memref<1x56x128xbf16, #tpu.memory_space<vmem>>, %arg2: memref<9x128x128xbf16, #tpu.memory_space<vmem>>, %arg3: memref<2x128xf32, #tpu.memory_space<vmem>>, %arg4: memref<1x40x128xbf16, #tpu.memory_space<vmem>>) attributes {dimension_semantics = [#tpu.dimension_semantics<parallel>], iteration_bounds = array<i64: 2>, scalar_prefetch = 0 : i64, scratch_operands = 0 : i64, tpu.core_type = #tpu.core_type<tc>, window_params = [{transform_indices = @transform_0, window_bounds = array<i64: 1, 56, 128>}, {pipeline_mode = #tpu.pipeline_mode<synchronous>, transform_indices = @transform_1, window_bounds = array<i64: 9, 128, 128>}, {pipeline_mode = #tpu.pipeline_mode<synchronous>, transform_indices = @transform_2, window_bounds = array<i64: 2, 128>}, {transform_indices = @transform_3, window_bounds = array<i64: 1, 40, 128>}]} {
    %c0 = arith.constant 0 : index
    %c0_0 = arith.constant 0 : index
    %c0_1 = arith.constant 0 : index
    %0 = vector.load %arg1[%c0, %c0_0, %c0_1] : memref<1x56x128xbf16, #tpu.memory_space<vmem>>, vector<1x56x128xbf16>
    %1 = vector.shape_cast %0 : vector<1x56x128xbf16> to vector<56x128xbf16>
    %2 = vector.extract_strided_slice %1 {offsets = [0, 0], sizes = [40, 128], strides = [1, 1]} : vector<56x128xbf16> to vector<40x128xbf16>
    %c0_2 = arith.constant 0 : index
    %c0_3 = arith.constant 0 : index
    %c0_4 = arith.constant 0 : index
    %3 = vector.load %arg2[%c0_2, %c0_3, %c0_4] : memref<9x128x128xbf16, #tpu.memory_space<vmem>>, vector<1x128x128xbf16>
    %4 = vector.shape_cast %3 : vector<1x128x128xbf16> to vector<128x128xbf16>
    %cst = arith.constant dense<0.000000e+00> : vector<40x128xf32>
    %5 = tpu.matmul %2, %4, %cst {dimension_numbers = #tpu.dot_dimension_numbers<[1], [0], [0], [1], [0, 0, 1, 1], [], []>} : vector<40x128xbf16>, vector<128x128xbf16>, vector<40x128xf32> -> vector<40x128xf32>
    %6 = vector.extract_strided_slice %1 {offsets = [1, 0], sizes = [40, 128], strides = [1, 1]} : vector<56x128xbf16> to vector<40x128xbf16>
    %c1 = arith.constant 1 : index
    %c0_5 = arith.constant 0 : index
    %c0_6 = arith.constant 0 : index
    %7 = vector.load %arg2[%c1, %c0_5, %c0_6] : memref<9x128x128xbf16, #tpu.memory_space<vmem>>, vector<1x128x128xbf16>
    %8 = vector.shape_cast %7 : vector<1x128x128xbf16> to vector<128x128xbf16>
    %cst_7 = arith.constant dense<0.000000e+00> : vector<40x128xf32>
    %9 = tpu.matmul %6, %8, %cst_7 {dimension_numbers = #tpu.dot_dimension_numbers<[1], [0], [0], [1], [0, 0, 1, 1], [], []>} : vector<40x128xbf16>, vector<128x128xbf16>, vector<40x128xf32> -> vector<40x128xf32>
    %10 = arith.addf %5, %9 : vector<40x128xf32>
    %11 = vector.extract_strided_slice %1 {offsets = [2, 0], sizes = [40, 128], strides = [1, 1]} : vector<56x128xbf16> to vector<40x128xbf16>
    %c2 = arith.constant 2 : index
    %c0_8 = arith.constant 0 : index
    %c0_9 = arith.constant 0 : index
    %12 = vector.load %arg2[%c2, %c0_8, %c0_9] : memref<9x128x128xbf16, #tpu.memory_space<vmem>>, vector<1x128x128xbf16>
    %13 = vector.shape_cast %12 : vector<1x128x128xbf16> to vector<128x128xbf16>
    %cst_10 = arith.constant dense<0.000000e+00> : vector<40x128xf32>
    %14 = tpu.matmul %11, %13, %cst_10 {dimension_numbers = #tpu.dot_dimension_numbers<[1], [0], [0], [1], [0, 0, 1, 1], [], []>} : vector<40x128xbf16>, vector<128x128xbf16>, vector<40x128xf32> -> vector<40x128xf32>
    %15 = arith.addf %10, %14 : vector<40x128xf32>
    %16 = vector.extract_strided_slice %1 {offsets = [6, 0], sizes = [40, 128], strides = [1, 1]} : vector<56x128xbf16> to vector<40x128xbf16>
    %c3 = arith.constant 3 : index
    %c0_11 = arith.constant 0 : index
    %c0_12 = arith.constant 0 : index
    %17 = vector.load %arg2[%c3, %c0_11, %c0_12] : memref<9x128x128xbf16, #tpu.memory_space<vmem>>, vector<1x128x128xbf16>
    %18 = vector.shape_cast %17 : vector<1x128x128xbf16> to vector<128x128xbf16>
    %cst_13 = arith.constant dense<0.000000e+00> : vector<40x128xf32>
    %19 = tpu.matmul %16, %18, %cst_13 {dimension_numbers = #tpu.dot_dimension_numbers<[1], [0], [0], [1], [0, 0, 1, 1], [], []>} : vector<40x128xbf16>, vector<128x128xbf16>, vector<40x128xf32> -> vector<40x128xf32>
    %20 = arith.addf %15, %19 : vector<40x128xf32>
    %21 = vector.extract_strided_slice %1 {offsets = [7, 0], sizes = [40, 128], strides = [1, 1]} : vector<56x128xbf16> to vector<40x128xbf16>
    %c4 = arith.constant 4 : index
    %c0_14 = arith.constant 0 : index
    %c0_15 = arith.constant 0 : index
    %22 = vector.load %arg2[%c4, %c0_14, %c0_15] : memref<9x128x128xbf16, #tpu.memory_space<vmem>>, vector<1x128x128xbf16>
    %23 = vector.shape_cast %22 : vector<1x128x128xbf16> to vector<128x128xbf16>
    %cst_16 = arith.constant dense<0.000000e+00> : vector<40x128xf32>
    %24 = tpu.matmul %21, %23, %cst_16 {dimension_numbers = #tpu.dot_dimension_numbers<[1], [0], [0], [1], [0, 0, 1, 1], [], []>} : vector<40x128xbf16>, vector<128x128xbf16>, vector<40x128xf32> -> vector<40x128xf32>
    %25 = arith.addf %20, %24 : vector<40x128xf32>
    %26 = vector.extract_strided_slice %1 {offsets = [8, 0], sizes = [40, 128], strides = [1, 1]} : vector<56x128xbf16> to vector<40x128xbf16>
    %c5 = arith.constant 5 : index
    %c0_17 = arith.constant 0 : index
    %c0_18 = arith.constant 0 : index
    %27 = vector.load %arg2[%c5, %c0_17, %c0_18] : memref<9x128x128xbf16, #tpu.memory_space<vmem>>, vector<1x128x128xbf16>
    %28 = vector.shape_cast %27 : vector<1x128x128xbf16> to vector<128x128xbf16>
    %cst_19 = arith.constant dense<0.000000e+00> : vector<40x128xf32>
    %29 = tpu.matmul %26, %28, %cst_19 {dimension_numbers = #tpu.dot_dimension_numbers<[1], [0], [0], [1], [0, 0, 1, 1], [], []>} : vector<40x128xbf16>, vector<128x128xbf16>, vector<40x128xf32> -> vector<40x128xf32>
    %30 = arith.addf %25, %29 : vector<40x128xf32>
    %31 = vector.extract_strided_slice %1 {offsets = [12, 0], sizes = [40, 128], strides = [1, 1]} : vector<56x128xbf16> to vector<40x128xbf16>
    %c6 = arith.constant 6 : index
    %c0_20 = arith.constant 0 : index
    %c0_21 = arith.constant 0 : index
    %32 = vector.load %arg2[%c6, %c0_20, %c0_21] : memref<9x128x128xbf16, #tpu.memory_space<vmem>>, vector<1x128x128xbf16>
    %33 = vector.shape_cast %32 : vector<1x128x128xbf16> to vector<128x128xbf16>
    %cst_22 = arith.constant dense<0.000000e+00> : vector<40x128xf32>
    %34 = tpu.matmul %31, %33, %cst_22 {dimension_numbers = #tpu.dot_dimension_numbers<[1], [0], [0], [1], [0, 0, 1, 1], [], []>} : vector<40x128xbf16>, vector<128x128xbf16>, vector<40x128xf32> -> vector<40x128xf32>
    %35 = arith.addf %30, %34 : vector<40x128xf32>
    %36 = vector.extract_strided_slice %1 {offsets = [13, 0], sizes = [40, 128], strides = [1, 1]} : vector<56x128xbf16> to vector<40x128xbf16>
    %c7 = arith.constant 7 : index
    %c0_23 = arith.constant 0 : index
    %c0_24 = arith.constant 0 : index
    %37 = vector.load %arg2[%c7, %c0_23, %c0_24] : memref<9x128x128xbf16, #tpu.memory_space<vmem>>, vector<1x128x128xbf16>
    %38 = vector.shape_cast %37 : vector<1x128x128xbf16> to vector<128x128xbf16>
    %cst_25 = arith.constant dense<0.000000e+00> : vector<40x128xf32>
    %39 = tpu.matmul %36, %38, %cst_25 {dimension_numbers = #tpu.dot_dimension_numbers<[1], [0], [0], [1], [0, 0, 1, 1], [], []>} : vector<40x128xbf16>, vector<128x128xbf16>, vector<40x128xf32> -> vector<40x128xf32>
    %40 = arith.addf %35, %39 : vector<40x128xf32>
    %41 = vector.extract_strided_slice %1 {offsets = [14, 0], sizes = [40, 128], strides = [1, 1]} : vector<56x128xbf16> to vector<40x128xbf16>
    %c8 = arith.constant 8 : index
    %c0_26 = arith.constant 0 : index
    %c0_27 = arith.constant 0 : index
    %42 = vector.load %arg2[%c8, %c0_26, %c0_27] : memref<9x128x128xbf16, #tpu.memory_space<vmem>>, vector<1x128x128xbf16>
    %43 = vector.shape_cast %42 : vector<1x128x128xbf16> to vector<128x128xbf16>
    %cst_28 = arith.constant dense<0.000000e+00> : vector<40x128xf32>
    %44 = tpu.matmul %41, %43, %cst_28 {dimension_numbers = #tpu.dot_dimension_numbers<[1], [0], [0], [1], [0, 0, 1, 1], [], []>} : vector<40x128xbf16>, vector<128x128xbf16>, vector<40x128xf32> -> vector<40x128xf32>
    %45 = arith.addf %40, %44 : vector<40x128xf32>
    %c0_29 = arith.constant 0 : index
    %c0_30 = arith.constant 0 : index
    %46 = vector.load %arg3[%c0_29, %c0_30] : memref<2x128xf32, #tpu.memory_space<vmem>>, vector<1x128xf32>
    %47 = vector.broadcast %46 : vector<1x128xf32> to vector<40x128xf32>
    %48 = arith.mulf %45, %47 : vector<40x128xf32>
    %c1_31 = arith.constant 1 : index
    %c0_32 = arith.constant 0 : index
    %49 = vector.load %arg3[%c1_31, %c0_32] : memref<2x128xf32, #tpu.memory_space<vmem>>, vector<1x128xf32>
    %50 = vector.broadcast %49 : vector<1x128xf32> to vector<40x128xf32>
    %51 = arith.addf %48, %50 : vector<40x128xf32>
    %cst_33 = arith.constant 0.000000e+00 : f32
    %52 = vector.broadcast %cst_33 : f32 to vector<40x128xf32>
    %53 = arith.maximumf %51, %52 : vector<40x128xf32>
    %54 = arith.truncf %53 : vector<40x128xf32> to vector<40x128xbf16>
    %c0_34 = arith.constant 0 : index
    %c0_35 = arith.constant 0 : index
    %c0_36 = arith.constant 0 : index
    %55 = vector.load %arg4[%c0_34, %c0_35, %c0_36] : memref<1x40x128xbf16, #tpu.memory_space<vmem>>, vector<1x40x128xbf16>
    %56 = vector.shape_cast %55 : vector<1x40x128xbf16> to vector<40x128xbf16>
    %57 = vector.shape_cast %54 : vector<40x128xbf16> to vector<1x40x128xbf16>
    tpu.vector_store %arg4[%c0_34, %c0_35, %c0_36], %57 {strides = array<i32>} : memref<1x40x128xbf16, #tpu.memory_space<vmem>>, vector<1x40x128xbf16>,
    return
  }
  func.func @transform_0(%arg0: i32) -> (i32, i32, i32) {
    %c0_i32 = arith.constant 0 : i32
    %c0_i32_0 = arith.constant 0 : i32
    %c0_i32_1 = arith.constant 0 : i32
    return %arg0, %c0_i32, %c0_i32_0 : i32, i32, i32
  }
  func.func @transform_1(%arg0: i32) -> (i32, i32, i32) {
    %c0_i32 = arith.constant 0 : i32
    %c0_i32_0 = arith.constant 0 : i32
    %c0_i32_1 = arith.constant 0 : i32
    %c0_i32_2 = arith.constant 0 : i32
    return %c0_i32, %c0_i32_0, %c0_i32_1 : i32, i32, i32
  }
  func.func @transform_2(%arg0: i32) -> (i32, i32) {
    %c0_i32 = arith.constant 0 : i32
    %c0_i32_0 = arith.constant 0 : i32
    %c0_i32_1 = arith.constant 0 : i32
    return %c0_i32, %c0_i32_0 : i32, i32
  }
  func.func @transform_3(%arg0: i32) -> (i32, i32, i32) {
    %c0_i32 = arith.constant 0 : i32
    %c0_i32_0 = arith.constant 0 : i32
    %c0_i32_1 = arith.constant 0 : i32
    return %arg0, %c0_i32, %c0_i32_0 : i32, i32, i32
  }
}

module attributes {stable_mosaic.version = 11 : i64} {
  func.func @_gemm_bn_kernel(%arg0: i32, %arg1: i32, %arg2: memref<16x128xbf16, #tpu.memory_space<vmem>>, %arg3: memref<128x128xbf16, #tpu.memory_space<vmem>>, %arg4: memref<2x128xf32, #tpu.memory_space<vmem>>, %arg5: memref<16x128xbf16, #tpu.memory_space<vmem>>, %arg6: memref<16x128xbf16, #tpu.memory_space<vmem>>) attributes {dimension_semantics = [#tpu.dimension_semantics<parallel>, #tpu.dimension_semantics<parallel>], iteration_bounds = array<i64: 2, 1>, scalar_prefetch = 0 : i64, scratch_operands = 0 : i64, tpu.core_type = #tpu.core_type<tc>, window_params = [{transform_indices = @transform_0, window_bounds = array<i64: 16, 128>}, {transform_indices = @transform_1, window_bounds = array<i64: 128, 128>}, {transform_indices = @transform_2, window_bounds = array<i64: 2, 128>}, {transform_indices = @transform_3, window_bounds = array<i64: 16, 128>}, {transform_indices = @transform_4, window_bounds = array<i64: 16, 128>}]} {
    %c0 = arith.constant 0 : index
    %c0_0 = arith.constant 0 : index
    %0 = vector.load %arg2[%c0, %c0_0] : memref<16x128xbf16, #tpu.memory_space<vmem>>, vector<16x128xbf16>
    %c0_1 = arith.constant 0 : index
    %c0_2 = arith.constant 0 : index
    %1 = vector.load %arg3[%c0_1, %c0_2] : memref<128x128xbf16, #tpu.memory_space<vmem>>, vector<128x128xbf16>
    %cst = arith.constant dense<0.000000e+00> : vector<16x128xf32>
    %2 = tpu.matmul %0, %1, %cst {dimension_numbers = #tpu.dot_dimension_numbers<[1], [0], [0], [1], [0, 0, 1, 1], [], []>} : vector<16x128xbf16>, vector<128x128xbf16>, vector<16x128xf32> -> vector<16x128xf32>
    %c0_3 = arith.constant 0 : index
    %c0_4 = arith.constant 0 : index
    %3 = vector.load %arg4[%c0_3, %c0_4] : memref<2x128xf32, #tpu.memory_space<vmem>>, vector<1x128xf32>
    %4 = vector.broadcast %3 : vector<1x128xf32> to vector<16x128xf32>
    %5 = arith.mulf %2, %4 : vector<16x128xf32>
    %c1 = arith.constant 1 : index
    %c0_5 = arith.constant 0 : index
    %6 = vector.load %arg4[%c1, %c0_5] : memref<2x128xf32, #tpu.memory_space<vmem>>, vector<1x128xf32>
    %7 = vector.broadcast %6 : vector<1x128xf32> to vector<16x128xf32>
    %8 = arith.addf %5, %7 : vector<16x128xf32>
    %c0_6 = arith.constant 0 : index
    %c0_7 = arith.constant 0 : index
    %9 = vector.load %arg5[%c0_6, %c0_7] : memref<16x128xbf16, #tpu.memory_space<vmem>>, vector<16x128xbf16>
    %10 = arith.extf %9 : vector<16x128xbf16> to vector<16x128xf32>
    %11 = arith.addf %8, %10 : vector<16x128xf32>
    %cst_8 = arith.constant 0.000000e+00 : f32
    %12 = vector.broadcast %cst_8 : f32 to vector<16x128xf32>
    %13 = arith.maximumf %11, %12 : vector<16x128xf32>
    %14 = arith.truncf %13 : vector<16x128xf32> to vector<16x128xbf16>
    %c0_9 = arith.constant 0 : index
    %c0_10 = arith.constant 0 : index
    %15 = vector.load %arg6[%c0_9, %c0_10] : memref<16x128xbf16, #tpu.memory_space<vmem>>, vector<16x128xbf16>
    tpu.vector_store %arg6[%c0_9, %c0_10], %14 {strides = array<i32>} : memref<16x128xbf16, #tpu.memory_space<vmem>>, vector<16x128xbf16>,
    return
  }
  func.func @transform_0(%arg0: i32, %arg1: i32) -> (i32, i32) {
    %c0_i32 = arith.constant 0 : i32
    %c0_i32_0 = arith.constant 0 : i32
    return %arg0, %c0_i32 : i32, i32
  }
  func.func @transform_1(%arg0: i32, %arg1: i32) -> (i32, i32) {
    %c0_i32 = arith.constant 0 : i32
    %c0_i32_0 = arith.constant 0 : i32
    return %c0_i32, %arg1 : i32, i32
  }
  func.func @transform_2(%arg0: i32, %arg1: i32) -> (i32, i32) {
    %c0_i32 = arith.constant 0 : i32
    %c0_i32_0 = arith.constant 0 : i32
    return %c0_i32, %arg1 : i32, i32
  }
  func.func @transform_3(%arg0: i32, %arg1: i32) -> (i32, i32) {
    %c0_i32 = arith.constant 0 : i32
    return %arg0, %arg1 : i32, i32
  }
  func.func @transform_4(%arg0: i32, %arg1: i32) -> (i32, i32) {
    %c0_i32 = arith.constant 0 : i32
    return %arg0, %arg1 : i32, i32
  }
}

module attributes {stable_mosaic.version = 11 : i64} {
  func.func @_gemm_bn_kernel(%arg0: i32, %arg1: i32, %arg2: memref<8x128xbf16, #tpu.memory_space<vmem>>, %arg3: memref<128x128xbf16, #tpu.memory_space<vmem>>, %arg4: memref<2x128xf32, #tpu.memory_space<vmem>>, %arg5: memref<8x128xf32, #tpu.memory_space<vmem>>) attributes {dimension_semantics = [#tpu.dimension_semantics<parallel>, #tpu.dimension_semantics<parallel>], iteration_bounds = array<i64: 1, 1>, scalar_prefetch = 0 : i64, scratch_operands = 0 : i64, tpu.core_type = #tpu.core_type<tc>, window_params = [{transform_indices = @transform_0, window_bounds = array<i64: 8, 128>}, {transform_indices = @transform_1, window_bounds = array<i64: 128, 128>}, {transform_indices = @transform_2, window_bounds = array<i64: 2, 128>}, {transform_indices = @transform_3, window_bounds = array<i64: 8, 128>}]} {
    %c0 = arith.constant 0 : index
    %c0_0 = arith.constant 0 : index
    %0 = vector.load %arg2[%c0, %c0_0] : memref<8x128xbf16, #tpu.memory_space<vmem>>, vector<8x128xbf16>
    %c0_1 = arith.constant 0 : index
    %c0_2 = arith.constant 0 : index
    %1 = vector.load %arg3[%c0_1, %c0_2] : memref<128x128xbf16, #tpu.memory_space<vmem>>, vector<128x128xbf16>
    %cst = arith.constant dense<0.000000e+00> : vector<8x128xf32>
    %2 = tpu.matmul %0, %1, %cst {dimension_numbers = #tpu.dot_dimension_numbers<[1], [0], [0], [1], [0, 0, 1, 1], [], []>} : vector<8x128xbf16>, vector<128x128xbf16>, vector<8x128xf32> -> vector<8x128xf32>
    %c0_3 = arith.constant 0 : index
    %c0_4 = arith.constant 0 : index
    %3 = vector.load %arg4[%c0_3, %c0_4] : memref<2x128xf32, #tpu.memory_space<vmem>>, vector<1x128xf32>
    %4 = vector.broadcast %3 : vector<1x128xf32> to vector<8x128xf32>
    %5 = arith.mulf %2, %4 : vector<8x128xf32>
    %c1 = arith.constant 1 : index
    %c0_5 = arith.constant 0 : index
    %6 = vector.load %arg4[%c1, %c0_5] : memref<2x128xf32, #tpu.memory_space<vmem>>, vector<1x128xf32>
    %7 = vector.broadcast %6 : vector<1x128xf32> to vector<8x128xf32>
    %8 = arith.addf %5, %7 : vector<8x128xf32>
    %c0_6 = arith.constant 0 : index
    %c0_7 = arith.constant 0 : index
    %9 = vector.load %arg5[%c0_6, %c0_7] : memref<8x128xf32, #tpu.memory_space<vmem>>, vector<8x128xf32>
    tpu.vector_store %arg5[%c0_6, %c0_7], %8 {strides = array<i32>} : memref<8x128xf32, #tpu.memory_space<vmem>>, vector<8x128xf32>,
    return
  }
  func.func @transform_0(%arg0: i32, %arg1: i32) -> (i32, i32) {
    %c0_i32 = arith.constant 0 : i32
    %c0_i32_0 = arith.constant 0 : i32
    return %arg0, %c0_i32 : i32, i32
  }
  func.func @transform_1(%arg0: i32, %arg1: i32) -> (i32, i32) {
    %c0_i32 = arith.constant 0 : i32
    %c0_i32_0 = arith.constant 0 : i32
    return %c0_i32, %arg1 : i32, i32
  }
  func.func @transform_2(%arg0: i32, %arg1: i32) -> (i32, i32) {
    %c0_i32 = arith.constant 0 : i32
    %c0_i32_0 = arith.constant 0 : i32
    return %c0_i32, %arg1 : i32, i32
  }
  func.func @transform_3(%arg0: i32, %arg1: i32) -> (i32, i32) {
    %c0_i32 = arith.constant 0 : i32
    return %arg0, %arg1 : i32, i32
  }
}

module attributes {stable_mosaic.version = 11 : i64} {
  func.func @_cam_kernel(%arg0: i32, %arg1: memref<1x16x128xbf16, #tpu.memory_space<vmem>>, %arg2: memref<1xf32, #tpu.memory_space<smem>>, %arg3: memref<1x16x128xbf16, #tpu.memory_space<vmem>>) attributes {dimension_semantics = [#tpu.dimension_semantics<parallel>], iteration_bounds = array<i64: 2>, scalar_prefetch = 0 : i64, scratch_operands = 0 : i64, tpu.core_type = #tpu.core_type<tc>, window_params = [{transform_indices = @transform_0, window_bounds = array<i64: 1, 16, 128>}, {transform_indices = @transform_1, window_bounds = array<i64: 1>}, {transform_indices = @transform_2, window_bounds = array<i64: 1, 16, 128>}]} {
    %c0 = arith.constant 0 : index
    %c0_0 = arith.constant 0 : index
    %c0_1 = arith.constant 0 : index
    %0 = vector.load %arg1[%c0, %c0_0, %c0_1] : memref<1x16x128xbf16, #tpu.memory_space<vmem>>, vector<1x16x128xbf16>
    %1 = vector.shape_cast %0 : vector<1x16x128xbf16> to vector<16x128xbf16>
    %2 = arith.extf %1 : vector<16x128xbf16> to vector<16x128xf32>
    %3 = tpu.transpose %2, [1, 0] : vector<16x128xf32> -> vector<128x16xf32>
    %cst = arith.constant dense<0.000000e+00> : vector<128x128xf32>
    %4 = tpu.matmul %3, %2, %cst {dimension_numbers = #tpu.dot_dimension_numbers<[1], [0], [0], [1], [0, 0, 1, 1], [], []>} : vector<128x16xf32>, vector<16x128xf32>, vector<128x128xf32> -> vector<128x128xf32>
    %5 = tpu.iota {dimensions = array<i32: 1>} : vector<128x128xi32>
    %cst_2 = arith.constant dense<0xFF800000> : vector<128xf32>
    %6 = vector.multi_reduction <maximumf>, %4, %cst_2 [1] : vector<128x128xf32> to vector<128xf32>
    %7 = vector.shape_cast %6 : vector<128xf32> to vector<128x1xf32>
    %8 = vector.broadcast %7 : vector<128x1xf32> to vector<128x128xf32>
    %9 = arith.subf %8, %4 : vector<128x128xf32>
    %c64_i32 = arith.constant 64 : i32
    %10 = vector.broadcast %c64_i32 : i32 to vector<128x128xi32>
    %11 = arith.cmpi slt, %5, %10 : vector<128x128xi32>
    %cst_3 = arith.constant -1.000000e+30 : f32
    %12 = vector.broadcast %cst_3 : f32 to vector<128x128xf32>
    %13 = arith.select %11, %9, %12 : vector<128x128xi1>, vector<128x128xf32>
    %cst_4 = arith.constant dense<0xFF800000> : vector<128xf32>
    %14 = vector.multi_reduction <maximumf>, %13, %cst_4 [1] : vector<128x128xf32> to vector<128xf32>
    %15 = vector.shape_cast %14 : vector<128xf32> to vector<128x1xf32>
    %16 = vector.broadcast %15 : vector<128x1xf32> to vector<128x128xf32>
    %17 = arith.subf %13, %16 : vector<128x128xf32>
    %18 = math.exp %17 : vector<128x128xf32>
    %cst_5 = arith.constant dense<0.000000e+00> : vector<128xf32>
    %19 = vector.multi_reduction <add>, %18, %cst_5 [1] : vector<128x128xf32> to vector<128xf32>
    %20 = vector.shape_cast %19 : vector<128xf32> to vector<128x1xf32>
    %21 = tpu.reciprocal %20 {approx = true} : vector<128x1xf32> -> vector<128x1xf32>
    %22 = vector.broadcast %21 : vector<128x1xf32> to vector<128x128xf32>
    %23 = arith.mulf %18, %22 : vector<128x128xf32>
    %cst_6 = arith.constant dense<0.000000e+00> : vector<128x16xf32>
    %24 = tpu.matmul %23, %3, %cst_6 {dimension_numbers = #tpu.dot_dimension_numbers<[1], [0], [0], [1], [0, 0, 1, 1], [], []>} : vector<128x128xf32>, vector<128x16xf32>, vector<128x16xf32> -> vector<128x16xf32>
    %25 = tpu.transpose %24, [1, 0] : vector<128x16xf32> -> vector<16x128xf32>
    %26 = tpu.iota {dimensions = array<i32: 1>} : vector<16x128xi32>
    %c64_i32_7 = arith.constant 64 : i32
    %27 = vector.broadcast %c64_i32_7 : i32 to vector<16x128xi32>
    %28 = arith.cmpi slt, %26, %27 : vector<16x128xi32>
    %cst_8 = arith.constant 0.000000e+00 : f32
    %29 = vector.broadcast %cst_8 : f32 to vector<16x128xf32>
    %30 = arith.select %28, %25, %29 : vector<16x128xi1>, vector<16x128xf32>
    %c0_9 = arith.constant 0 : index
    %31 = memref.load %arg2[%c0_9] : memref<1xf32, #tpu.memory_space<smem>>
    %32 = vector.broadcast %31 : f32 to vector<16x128xf32>
    %33 = arith.mulf %32, %30 : vector<16x128xf32>
    %34 = arith.addf %2, %33 : vector<16x128xf32>
    %35 = arith.truncf %34 : vector<16x128xf32> to vector<16x128xbf16>
    %c0_10 = arith.constant 0 : index
    %c0_11 = arith.constant 0 : index
    %c0_12 = arith.constant 0 : index
    %36 = vector.load %arg3[%c0_10, %c0_11, %c0_12] : memref<1x16x128xbf16, #tpu.memory_space<vmem>>, vector<1x16x128xbf16>
    %37 = vector.shape_cast %36 : vector<1x16x128xbf16> to vector<16x128xbf16>
    %38 = vector.shape_cast %35 : vector<16x128xbf16> to vector<1x16x128xbf16>
    tpu.vector_store %arg3[%c0_10, %c0_11, %c0_12], %38 {strides = array<i32>} : memref<1x16x128xbf16, #tpu.memory_space<vmem>>, vector<1x16x128xbf16>,
    return
  }
  func.func @transform_0(%arg0: i32) -> (i32, i32, i32) {
    %c0_i32 = arith.constant 0 : i32
    %c0_i32_0 = arith.constant 0 : i32
    %c0_i32_1 = arith.constant 0 : i32
    return %arg0, %c0_i32, %c0_i32_0 : i32, i32, i32
  }
  func.func @transform_1(%arg0: i32) -> i32 {
    %c0_i32 = arith.constant 0 : i32
    %c0_i32_0 = arith.constant 0 : i32
    return %c0_i32 : i32
  }
  func.func @transform_2(%arg0: i32) -> (i32, i32, i32) {
    %c0_i32 = arith.constant 0 : i32
    %c0_i32_0 = arith.constant 0 : i32
    %c0_i32_1 = arith.constant 0 : i32
    return %arg0, %c0_i32, %c0_i32_0 : i32, i32, i32
  }
}

</mosaic_0001>

<llo_original>
// kernel: two_stream_forward.16
$region0: #{two_stream_forward.16}
  #allocation0 [shape = 'u32[]', space=smem, size = 0x4, offset = 0x4, fixed_abs, tag = 'smem constant byte address 0x4 - core index']
  #allocation1 [shape = 'u32[144,128]{1,0:T(1,128)}', space=vmem, size = 0x12000, scoped, tag = 'internal scratch']
  %s0 = inlined_call_operand.vmem [shape: bf16[1024,128], index: 0, kind: input, shape index: {}]
  %s1 = inlined_call_operand.vmem [shape: bf16[128,128], index: 1, kind: input, shape index: {}]
  %s2 = inlined_call_operand.vmem [shape: f32[2,128], index: 2, kind: input, shape index: {}]
  %s3 = inlined_call_operand.vmem [shape: bf16[1024,128], index: 3, kind: output, shape index: {}]
  %s4 = sld [smem:[#allocation0]]
  $region45: #{two_stream_forward.16} parent=0
    _
  %s6 = ssub.s32 1, %s4
  %s7 = scalar_select 0, %s6, %s4
  loop: start=0, step=1, limit=6
  $region2: #{two_stream_forward.16} parent=0 // loop_pre_header
    _
  $region3: #{two_stream_forward.16} parent=0 // loop_header
    %s9 = sphi 0, %s13
    %p10 = scmp.ge.s32.totalorder %s9, 6
    %s16 = sphi 0, %s28
    %s17 = sphi 0, %s24
    %s18 = sphi 0, %s16
    %s19 = sphi 0, %s17
    %s20 = sphi 0, %s18
    %s21 = sphi 0, %s19
    %s31 = sphi 0, %s33
    %s34 = sphi 0, %s31
    %s35 = sphi 0, %s34
    %s51 = sphi 0, %s35
    %s57 = sphi 0, %s59
    %s60 = sphi 0, %s57
    %s61 = sphi 0, %s60
    %s77 = sphi 0, %s61
    %s83 = sphi 0, %s85
    %s86 = sphi 0, %s83
    %s87 = sphi 0, %s86
    %s103 = sphi 0, %s87
    %s111 = sphi 0, %s113
    %s114 = sphi 0, %s111
    %s115 = sphi 0, %s114
    %s131 = sphi 0, %s115
  $region4: #{two_stream_forward.16} parent=0 // loop_header_branch
    %12 = sbr.rel (%p10) target = $region8
  $region5: #{two_stream_forward.16} parent=0 // loop_body
    %s14 = ssub.s32 %s9, 1
    %s15 = ssub.s32 %s9, 2
    %s22 = sadd.s32 1, %s17
    %p23 = scmp.ge.s32.totalorder %s22, 1
    %s24 = scalar_select %p23, 0, %s22
    %s25 = sadd.s32 1, %s16
    %s26 = scalar_select %p23, %s25, %s16
    %p27 = scmp.ge.s32.totalorder %s26, 4
    %s28 = scalar_select %p27, 0, %s26
    %s29 = ssub.s32 %s16, %s28
    %p30 = scmp.eq.s32.totalorder %s29, 0
    %s32 = sadd.s32 %s31, 1
    %s33 = scalar_select %p30, %s31, %s32
    %p36 = pneg %p30
    %p37 = scmp.eq.s32.totalorder %s9, 3
    %p38 = por %p36, %p37
    %p39 = scmp.ne.s32.totalorder %s31, %s34
    %p40 = scmp.eq.s32.totalorder %s9, 0
    %p41 = por %p39, %p40
    %p42 = scmp.ne.s32.totalorder %s31, %s34
    %p43 = scmp.eq.s32.totalorder %s14, 3
    %p44 = por %p42, %p43
    %p45 = scmp.ne.s32.totalorder %s34, %s35
    %p46 = scmp.eq.s32.totalorder %s14, 0
    %p47 = por %p45, %p46
    %p48 = scmp.ne.s32.totalorder %s34, %s35
    %p49 = scmp.eq.s32.totalorder %s15, 3
    %p50 = por %p48, %p49
    %p52 = scmp.ne.s32.totalorder %s35, %s51
    %p53 = scmp.eq.s32.totalorder %s15, 0
    %p54 = por %p52, %p53
    %s55 = ssub.s32 %s17, %s24
    %p56 = scmp.eq.s32.totalorder %s55, 0
    %s58 = sadd.s32 %s57, 1
    %s59 = scalar_select %p56, %s57, %s58
    %p62 = pneg %p56
    %p63 = scmp.eq.s32.totalorder %s9, 3
    %p64 = por %p62, %p63
    %p65 = scmp.ne.s32.totalorder %s57, %s60
    %p66 = scmp.eq.s32.totalorder %s9, 0
    %p67 = por %p65, %p66
    %p68 = scmp.ne.s32.totalorder %s57, %s60
    %p69 = scmp.eq.s32.totalorder %s14, 3
    %p70 = por %p68, %p69
    %p71 = scmp.ne.s32.totalorder %s60, %s61
    %p72 = scmp.eq.s32.totalorder %s14, 0
    %p73 = por %p71, %p72
    %p74 = scmp.ne.s32.totalorder %s60, %s61
    %p75 = scmp.eq.s32.totalorder %s15, 3
    %p76 = por %p74, %p75
    %p78 = scmp.ne.s32.totalorder %s61, %s77
    %p79 = scmp.eq.s32.totalorder %s15, 0
    %p80 = por %p78, %p79
    %s81 = ssub.s32 %s17, %s24
    %p82 = scmp.eq.s32.totalorder %s81, 0
    %s84 = sadd.s32 %s83, 1
    %s85 = scalar_select %p82, %s83, %s84
    %p88 = pneg %p82
    %p89 = scmp.eq.s32.totalorder %s9, 3
    %p90 = por %p88, %p89
    %p91 = scmp.ne.s32.totalorder %s83, %s86
    %p92 = scmp.eq.s32.totalorder %s9, 0
    %p93 = por %p91, %p92
    %p94 = scmp.ne.s32.totalorder %s83, %s86
    %p95 = scmp.eq.s32.totalorder %s14, 3
    %p96 = por %p94, %p95
    %p97 = scmp.ne.s32.totalorder %s86, %s87
    %p98 = scmp.eq.s32.totalorder %s14, 0
    %p99 = por %p97, %p98
    %p100 = scmp.ne.s32.totalorder %s86, %s87
    %p101 = scmp.eq.s32.totalorder %s15, 3
    %p102 = por %p100, %p101
    %p104 = scmp.ne.s32.totalorder %s87, %s103
    %p105 = scmp.eq.s32.totalorder %s15, 0
    %p106 = por %p104, %p105
    %s107 = ssub.s32 %s16, %s28
    %s108 = ssub.s32 %s17, %s24
    %s109 = sor.u32 %s107, %s108
    %p110 = scmp.eq.s32.totalorder %s109, 0
    %s112 = sadd.s32 %s111, 1
    %s113 = scalar_select %p110, %s111, %s112
    %p116 = pneg %p110
    %p117 = scmp.eq.s32.totalorder %s9, 3
    %p118 = por %p116, %p117
    %p119 = scmp.ne.s32.totalorder %s111, %s114
    %p120 = scmp.eq.s32.totalorder %s9, 0
    %p121 = por %p119, %p120
    %p122 = scmp.ne.s32.totalorder %s111, %s114
    %p123 = scmp.eq.s32.totalorder %s14, 3
    %p124 = por %p122, %p123
    %p125 = scmp.ne.s32.totalorder %s114, %s115
    %p126 = scmp.eq.s32.totalorder %s14, 0
    %p127 = por %p125, %p126
    %p128 = scmp.ne.s32.totalorder %s114, %s115
    %p129 = scmp.eq.s32.totalorder %s15, 3
    %p130 = por %p128, %p129
    %p132 = scmp.ne.s32.totalorder %s115, %s131
    %p133 = scmp.eq.s32.totalorder %s15, 0
    %p134 = por %p132, %p133
    %p135 = scmp.le.s32.totalorder 1, %s9
    %p136 = scmp.lt.s32.totalorder %s9, 5
    %p137 = pnand %p135, %p136
    %p138 = pneg %p137
    // Predicated region
    $region9: #{two_stream_forward.16} parent=5 // pred_check
      _
    $region10: #{two_stream_forward.16} parent=5 // pred_check_branch
      %140 = sbr.rel (%p137) target = $region12
    $region11: #{two_stream_forward.16} parent=5 // pred_region
      %s141 = ssub.s32 %s9, 1
      // Predicated region
      $region13: #{two_stream_forward.16} parent=11 // pred_check
        %p142 = pneg %p73
      $region14: #{two_stream_forward.16} parent=11 // pred_check_branch
        %144 = sbr.rel (%p142) target = $region16
      $region15: #{two_stream_forward.16} parent=11 // pred_region
        %p145 = scmp.lt.s32.totalorder %s19, 0
        %s146 = scalar_select %p145, %s19, 0
        %s147 = smul.addr %s146, 4
        %s148 = scalar_lea.vmem %s1, %s147
      $region16: #{two_stream_forward.16} parent=11 // pred_fallthru
        _
      // Predicated region
      $region17: #{two_stream_forward.16} parent=11 // pred_check
        %p149 = pneg %p99
      $region18: #{two_stream_forward.16} parent=11 // pred_check_branch
        %151 = sbr.rel (%p149) target = $region20
      $region19: #{two_stream_forward.16} parent=11 // pred_region
        %p152 = scmp.lt.s32.totalorder %s19, 0
        %s153 = scalar_select %p152, %s19, 0
        %s154 = smul.addr %s153, 2
        %s155 = scalar_lea.vmem %s2, %s154
      $region20: #{two_stream_forward.16} parent=11 // pred_fallthru
        _
    $region12: #{two_stream_forward.16} parent=5 // pred_fallthru
      _
    %p156 = scmp.lt.s32.totalorder %s9, 4
    // Predicated region
    $region21: #{two_stream_forward.16} parent=5 // pred_check
      %p157 = pneg %p156
    $region22: #{two_stream_forward.16} parent=5 // pred_check_branch
      %159 = sbr.rel (%p157) target = $region24
    $region23: #{two_stream_forward.16} parent=5 // pred_region
      // Predicated region
      $region25: #{two_stream_forward.16} parent=23 // pred_check
        %p160 = pneg %p41
      $region26: #{two_stream_forward.16} parent=23 // pred_check_branch
        %162 = sbr.rel (%p160) target = $region28
      $region27: #{two_stream_forward.16} parent=23 // pred_region
        %s163 = smul.u32 32, %s16
        %p164 = scmp.lt.s32.totalorder %s163, 127
        %s165 = scalar_select %p164, %s163, 127
        %s166 = smul.addr %s165, 4
        %s167 = scalar_lea.vmem %s0, %s166
        %s168 = smul.u32 32, %s16
      $region28: #{two_stream_forward.16} parent=23 // pred_fallthru
        _
    $region24: #{two_stream_forward.16} parent=5 // pred_fallthru
      _
    %p169 = scmp.le.s32.totalorder 1, %s9
    %p170 = scmp.lt.s32.totalorder %s9, 5
    %p171 = pnand %p169, %p170
    %p172 = pneg %p171
    // Predicated region
    $region29: #{two_stream_forward.16} parent=5 // pred_check
      _
    $region30: #{two_stream_forward.16} parent=5 // pred_check_branch
      %174 = sbr.rel (%p171) target = $region32
    $region31: #{two_stream_forward.16} parent=5 // pred_region
      %s175 = ssub.s32 %s9, 1
      %s176 = smul.u32 32, %s18
      %p177 = scmp.lt.s32.totalorder %s176, 127
      %s178 = scalar_select %p177, %s176, 127
      %s179 = smul.addr %s178, 4
      %s180 = scalar_lea.vmem %s0, %s179
      %p181 = pneg %p47
      %p182 = pneg %p44
      %p183 = scmp.lt.s32.totalorder %s19, 0
      %s184 = scalar_select %p183, %s19, 0
      %s185 = smul.addr %s184, 4
      %s186 = scalar_lea.vmem %s1, %s185
      %p187 = pneg %p73
      %p188 = pneg %p70
      %p189 = scmp.lt.s32.totalorder %s19, 0
      %s190 = scalar_select %p189, %s19, 0
      %s191 = smul.addr %s190, 2
      %s192 = scalar_lea.vmem %s2, %s191
      %p193 = pneg %p99
      %p194 = pneg %p96
      %p195 = pneg %p127
      %p196 = pneg %p124
      %s197 = smul.u32 32, %s18
      %p198 = scmp.lt.s32.totalorder %s197, 127
      %s199 = scalar_select %p198, %s197, 127
      %p200 = scmp.lt.s32.totalorder %s19, 0
      %s201 = scalar_select %p200, %s19, 0
      %s202 = sadd.s32 %s201, %s199
      %s203 = smul.addr %s202, 4
      %s204 = scalar_lea.vmem %s3, %s203
      %s205 = smul.u32 32, %s18
      %p206 = scmp.lt.s32.totalorder %s205, 127
      %s207 = scalar_select %p206, %s205, 127
      %s208 = smul.addr %s207, 4
      %s209 = scalar_lea.vmem %s0, %s208
      %s210 = smul.u32 32, %s18
      %p211 = scmp.lt.s32.totalorder %s19, 0
      %s212 = scalar_select %p211, %s19, 0
      %s213 = smul.addr %s212, 4
      %s214 = scalar_lea.vmem %s1, %s213
      %p215 = scmp.lt.s32.totalorder %s19, 0
      %s216 = scalar_select %p215, %s19, 0
      %s217 = smul.addr %s216, 2
      %s218 = scalar_lea.vmem %s2, %s217
      %s219 = smul.u32 32, %s18
      %p220 = scmp.lt.s32.totalorder %s219, 127
      %s221 = scalar_select %p220, %s219, 127
      %p222 = scmp.lt.s32.totalorder %s19, 0
      %s223 = scalar_select %p222, %s19, 0
      %s224 = sadd.s32 %s223, %s221
      %s225 = smul.addr %s224, 4
      %s226 = scalar_lea.vmem %s3, %s225
      %s227 = smul.u32 32, %s18
      %v229 = vld [vmem:[%s209] sm:$0xf]
      %v230 = vld [vmem:[%s209 + $0x4] sm:$0xf]
      %v231 = vld [vmem:[%s209 + $0x8] sm:$0xf]
      %v232 = vld [vmem:[%s209 + $0xc] sm:$0xf]
      %v233 = vld [vmem:[%s209 + $0x10] sm:$0xf]
      %v234 = vld [vmem:[%s209 + $0x14] sm:$0xf]
      %v235 = vld [vmem:[%s209 + $0x18] sm:$0xf]
      %v236 = vld [vmem:[%s209 + $0x1c] sm:$0xf]
      %v237 = vld [vmem:[%s209 + $0x20] sm:$0xf]
      %v238 = vld [vmem:[%s209 + $0x24] sm:$0xf]
      %v239 = vld [vmem:[%s209 + $0x28] sm:$0xf]
      %v240 = vld [vmem:[%s209 + $0x2c] sm:$0xf]
      %v241 = vld [vmem:[%s209 + $0x30] sm:$0xf]
      %v242 = vld [vmem:[%s209 + $0x34] sm:$0xf]
      %v243 = vld [vmem:[%s209 + $0x38] sm:$0xf]
      %v244 = vld [vmem:[%s209 + $0x3c] sm:$0xf]
      %v245 = vld [vmem:[%s209 + $0x40] sm:$0xf]
      %v246 = vld [vmem:[%s209 + $0x44] sm:$0xf]
      %v247 = vld [vmem:[%s209 + $0x48] sm:$0xf]
      %v248 = vld [vmem:[%s209 + $0x4c] sm:$0xf]
      %v249 = vld [vmem:[%s209 + $0x50] sm:$0xf]
      %v250 = vld [vmem:[%s209 + $0x54] sm:$0xf]
      %v251 = vld [vmem:[%s209 + $0x58] sm:$0xf]
      %v252 = vld [vmem:[%s209 + $0x5c] sm:$0xf]
      %v253 = vld [vmem:[%s209 + $0x60] sm:$0xf]
      %v254 = vld [vmem:[%s209 + $0x64] sm:$0xf]
      %v255 = vld [vmem:[%s209 + $0x68] sm:$0xf]
      %v256 = vld [vmem:[%s209 + $0x6c] sm:$0xf]
      %v257 = vld [vmem:[%s209 + $0x70] sm:$0xf]
      %v258 = vld [vmem:[%s209 + $0x74] sm:$0xf]
      %v259 = vld [vmem:[%s209 + $0x78] sm:$0xf]
      %v260 = vld [vmem:[%s209 + $0x7c] sm:$0xf]
      %v261 = vld [vmem:[%s214] sm:$0xf]
      %v262 = vld [vmem:[%s214 + $0x4] sm:$0xf]
      %v263 = vld [vmem:[%s214 + $0x8] sm:$0xf]
      %v264 = vld [vmem:[%s214 + $0xc] sm:$0xf]
      %v265 = vld [vmem:[%s214 + $0x10] sm:$0xf]
      %v266 = vld [vmem:[%s214 + $0x14] sm:$0xf]
      %v267 = vld [vmem:[%s214 + $0x18] sm:$0xf]
      %v268 = vld [vmem:[%s214 + $0x1c] sm:$0xf]
      %v269 = vld [vmem:[%s214 + $0x20] sm:$0xf]
      %v270 = vld [vmem:[%s214 + $0x24] sm:$0xf]
      %v271 = vld [vmem:[%s214 + $0x28] sm:$0xf]
      %v272 = vld [vmem:[%s214 + $0x2c] sm:$0xf]
      %v273 = vld [vmem:[%s214 + $0x30] sm:$0xf]
      %v274 = vld [vmem:[%s214 + $0x34] sm:$0xf]
      %v275 = vld [vmem:[%s214 + $0x38] sm:$0xf]
      %v276 = vld [vmem:[%s214 + $0x3c] sm:$0xf]
      %v309 = vunpack.c.l.b16 %v229
      %v310 = vunpack.c.l.b16 %v230
      %v311 = vunpack.c.l.b16 %v231
      %v312 = vunpack.c.l.b16 %v232
      %v313 = vunpack.c.l.b16 %v233
      %v314 = vunpack.c.l.b16 %v234
      %v315 = vunpack.c.l.b16 %v235
      %v316 = vunpack.c.l.b16 %v236
      %v317 = vunpack.c.l.b16 %v237
      %v318 = vunpack.c.l.b16 %v238
      %v319 = vunpack.c.l.b16 %v239
      %v320 = vunpack.c.l.b16 %v240
      %v321 = vunpack.c.l.b16 %v241
      %v322 = vunpack.c.l.b16 %v242
      %v323 = vunpack.c.l.b16 %v243
      %v324 = vunpack.c.l.b16 %v244
      %v325 = vunpack.c.l.b16 %v245
      %v326 = vunpack.c.l.b16 %v246
      %v327 = vunpack.c.l.b16 %v247
      %v328 = vunpack.c.l.b16 %v248
      %v329 = vunpack.c.l.b16 %v249
      %v330 = vunpack.c.l.b16 %v250
      %v331 = vunpack.c.l.b16 %v251
      %v332 = vunpack.c.l.b16 %v252
      %v333 = vunpack.c.l.b16 %v253
      %v334 = vunpack.c.l.b16 %v254
      %v335 = vunpack.c.l.b16 %v255
      %v336 = vunpack.c.l.b16 %v256
      %v337 = vunpack.c.l.b16 %v257
      %v338 = vunpack.c.l.b16 %v258
      %v339 = vunpack.c.l.b16 %v259
      %v340 = vunpack.c.l.b16 %v260
      %v341 = vpack.c.b16 %v310, %v309
      %v342 = vpack.c.b16 %v312, %v311
      %v343 = vpack.c.b16 %v314, %v313
      %v344 = vpack.c.b16 %v316, %v315
      %v345 = vpack.c.b16 %v318, %v317
      %v346 = vpack.c.b16 %v320, %v319
      %v347 = vpack.c.b16 %v322, %v321
      %v348 = vpack.c.b16 %v324, %v323
      %v349 = vpack.c.b16 %v326, %v325
      %v350 = vpack.c.b16 %v328, %v327
      %v351 = vpack.c.b16 %v330, %v329
      %v352 = vpack.c.b16 %v332, %v331
      %v353 = vpack.c.b16 %v334, %v333
      %v354 = vpack.c.b16 %v336, %v335
      %v355 = vpack.c.b16 %v338, %v337
      %v356 = vpack.c.b16 %v340, %v339
      %v389 = vunpack.c.l.b16 %v261
      %v390 = vunpack.c.l.b16 %v262
      %v391 = vunpack.c.l.b16 %v263
      %v392 = vunpack.c.l.b16 %v264
      %v393 = vunpack.c.l.b16 %v265
      %v394 = vunpack.c.l.b16 %v266
      %v395 = vunpack.c.l.b16 %v267
      %v396 = vunpack.c.l.b16 %v268
      %v397 = vunpack.c.l.b16 %v269
      %v398 = vunpack.c.l.b16 %v270
      %v399 = vunpack.c.l.b16 %v271
      %v400 = vunpack.c.l.b16 %v272
      %v401 = vunpack.c.l.b16 %v273
      %v402 = vunpack.c.l.b16 %v274
      %v403 = vunpack.c.l.b16 %v275
      %v404 = vunpack.c.l.b16 %v276
      %v405 = vpack.c.b16 %v390, %v389
      %v406 = vpack.c.b16 %v392, %v391
      %v407 = vpack.c.b16 %v394, %v393
      %v408 = vpack.c.b16 %v396, %v395
      %v409 = vpack.c.b16 %v398, %v397
      %v410 = vpack.c.b16 %v400, %v399
      %v411 = vpack.c.b16 %v402, %v401
      %v412 = vpack.c.b16 %v404, %v403
      %421 = vmatprep.subr.bf16.mxu0 0
      %422 = vmatpush1.bf16.msra.mxu0 %v405
      %423 = vmatprep.subr.bf16.mxu0 0
      %424 = vmatpush1.bf16.msra.mxu0 %v406
      %425 = vmatprep.subr.bf16.mxu0 0
      %426 = vmatpush1.bf16.msra.mxu0 %v407
      %427 = vmatprep.subr.bf16.mxu0 0
      %428 = vmatpush1.bf16.msra.mxu0 %v408
      %429 = vmatprep.subr.bf16.mxu0 0
      %430 = vmatpush1.bf16.msra.mxu0 %v409
      %431 = vmatprep.subr.bf16.mxu0 0
      %432 = vmatpush1.bf16.msra.mxu0 %v410
      %433 = vmatprep.subr.bf16.mxu0 0
      %434 = vmatpush1.bf16.msra.mxu0 %v411
      %435 = vmatprep.subr.bf16.mxu0 0
      %436 = vmatpush1.bf16.msra.mxu0 %v412
      %437 = vmatprep.subr.bf16.mxu0 0
      %438 = vmatpush1.bf16.msra.mxu0 0
      %439 = vmatprep.subr.bf16.mxu0 0
      %440 = vmatpush1.bf16.msra.mxu0 0
      %441 = vmatprep.subr.bf16.mxu0 0
      %442 = vmatpush1.bf16.msra.mxu0 0
      %443 = vmatprep.subr.bf16.mxu0 0
      %444 = vmatpush1.bf16.msra.mxu0 0
      %445 = vmatprep.subr.bf16.mxu0 0
      %446 = vmatpush1.bf16.msra.mxu0 0
      %447 = vmatprep.subr.bf16.mxu0 0
      %448 = vmatpush1.bf16.msra.mxu0 0
      %449 = vmatprep.subr.bf16.mxu0 0
      %450 = vmatpush1.bf16.msra.mxu0 0
      %451 = vmatprep.subr.bf16.mxu0 0
      %452 = vmatpush1.bf16.msra.mxu0 0
      %453 = vmatprep.mubr.bf16.mxu0 0
      %454 = vmatmul.mubr.bf16.gmra.mrb[0].mxu0 %v341
      %v455 = vpop.f32.mrb[0].mxu0
      %v456 = vadd.f32 0.0, %v455
      %v457 = vpop.f32.mrb[0].mxu0
      %v458 = vpop.f32.mrb[0].mxu0
      %v459 = vadd.f32 0.0, %v458
      %v460 = vpop.f32.mrb[0].mxu0
      %461 = vmatprep.mubr.bf16.mxu0 0
      %462 = vmatmul.mubr.bf16.gmra.mrb[0].mxu0 %v342
      %v463 = vpop.f32.mrb[0].mxu0
      %v464 = vadd.f32 0.0, %v463
      %v465 = vpop.f32.mrb[0].mxu0
      %v466 = vpop.f32.mrb[0].mxu0
      %v467 = vadd.f32 0.0, %v466
      %v468 = vpop.f32.mrb[0].mxu0
      %469 = vmatprep.mubr.bf16.mxu0 0
      %470 = vmatmul.mubr.bf16.gmra.mrb[0].mxu0 %v343
      %v471 = vpop.f32.mrb[0].mxu0
      %v472 = vadd.f32 0.0, %v471
      %v473 = vpop.f32.mrb[0].mxu0
      %v474 = vpop.f32.mrb[0].mxu0
      %v475 = vadd.f32 0.0, %v474
      %v476 = vpop.f32.mrb[0].mxu0
      %477 = vmatprep.mubr.bf16.mxu0 0
      %478 = vmatmul.mubr.bf16.gmra.mrb[0].mxu0 %v344
      %v479 = vpop.f32.mrb[0].mxu0
      %v480 = vadd.f32 0.0, %v479
      %v481 = vpop.f32.mrb[0].mxu0
      %v482 = vpop.f32.mrb[0].mxu0
      %v483 = vadd.f32 0.0, %v482
      %v484 = vpop.f32.mrb[0].mxu0
      %485 = vmatprep.mubr.bf16.mxu0 0
      %486 = vmatmul.mubr.bf16.gmra.mrb[0].mxu0 %v345
      %v487 = vpop.f32.mrb[0].mxu0
      %v488 = vadd.f32 0.0, %v487
      %v489 = vpop.f32.mrb[0].mxu0
      %v490 = vpop.f32.mrb[0].mxu0
      %v491 = vadd.f32 0.0, %v490
      %v492 = vpop.f32.mrb[0].mxu0
      %493 = vmatprep.mubr.bf16.mxu0 0
      %494 = vmatmul.mubr.bf16.gmra.mrb[0].mxu0 %v346
      %v495 = vpop.f32.mrb[0].mxu0
      %v496 = vadd.f32 0.0, %v495
      %v497 = vpop.f32.mrb[0].mxu0
      %v498 = vpop.f32.mrb[0].mxu0
      %v499 = vadd.f32 0.0, %v498
      %v500 = vpop.f32.mrb[0].mxu0
      %501 = vmatprep.mubr.bf16.mxu0 0
      %502 = vmatmul.mubr.bf16.gmra.mrb[0].mxu0 %v347
      %v503 = vpop.f32.mrb[0].mxu0
      %v504 = vadd.f32 0.0, %v503
      %v505 = vpop.f32.mrb[0].mxu0
      %v506 = vpop.f32.mrb[0].mxu0
      %v507 = vadd.f32 0.0, %v506
      %v508 = vpop.f32.mrb[0].mxu0
      %509 = vmatprep.mubr.bf16.mxu0 0
      %510 = vmatmul.mubr.bf16.gmra.mrb[0].mxu0 %v348
      %v511 = vpop.f32.mrb[0].mxu0
      %v512 = vadd.f32 0.0, %v511
      %v513 = vpop.f32.mrb[0].mxu0
      %v514 = vpop.f32.mrb[0].mxu0
      %v515 = vadd.f32 0.0, %v514
      %v516 = vpop.f32.mrb[0].mxu0
      %517 = vmatprep.mubr.bf16.mxu0 0
      %518 = vmatmul.mubr.bf16.gmra.mrb[0].mxu0 %v349
      %v519 = vpop.f32.mrb[0].mxu0
      %v520 = vadd.f32 0.0, %v519
      %v521 = vpop.f32.mrb[0].mxu0
      %v522 = vpop.f32.mrb[0].mxu0
      %v523 = vadd.f32 0.0, %v522
      %v524 = vpop.f32.mrb[0].mxu0
      %525 = vmatprep.mubr.bf16.mxu0 0
      %526 = vmatmul.mubr.bf16.gmra.mrb[0].mxu0 %v350
      %v527 = vpop.f32.mrb[0].mxu0
      %v528 = vadd.f32 0.0, %v527
      %v529 = vpop.f32.mrb[0].mxu0
      %v530 = vpop.f32.mrb[0].mxu0
      %v531 = vadd.f32 0.0, %v530
      %v532 = vpop.f32.mrb[0].mxu0
      %533 = vmatprep.mubr.bf16.mxu0 0
      %534 = vmatmul.mubr.bf16.gmra.mrb[0].mxu0 %v351
      %v535 = vpop.f32.mrb[0].mxu0
      %v536 = vadd.f32 0.0, %v535
      %v537 = vpop.f32.mrb[0].mxu0
      %v538 = vpop.f32.mrb[0].mxu0
      %v539 = vadd.f32 0.0, %v538
      %v540 = vpop.f32.mrb[0].mxu0
      %541 = vmatprep.mubr.bf16.mxu0 0
      %542 = vmatmul.mubr.bf16.gmra.mrb[0].mxu0 %v352
      %v543 = vpop.f32.mrb[0].mxu0
      %v544 = vadd.f32 0.0, %v543
      %v545 = vpop.f32.mrb[0].mxu0
      %v546 = vpop.f32.mrb[0].mxu0
      %v547 = vadd.f32 0.0, %v546
      %v548 = vpop.f32.mrb[0].mxu0
      %549 = vmatprep.mubr.bf16.mxu0 0
      %550 = vmatmul.mubr.bf16.gmra.mrb[0].mxu0 %v353
      %v551 = vpop.f32.mrb[0].mxu0
      %v552 = vadd.f32 0.0, %v551
      %v553 = vpop.f32.mrb[0].mxu0
      %v554 = vpop.f32.mrb[0].mxu0
      %v555 = vadd.f32 0.0, %v554
      %v556 = vpop.f32.mrb[0].mxu0
      %557 = vmatprep.mubr.bf16.mxu0 0
      %558 = vmatmul.mubr.bf16.gmra.mrb[0].mxu0 %v354
      %v559 = vpop.f32.mrb[0].mxu0
      %v560 = vadd.f32 0.0, %v559
      %v561 = vpop.f32.mrb[0].mxu0
      %v562 = vpop.f32.mrb[0].mxu0
      %v563 = vadd.f32 0.0, %v562
      %v564 = vpop.f32.mrb[0].mxu0
      %565 = vmatprep.mubr.bf16.mxu0 0
      %566 = vmatmul.mubr.bf16.gmra.mrb[0].mxu0 %v355
      %v567 = vpop.f32.mrb[0].mxu0
      %v568 = vadd.f32 0.0, %v567
      %v569 = vpop.f32.mrb[0].mxu0
      %v570 = vpop.f32.mrb[0].mxu0
      %v571 = vadd.f32 0.0, %v570
      %v572 = vpop.f32.mrb[0].mxu0
      %573 = vmatprep.mubr.bf16.mxu0 0
      %574 = vmatmul.mubr.bf16.gmra.mrb[0].mxu0 %v356
      %v575 = vpop.f32.mrb[0].mxu0
      %v576 = vadd.f32 0.0, %v575
      %v577 = vpop.f32.mrb[0].mxu0
      %v578 = vpop.f32.mrb[0].mxu0
      %v579 = vadd.f32 0.0, %v578
      %v580 = vpop.f32.mrb[0].mxu0
      %581 = vdwg.mxu0
      %v582 = vld [vmem:[%s218] sm:$0x1]
      %v583 = vlaneseq
      %v584 = vshrl.u32 %v583, 7
      %v585 = vsub.s32 0, %v584
      %v586 = vrot.slane %v582, %v585
      %v587 = vmul.f32 %v456, %v586
      %v588 = vmul.f32 %v459, %v586
      %v589 = vmul.f32 %v464, %v586
      %v590 = vmul.f32 %v467, %v586
      %v591 = vmul.f32 %v472, %v586
      %v592 = vmul.f32 %v475, %v586
      %v593 = vmul.f32 %v480, %v586
      %v594 = vmul.f32 %v483, %v586
      %v595 = vmul.f32 %v488, %v586
      %v596 = vmul.f32 %v491, %v586
      %v597 = vmul.f32 %v496, %v586
      %v598 = vmul.f32 %v499, %v586
      %v599 = vmul.f32 %v504, %v586
      %v600 = vmul.f32 %v507, %v586
      %v601 = vmul.f32 %v512, %v586
      %v602 = vmul.f32 %v515, %v586
      %v603 = vmul.f32 %v520, %v586
      %v604 = vmul.f32 %v523, %v586
      %v605 = vmul.f32 %v528, %v586
      %v606 = vmul.f32 %v531, %v586
      %v607 = vmul.f32 %v536, %v586
      %v608 = vmul.f32 %v539, %v586
      %v609 = vmul.f32 %v544, %v586
      %v610 = vmul.f32 %v547, %v586
      %v611 = vmul.f32 %v552, %v586
      %v612 = vmul.f32 %v555, %v586
      %v613 = vmul.f32 %v560, %v586
      %v614 = vmul.f32 %v563, %v586
      %v615 = vmul.f32 %v568, %v586
      %v616 = vmul.f32 %v571, %v586
      %v617 = vmul.f32 %v576, %v586
      %v618 = vmul.f32 %v579, %v586
      %v619 = vld [vmem:[%s218 + $0x1] sm:$0x1]
      %v620 = vlaneseq
      %v621 = vshrl.u32 %v620, 7
      %v622 = vsub.s32 0, %v621
      %v623 = vrot.slane %v619, %v622
      %v624 = vadd.f32 %v587, %v623
      %v625 = vadd.f32 %v588, %v623
      %v626 = vadd.f32 %v589, %v623
      %v627 = vadd.f32 %v590, %v623
      %v628 = vadd.f32 %v591, %v623
      %v629 = vadd.f32 %v592, %v623
      %v630 = vadd.f32 %v593, %v623
      %v631 = vadd.f32 %v594, %v623
      %v632 = vadd.f32 %v595, %v623
      %v633 = vadd.f32 %v596, %v623
      %v634 = vadd.f32 %v597, %v623
      %v635 = vadd.f32 %v598, %v623
      %v636 = vadd.f32 %v599, %v623
      %v637 = vadd.f32 %v600, %v623
      %v638 = vadd.f32 %v601, %v623
      %v639 = vadd.f32 %v602, %v623
      %v640 = vadd.f32 %v603, %v623
      %v641 = vadd.f32 %v604, %v623
      %v642 = vadd.f32 %v605, %v623
      %v643 = vadd.f32 %v606, %v623
      %v644 = vadd.f32 %v607, %v623
      %v645 = vadd.f32 %v608, %v623
      %v646 = vadd.f32 %v609, %v623
      %v647 = vadd.f32 %v610, %v623
      %v648 = vadd.f32 %v611, %v623
      %v649 = vadd.f32 %v612, %v623
      %v650 = vadd.f32 %v613, %v623
      %v651 = vadd.f32 %v614, %v623
      %v652 = vadd.f32 %v615, %v623
      %v653 = vadd.f32 %v616, %v623
      %v654 = vadd.f32 %v617, %v623
      %v655 = vadd.f32 %v618, %v623
      %v656 = vmax.f32 %v624, 0.0
      %v657 = vmax.f32 %v625, 0.0
      %v658 = vmax.f32 %v626, 0.0
      %v659 = vmax.f32 %v627, 0.0
      %v660 = vmax.f32 %v628, 0.0
      %v661 = vmax.f32 %v629, 0.0
      %v662 = vmax.f32 %v630, 0.0
      %v663 = vmax.f32 %v631, 0.0
      %v664 = vmax.f32 %v632, 0.0
      %v665 = vmax.f32 %v633, 0.0
      %v666 = vmax.f32 %v634, 0.0
      %v667 = vmax.f32 %v635, 0.0
      %v668 = vmax.f32 %v636, 0.0
      %v669 = vmax.f32 %v637, 0.0
      %v670 = vmax.f32 %v638, 0.0
      %v671 = vmax.f32 %v639, 0.0
      %v672 = vmax.f32 %v640, 0.0
      %v673 = vmax.f32 %v641, 0.0
      %v674 = vmax.f32 %v642, 0.0
      %v675 = vmax.f32 %v643, 0.0
      %v676 = vmax.f32 %v644, 0.0
      %v677 = vmax.f32 %v645, 0.0
      %v678 = vmax.f32 %v646, 0.0
      %v679 = vmax.f32 %v647, 0.0
      %v680 = vmax.f32 %v648, 0.0
      %v681 = vmax.f32 %v649, 0.0
      %v682 = vmax.f32 %v650, 0.0
      %v683 = vmax.f32 %v651, 0.0
      %v684 = vmax.f32 %v652, 0.0
      %v685 = vmax.f32 %v653, 0.0
      %v686 = vmax.f32 %v654, 0.0
      %v687 = vmax.f32 %v655, 0.0
      %v688 = vpack.c.bf16 %v657, %v656
      %v689 = vpack.c.bf16 %v659, %v658
      %v690 = vpack.c.bf16 %v661, %v660
      %v691 = vpack.c.bf16 %v663, %v662
      %v692 = vpack.c.bf16 %v665, %v664
      %v693 = vpack.c.bf16 %v667, %v666
      %v694 = vpack.c.bf16 %v669, %v668
      %v695 = vpack.c.bf16 %v671, %v670
      %v696 = vpack.c.bf16 %v673, %v672
      %v697 = vpack.c.bf16 %v675, %v674
      %v698 = vpack.c.bf16 %v677, %v676
      %v699 = vpack.c.bf16 %v679, %v678
      %v700 = vpack.c.bf16 %v681, %v680
      %v701 = vpack.c.bf16 %v683, %v682
      %v702 = vpack.c.bf16 %v685, %v684
      %v703 = vpack.c.bf16 %v687, %v686
      %v720 = vunpack.c.l.b16 %v688
      %v721 = vunpack.c.h.b16 %v688
      %v722 = vunpack.c.l.b16 %v689
      %v723 = vunpack.c.h.b16 %v689
      %v724 = vunpack.c.l.b16 %v690
      %v725 = vunpack.c.h.b16 %v690
      %v726 = vunpack.c.l.b16 %v691
      %v727 = vunpack.c.h.b16 %v691
      %v728 = vunpack.c.l.b16 %v692
      %v729 = vunpack.c.h.b16 %v692
      %v730 = vunpack.c.l.b16 %v693
      %v731 = vunpack.c.h.b16 %v693
      %v732 = vunpack.c.l.b16 %v694
      %v733 = vunpack.c.h.b16 %v694
      %v734 = vunpack.c.l.b16 %v695
      %v735 = vunpack.c.h.b16 %v695
      %v736 = vunpack.c.l.b16 %v696
      %v737 = vunpack.c.h.b16 %v696
      %v738 = vunpack.c.l.b16 %v697
      %v739 = vunpack.c.h.b16 %v697
      %v740 = vunpack.c.l.b16 %v698
      %v741 = vunpack.c.h.b16 %v698
      %v742 = vunpack.c.l.b16 %v699
      %v743 = vunpack.c.h.b16 %v699
      %v744 = vunpack.c.l.b16 %v700
      %v745 = vunpack.c.h.b16 %v700
      %v746 = vunpack.c.l.b16 %v701
      %v747 = vunpack.c.h.b16 %v701
      %v748 = vunpack.c.l.b16 %v702
      %v749 = vunpack.c.h.b16 %v702
      %v750 = vunpack.c.l.b16 %v703
      %v751 = vunpack.c.h.b16 %v703
      %v752 = vpack.c.b16 %v720, %v720
      %v753 = vpack.c.b16 %v721, %v721
      %v754 = vpack.c.b16 %v722, %v722
      %v755 = vpack.c.b16 %v723, %v723
      %v756 = vpack.c.b16 %v724, %v724
      %v757 = vpack.c.b16 %v725, %v725
      %v758 = vpack.c.b16 %v726, %v726
      %v759 = vpack.c.b16 %v727, %v727
      %v760 = vpack.c.b16 %v728, %v728
      %v761 = vpack.c.b16 %v729, %v729
      %v762 = vpack.c.b16 %v730, %v730
      %v763 = vpack.c.b16 %v731, %v731
      %v764 = vpack.c.b16 %v732, %v732
      %v765 = vpack.c.b16 %v733, %v733
      %v766 = vpack.c.b16 %v734, %v734
      %v767 = vpack.c.b16 %v735, %v735
      %v768 = vpack.c.b16 %v736, %v736
      %v769 = vpack.c.b16 %v737, %v737
      %v770 = vpack.c.b16 %v738, %v738
      %v771 = vpack.c.b16 %v739, %v739
      %v772 = vpack.c.b16 %v740, %v740
      %v773 = vpack.c.b16 %v741, %v741
      %v774 = vpack.c.b16 %v742, %v742
      %v775 = vpack.c.b16 %v743, %v743
      %v776 = vpack.c.b16 %v744, %v744
      %v777 = vpack.c.b16 %v745, %v745
      %v778 = vpack.c.b16 %v746, %v746
      %v779 = vpack.c.b16 %v747, %v747
      %v780 = vpack.c.b16 %v748, %v748
      %v781 = vpack.c.b16 %v749, %v749
      %v782 = vpack.c.b16 %v750, %v750
      %v783 = vpack.c.b16 %v751, %v751
      %816 = vst [vmem:[%s226] sm:$0xf] %v752
      %817 = vst [vmem:[%s226 + $0x4] sm:$0xf] %v753
      %818 = vst [vmem:[%s226 + $0x8] sm:$0xf] %v754
      %819 = vst [vmem:[%s226 + $0xc] sm:$0xf] %v755
      %820 = vst [vmem:[%s226 + $0x10] sm:$0xf] %v756
      %821 = vst [vmem:[%s226 + $0x14] sm:$0xf] %v757
      %822 = vst [vmem:[%s226 + $0x18] sm:$0xf] %v758
      %823 = vst [vmem:[%s226 + $0x1c] sm:$0xf] %v759
      %824 = vst [vmem:[%s226 + $0x20] sm:$0xf] %v760
      %825 = vst [vmem:[%s226 + $0x24] sm:$0xf] %v761
      %826 = vst [vmem:[%s226 + $0x28] sm:$0xf] %v762
      %827 = vst [vmem:[%s226 + $0x2c] sm:$0xf] %v763
      %828 = vst [vmem:[%s226 + $0x30] sm:$0xf] %v764
      %829 = vst [vmem:[%s226 + $0x34] sm:$0xf] %v765
      %830 = vst [vmem:[%s226 + $0x38] sm:$0xf] %v766
      %831 = vst [vmem:[%s226 + $0x3c] sm:$0xf] %v767
      %832 = vst [vmem:[%s226 + $0x40] sm:$0xf] %v768
      %833 = vst [vmem:[%s226 + $0x44] sm:$0xf] %v769
      %834 = vst [vmem:[%s226 + $0x48] sm:$0xf] %v770
      %835 = vst [vmem:[%s226 + $0x4c] sm:$0xf] %v771
      %836 = vst [vmem:[%s226 + $0x50] sm:$0xf] %v772
      %837 = vst [vmem:[%s226 + $0x54] sm:$0xf] %v773
      %838 = vst [vmem:[%s226 + $0x58] sm:$0xf] %v774
      %839 = vst [vmem:[%s226 + $0x5c] sm:$0xf] %v775
      %840 = vst [vmem:[%s226 + $0x60] sm:$0xf] %v776
      %841 = vst [vmem:[%s226 + $0x64] sm:$0xf] %v777
      %842 = vst [vmem:[%s226 + $0x68] sm:$0xf] %v778
      %843 = vst [vmem:[%s226 + $0x6c] sm:$0xf] %v779
      %844 = vst [vmem:[%s226 + $0x70] sm:$0xf] %v780
      %845 = vst [vmem:[%s226 + $0x74] sm:$0xf] %v781
      %846 = vst [vmem:[%s226 + $0x78] sm:$0xf] %v782
      %847 = vst [vmem:[%s226 + $0x7c] sm:$0xf] %v783
      %s848 = smul.u32 32, %s18
      %p849 = scmp.lt.s32.totalorder %s848, 127
      %s850 = scalar_select %p849, %s848, 127
      %p851 = scmp.lt.s32.totalorder %s19, 0
      %s852 = scalar_select %p851, %s19, 0
      %s853 = sadd.s32 %s852, %s850
      %s854 = smul.addr %s853, 4
      %s855 = scalar_lea.vmem %s3, %s854
      // Predicated region
      $region33: #{two_stream_forward.16} parent=31 // pred_check
        %p856 = pneg %p124
      $region34: #{two_stream_forward.16} parent=31 // pred_check_branch
        %858 = sbr.rel (%p856) target = $region36
      $region35: #{two_stream_forward.16} parent=31 // pred_region
        %s859 = smul.u32 32, %s18
      $region36: #{two_stream_forward.16} parent=31 // pred_fallthru
        _
    $region32: #{two_stream_forward.16} parent=5 // pred_fallthru
      _
    %p860 = scmp.le.s32.totalorder 2, %s9
    // Predicated region
    $region37: #{two_stream_forward.16} parent=5 // pred_check
      %p861 = pneg %p860
    $region38: #{two_stream_forward.16} parent=5 // pred_check_branch
      %863 = sbr.rel (%p861) target = $region40
    $region39: #{two_stream_forward.16} parent=5 // pred_region
      %s864 = ssub.s32 %s9, 2
      // Predicated region
      $region41: #{two_stream_forward.16} parent=39 // pred_check
        %p865 = pneg %p130
      $region42: #{two_stream_forward.16} parent=39 // pred_check_branch
        %867 = sbr.rel (%p865) target = $region44
      $region43: #{two_stream_forward.16} parent=39 // pred_region
        %s868 = smul.u32 32, %s20
        %p869 = scmp.lt.s32.totalorder %s868, 127
        %s870 = scalar_select %p869, %s868, 127
        %p871 = scmp.lt.s32.totalorder %s21, 0
        %s872 = scalar_select %p871, %s21, 0
        %s873 = sadd.s32 %s872, %s870
        %s874 = smul.addr %s873, 4
        %s875 = scalar_lea.vmem %s3, %s874
      $region44: #{two_stream_forward.16} parent=39 // pred_fallthru
        _
    $region40: #{two_stream_forward.16} parent=5 // pred_fallthru
      _
  $region6: #{two_stream_forward.16} parent=0 // loop_footer
    %s13 = sadd.s32 1, %s9
  $region7: #{two_stream_forward.16} parent=0 // loop_footer_branch
    %8 = sbr.rel target = $region3
  $region8: #{two_stream_forward.16} parent=0 // loop_exit
    _

// kernel: two_stream_forward.17
$region0: #{two_stream_forward.17}
  #allocation0 [shape = 'u32[]', space=smem, size = 0x4, offset = 0x4, fixed_abs, tag = 'smem constant byte address 0x4 - core index']
  #allocation1 [shape = 'u32[144,128]{1,0:T(1,128)}', space=vmem, size = 0x12000, scoped, tag = 'internal scratch']
  %s0 = inlined_call_operand.vmem [shape: bf16[128,896], index: 0, kind: input, shape index: {}]
  %s1 = inlined_call_operand.vmem [shape: bf16[896,128], index: 1, kind: input, shape index: {}]
  %s2 = inlined_call_operand.vmem [shape: f32[2,128], index: 2, kind: input, shape index: {}]
  %s3 = inlined_call_operand.vmem [shape: bf16[128,128], index: 3, kind: output, shape index: {}]
  %s4 = sld [smem:[#allocation0]]
  $region45: #{two_stream_forward.17} parent=0
    _
  %s6 = ssub.s32 1, %s4
  %s7 = scalar_select 0, %s6, %s4
  loop: start=0, step=1, limit=4
  $region2: #{two_stream_forward.17} parent=0 // loop_pre_header
    _
  $region3: #{two_stream_forward.17} parent=0 // loop_header
    %s9 = sphi 0, %s13
    %p10 = scmp.ge.s32.totalorder %s9, 4
    %s16 = sphi 0, %s28
    %s17 = sphi 0, %s24
    %s18 = sphi 0, %s16
    %s19 = sphi 0, %s17
    %s20 = sphi 0, %s18
    %s21 = sphi 0, %s19
    %s31 = sphi 0, %s33
    %s34 = sphi 0, %s31
    %s35 = sphi 0, %s34
    %s51 = sphi 0, %s35
    %s57 = sphi 0, %s59
    %s60 = sphi 0, %s57
    %s61 = sphi 0, %s60
    %s77 = sphi 0, %s61
    %s83 = sphi 0, %s85
    %s86 = sphi 0, %s83
    %s87 = sphi 0, %s86
    %s103 = sphi 0, %s87
    %s111 = sphi 0, %s113
    %s114 = sphi 0, %s111
    %s115 = sphi 0, %s114
    %s131 = sphi 0, %s115
  $region4: #{two_stream_forward.17} parent=0 // loop_header_branch
    %12 = sbr.rel (%p10) target = $region8
  $region5: #{two_stream_forward.17} parent=0 // loop_body
    %s14 = ssub.s32 %s9, 1
    %s15 = ssub.s32 %s9, 2
    %s22 = sadd.s32 1, %s17
    %p23 = scmp.ge.s32.totalorder %s22, 1
    %s24 = scalar_select %p23, 0, %s22
    %s25 = sadd.s32 1, %s16
    %s26 = scalar_select %p23, %s25, %s16
    %p27 = scmp.ge.s32.totalorder %s26, 2
    %s28 = scalar_select %p27, 0, %s26
    %s29 = ssub.s32 %s16, %s28
    %p30 = scmp.eq.s32.totalorder %s29, 0
    %s32 = sadd.s32 %s31, 1
    %s33 = scalar_select %p30, %s31, %s32
    %p36 = pneg %p30
    %p37 = scmp.eq.s32.totalorder %s9, 1
    %p38 = por %p36, %p37
    %p39 = scmp.ne.s32.totalorder %s31, %s34
    %p40 = scmp.eq.s32.totalorder %s9, 0
    %p41 = por %p39, %p40
    %p42 = scmp.ne.s32.totalorder %s31, %s34
    %p43 = scmp.eq.s32.totalorder %s14, 1
    %p44 = por %p42, %p43
    %p45 = scmp.ne.s32.totalorder %s34, %s35
    %p46 = scmp.eq.s32.totalorder %s14, 0
    %p47 = por %p45, %p46
    %p48 = scmp.ne.s32.totalorder %s34, %s35
    %p49 = scmp.eq.s32.totalorder %s15, 1
    %p50 = por %p48, %p49
    %p52 = scmp.ne.s32.totalorder %s35, %s51
    %p53 = scmp.eq.s32.totalorder %s15, 0
    %p54 = por %p52, %p53
    %s55 = ssub.s32 %s17, %s24
    %p56 = scmp.eq.s32.totalorder %s55, 0
    %s58 = sadd.s32 %s57, 1
    %s59 = scalar_select %p56, %s57, %s58
    %p62 = pneg %p56
    %p63 = scmp.eq.s32.totalorder %s9, 1
    %p64 = por %p62, %p63
    %p65 = scmp.ne.s32.totalorder %s57, %s60
    %p66 = scmp.eq.s32.totalorder %s9, 0
    %p67 = por %p65, %p66
    %p68 = scmp.ne.s32.totalorder %s57, %s60
    %p69 = scmp.eq.s32.totalorder %s14, 1
    %p70 = por %p68, %p69
    %p71 = scmp.ne.s32.totalorder %s60, %s61
    %p72 = scmp.eq.s32.totalorder %s14, 0
    %p73 = por %p71, %p72
    %p74 = scmp.ne.s32.totalorder %s60, %s61
    %p75 = scmp.eq.s32.totalorder %s15, 1
    %p76 = por %p74, %p75
    %p78 = scmp.ne.s32.totalorder %s61, %s77
    %p79 = scmp.eq.s32.totalorder %s15, 0
    %p80 = por %p78, %p79
    %s81 = ssub.s32 %s17, %s24
    %p82 = scmp.eq.s32.totalorder %s81, 0
    %s84 = sadd.s32 %s83, 1
    %s85 = scalar_select %p82, %s83, %s84
    %p88 = pneg %p82
    %p89 = scmp.eq.s32.totalorder %s9, 1
    %p90 = por %p88, %p89
    %p91 = scmp.ne.s32.totalorder %s83, %s86
    %p92 = scmp.eq.s32.totalorder %s9, 0
    %p93 = por %p91, %p92
    %p94 = scmp.ne.s32.totalorder %s83, %s86
    %p95 = scmp.eq.s32.totalorder %s14, 1
    %p96 = por %p94, %p95
    %p97 = scmp.ne.s32.totalorder %s86, %s87
    %p98 = scmp.eq.s32.totalorder %s14, 0
    %p99 = por %p97, %p98
    %p100 = scmp.ne.s32.totalorder %s86, %s87
    %p101 = scmp.eq.s32.totalorder %s15, 1
    %p102 = por %p100, %p101
    %p104 = scmp.ne.s32.totalorder %s87, %s103
    %p105 = scmp.eq.s32.totalorder %s15, 0
    %p106 = por %p104, %p105
    %s107 = ssub.s32 %s16, %s28
    %s108 = ssub.s32 %s17, %s24
    %s109 = sor.u32 %s107, %s108
    %p110 = scmp.eq.s32.totalorder %s109, 0
    %s112 = sadd.s32 %s111, 1
    %s113 = scalar_select %p110, %s111, %s112
    %p116 = pneg %p110
    %p117 = scmp.eq.s32.totalorder %s9, 1
    %p118 = por %p116, %p117
    %p119 = scmp.ne.s32.totalorder %s111, %s114
    %p120 = scmp.eq.s32.totalorder %s9, 0
    %p121 = por %p119, %p120
    %p122 = scmp.ne.s32.totalorder %s111, %s114
    %p123 = scmp.eq.s32.totalorder %s14, 1
    %p124 = por %p122, %p123
    %p125 = scmp.ne.s32.totalorder %s114, %s115
    %p126 = scmp.eq.s32.totalorder %s14, 0
    %p127 = por %p125, %p126
    %p128 = scmp.ne.s32.totalorder %s114, %s115
    %p129 = scmp.eq.s32.totalorder %s15, 1
    %p130 = por %p128, %p129
    %p132 = scmp.ne.s32.totalorder %s115, %s131
    %p133 = scmp.eq.s32.totalorder %s15, 0
    %p134 = por %p132, %p133
    %p135 = scmp.le.s32.totalorder 1, %s9
    %p136 = scmp.lt.s32.totalorder %s9, 3
    %p137 = pnand %p135, %p136
    %p138 = pneg %p137
    // Predicated region
    $region9: #{two_stream_forward.17} parent=5 // pred_check
      _
    $region10: #{two_stream_forward.17} parent=5 // pred_check_branch
      %140 = sbr.rel (%p137) target = $region12
    $region11: #{two_stream_forward.17} parent=5 // pred_region
      %s141 = ssub.s32 %s9, 1
      // Predicated region
      $region13: #{two_stream_forward.17} parent=11 // pred_check
        %p142 = pneg %p73
      $region14: #{two_stream_forward.17} parent=11 // pred_check_branch
        %144 = sbr.rel (%p142) target = $region16
      $region15: #{two_stream_forward.17} parent=11 // pred_region
        %p145 = scmp.lt.s32.totalorder %s19, 0
        %s146 = scalar_select %p145, %s19, 0
        %s147 = smul.addr %s146, 4
        %s148 = scalar_lea.vmem %s1, %s147
      $region16: #{two_stream_forward.17} parent=11 // pred_fallthru
        _
      // Predicated region
      $region17: #{two_stream_forward.17} parent=11 // pred_check
        %p149 = pneg %p99
      $region18: #{two_stream_forward.17} parent=11 // pred_check_branch
        %151 = sbr.rel (%p149) target = $region20
      $region19: #{two_stream_forward.17} parent=11 // pred_region
        %p152 = scmp.lt.s32.totalorder %s19, 0
        %s153 = scalar_select %p152, %s19, 0
        %s154 = smul.addr %s153, 2
        %s155 = scalar_lea.vmem %s2, %s154
      $region20: #{two_stream_forward.17} parent=11 // pred_fallthru
        _
    $region12: #{two_stream_forward.17} parent=5 // pred_fallthru
      _
    %p156 = scmp.lt.s32.totalorder %s9, 2
    // Predicated region
    $region21: #{two_stream_forward.17} parent=5 // pred_check
      %p157 = pneg %p156
    $region22: #{two_stream_forward.17} parent=5 // pred_check_branch
      %159 = sbr.rel (%p157) target = $region24
    $region23: #{two_stream_forward.17} parent=5 // pred_region
      // Predicated region
      $region25: #{two_stream_forward.17} parent=23 // pred_check
        %p160 = pneg %p41
      $region26: #{two_stream_forward.17} parent=23 // pred_check_branch
        %162 = sbr.rel (%p160) target = $region28
      $region27: #{two_stream_forward.17} parent=23 // pred_region
        %s163 = smul.u32 8, %s16
        %p164 = scmp.lt.s32.totalorder %s163, 15
        %s165 = scalar_select %p164, %s163, 15
        %s166 = smul.addr %s165, 7
        %s167 = smul.addr %s166, 4
        %s168 = scalar_lea.vmem %s0, %s167
        %s169 = smul.u32 8, %s16
      $region28: #{two_stream_forward.17} parent=23 // pred_fallthru
        _
    $region24: #{two_stream_forward.17} parent=5 // pred_fallthru
      _
    %p170 = scmp.le.s32.totalorder 1, %s9
    %p171 = scmp.lt.s32.totalorder %s9, 3
    %p172 = pnand %p170, %p171
    %p173 = pneg %p172
    // Predicated region
    $region29: #{two_stream_forward.17} parent=5 // pred_check
      _
    $region30: #{two_stream_forward.17} parent=5 // pred_check_branch
      %175 = sbr.rel (%p172) target = $region32
    $region31: #{two_stream_forward.17} parent=5 // pred_region
      %s176 = ssub.s32 %s9, 1
      %s177 = smul.u32 8, %s18
      %p178 = scmp.lt.s32.totalorder %s177, 15
      %s179 = scalar_select %p178, %s177, 15
      %s180 = smul.addr %s179, 7
      %s181 = smul.addr %s180, 4
      %s182 = scalar_lea.vmem %s0, %s181
      %p183 = pneg %p47
      %p184 = pneg %p44
      %p185 = scmp.lt.s32.totalorder %s19, 0
      %s186 = scalar_select %p185, %s19, 0
      %s187 = smul.addr %s186, 4
      %s188 = scalar_lea.vmem %s1, %s187
      %p189 = pneg %p73
      %p190 = pneg %p70
      %p191 = scmp.lt.s32.totalorder %s19, 0
      %s192 = scalar_select %p191, %s19, 0
      %s193 = smul.addr %s192, 2
      %s194 = scalar_lea.vmem %s2, %s193
      %p195 = pneg %p99
      %p196 = pneg %p96
      %p197 = pneg %p127
      %p198 = pneg %p124
      %s199 = smul.u32 8, %s18
      %p200 = scmp.lt.s32.totalorder %s199, 15
      %s201 = scalar_select %p200, %s199, 15
      %p202 = scmp.lt.s32.totalorder %s19, 0
      %s203 = scalar_select %p202, %s19, 0
      %s204 = sadd.s32 %s203, %s201
      %s205 = smul.addr %s204, 4
      %s206 = scalar_lea.vmem %s3, %s205
      %s207 = smul.u32 8, %s18
      %p208 = scmp.lt.s32.totalorder %s207, 15
      %s209 = scalar_select %p208, %s207, 15
      %s210 = smul.addr %s209, 7
      %s211 = smul.addr %s210, 4
      %s212 = scalar_lea.vmem %s0, %s211
      %s213 = smul.u32 8, %s18
      %p214 = scmp.lt.s32.totalorder %s19, 0
      %s215 = scalar_select %p214, %s19, 0
      %s216 = smul.addr %s215, 4
      %s217 = scalar_lea.vmem %s1, %s216
      %p218 = scmp.lt.s32.totalorder %s19, 0
      %s219 = scalar_select %p218, %s19, 0
      %s220 = smul.addr %s219, 2
      %s221 = scalar_lea.vmem %s2, %s220
      %s222 = smul.u32 8, %s18
      %p223 = scmp.lt.s32.totalorder %s222, 15
      %s224 = scalar_select %p223, %s222, 15
      %p225 = scmp.lt.s32.totalorder %s19, 0
      %s226 = scalar_select %p225, %s19, 0
      %s227 = sadd.s32 %s226, %s224
      %s228 = smul.addr %s227, 4
      %s229 = scalar_lea.vmem %s3, %s228
      %s230 = smul.u32 8, %s18
      %v232 = vld [vmem:[%s212] sm:$0xff]
      %v233 = vld [vmem:[%s212 + $0x8] sm:$0xff]
      %v234 = vld [vmem:[%s212 + $0x10] sm:$0xff]
      %v235 = vld [vmem:[%s212 + $0x18] sm:$0xf]
      %v236 = vld [vmem:[%s212 + $0x1c] sm:$0xff]
      %v237 = vld [vmem:[%s212 + $0x24] sm:$0xff]
      %v238 = vld [vmem:[%s212 + $0x2c] sm:$0xff]
      %v239 = vld [vmem:[%s212 + $0x34] sm:$0xf]
      %v240 = vld [vmem:[%s212 + $0x38] sm:$0xff]
      %v241 = vld [vmem:[%s212 + $0x40] sm:$0xff]
      %v242 = vld [vmem:[%s212 + $0x48] sm:$0xff]
      %v243 = vld [vmem:[%s212 + $0x50] sm:$0xf]
      %v244 = vld [vmem:[%s212 + $0x54] sm:$0xff]
      %v245 = vld [vmem:[%s212 + $0x5c] sm:$0xff]
      %v246 = vld [vmem:[%s212 + $0x64] sm:$0xff]
      %v247 = vld [vmem:[%s212 + $0x6c] sm:$0xf]
      %v248 = vld [vmem:[%s212 + $0x70] sm:$0xff]
      %v249 = vld [vmem:[%s212 + $0x78] sm:$0xff]
      %v250 = vld [vmem:[%s212 + $0x80] sm:$0xff]
      %v251 = vld [vmem:[%s212 + $0x88] sm:$0xf]
      %v252 = vld [vmem:[%s212 + $0x8c] sm:$0xff]
      %v253 = vld [vmem:[%s212 + $0x94] sm:$0xff]
      %v254 = vld [vmem:[%s212 + $0x9c] sm:$0xff]
      %v255 = vld [vmem:[%s212 + $0xa4] sm:$0xf]
      %v256 = vld [vmem:[%s212 + $0xa8] sm:$0xff]
      %v257 = vld [vmem:[%s212 + $0xb0] sm:$0xff]
      %v258 = vld [vmem:[%s212 + $0xb8] sm:$0xff]
      %v259 = vld [vmem:[%s212 + $0xc0] sm:$0xf]
      %v260 = vld [vmem:[%s212 + $0xc4] sm:$0xff]
      %v261 = vld [vmem:[%s212 + $0xcc] sm:$0xff]
      %v262 = vld [vmem:[%s212 + $0xd4] sm:$0xff]
      %v263 = vld [vmem:[%s212 + $0xdc] sm:$0xf]
      %v264 = vld [vmem:[%s217] sm:$0xf]
      %v265 = vld [vmem:[%s217 + $0x4] sm:$0xf]
      %v266 = vld [vmem:[%s217 + $0x8] sm:$0xf]
      %v267 = vld [vmem:[%s217 + $0xc] sm:$0xf]
      %v268 = vld [vmem:[%s217 + $0x10] sm:$0xf]
      %v269 = vld [vmem:[%s217 + $0x14] sm:$0xf]
      %v270 = vld [vmem:[%s217 + $0x18] sm:$0xf]
      %v271 = vld [vmem:[%s217 + $0x1c] sm:$0xf]
      %v272 = vld [vmem:[%s217 + $0x20] sm:$0xf]
      %v273 = vld [vmem:[%s217 + $0x24] sm:$0xf]
      %v274 = vld [vmem:[%s217 + $0x28] sm:$0xf]
      %v275 = vld [vmem:[%s217 + $0x2c] sm:$0xf]
      %v276 = vld [vmem:[%s217 + $0x30] sm:$0xf]
      %v277 = vld [vmem:[%s217 + $0x34] sm:$0xf]
      %v278 = vld [vmem:[%s217 + $0x38] sm:$0xf]
      %v279 = vld [vmem:[%s217 + $0x3c] sm:$0xf]
      %v280 = vld [vmem:[%s217 + $0x40] sm:$0xf]
      %v281 = vld [vmem:[%s217 + $0x44] sm:$0xf]
      %v282 = vld [vmem:[%s217 + $0x48] sm:$0xf]
      %v283 = vld [vmem:[%s217 + $0x4c] sm:$0xf]
      %v284 = vld [vmem:[%s217 + $0x50] sm:$0xf]
      %v285 = vld [vmem:[%s217 + $0x54] sm:$0xf]
      %v286 = vld [vmem:[%s217 + $0x58] sm:$0xf]
      %v287 = vld [vmem:[%s217 + $0x5c] sm:$0xf]
      %v288 = vld [vmem:[%s217 + $0x60] sm:$0xf]
      %v289 = vld [vmem:[%s217 + $0x64] sm:$0xf]
      %v290 = vld [vmem:[%s217 + $0x68] sm:$0xf]
      %v291 = vld [vmem:[%s217 + $0x6c] sm:$0xf]
      %v292 = vld [vmem:[%s217 + $0x70] sm:$0xf]
      %v293 = vld [vmem:[%s217 + $0x74] sm:$0xf]
      %v294 = vld [vmem:[%s217 + $0x78] sm:$0xf]
      %v295 = vld [vmem:[%s217 + $0x7c] sm:$0xf]
      %v296 = vld [vmem:[%s217 + $0x80] sm:$0xf]
      %v297 = vld [vmem:[%s217 + $0x84] sm:$0xf]
      %v298 = vld [vmem:[%s217 + $0x88] sm:$0xf]
      %v299 = vld [vmem:[%s217 + $0x8c] sm:$0xf]
      %v300 = vld [vmem:[%s217 + $0x90] sm:$0xf]
      %v301 = vld [vmem:[%s217 + $0x94] sm:$0xf]
      %v302 = vld [vmem:[%s217 + $0x98] sm:$0xf]
      %v303 = vld [vmem:[%s217 + $0x9c] sm:$0xf]
      %v304 = vld [vmem:[%s217 + $0xa0] sm:$0xf]
      %v305 = vld [vmem:[%s217 + $0xa4] sm:$0xf]
      %v306 = vld [vmem:[%s217 + $0xa8] sm:$0xf]
      %v307 = vld [vmem:[%s217 + $0xac] sm:$0xf]
      %v308 = vld [vmem:[%s217 + $0xb0] sm:$0xf]
      %v309 = vld [vmem:[%s217 + $0xb4] sm:$0xf]
      %v310 = vld [vmem:[%s217 + $0xb8] sm:$0xf]
      %v311 = vld [vmem:[%s217 + $0xbc] sm:$0xf]
      %v312 = vld [vmem:[%s217 + $0xc0] sm:$0xf]
      %v313 = vld [vmem:[%s217 + $0xc4] sm:$0xf]
      %v314 = vld [vmem:[%s217 + $0xc8] sm:$0xf]
      %v315 = vld [vmem:[%s217 + $0xcc] sm:$0xf]
      %v316 = vld [vmem:[%s217 + $0xd0] sm:$0xf]
      %v317 = vld [vmem:[%s217 + $0xd4] sm:$0xf]
      %v318 = vld [vmem:[%s217 + $0xd8] sm:$0xf]
      %v319 = vld [vmem:[%s217 + $0xdc] sm:$0xf]
      %v320 = vld [vmem:[%s217 + $0xe0] sm:$0xf]
      %v321 = vld [vmem:[%s217 + $0xe4] sm:$0xf]
      %v322 = vld [vmem:[%s217 + $0xe8] sm:$0xf]
      %v323 = vld [vmem:[%s217 + $0xec] sm:$0xf]
      %v324 = vld [vmem:[%s217 + $0xf0] sm:$0xf]
      %v325 = vld [vmem:[%s217 + $0xf4] sm:$0xf]
      %v326 = vld [vmem:[%s217 + $0xf8] sm:$0xf]
      %v327 = vld [vmem:[%s217 + $0xfc] sm:$0xf]
      %v328 = vld [vmem:[%s217 + $0x100] sm:$0xf]
      %v329 = vld [vmem:[%s217 + $0x104] sm:$0xf]
      %v330 = vld [vmem:[%s217 + $0x108] sm:$0xf]
      %v331 = vld [vmem:[%s217 + $0x10c] sm:$0xf]
      %v332 = vld [vmem:[%s217 + $0x110] sm:$0xf]
      %v333 = vld [vmem:[%s217 + $0x114] sm:$0xf]
      %v334 = vld [vmem:[%s217 + $0x118] sm:$0xf]
      %v335 = vld [vmem:[%s217 + $0x11c] sm:$0xf]
      %v336 = vld [vmem:[%s217 + $0x120] sm:$0xf]
      %v337 = vld [vmem:[%s217 + $0x124] sm:$0xf]
      %v338 = vld [vmem:[%s217 + $0x128] sm:$0xf]
      %v339 = vld [vmem:[%s217 + $0x12c] sm:$0xf]
      %v340 = vld [vmem:[%s217 + $0x130] sm:$0xf]
      %v341 = vld [vmem:[%s217 + $0x134] sm:$0xf]
      %v342 = vld [vmem:[%s217 + $0x138] sm:$0xf]
      %v343 = vld [vmem:[%s217 + $0x13c] sm:$0xf]
      %v344 = vld [vmem:[%s217 + $0x140] sm:$0xf]
      %v345 = vld [vmem:[%s217 + $0x144] sm:$0xf]
      %v346 = vld [vmem:[%s217 + $0x148] sm:$0xf]
      %v347 = vld [vmem:[%s217 + $0x14c] sm:$0xf]
      %v348 = vld [vmem:[%s217 + $0x150] sm:$0xf]
      %v349 = vld [vmem:[%s217 + $0x154] sm:$0xf]
      %v350 = vld [vmem:[%s217 + $0x158] sm:$0xf]
      %v351 = vld [vmem:[%s217 + $0x15c] sm:$0xf]
      %v352 = vld [vmem:[%s217 + $0x160] sm:$0xf]
      %v353 = vld [vmem:[%s217 + $0x164] sm:$0xf]
      %v354 = vld [vmem:[%s217 + $0x168] sm:$0xf]
      %v355 = vld [vmem:[%s217 + $0x16c] sm:$0xf]
      %v356 = vld [vmem:[%s217 + $0x170] sm:$0xf]
      %v357 = vld [vmem:[%s217 + $0x174] sm:$0xf]
      %v358 = vld [vmem:[%s217 + $0x178] sm:$0xf]
      %v359 = vld [vmem:[%s217 + $0x17c] sm:$0xf]
      %v360 = vld [vmem:[%s217 + $0x180] sm:$0xf]
      %v361 = vld [vmem:[%s217 + $0x184] sm:$0xf]
      %v362 = vld [vmem:[%s217 + $0x188] sm:$0xf]
      %v363 = vld [vmem:[%s217 + $0x18c] sm:$0xf]
      %v364 = vld [vmem:[%s217 + $0x190] sm:$0xf]
      %v365 = vld [vmem:[%s217 + $0x194] sm:$0xf]
      %v366 = vld [vmem:[%s217 + $0x198] sm:$0xf]
      %v367 = vld [vmem:[%s217 + $0x19c] sm:$0xf]
      %v368 = vld [vmem:[%s217 + $0x1a0] sm:$0xf]
      %v369 = vld [vmem:[%s217 + $0x1a4] sm:$0xf]
      %v370 = vld [vmem:[%s217 + $0x1a8] sm:$0xf]
      %v371 = vld [vmem:[%s217 + $0x1ac] sm:$0xf]
      %v372 = vld [vmem:[%s217 + $0x1b0] sm:$0xf]
      %v373 = vld [vmem:[%s217 + $0x1b4] sm:$0xf]
      %v374 = vld [vmem:[%s217 + $0x1b8] sm:$0xf]
      %v375 = vld [vmem:[%s217 + $0x1bc] sm:$0xf]
      %v408 = vunpack.c.l.b16 %v232
      %v409 = vunpack.c.h.b16 %v232
      %v410 = vunpack.c.l.b16 %v233
      %v411 = vunpack.c.h.b16 %v233
      %v412 = vunpack.c.l.b16 %v234
      %v413 = vunpack.c.h.b16 %v234
      %v414 = vunpack.c.l.b16 %v235
      %v415 = vunpack.c.l.b16 %v236
      %v416 = vunpack.c.h.b16 %v236
      %v417 = vunpack.c.l.b16 %v237
      %v418 = vunpack.c.h.b16 %v237
      %v419 = vunpack.c.l.b16 %v238
      %v420 = vunpack.c.h.b16 %v238
      %v421 = vunpack.c.l.b16 %v239
      %v422 = vunpack.c.l.b16 %v240
      %v423 = vunpack.c.h.b16 %v240
      %v424 = vunpack.c.l.b16 %v241
      %v425 = vunpack.c.h.b16 %v241
      %v426 = vunpack.c.l.b16 %v242
      %v427 = vunpack.c.h.b16 %v242
      %v428 = vunpack.c.l.b16 %v243
      %v429 = vunpack.c.l.b16 %v244
      %v430 = vunpack.c.h.b16 %v244
      %v431 = vunpack.c.l.b16 %v245
      %v432 = vunpack.c.h.b16 %v245
      %v433 = vunpack.c.l.b16 %v246
      %v434 = vunpack.c.h.b16 %v246
      %v435 = vunpack.c.l.b16 %v247
      %v436 = vunpack.c.l.b16 %v248
      %v437 = vunpack.c.h.b16 %v248
      %v438 = vunpack.c.l.b16 %v249
      %v439 = vunpack.c.h.b16 %v249
      %v440 = vunpack.c.l.b16 %v250
      %v441 = vunpack.c.h.b16 %v250
      %v442 = vunpack.c.l.b16 %v251
      %v443 = vunpack.c.l.b16 %v252
      %v444 = vunpack.c.h.b16 %v252
      %v445 = vunpack.c.l.b16 %v253
      %v446 = vunpack.c.h.b16 %v253
      %v447 = vunpack.c.l.b16 %v254
      %v448 = vunpack.c.h.b16 %v254
      %v449 = vunpack.c.l.b16 %v255
      %v450 = vunpack.c.l.b16 %v256
      %v451 = vunpack.c.h.b16 %v256
      %v452 = vunpack.c.l.b16 %v257
      %v453 = vunpack.c.h.b16 %v257
      %v454 = vunpack.c.l.b16 %v258
      %v455 = vunpack.c.h.b16 %v258
      %v456 = vunpack.c.l.b16 %v259
      %v457 = vunpack.c.l.b16 %v260
      %v458 = vunpack.c.h.b16 %v260
      %v459 = vunpack.c.l.b16 %v261
      %v460 = vunpack.c.h.b16 %v261
      %v461 = vunpack.c.l.b16 %v262
      %v462 = vunpack.c.h.b16 %v262
      %v463 = vunpack.c.l.b16 %v263
      %v464 = vpack.c.b16 %v415, %v408
      %v465 = vpack.c.b16 %v416, %v409
      %v466 = vpack.c.b16 %v417, %v410
      %v467 = vpack.c.b16 %v418, %v411
      %v468 = vpack.c.b16 %v419, %v412
      %v469 = vpack.c.b16 %v420, %v413
      %v470 = vpack.c.b16 %v421, %v414
      %v471 = vpack.c.b16 %v429, %v422
      %v472 = vpack.c.b16 %v430, %v423
      %v473 = vpack.c.b16 %v431, %v424
      %v474 = vpack.c.b16 %v432, %v425
      %v475 = vpack.c.b16 %v433, %v426
      %v476 = vpack.c.b16 %v434, %v427
      %v477 = vpack.c.b16 %v435, %v428
      %v478 = vpack.c.b16 %v443, %v436
      %v479 = vpack.c.b16 %v444, %v437
      %v480 = vpack.c.b16 %v445, %v438
      %v481 = vpack.c.b16 %v446, %v439
      %v482 = vpack.c.b16 %v447, %v440
      %v483 = vpack.c.b16 %v448, %v441
      %v484 = vpack.c.b16 %v449, %v442
      %v485 = vpack.c.b16 %v457, %v450
      %v486 = vpack.c.b16 %v458, %v451
      %v487 = vpack.c.b16 %v459, %v452
      %v488 = vpack.c.b16 %v460, %v453
      %v489 = vpack.c.b16 %v461, %v454
      %v490 = vpack.c.b16 %v462, %v455
      %v491 = vpack.c.b16 %v463, %v456
      %v632 = vunpack.c.l.b16 %v264
      %v633 = vunpack.c.l.b16 %v265
      %v634 = vunpack.c.l.b16 %v266
      %v635 = vunpack.c.l.b16 %v267
      %v636 = vunpack.c.l.b16 %v268
      %v637 = vunpack.c.l.b16 %v269
      %v638 = vunpack.c.l.b16 %v270
      %v639 = vunpack.c.l.b16 %v271
      %v640 = vunpack.c.l.b16 %v272
      %v641 = vunpack.c.l.b16 %v273
      %v642 = vunpack.c.l.b16 %v274
      %v643 = vunpack.c.l.b16 %v275
      %v644 = vunpack.c.l.b16 %v276
      %v645 = vunpack.c.l.b16 %v277
      %v646 = vunpack.c.l.b16 %v278
      %v647 = vunpack.c.l.b16 %v279
      %v648 = vunpack.c.l.b16 %v280
      %v649 = vunpack.c.l.b16 %v281
      %v650 = vunpack.c.l.b16 %v282
      %v651 = vunpack.c.l.b16 %v283
      %v652 = vunpack.c.l.b16 %v284
      %v653 = vunpack.c.l.b16 %v285
      %v654 = vunpack.c.l.b16 %v286
      %v655 = vunpack.c.l.b16 %v287
      %v656 = vunpack.c.l.b16 %v288
      %v657 = vunpack.c.l.b16 %v289
      %v658 = vunpack.c.l.b16 %v290
      %v659 = vunpack.c.l.b16 %v291
      %v660 = vunpack.c.l.b16 %v292
      %v661 = vunpack.c.l.b16 %v293
      %v662 = vunpack.c.l.b16 %v294
      %v663 = vunpack.c.l.b16 %v295
      %v664 = vunpack.c.l.b16 %v296
      %v665 = vunpack.c.l.b16 %v297
      %v666 = vunpack.c.l.b16 %v298
      %v667 = vunpack.c.l.b16 %v299
      %v668 = vunpack.c.l.b16 %v300
      %v669 = vunpack.c.l.b16 %v301
      %v670 = vunpack.c.l.b16 %v302
      %v671 = vunpack.c.l.b16 %v303
      %v672 = vunpack.c.l.b16 %v304
      %v673 = vunpack.c.l.b16 %v305
      %v674 = vunpack.c.l.b16 %v306
      %v675 = vunpack.c.l.b16 %v307
      %v676 = vunpack.c.l.b16 %v308
      %v677 = vunpack.c.l.b16 %v309
      %v678 = vunpack.c.l.b16 %v310
      %v679 = vunpack.c.l.b16 %v311
      %v680 = vunpack.c.l.b16 %v312
      %v681 = vunpack.c.l.b16 %v313
      %v682 = vunpack.c.l.b16 %v314
      %v683 = vunpack.c.l.b16 %v315
      %v684 = vunpack.c.l.b16 %v316
      %v685 = vunpack.c.l.b16 %v317
      %v686 = vunpack.c.l.b16 %v318
      %v687 = vunpack.c.l.b16 %v319
      %v688 = vunpack.c.l.b16 %v320
      %v689 = vunpack.c.l.b16 %v321
      %v690 = vunpack.c.l.b16 %v322
      %v691 = vunpack.c.l.b16 %v323
      %v692 = vunpack.c.l.b16 %v324
      %v693 = vunpack.c.l.b16 %v325
      %v694 = vunpack.c.l.b16 %v326
      %v695 = vunpack.c.l.b16 %v327
      %v696 = vunpack.c.l.b16 %v328
      %v697 = vunpack.c.l.b16 %v329
      %v698 = vunpack.c.l.b16 %v330
      %v699 = vunpack.c.l.b16 %v331
      %v700 = vunpack.c.l.b16 %v332
      %v701 = vunpack.c.l.b16 %v333
      %v702 = vunpack.c.l.b16 %v334
      %v703 = vunpack.c.l.b16 %v335
      %v704 = vunpack.c.l.b16 %v336
      %v705 = vunpack.c.l.b16 %v337
      %v706 = vunpack.c.l.b16 %v338
      %v707 = vunpack.c.l.b16 %v339
      %v708 = vunpack.c.l.b16 %v340
      %v709 = vunpack.c.l.b16 %v341
      %v710 = vunpack.c.l.b16 %v342
      %v711 = vunpack.c.l.b16 %v343
      %v712 = vunpack.c.l.b16 %v344
      %v713 = vunpack.c.l.b16 %v345
      %v714 = vunpack.c.l.b16 %v346
      %v715 = vunpack.c.l.b16 %v347
      %v716 = vunpack.c.l.b16 %v348
      %v717 = vunpack.c.l.b16 %v349
      %v718 = vunpack.c.l.b16 %v350
      %v719 = vunpack.c.l.b16 %v351
      %v720 = vunpack.c.l.b16 %v352
      %v721 = vunpack.c.l.b16 %v353
      %v722 = vunpack.c.l.b16 %v354
      %v723 = vunpack.c.l.b16 %v355
      %v724 = vunpack.c.l.b16 %v356
      %v725 = vunpack.c.l.b16 %v357
      %v726 = vunpack.c.l.b16 %v358
      %v727 = vunpack.c.l.b16 %v359
      %v728 = vunpack.c.l.b16 %v360
      %v729 = vunpack.c.l.b16 %v361
      %v730 = vunpack.c.l.b16 %v362
      %v731 = vunpack.c.l.b16 %v363
      %v732 = vunpack.c.l.b16 %v364
      %v733 = vunpack.c.l.b16 %v365
      %v734 = vunpack.c.l.b16 %v366
      %v735 = vunpack.c.l.b16 %v367
      %v736 = vunpack.c.l.b16 %v368
      %v737 = vunpack.c.l.b16 %v369
      %v738 = vunpack.c.l.b16 %v370
      %v739 = vunpack.c.l.b16 %v371
      %v740 = vunpack.c.l.b16 %v372
      %v741 = vunpack.c.l.b16 %v373
      %v742 = vunpack.c.l.b16 %v374
      %v743 = vunpack.c.l.b16 %v375
      %v744 = vpack.c.b16 %v633, %v632
      %v745 = vpack.c.b16 %v635, %v634
      %v746 = vpack.c.b16 %v637, %v636
      %v747 = vpack.c.b16 %v639, %v638
      %v748 = vpack.c.b16 %v641, %v640
      %v749 = vpack.c.b16 %v643, %v642
      %v750 = vpack.c.b16 %v645, %v644
      %v751 = vpack.c.b16 %v647, %v646
      %v752 = vpack.c.b16 %v649, %v648
      %v753 = vpack.c.b16 %v651, %v650
      %v754 = vpack.c.b16 %v653, %v652
      %v755 = vpack.c.b16 %v655, %v654
      %v756 = vpack.c.b16 %v657, %v656
      %v757 = vpack.c.b16 %v659, %v658
      %v758 = vpack.c.b16 %v661, %v660
      %v759 = vpack.c.b16 %v663, %v662
      %v760 = vpack.c.b16 %v665, %v664
      %v761 = vpack.c.b16 %v667, %v666
      %v762 = vpack.c.b16 %v669, %v668
      %v763 = vpack.c.b16 %v671, %v670
      %v764 = vpack.c.b16 %v673, %v672
      %v765 = vpack.c.b16 %v675, %v674
      %v766 = vpack.c.b16 %v677, %v676
      %v767 = vpack.c.b16 %v679, %v678
      %v768 = vpack.c.b16 %v681, %v680
      %v769 = vpack.c.b16 %v683, %v682
      %v770 = vpack.c.b16 %v685, %v684
      %v771 = vpack.c.b16 %v687, %v686
      %v772 = vpack.c.b16 %v689, %v688
      %v773 = vpack.c.b16 %v691, %v690
      %v774 = vpack.c.b16 %v693, %v692
      %v775 = vpack.c.b16 %v695, %v694
      %v776 = vpack.c.b16 %v697, %v696
      %v777 = vpack.c.b16 %v699, %v698
      %v778 = vpack.c.b16 %v701, %v700
      %v779 = vpack.c.b16 %v703, %v702
      %v780 = vpack.c.b16 %v705, %v704
      %v781 = vpack.c.b16 %v707, %v706
      %v782 = vpack.c.b16 %v709, %v708
      %v783 = vpack.c.b16 %v711, %v710
      %v784 = vpack.c.b16 %v713, %v712
      %v785 = vpack.c.b16 %v715, %v714
      %v786 = vpack.c.b16 %v717, %v716
      %v787 = vpack.c.b16 %v719, %v718
      %v788 = vpack.c.b16 %v721, %v720
      %v789 = vpack.c.b16 %v723, %v722
      %v790 = vpack.c.b16 %v725, %v724
      %v791 = vpack.c.b16 %v727, %v726
      %v792 = vpack.c.b16 %v729, %v728
      %v793 = vpack.c.b16 %v731, %v730
      %v794 = vpack.c.b16 %v733, %v732
      %v795 = vpack.c.b16 %v735, %v734
      %v796 = vpack.c.b16 %v737, %v736
      %v797 = vpack.c.b16 %v739, %v738
      %v798 = vpack.c.b16 %v741, %v740
      %v799 = vpack.c.b16 %v743, %v742
      %856 = vmatprep.subr.bf16.mxu0 0
      %857 = vmatpush1.bf16.msra.mxu0 %v744
      %858 = vmatprep.subr.bf16.mxu0 0
      %859 = vmatpush1.bf16.msra.mxu0 %v745
      %860 = vmatprep.subr.bf16.mxu0 0
      %861 = vmatpush1.bf16.msra.mxu0 %v746
      %862 = vmatprep.subr.bf16.mxu0 0
      %863 = vmatpush1.bf16.msra.mxu0 %v747
      %864 = vmatprep.subr.bf16.mxu0 0
      %865 = vmatpush1.bf16.msra.mxu0 %v748
      %866 = vmatprep.subr.bf16.mxu0 0
      %867 = vmatpush1.bf16.msra.mxu0 %v749
      %868 = vmatprep.subr.bf16.mxu0 0
      %869 = vmatpush1.bf16.msra.mxu0 %v750
      %870 = vmatprep.subr.bf16.mxu0 0
      %871 = vmatpush1.bf16.msra.mxu0 %v751
      %872 = vmatprep.subr.bf16.mxu0 0
      %873 = vmatpush1.bf16.msra.mxu0 %v752
      %874 = vmatprep.subr.bf16.mxu0 0
      %875 = vmatpush1.bf16.msra.mxu0 %v753
      %876 = vmatprep.subr.bf16.mxu0 0
      %877 = vmatpush1.bf16.msra.mxu0 %v754
      %878 = vmatprep.subr.bf16.mxu0 0
      %879 = vmatpush1.bf16.msra.mxu0 %v755
      %880 = vmatprep.subr.bf16.mxu0 0
      %881 = vmatpush1.bf16.msra.mxu0 %v756
      %882 = vmatprep.subr.bf16.mxu0 0
      %883 = vmatpush1.bf16.msra.mxu0 %v757
      %884 = vmatprep.subr.bf16.mxu0 0
      %885 = vmatpush1.bf16.msra.mxu0 %v758
      %886 = vmatprep.subr.bf16.mxu0 0
      %887 = vmatpush1.bf16.msra.mxu0 %v759
      %888 = vmatprep.mubr.bf16.mxu0 %v465
      %889 = vmatmul.mubr.bf16.gmra.mrb[0].mxu0 %v464
      %v890 = vpop.f32.mrb[0].mxu0
      %v891 = vadd.f32 0.0, %v890
      %v892 = vpop.f32.mrb[0].mxu0
      %v893 = vpop.f32.mrb[0].mxu0
      %v894 = vadd.f32 0.0, %v893
      %v895 = vpop.f32.mrb[0].mxu0
      %896 = vmatprep.mubr.bf16.mxu0 %v472
      %897 = vmatmul.mubr.bf16.gmra.mrb[0].mxu0 %v471
      %v898 = vpop.f32.mrb[0].mxu0
      %v899 = vadd.f32 0.0, %v898
      %v900 = vpop.f32.mrb[0].mxu0
      %v901 = vpop.f32.mrb[0].mxu0
      %v902 = vadd.f32 0.0, %v901
      %v903 = vpop.f32.mrb[0].mxu0
      %904 = vmatprep.mubr.bf16.mxu0 %v479
      %905 = vmatmul.mubr.bf16.gmra.mrb[0].mxu0 %v478
      %v906 = vpop.f32.mrb[0].mxu0
      %v907 = vadd.f32 0.0, %v906
      %v908 = vpop.f32.mrb[0].mxu0
      %v909 = vpop.f32.mrb[0].mxu0
      %v910 = vadd.f32 0.0, %v909
      %v911 = vpop.f32.mrb[0].mxu0
      %912 = vmatprep.mubr.bf16.mxu0 %v486
      %913 = vmatmul.mubr.bf16.gmra.mrb[0].mxu0 %v485
      %v914 = vpop.f32.mrb[0].mxu0
      %v915 = vadd.f32 0.0, %v914
      %v916 = vpop.f32.mrb[0].mxu0
      %v917 = vpop.f32.mrb[0].mxu0
      %v918 = vadd.f32 0.0, %v917
      %v919 = vpop.f32.mrb[0].mxu0
      %920 = vdwg.mxu0
      %921 = vmatprep.subr.bf16.mxu0 0
      %922 = vmatpush1.bf16.msra.mxu0 %v760
      %923 = vmatprep.subr.bf16.mxu0 0
      %924 = vmatpush1.bf16.msra.mxu0 %v761
      %925 = vmatprep.subr.bf16.mxu0 0
      %926 = vmatpush1.bf16.msra.mxu0 %v762
      %927 = vmatprep.subr.bf16.mxu0 0
      %928 = vmatpush1.bf16.msra.mxu0 %v763
      %929 = vmatprep.subr.bf16.mxu0 0
      %930 = vmatpush1.bf16.msra.mxu0 %v764
      %931 = vmatprep.subr.bf16.mxu0 0
      %932 = vmatpush1.bf16.msra.mxu0 %v765
      %933 = vmatprep.subr.bf16.mxu0 0
      %934 = vmatpush1.bf16.msra.mxu0 %v766
      %935 = vmatprep.subr.bf16.mxu0 0
      %936 = vmatpush1.bf16.msra.mxu0 %v767
      %937 = vmatprep.subr.bf16.mxu0 0
      %938 = vmatpush1.bf16.msra.mxu0 %v768
      %939 = vmatprep.subr.bf16.mxu0 0
      %940 = vmatpush1.bf16.msra.mxu0 %v769
      %941 = vmatprep.subr.bf16.mxu0 0
      %942 = vmatpush1.bf16.msra.mxu0 %v770
      %943 = vmatprep.subr.bf16.mxu0 0
      %944 = vmatpush1.bf16.msra.mxu0 %v771
      %945 = vmatprep.subr.bf16.mxu0 0
      %946 = vmatpush1.bf16.msra.mxu0 %v772
      %947 = vmatprep.subr.bf16.mxu0 0
      %948 = vmatpush1.bf16.msra.mxu0 %v773
      %949 = vmatprep.subr.bf16.mxu0 0
      %950 = vmatpush1.bf16.msra.mxu0 %v774
      %951 = vmatprep.subr.bf16.mxu0 0
      %952 = vmatpush1.bf16.msra.mxu0 %v775
      %953 = vmatprep.mubr.bf16.mxu0 %v467
      %954 = vmatmul.mubr.bf16.gmra.mrb[0].mxu0 %v466
      %v955 = vpop.f32.mrb[0].mxu0
      %v956 = vadd.f32 %v891, %v955
      %v957 = vpop.f32.mrb[0].mxu0
      %v958 = vpop.f32.mrb[0].mxu0
      %v959 = vadd.f32 %v894, %v958
      %v960 = vpop.f32.mrb[0].mxu0
      %961 = vmatprep.mubr.bf16.mxu0 %v474
      %962 = vmatmul.mubr.bf16.gmra.mrb[0].mxu0 %v473
      %v963 = vpop.f32.mrb[0].mxu0
      %v964 = vadd.f32 %v899, %v963
      %v965 = vpop.f32.mrb[0].mxu0
      %v966 = vpop.f32.mrb[0].mxu0
      %v967 = vadd.f32 %v902, %v966
      %v968 = vpop.f32.mrb[0].mxu0
      %969 = vmatprep.mubr.bf16.mxu0 %v481
      %970 = vmatmul.mubr.bf16.gmra.mrb[0].mxu0 %v480
      %v971 = vpop.f32.mrb[0].mxu0
      %v972 = vadd.f32 %v907, %v971
      %v973 = vpop.f32.mrb[0].mxu0
      %v974 = vpop.f32.mrb[0].mxu0
      %v975 = vadd.f32 %v910, %v974
      %v976 = vpop.f32.mrb[0].mxu0
      %977 = vmatprep.mubr.bf16.mxu0 %v488
      %978 = vmatmul.mubr.bf16.gmra.mrb[0].mxu0 %v487
      %v979 = vpop.f32.mrb[0].mxu0
      %v980 = vadd.f32 %v915, %v979
      %v981 = vpop.f32.mrb[0].mxu0
      %v982 = vpop.f32.mrb[0].mxu0
      %v983 = vadd.f32 %v918, %v982
      %v984 = vpop.f32.mrb[0].mxu0
      %985 = vdwg.mxu0
      %986 = vmatprep.subr.bf16.mxu0 0
      %987 = vmatpush1.bf16.msra.mxu0 %v776
      %988 = vmatprep.subr.bf16.mxu0 0
      %989 = vmatpush1.bf16.msra.mxu0 %v777
      %990 = vmatprep.subr.bf16.mxu0 0
      %991 = vmatpush1.bf16.msra.mxu0 %v778
      %992 = vmatprep.subr.bf16.mxu0 0
      %993 = vmatpush1.bf16.msra.mxu0 %v779
      %994 = vmatprep.subr.bf16.mxu0 0
      %995 = vmatpush1.bf16.msra.mxu0 %v780
      %996 = vmatprep.subr.bf16.mxu0 0
      %997 = vmatpush1.bf16.msra.mxu0 %v781
      %998 = vmatprep.subr.bf16.mxu0 0
      %999 = vmatpush1.bf16.msra.mxu0 %v782
      %1000 = vmatprep.subr.bf16.mxu0 0
      %1001 = vmatpush1.bf16.msra.mxu0 %v783
      %1002 = vmatprep.subr.bf16.mxu0 0
      %1003 = vmatpush1.bf16.msra.mxu0 %v784
      %1004 = vmatprep.subr.bf16.mxu0 0
      %1005 = vmatpush1.bf16.msra.mxu0 %v785
      %1006 = vmatprep.subr.bf16.mxu0 0
      %1007 = vmatpush1.bf16.msra.mxu0 %v786
      %1008 = vmatprep.subr.bf16.mxu0 0
      %1009 = vmatpush1.bf16.msra.mxu0 %v787
      %1010 = vmatprep.subr.bf16.mxu0 0
      %1011 = vmatpush1.bf16.msra.mxu0 %v788
      %1012 = vmatprep.subr.bf16.mxu0 0
      %1013 = vmatpush1.bf16.msra.mxu0 %v789
      %1014 = vmatprep.subr.bf16.mxu0 0
      %1015 = vmatpush1.bf16.msra.mxu0 %v790
      %1016 = vmatprep.subr.bf16.mxu0 0
      %1017 = vmatpush1.bf16.msra.mxu0 %v791
      %1018 = vmatprep.mubr.bf16.mxu0 %v469
      %1019 = vmatmul.mubr.bf16.gmra.mrb[0].mxu0 %v468
      %v1020 = vpop.f32.mrb[0].mxu0
      %v1021 = vadd.f32 %v956, %v1020
      %v1022 = vpop.f32.mrb[0].mxu0
      %v1023 = vpop.f32.mrb[0].mxu0
      %v1024 = vadd.f32 %v959, %v1023
      %v1025 = vpop.f32.mrb[0].mxu0
      %1026 = vmatprep.mubr.bf16.mxu0 %v476
      %1027 = vmatmul.mubr.bf16.gmra.mrb[0].mxu0 %v475
      %v1028 = vpop.f32.mrb[0].mxu0
      %v1029 = vadd.f32 %v964, %v1028
      %v1030 = vpop.f32.mrb[0].mxu0
      %v1031 = vpop.f32.mrb[0].mxu0
      %v1032 = vadd.f32 %v967, %v1031
      %v1033 = vpop.f32.mrb[0].mxu0
      %1034 = vmatprep.mubr.bf16.mxu0 %v483
      %1035 = vmatmul.mubr.bf16.gmra.mrb[0].mxu0 %v482
      %v1036 = vpop.f32.mrb[0].mxu0
      %v1037 = vadd.f32 %v972, %v1036
      %v1038 = vpop.f32.mrb[0].mxu0
      %v1039 = vpop.f32.mrb[0].mxu0
      %v1040 = vadd.f32 %v975, %v1039
      %v1041 = vpop.f32.mrb[0].mxu0
      %1042 = vmatprep.mubr.bf16.mxu0 %v490
      %1043 = vmatmul.mubr.bf16.gmra.mrb[0].mxu0 %v489
      %v1044 = vpop.f32.mrb[0].mxu0
      %v1045 = vadd.f32 %v980, %v1044
      %v1046 = vpop.f32.mrb[0].mxu0
      %v1047 = vpop.f32.mrb[0].mxu0
      %v1048 = vadd.f32 %v983, %v1047
      %v1049 = vpop.f32.mrb[0].mxu0
      %1050 = vdwg.mxu0
      %1051 = vmatprep.subr.bf16.mxu0 0
      %1052 = vmatpush1.bf16.msra.mxu0 %v792
      %1053 = vmatprep.subr.bf16.mxu0 0
      %1054 = vmatpush1.bf16.msra.mxu0 %v793
      %1055 = vmatprep.subr.bf16.mxu0 0
      %1056 = vmatpush1.bf16.msra.mxu0 %v794
      %1057 = vmatprep.subr.bf16.mxu0 0
      %1058 = vmatpush1.bf16.msra.mxu0 %v795
      %1059 = vmatprep.subr.bf16.mxu0 0
      %1060 = vmatpush1.bf16.msra.mxu0 %v796
      %1061 = vmatprep.subr.bf16.mxu0 0
      %1062 = vmatpush1.bf16.msra.mxu0 %v797
      %1063 = vmatprep.subr.bf16.mxu0 0
      %1064 = vmatpush1.bf16.msra.mxu0 %v798
      %1065 = vmatprep.subr.bf16.mxu0 0
      %1066 = vmatpush1.bf16.msra.mxu0 %v799
      %1067 = vmatprep.subr.bf16.mxu0 0
      %1068 = vmatpush1.bf16.msra.mxu0 0
      %1069 = vmatprep.subr.bf16.mxu0 0
      %1070 = vmatpush1.bf16.msra.mxu0 0
      %1071 = vmatprep.subr.bf16.mxu0 0
      %1072 = vmatpush1.bf16.msra.mxu0 0
      %1073 = vmatprep.subr.bf16.mxu0 0
      %1074 = vmatpush1.bf16.msra.mxu0 0
      %1075 = vmatprep.subr.bf16.mxu0 0
      %1076 = vmatpush1.bf16.msra.mxu0 0
      %1077 = vmatprep.subr.bf16.mxu0 0
      %1078 = vmatpush1.bf16.msra.mxu0 0
      %1079 = vmatprep.subr.bf16.mxu0 0
      %1080 = vmatpush1.bf16.msra.mxu0 0
      %1081 = vmatprep.subr.bf16.mxu0 0
      %1082 = vmatpush1.bf16.msra.mxu0 0
      %1083 = vmatprep.mubr.bf16.mxu0 0
      %1084 = vmatmul.mubr.bf16.gmra.mrb[0].mxu0 %v470
      %v1085 = vpop.f32.mrb[0].mxu0
      %v1086 = vadd.f32 %v1021, %v1085
      %v1087 = vpop.f32.mrb[0].mxu0
      %v1088 = vpop.f32.mrb[0].mxu0
      %v1089 = vadd.f32 %v1024, %v1088
      %v1090 = vpop.f32.mrb[0].mxu0
      %1091 = vmatprep.mubr.bf16.mxu0 0
      %1092 = vmatmul.mubr.bf16.gmra.mrb[0].mxu0 %v477
      %v1093 = vpop.f32.mrb[0].mxu0
      %v1094 = vadd.f32 %v1029, %v1093
      %v1095 = vpop.f32.mrb[0].mxu0
      %v1096 = vpop.f32.mrb[0].mxu0
      %v1097 = vadd.f32 %v1032, %v1096
      %v1098 = vpop.f32.mrb[0].mxu0
      %1099 = vmatprep.mubr.bf16.mxu0 0
      %1100 = vmatmul.mubr.bf16.gmra.mrb[0].mxu0 %v484
      %v1101 = vpop.f32.mrb[0].mxu0
      %v1102 = vadd.f32 %v1037, %v1101
      %v1103 = vpop.f32.mrb[0].mxu0
      %v1104 = vpop.f32.mrb[0].mxu0
      %v1105 = vadd.f32 %v1040, %v1104
      %v1106 = vpop.f32.mrb[0].mxu0
      %1107 = vmatprep.mubr.bf16.mxu0 0
      %1108 = vmatmul.mubr.bf16.gmra.mrb[0].mxu0 %v491
      %v1109 = vpop.f32.mrb[0].mxu0
      %v1110 = vadd.f32 %v1045, %v1109
      %v1111 = vpop.f32.mrb[0].mxu0
      %v1112 = vpop.f32.mrb[0].mxu0
      %v1113 = vadd.f32 %v1048, %v1112
      %v1114 = vpop.f32.mrb[0].mxu0
      %1115 = vdwg.mxu0
      %v1116 = vld [vmem:[%s221] sm:$0x1]
      %v1117 = vlaneseq
      %v1118 = vshrl.u32 %v1117, 7
      %v1119 = vsub.s32 0, %v1118
      %v1120 = vrot.slane %v1116, %v1119
      %v1121 = vmul.f32 %v1086, %v1120
      %v1122 = vmul.f32 %v1089, %v1120
      %v1123 = vmul.f32 %v1094, %v1120
      %v1124 = vmul.f32 %v1097, %v1120
      %v1125 = vmul.f32 %v1102, %v1120
      %v1126 = vmul.f32 %v1105, %v1120
      %v1127 = vmul.f32 %v1110, %v1120
      %v1128 = vmul.f32 %v1113, %v1120
      %v1129 = vld [vmem:[%s221 + $0x1] sm:$0x1]
      %v1130 = vlaneseq
      %v1131 = vshrl.u32 %v1130, 7
      %v1132 = vsub.s32 0, %v1131
      %v1133 = vrot.slane %v1129, %v1132
      %v1134 = vadd.f32 %v1121, %v1133
      %v1135 = vadd.f32 %v1122, %v1133
      %v1136 = vadd.f32 %v1123, %v1133
      %v1137 = vadd.f32 %v1124, %v1133
      %v1138 = vadd.f32 %v1125, %v1133
      %v1139 = vadd.f32 %v1126, %v1133
      %v1140 = vadd.f32 %v1127, %v1133
      %v1141 = vadd.f32 %v1128, %v1133
      %v1142 = vmax.f32 %v1134, 0.0
      %v1143 = vmax.f32 %v1135, 0.0
      %v1144 = vmax.f32 %v1136, 0.0
      %v1145 = vmax.f32 %v1137, 0.0
      %v1146 = vmax.f32 %v1138, 0.0
      %v1147 = vmax.f32 %v1139, 0.0
      %v1148 = vmax.f32 %v1140, 0.0
      %v1149 = vmax.f32 %v1141, 0.0
      %v1150 = vpack.c.bf16 %v1143, %v1142
      %v1151 = vpack.c.bf16 %v1145, %v1144
      %v1152 = vpack.c.bf16 %v1147, %v1146
      %v1153 = vpack.c.bf16 %v1149, %v1148
      %v1158 = vunpack.c.l.b16 %v1150
      %v1159 = vunpack.c.h.b16 %v1150
      %v1160 = vunpack.c.l.b16 %v1151
      %v1161 = vunpack.c.h.b16 %v1151
      %v1162 = vunpack.c.l.b16 %v1152
      %v1163 = vunpack.c.h.b16 %v1152
      %v1164 = vunpack.c.l.b16 %v1153
      %v1165 = vunpack.c.h.b16 %v1153
      %v1166 = vpack.c.b16 %v1158, %v1158
      %v1167 = vpack.c.b16 %v1159, %v1159
      %v1168 = vpack.c.b16 %v1160, %v1160
      %v1169 = vpack.c.b16 %v1161, %v1161
      %v1170 = vpack.c.b16 %v1162, %v1162
      %v1171 = vpack.c.b16 %v1163, %v1163
      %v1172 = vpack.c.b16 %v1164, %v1164
      %v1173 = vpack.c.b16 %v1165, %v1165
      %1182 = vst [vmem:[%s229] sm:$0xf] %v1166
      %1183 = vst [vmem:[%s229 + $0x4] sm:$0xf] %v1167
      %1184 = vst [vmem:[%s229 + $0x8] sm:$0xf] %v1168
      %1185 = vst [vmem:[%s229 + $0xc] sm:$0xf] %v1169
      %1186 = vst [vmem:[%s229 + $0x10] sm:$0xf] %v1170
      %1187 = vst [vmem:[%s229 + $0x14] sm:$0xf] %v1171
      %1188 = vst [vmem:[%s229 + $0x18] sm:$0xf] %v1172
      %1189 = vst [vmem:[%s229 + $0x1c] sm:$0xf] %v1173
      %s1190 = smul.u32 8, %s18
      %p1191 = scmp.lt.s32.totalorder %s1190, 15
      %s1192 = scalar_select %p1191, %s1190, 15
      %p1193 = scmp.lt.s32.totalorder %s19, 0
      %s1194 = scalar_select %p1193, %s19, 0
      %s1195 = sadd.s32 %s1194, %s1192
      %s1196 = smul.addr %s1195, 4
      %s1197 = scalar_lea.vmem %s3, %s1196
      // Predicated region
      $region33: #{two_stream_forward.17} parent=31 // pred_check
        %p1198 = pneg %p124
      $region34: #{two_stream_forward.17} parent=31 // pred_check_branch
        %1200 = sbr.rel (%p1198) target = $region36
      $region35: #{two_stream_forward.17} parent=31 // pred_region
        %s1201 = smul.u32 8, %s18
      $region36: #{two_stream_forward.17} parent=31 // pred_fallthru
        _
    $region32: #{two_stream_forward.17} parent=5 // pred_fallthru
      _
    %p1202 = scmp.le.s32.totalorder 2, %s9
    // Predicated region
    $region37: #{two_stream_forward.17} parent=5 // pred_check
      %p1203 = pneg %p1202
    $region38: #{two_stream_forward.17} parent=5 // pred_check_branch
      %1205 = sbr.rel (%p1203) target = $region40
    $region39: #{two_stream_forward.17} parent=5 // pred_region
      %s1206 = ssub.s32 %s9, 2
      // Predicated region
      $region41: #{two_stream_forward.17} parent=39 // pred_check
        %p1207 = pneg %p130
      $region42: #{two_stream_forward.17} parent=39 // pred_check_branch
        %1209 = sbr.rel (%p1207) target = $region44
      $region43: #{two_stream_forward.17} parent=39 // pred_region
        %s1210 = smul.u32 8, %s20
        %p1211 = scmp.lt.s32.totalorder %s1210, 15
        %s1212 = scalar_select %p1211, %s1210, 15
        %p1213 = scmp.lt.s32.totalorder %s21, 0
        %s1214 = scalar_select %p1213, %s21, 0
        %s1215 = sadd.s32 %s1214, %s1212
        %s1216 = smul.addr %s1215, 4
        %s1217 = scalar_lea.vmem %s3, %s1216
      $region44: #{two_stream_forward.17} parent=39 // pred_fallthru
        _
    $region40: #{two_stream_forward.17} parent=5 // pred_fallthru
      _
  $region6: #{two_stream_forward.17} parent=0 // loop_footer
    %s13 = sadd.s32 1, %s9
  $region7: #{two_stream_forward.17} parent=0 // loop_footer_branch
    %8 = sbr.rel target = $region3
  $region8: #{two_stream_forward.17} parent=0 // loop_exit
    _

// kernel: two_stream_forward.18
$region0: #{two_stream_forward.18}
  #allocation0 [shape = 'u32[]', space=smem, size = 0x4, offset = 0x4, fixed_abs, tag = 'smem constant byte address 0x4 - core index']
  #allocation1 [shape = 'u32[144,128]{1,0:T(1,128)}', space=vmem, size = 0x12000, scoped, tag = 'internal scratch']
  %s0 = inlined_call_operand.vmem [shape: bf16[128,256], index: 0, kind: input, shape index: {}]
  %s1 = inlined_call_operand.vmem [shape: bf16[256,128], index: 1, kind: input, shape index: {}]
  %s2 = inlined_call_operand.vmem [shape: f32[2,128], index: 2, kind: input, shape index: {}]
  %s3 = inlined_call_operand.vmem [shape: bf16[128,128], index: 3, kind: output, shape index: {}]
  %s4 = sld [smem:[#allocation0]]
  $region45: #{two_stream_forward.18} parent=0
    _
  %s6 = ssub.s32 1, %s4
  %s7 = scalar_select 0, %s6, %s4
  loop: start=0, step=1, limit=4
  $region2: #{two_stream_forward.18} parent=0 // loop_pre_header
    _
  $region3: #{two_stream_forward.18} parent=0 // loop_header
    %s9 = sphi 0, %s13
    %p10 = scmp.ge.s32.totalorder %s9, 4
    %s16 = sphi 0, %s28
    %s17 = sphi 0, %s24
    %s18 = sphi 0, %s16
    %s19 = sphi 0, %s17
    %s20 = sphi 0, %s18
    %s21 = sphi 0, %s19
    %s31 = sphi 0, %s33
    %s34 = sphi 0, %s31
    %s35 = sphi 0, %s34
    %s51 = sphi 0, %s35
    %s57 = sphi 0, %s59
    %s60 = sphi 0, %s57
    %s61 = sphi 0, %s60
    %s77 = sphi 0, %s61
    %s83 = sphi 0, %s85
    %s86 = sphi 0, %s83
    %s87 = sphi 0, %s86
    %s103 = sphi 0, %s87
    %s111 = sphi 0, %s113
    %s114 = sphi 0, %s111
    %s115 = sphi 0, %s114
    %s131 = sphi 0, %s115
  $region4: #{two_stream_forward.18} parent=0 // loop_header_branch
    %12 = sbr.rel (%p10) target = $region8
  $region5: #{two_stream_forward.18} parent=0 // loop_body
    %s14 = ssub.s32 %s9, 1
    %s15 = ssub.s32 %s9, 2
    %s22 = sadd.s32 1, %s17
    %p23 = scmp.ge.s32.totalorder %s22, 1
    %s24 = scalar_select %p23, 0, %s22
    %s25 = sadd.s32 1, %s16
    %s26 = scalar_select %p23, %s25, %s16
    %p27 = scmp.ge.s32.totalorder %s26, 2
    %s28 = scalar_select %p27, 0, %s26
    %s29 = ssub.s32 %s16, %s28
    %p30 = scmp.eq.s32.totalorder %s29, 0
    %s32 = sadd.s32 %s31, 1
    %s33 = scalar_select %p30, %s31, %s32
    %p36 = pneg %p30
    %p37 = scmp.eq.s32.totalorder %s9, 1
    %p38 = por %p36, %p37
    %p39 = scmp.ne.s32.totalorder %s31, %s34
    %p40 = scmp.eq.s32.totalorder %s9, 0
    %p41 = por %p39, %p40
    %p42 = scmp.ne.s32.totalorder %s31, %s34
    %p43 = scmp.eq.s32.totalorder %s14, 1
    %p44 = por %p42, %p43
    %p45 = scmp.ne.s32.totalorder %s34, %s35
    %p46 = scmp.eq.s32.totalorder %s14, 0
    %p47 = por %p45, %p46
    %p48 = scmp.ne.s32.totalorder %s34, %s35
    %p49 = scmp.eq.s32.totalorder %s15, 1
    %p50 = por %p48, %p49
    %p52 = scmp.ne.s32.totalorder %s35, %s51
    %p53 = scmp.eq.s32.totalorder %s15, 0
    %p54 = por %p52, %p53
    %s55 = ssub.s32 %s17, %s24
    %p56 = scmp.eq.s32.totalorder %s55, 0
    %s58 = sadd.s32 %s57, 1
    %s59 = scalar_select %p56, %s57, %s58
    %p62 = pneg %p56
    %p63 = scmp.eq.s32.totalorder %s9, 1
    %p64 = por %p62, %p63
    %p65 = scmp.ne.s32.totalorder %s57, %s60
    %p66 = scmp.eq.s32.totalorder %s9, 0
    %p67 = por %p65, %p66
    %p68 = scmp.ne.s32.totalorder %s57, %s60
    %p69 = scmp.eq.s32.totalorder %s14, 1
    %p70 = por %p68, %p69
    %p71 = scmp.ne.s32.totalorder %s60, %s61
    %p72 = scmp.eq.s32.totalorder %s14, 0
    %p73 = por %p71, %p72
    %p74 = scmp.ne.s32.totalorder %s60, %s61
    %p75 = scmp.eq.s32.totalorder %s15, 1
    %p76 = por %p74, %p75
    %p78 = scmp.ne.s32.totalorder %s61, %s77
    %p79 = scmp.eq.s32.totalorder %s15, 0
    %p80 = por %p78, %p79
    %s81 = ssub.s32 %s17, %s24
    %p82 = scmp.eq.s32.totalorder %s81, 0
    %s84 = sadd.s32 %s83, 1
    %s85 = scalar_select %p82, %s83, %s84
    %p88 = pneg %p82
    %p89 = scmp.eq.s32.totalorder %s9, 1
    %p90 = por %p88, %p89
    %p91 = scmp.ne.s32.totalorder %s83, %s86
    %p92 = scmp.eq.s32.totalorder %s9, 0
    %p93 = por %p91, %p92
    %p94 = scmp.ne.s32.totalorder %s83, %s86
    %p95 = scmp.eq.s32.totalorder %s14, 1
    %p96 = por %p94, %p95
    %p97 = scmp.ne.s32.totalorder %s86, %s87
    %p98 = scmp.eq.s32.totalorder %s14, 0
    %p99 = por %p97, %p98
    %p100 = scmp.ne.s32.totalorder %s86, %s87
    %p101 = scmp.eq.s32.totalorder %s15, 1
    %p102 = por %p100, %p101
    %p104 = scmp.ne.s32.totalorder %s87, %s103
    %p105 = scmp.eq.s32.totalorder %s15, 0
    %p106 = por %p104, %p105
    %s107 = ssub.s32 %s16, %s28
    %s108 = ssub.s32 %s17, %s24
    %s109 = sor.u32 %s107, %s108
    %p110 = scmp.eq.s32.totalorder %s109, 0
    %s112 = sadd.s32 %s111, 1
    %s113 = scalar_select %p110, %s111, %s112
    %p116 = pneg %p110
    %p117 = scmp.eq.s32.totalorder %s9, 1
    %p118 = por %p116, %p117
    %p119 = scmp.ne.s32.totalorder %s111, %s114
    %p120 = scmp.eq.s32.totalorder %s9, 0
    %p121 = por %p119, %p120
    %p122 = scmp.ne.s32.totalorder %s111, %s114
    %p123 = scmp.eq.s32.totalorder %s14, 1
    %p124 = por %p122, %p123
    %p125 = scmp.ne.s32.totalorder %s114, %s115
    %p126 = scmp.eq.s32.totalorder %s14, 0
    %p127 = por %p125, %p126
    %p128 = scmp.ne.s32.totalorder %s114, %s115
    %p129 = scmp.eq.s32.totalorder %s15, 1
    %p130 = por %p128, %p129
    %p132 = scmp.ne.s32.totalorder %s115, %s131
    %p133 = scmp.eq.s32.totalorder %s15, 0
    %p134 = por %p132, %p133
    %p135 = scmp.le.s32.totalorder 1, %s9
    %p136 = scmp.lt.s32.totalorder %s9, 3
    %p137 = pnand %p135, %p136
    %p138 = pneg %p137
    // Predicated region
    $region9: #{two_stream_forward.18} parent=5 // pred_check
      _
    $region10: #{two_stream_forward.18} parent=5 // pred_check_branch
      %140 = sbr.rel (%p137) target = $region12
    $region11: #{two_stream_forward.18} parent=5 // pred_region
      %s141 = ssub.s32 %s9, 1
      // Predicated region
      $region13: #{two_stream_forward.18} parent=11 // pred_check
        %p142 = pneg %p73
      $region14: #{two_stream_forward.18} parent=11 // pred_check_branch
        %144 = sbr.rel (%p142) target = $region16
      $region15: #{two_stream_forward.18} parent=11 // pred_region
        %p145 = scmp.lt.s32.totalorder %s19, 0
        %s146 = scalar_select %p145, %s19, 0
        %s147 = smul.addr %s146, 4
        %s148 = scalar_lea.vmem %s1, %s147
      $region16: #{two_stream_forward.18} parent=11 // pred_fallthru
        _
      // Predicated region
      $region17: #{two_stream_forward.18} parent=11 // pred_check
        %p149 = pneg %p99
      $region18: #{two_stream_forward.18} parent=11 // pred_check_branch
        %151 = sbr.rel (%p149) target = $region20
      $region19: #{two_stream_forward.18} parent=11 // pred_region
        %p152 = scmp.lt.s32.totalorder %s19, 0
        %s153 = scalar_select %p152, %s19, 0
        %s154 = smul.addr %s153, 2
        %s155 = scalar_lea.vmem %s2, %s154
      $region20: #{two_stream_forward.18} parent=11 // pred_fallthru
        _
    $region12: #{two_stream_forward.18} parent=5 // pred_fallthru
      _
    %p156 = scmp.lt.s32.totalorder %s9, 2
    // Predicated region
    $region21: #{two_stream_forward.18} parent=5 // pred_check
      %p157 = pneg %p156
    $region22: #{two_stream_forward.18} parent=5 // pred_check_branch
      %159 = sbr.rel (%p157) target = $region24
    $region23: #{two_stream_forward.18} parent=5 // pred_region
      // Predicated region
      $region25: #{two_stream_forward.18} parent=23 // pred_check
        %p160 = pneg %p41
      $region26: #{two_stream_forward.18} parent=23 // pred_check_branch
        %162 = sbr.rel (%p160) target = $region28
      $region27: #{two_stream_forward.18} parent=23 // pred_region
        %s163 = smul.u32 8, %s16
        %p164 = scmp.lt.s32.totalorder %s163, 15
        %s165 = scalar_select %p164, %s163, 15
        %s166 = smul.addr %s165, 2
        %s167 = smul.addr %s166, 4
        %s168 = scalar_lea.vmem %s0, %s167
        %s169 = smul.u32 8, %s16
      $region28: #{two_stream_forward.18} parent=23 // pred_fallthru
        _
    $region24: #{two_stream_forward.18} parent=5 // pred_fallthru
      _
    %p170 = scmp.le.s32.totalorder 1, %s9
    %p171 = scmp.lt.s32.totalorder %s9, 3
    %p172 = pnand %p170, %p171
    %p173 = pneg %p172
    // Predicated region
    $region29: #{two_stream_forward.18} parent=5 // pred_check
      _
    $region30: #{two_stream_forward.18} parent=5 // pred_check_branch
      %175 = sbr.rel (%p172) target = $region32
    $region31: #{two_stream_forward.18} parent=5 // pred_region
      %s176 = ssub.s32 %s9, 1
      %s177 = smul.u32 8, %s18
      %p178 = scmp.lt.s32.totalorder %s177, 15
      %s179 = scalar_select %p178, %s177, 15
      %s180 = smul.addr %s179, 2
      %s181 = smul.addr %s180, 4
      %s182 = scalar_lea.vmem %s0, %s181
      %p183 = pneg %p47
      %p184 = pneg %p44
      %p185 = scmp.lt.s32.totalorder %s19, 0
      %s186 = scalar_select %p185, %s19, 0
      %s187 = smul.addr %s186, 4
      %s188 = scalar_lea.vmem %s1, %s187
      %p189 = pneg %p73
      %p190 = pneg %p70
      %p191 = scmp.lt.s32.totalorder %s19, 0
      %s192 = scalar_select %p191, %s19, 0
      %s193 = smul.addr %s192, 2
      %s194 = scalar_lea.vmem %s2, %s193
      %p195 = pneg %p99
      %p196 = pneg %p96
      %p197 = pneg %p127
      %p198 = pneg %p124
      %s199 = smul.u32 8, %s18
      %p200 = scmp.lt.s32.totalorder %s199, 15
      %s201 = scalar_select %p200, %s199, 15
      %p202 = scmp.lt.s32.totalorder %s19, 0
      %s203 = scalar_select %p202, %s19, 0
      %s204 = sadd.s32 %s203, %s201
      %s205 = smul.addr %s204, 4
      %s206 = scalar_lea.vmem %s3, %s205
      %s207 = smul.u32 8, %s18
      %p208 = scmp.lt.s32.totalorder %s207, 15
      %s209 = scalar_select %p208, %s207, 15
      %s210 = smul.addr %s209, 2
      %s211 = smul.addr %s210, 4
      %s212 = scalar_lea.vmem %s0, %s211
      %s213 = smul.u32 8, %s18
      %p214 = scmp.lt.s32.totalorder %s19, 0
      %s215 = scalar_select %p214, %s19, 0
      %s216 = smul.addr %s215, 4
      %s217 = scalar_lea.vmem %s1, %s216
      %p218 = scmp.lt.s32.totalorder %s19, 0
      %s219 = scalar_select %p218, %s19, 0
      %s220 = smul.addr %s219, 2
      %s221 = scalar_lea.vmem %s2, %s220
      %s222 = smul.u32 8, %s18
      %p223 = scmp.lt.s32.totalorder %s222, 15
      %s224 = scalar_select %p223, %s222, 15
      %p225 = scmp.lt.s32.totalorder %s19, 0
      %s226 = scalar_select %p225, %s19, 0
      %s227 = sadd.s32 %s226, %s224
      %s228 = smul.addr %s227, 4
      %s229 = scalar_lea.vmem %s3, %s228
      %s230 = smul.u32 8, %s18
      %v232 = vld [vmem:[%s212] sm:$0xff]
      %v233 = vld [vmem:[%s212 + $0x8] sm:$0xff]
      %v234 = vld [vmem:[%s212 + $0x10] sm:$0xff]
      %v235 = vld [vmem:[%s212 + $0x18] sm:$0xff]
      %v236 = vld [vmem:[%s212 + $0x20] sm:$0xff]
      %v237 = vld [vmem:[%s212 + $0x28] sm:$0xff]
      %v238 = vld [vmem:[%s212 + $0x30] sm:$0xff]
      %v239 = vld [vmem:[%s212 + $0x38] sm:$0xff]
      %v240 = vld [vmem:[%s217] sm:$0xf]
      %v241 = vld [vmem:[%s217 + $0x4] sm:$0xf]
      %v242 = vld [vmem:[%s217 + $0x8] sm:$0xf]
      %v243 = vld [vmem:[%s217 + $0xc] sm:$0xf]
      %v244 = vld [vmem:[%s217 + $0x10] sm:$0xf]
      %v245 = vld [vmem:[%s217 + $0x14] sm:$0xf]
      %v246 = vld [vmem:[%s217 + $0x18] sm:$0xf]
      %v247 = vld [vmem:[%s217 + $0x1c] sm:$0xf]
      %v248 = vld [vmem:[%s217 + $0x20] sm:$0xf]
      %v249 = vld [vmem:[%s217 + $0x24] sm:$0xf]
      %v250 = vld [vmem:[%s217 + $0x28] sm:$0xf]
      %v251 = vld [vmem:[%s217 + $0x2c] sm:$0xf]
      %v252 = vld [vmem:[%s217 + $0x30] sm:$0xf]
      %v253 = vld [vmem:[%s217 + $0x34] sm:$0xf]
      %v254 = vld [vmem:[%s217 + $0x38] sm:$0xf]
      %v255 = vld [vmem:[%s217 + $0x3c] sm:$0xf]
      %v256 = vld [vmem:[%s217 + $0x40] sm:$0xf]
      %v257 = vld [vmem:[%s217 + $0x44] sm:$0xf]
      %v258 = vld [vmem:[%s217 + $0x48] sm:$0xf]
      %v259 = vld [vmem:[%s217 + $0x4c] sm:$0xf]
      %v260 = vld [vmem:[%s217 + $0x50] sm:$0xf]
      %v261 = vld [vmem:[%s217 + $0x54] sm:$0xf]
      %v262 = vld [vmem:[%s217 + $0x58] sm:$0xf]
      %v263 = vld [vmem:[%s217 + $0x5c] sm:$0xf]
      %v264 = vld [vmem:[%s217 + $0x60] sm:$0xf]
      %v265 = vld [vmem:[%s217 + $0x64] sm:$0xf]
      %v266 = vld [vmem:[%s217 + $0x68] sm:$0xf]
      %v267 = vld [vmem:[%s217 + $0x6c] sm:$0xf]
      %v268 = vld [vmem:[%s217 + $0x70] sm:$0xf]
      %v269 = vld [vmem:[%s217 + $0x74] sm:$0xf]
      %v270 = vld [vmem:[%s217 + $0x78] sm:$0xf]
      %v271 = vld [vmem:[%s217 + $0x7c] sm:$0xf]
      %v280 = vunpack.c.l.b16 %v232
      %v281 = vunpack.c.h.b16 %v232
      %v282 = vunpack.c.l.b16 %v233
      %v283 = vunpack.c.h.b16 %v233
      %v284 = vunpack.c.l.b16 %v234
      %v285 = vunpack.c.h.b16 %v234
      %v286 = vunpack.c.l.b16 %v235
      %v287 = vunpack.c.h.b16 %v235
      %v288 = vunpack.c.l.b16 %v236
      %v289 = vunpack.c.h.b16 %v236
      %v290 = vunpack.c.l.b16 %v237
      %v291 = vunpack.c.h.b16 %v237
      %v292 = vunpack.c.l.b16 %v238
      %v293 = vunpack.c.h.b16 %v238
      %v294 = vunpack.c.l.b16 %v239
      %v295 = vunpack.c.h.b16 %v239
      %v296 = vpack.c.b16 %v282, %v280
      %v297 = vpack.c.b16 %v283, %v281
      %v298 = vpack.c.b16 %v286, %v284
      %v299 = vpack.c.b16 %v287, %v285
      %v300 = vpack.c.b16 %v290, %v288
      %v301 = vpack.c.b16 %v291, %v289
      %v302 = vpack.c.b16 %v294, %v292
      %v303 = vpack.c.b16 %v295, %v293
      %v344 = vunpack.c.l.b16 %v240
      %v345 = vunpack.c.l.b16 %v241
      %v346 = vunpack.c.l.b16 %v242
      %v347 = vunpack.c.l.b16 %v243
      %v348 = vunpack.c.l.b16 %v244
      %v349 = vunpack.c.l.b16 %v245
      %v350 = vunpack.c.l.b16 %v246
      %v351 = vunpack.c.l.b16 %v247
      %v352 = vunpack.c.l.b16 %v248
      %v353 = vunpack.c.l.b16 %v249
      %v354 = vunpack.c.l.b16 %v250
      %v355 = vunpack.c.l.b16 %v251
      %v356 = vunpack.c.l.b16 %v252
      %v357 = vunpack.c.l.b16 %v253
      %v358 = vunpack.c.l.b16 %v254
      %v359 = vunpack.c.l.b16 %v255
      %v360 = vunpack.c.l.b16 %v256
      %v361 = vunpack.c.l.b16 %v257
      %v362 = vunpack.c.l.b16 %v258
      %v363 = vunpack.c.l.b16 %v259
      %v364 = vunpack.c.l.b16 %v260
      %v365 = vunpack.c.l.b16 %v261
      %v366 = vunpack.c.l.b16 %v262
      %v367 = vunpack.c.l.b16 %v263
      %v368 = vunpack.c.l.b16 %v264
      %v369 = vunpack.c.l.b16 %v265
      %v370 = vunpack.c.l.b16 %v266
      %v371 = vunpack.c.l.b16 %v267
      %v372 = vunpack.c.l.b16 %v268
      %v373 = vunpack.c.l.b16 %v269
      %v374 = vunpack.c.l.b16 %v270
      %v375 = vunpack.c.l.b16 %v271
      %v376 = vpack.c.b16 %v345, %v344
      %v377 = vpack.c.b16 %v347, %v346
      %v378 = vpack.c.b16 %v349, %v348
      %v379 = vpack.c.b16 %v351, %v350
      %v380 = vpack.c.b16 %v353, %v352
      %v381 = vpack.c.b16 %v355, %v354
      %v382 = vpack.c.b16 %v357, %v356
      %v383 = vpack.c.b16 %v359, %v358
      %v384 = vpack.c.b16 %v361, %v360
      %v385 = vpack.c.b16 %v363, %v362
      %v386 = vpack.c.b16 %v365, %v364
      %v387 = vpack.c.b16 %v367, %v366
      %v388 = vpack.c.b16 %v369, %v368
      %v389 = vpack.c.b16 %v371, %v370
      %v390 = vpack.c.b16 %v373, %v372
      %v391 = vpack.c.b16 %v375, %v374
      %408 = vmatprep.subr.bf16.mxu0 0
      %409 = vmatpush1.bf16.msra.mxu0 %v376
      %410 = vmatprep.subr.bf16.mxu0 0
      %411 = vmatpush1.bf16.msra.mxu0 %v377
      %412 = vmatprep.subr.bf16.mxu0 0
      %413 = vmatpush1.bf16.msra.mxu0 %v378
      %414 = vmatprep.subr.bf16.mxu0 0
      %415 = vmatpush1.bf16.msra.mxu0 %v379
      %416 = vmatprep.subr.bf16.mxu0 0
      %417 = vmatpush1.bf16.msra.mxu0 %v380
      %418 = vmatprep.subr.bf16.mxu0 0
      %419 = vmatpush1.bf16.msra.mxu0 %v381
      %420 = vmatprep.subr.bf16.mxu0 0
      %421 = vmatpush1.bf16.msra.mxu0 %v382
      %422 = vmatprep.subr.bf16.mxu0 0
      %423 = vmatpush1.bf16.msra.mxu0 %v383
      %424 = vmatprep.subr.bf16.mxu0 0
      %425 = vmatpush1.bf16.msra.mxu0 %v384
      %426 = vmatprep.subr.bf16.mxu0 0
      %427 = vmatpush1.bf16.msra.mxu0 %v385
      %428 = vmatprep.subr.bf16.mxu0 0
      %429 = vmatpush1.bf16.msra.mxu0 %v386
      %430 = vmatprep.subr.bf16.mxu0 0
      %431 = vmatpush1.bf16.msra.mxu0 %v387
      %432 = vmatprep.subr.bf16.mxu0 0
      %433 = vmatpush1.bf16.msra.mxu0 %v388
      %434 = vmatprep.subr.bf16.mxu0 0
      %435 = vmatpush1.bf16.msra.mxu0 %v389
      %436 = vmatprep.subr.bf16.mxu0 0
      %437 = vmatpush1.bf16.msra.mxu0 %v390
      %438 = vmatprep.subr.bf16.mxu0 0
      %439 = vmatpush1.bf16.msra.mxu0 %v391
      %440 = vmatprep.mubr.bf16.mxu0 %v297
      %441 = vmatmul.mubr.bf16.gmra.mrb[0].mxu0 %v296
      %v442 = vpop.f32.mrb[0].mxu0
      %v443 = vadd.f32 0.0, %v442
      %v444 = vpop.f32.mrb[0].mxu0
      %v445 = vpop.f32.mrb[0].mxu0
      %v446 = vadd.f32 0.0, %v445
      %v447 = vpop.f32.mrb[0].mxu0
      %448 = vmatprep.mubr.bf16.mxu0 %v299
      %449 = vmatmul.mubr.bf16.gmra.mrb[0].mxu0 %v298
      %v450 = vpop.f32.mrb[0].mxu0
      %v451 = vadd.f32 0.0, %v450
      %v452 = vpop.f32.mrb[0].mxu0
      %v453 = vpop.f32.mrb[0].mxu0
      %v454 = vadd.f32 0.0, %v453
      %v455 = vpop.f32.mrb[0].mxu0
      %456 = vmatprep.mubr.bf16.mxu0 %v301
      %457 = vmatmul.mubr.bf16.gmra.mrb[0].mxu0 %v300
      %v458 = vpop.f32.mrb[0].mxu0
      %v459 = vadd.f32 0.0, %v458
      %v460 = vpop.f32.mrb[0].mxu0
      %v461 = vpop.f32.mrb[0].mxu0
      %v462 = vadd.f32 0.0, %v461
      %v463 = vpop.f32.mrb[0].mxu0
      %464 = vmatprep.mubr.bf16.mxu0 %v303
      %465 = vmatmul.mubr.bf16.gmra.mrb[0].mxu0 %v302
      %v466 = vpop.f32.mrb[0].mxu0
      %v467 = vadd.f32 0.0, %v466
      %v468 = vpop.f32.mrb[0].mxu0
      %v469 = vpop.f32.mrb[0].mxu0
      %v470 = vadd.f32 0.0, %v469
      %v471 = vpop.f32.mrb[0].mxu0
      %472 = vdwg.mxu0
      %v473 = vld [vmem:[%s221] sm:$0x1]
      %v474 = vlaneseq
      %v475 = vshrl.u32 %v474, 7
      %v476 = vsub.s32 0, %v475
      %v477 = vrot.slane %v473, %v476
      %v478 = vmul.f32 %v443, %v477
      %v479 = vmul.f32 %v446, %v477
      %v480 = vmul.f32 %v451, %v477
      %v481 = vmul.f32 %v454, %v477
      %v482 = vmul.f32 %v459, %v477
      %v483 = vmul.f32 %v462, %v477
      %v484 = vmul.f32 %v467, %v477
      %v485 = vmul.f32 %v470, %v477
      %v486 = vld [vmem:[%s221 + $0x1] sm:$0x1]
      %v487 = vlaneseq
      %v488 = vshrl.u32 %v487, 7
      %v489 = vsub.s32 0, %v488
      %v490 = vrot.slane %v486, %v489
      %v491 = vadd.f32 %v478, %v490
      %v492 = vadd.f32 %v479, %v490
      %v493 = vadd.f32 %v480, %v490
      %v494 = vadd.f32 %v481, %v490
      %v495 = vadd.f32 %v482, %v490
      %v496 = vadd.f32 %v483, %v490
      %v497 = vadd.f32 %v484, %v490
      %v498 = vadd.f32 %v485, %v490
      %v499 = vmax.f32 %v491, 0.0
      %v500 = vmax.f32 %v492, 0.0
      %v501 = vmax.f32 %v493, 0.0
      %v502 = vmax.f32 %v494, 0.0
      %v503 = vmax.f32 %v495, 0.0
      %v504 = vmax.f32 %v496, 0.0
      %v505 = vmax.f32 %v497, 0.0
      %v506 = vmax.f32 %v498, 0.0
      %v507 = vpack.c.bf16 %v500, %v499
      %v508 = vpack.c.bf16 %v502, %v501
      %v509 = vpack.c.bf16 %v504, %v503
      %v510 = vpack.c.bf16 %v506, %v505
      %v515 = vunpack.c.l.b16 %v507
      %v516 = vunpack.c.h.b16 %v507
      %v517 = vunpack.c.l.b16 %v508
      %v518 = vunpack.c.h.b16 %v508
      %v519 = vunpack.c.l.b16 %v509
      %v520 = vunpack.c.h.b16 %v509
      %v521 = vunpack.c.l.b16 %v510
      %v522 = vunpack.c.h.b16 %v510
      %v523 = vpack.c.b16 %v515, %v515
      %v524 = vpack.c.b16 %v516, %v516
      %v525 = vpack.c.b16 %v517, %v517
      %v526 = vpack.c.b16 %v518, %v518
      %v527 = vpack.c.b16 %v519, %v519
      %v528 = vpack.c.b16 %v520, %v520
      %v529 = vpack.c.b16 %v521, %v521
      %v530 = vpack.c.b16 %v522, %v522
      %539 = vst [vmem:[%s229] sm:$0xf] %v523
      %540 = vst [vmem:[%s229 + $0x4] sm:$0xf] %v524
      %541 = vst [vmem:[%s229 + $0x8] sm:$0xf] %v525
      %542 = vst [vmem:[%s229 + $0xc] sm:$0xf] %v526
      %543 = vst [vmem:[%s229 + $0x10] sm:$0xf] %v527
      %544 = vst [vmem:[%s229 + $0x14] sm:$0xf] %v528
      %545 = vst [vmem:[%s229 + $0x18] sm:$0xf] %v529
      %546 = vst [vmem:[%s229 + $0x1c] sm:$0xf] %v530
      %s547 = smul.u32 8, %s18
      %p548 = scmp.lt.s32.totalorder %s547, 15
      %s549 = scalar_select %p548, %s547, 15
      %p550 = scmp.lt.s32.totalorder %s19, 0
      %s551 = scalar_select %p550, %s19, 0
      %s552 = sadd.s32 %s551, %s549
      %s553 = smul.addr %s552, 4
      %s554 = scalar_lea.vmem %s3, %s553
      // Predicated region
      $region33: #{two_stream_forward.18} parent=31 // pred_check
        %p555 = pneg %p124
      $region34: #{two_stream_forward.18} parent=31 // pred_check_branch
        %557 = sbr.rel (%p555) target = $region36
      $region35: #{two_stream_forward.18} parent=31 // pred_region
        %s558 = smul.u32 8, %s18
      $region36: #{two_stream_forward.18} parent=31 // pred_fallthru
        _
    $region32: #{two_stream_forward.18} parent=5 // pred_fallthru
      _
    %p559 = scmp.le.s32.totalorder 2, %s9
    // Predicated region
    $region37: #{two_stream_forward.18} parent=5 // pred_check
      %p560 = pneg %p559
    $region38: #{two_stream_forward.18} parent=5 // pred_check_branch
      %562 = sbr.rel (%p560) target = $region40
    $region39: #{two_stream_forward.18} parent=5 // pred_region
      %s563 = ssub.s32 %s9, 2
      // Predicated region
      $region41: #{two_stream_forward.18} parent=39 // pred_check
        %p564 = pneg %p130
      $region42: #{two_stream_forward.18} parent=39 // pred_check_branch
        %566 = sbr.rel (%p564) target = $region44
      $region43: #{two_stream_forward.18} parent=39 // pred_region
        %s567 = smul.u32 8, %s20
        %p568 = scmp.lt.s32.totalorder %s567, 15
        %s569 = scalar_select %p568, %s567, 15
        %p570 = scmp.lt.s32.totalorder %s21, 0
        %s571 = scalar_select %p570, %s21, 0
        %s572 = sadd.s32 %s571, %s569
        %s573 = smul.addr %s572, 4
        %s574 = scalar_lea.vmem %s3, %s573
      $region44: #{two_stream_forward.18} parent=39 // pred_fallthru
        _
    $region40: #{two_stream_forward.18} parent=5 // pred_fallthru
      _
  $region6: #{two_stream_forward.18} parent=0 // loop_footer
    %s13 = sadd.s32 1, %s9
  $region7: #{two_stream_forward.18} parent=0 // loop_footer_branch
    %8 = sbr.rel target = $region3
  $region8: #{two_stream_forward.18} parent=0 // loop_exit
    _

// kernel: two_stream_forward.19
$region0: #{two_stream_forward.19}
  #allocation0 [shape = 'u32[]', space=smem, size = 0x4, offset = 0x4, fixed_abs, tag = 'smem constant byte address 0x4 - core index']
  #allocation1 [shape = 'u32[144,128]{1,0:T(1,128)}', space=vmem, size = 0x12000, scoped, tag = 'internal scratch']
  %s0 = inlined_call_operand.vmem [shape: bf16[32,128], index: 0, kind: input, shape index: {}]
  %s1 = inlined_call_operand.vmem [shape: bf16[128,128], index: 1, kind: input, shape index: {}]
  %s2 = inlined_call_operand.vmem [shape: f32[2,128], index: 2, kind: input, shape index: {}]
  %s3 = inlined_call_operand.vmem [shape: bf16[32,128], index: 3, kind: output, shape index: {}]
  %s4 = sld [smem:[#allocation0]]
  $region45: #{two_stream_forward.19} parent=0
    _
  %s6 = ssub.s32 1, %s4
  %s7 = scalar_select 0, %s6, %s4
  loop: start=0, step=1, limit=4
  $region2: #{two_stream_forward.19} parent=0 // loop_pre_header
    _
  $region3: #{two_stream_forward.19} parent=0 // loop_header
    %s9 = sphi 0, %s13
    %p10 = scmp.ge.s32.totalorder %s9, 4
    %s16 = sphi 0, %s28
    %s17 = sphi 0, %s24
    %s18 = sphi 0, %s16
    %s19 = sphi 0, %s17
    %s20 = sphi 0, %s18
    %s21 = sphi 0, %s19
    %s31 = sphi 0, %s33
    %s34 = sphi 0, %s31
    %s35 = sphi 0, %s34
    %s51 = sphi 0, %s35
    %s57 = sphi 0, %s59
    %s60 = sphi 0, %s57
    %s61 = sphi 0, %s60
    %s77 = sphi 0, %s61
    %s83 = sphi 0, %s85
    %s86 = sphi 0, %s83
    %s87 = sphi 0, %s86
    %s103 = sphi 0, %s87
    %s111 = sphi 0, %s113
    %s114 = sphi 0, %s111
    %s115 = sphi 0, %s114
    %s131 = sphi 0, %s115
  $region4: #{two_stream_forward.19} parent=0 // loop_header_branch
    %12 = sbr.rel (%p10) target = $region8
  $region5: #{two_stream_forward.19} parent=0 // loop_body
    %s14 = ssub.s32 %s9, 1
    %s15 = ssub.s32 %s9, 2
    %s22 = sadd.s32 1, %s17
    %p23 = scmp.ge.s32.totalorder %s22, 1
    %s24 = scalar_select %p23, 0, %s22
    %s25 = sadd.s32 1, %s16
    %s26 = scalar_select %p23, %s25, %s16
    %p27 = scmp.ge.s32.totalorder %s26, 2
    %s28 = scalar_select %p27, 0, %s26
    %s29 = ssub.s32 %s16, %s28
    %p30 = scmp.eq.s32.totalorder %s29, 0
    %s32 = sadd.s32 %s31, 1
    %s33 = scalar_select %p30, %s31, %s32
    %p36 = pneg %p30
    %p37 = scmp.eq.s32.totalorder %s9, 1
    %p38 = por %p36, %p37
    %p39 = scmp.ne.s32.totalorder %s31, %s34
    %p40 = scmp.eq.s32.totalorder %s9, 0
    %p41 = por %p39, %p40
    %p42 = scmp.ne.s32.totalorder %s31, %s34
    %p43 = scmp.eq.s32.totalorder %s14, 1
    %p44 = por %p42, %p43
    %p45 = scmp.ne.s32.totalorder %s34, %s35
    %p46 = scmp.eq.s32.totalorder %s14, 0
    %p47 = por %p45, %p46
    %p48 = scmp.ne.s32.totalorder %s34, %s35
    %p49 = scmp.eq.s32.totalorder %s15, 1
    %p50 = por %p48, %p49
    %p52 = scmp.ne.s32.totalorder %s35, %s51
    %p53 = scmp.eq.s32.totalorder %s15, 0
    %p54 = por %p52, %p53
    %s55 = ssub.s32 %s17, %s24
    %p56 = scmp.eq.s32.totalorder %s55, 0
    %s58 = sadd.s32 %s57, 1
    %s59 = scalar_select %p56, %s57, %s58
    %p62 = pneg %p56
    %p63 = scmp.eq.s32.totalorder %s9, 1
    %p64 = por %p62, %p63
    %p65 = scmp.ne.s32.totalorder %s57, %s60
    %p66 = scmp.eq.s32.totalorder %s9, 0
    %p67 = por %p65, %p66
    %p68 = scmp.ne.s32.totalorder %s57, %s60
    %p69 = scmp.eq.s32.totalorder %s14, 1
    %p70 = por %p68, %p69
    %p71 = scmp.ne.s32.totalorder %s60, %s61
    %p72 = scmp.eq.s32.totalorder %s14, 0
    %p73 = por %p71, %p72
    %p74 = scmp.ne.s32.totalorder %s60, %s61
    %p75 = scmp.eq.s32.totalorder %s15, 1
    %p76 = por %p74, %p75
    %p78 = scmp.ne.s32.totalorder %s61, %s77
    %p79 = scmp.eq.s32.totalorder %s15, 0
    %p80 = por %p78, %p79
    %s81 = ssub.s32 %s17, %s24
    %p82 = scmp.eq.s32.totalorder %s81, 0
    %s84 = sadd.s32 %s83, 1
    %s85 = scalar_select %p82, %s83, %s84
    %p88 = pneg %p82
    %p89 = scmp.eq.s32.totalorder %s9, 1
    %p90 = por %p88, %p89
    %p91 = scmp.ne.s32.totalorder %s83, %s86
    %p92 = scmp.eq.s32.totalorder %s9, 0
    %p93 = por %p91, %p92
    %p94 = scmp.ne.s32.totalorder %s83, %s86
    %p95 = scmp.eq.s32.totalorder %s14, 1
    %p96 = por %p94, %p95
    %p97 = scmp.ne.s32.totalorder %s86, %s87
    %p98 = scmp.eq.s32.totalorder %s14, 0
    %p99 = por %p97, %p98
    %p100 = scmp.ne.s32.totalorder %s86, %s87
    %p101 = scmp.eq.s32.totalorder %s15, 1
    %p102 = por %p100, %p101
    %p104 = scmp.ne.s32.totalorder %s87, %s103
    %p105 = scmp.eq.s32.totalorder %s15, 0
    %p106 = por %p104, %p105
    %s107 = ssub.s32 %s16, %s28
    %s108 = ssub.s32 %s17, %s24
    %s109 = sor.u32 %s107, %s108
    %p110 = scmp.eq.s32.totalorder %s109, 0
    %s112 = sadd.s32 %s111, 1
    %s113 = scalar_select %p110, %s111, %s112
    %p116 = pneg %p110
    %p117 = scmp.eq.s32.totalorder %s9, 1
    %p118 = por %p116, %p117
    %p119 = scmp.ne.s32.totalorder %s111, %s114
    %p120 = scmp.eq.s32.totalorder %s9, 0
    %p121 = por %p119, %p120
    %p122 = scmp.ne.s32.totalorder %s111, %s114
    %p123 = scmp.eq.s32.totalorder %s14, 1
    %p124 = por %p122, %p123
    %p125 = scmp.ne.s32.totalorder %s114, %s115
    %p126 = scmp.eq.s32.totalorder %s14, 0
    %p127 = por %p125, %p126
    %p128 = scmp.ne.s32.totalorder %s114, %s115
    %p129 = scmp.eq.s32.totalorder %s15, 1
    %p130 = por %p128, %p129
    %p132 = scmp.ne.s32.totalorder %s115, %s131
    %p133 = scmp.eq.s32.totalorder %s15, 0
    %p134 = por %p132, %p133
    %p135 = scmp.le.s32.totalorder 1, %s9
    %p136 = scmp.lt.s32.totalorder %s9, 3
    %p137 = pnand %p135, %p136
    %p138 = pneg %p137
    // Predicated region
    $region9: #{two_stream_forward.19} parent=5 // pred_check
      _
    $region10: #{two_stream_forward.19} parent=5 // pred_check_branch
      %140 = sbr.rel (%p137) target = $region12
    $region11: #{two_stream_forward.19} parent=5 // pred_region
      %s141 = ssub.s32 %s9, 1
      // Predicated region
      $region13: #{two_stream_forward.19} parent=11 // pred_check
        %p142 = pneg %p73
      $region14: #{two_stream_forward.19} parent=11 // pred_check_branch
        %144 = sbr.rel (%p142) target = $region16
      $region15: #{two_stream_forward.19} parent=11 // pred_region
        %p145 = scmp.lt.s32.totalorder %s19, 0
        %s146 = scalar_select %p145, %s19, 0
        %s147 = smul.addr %s146, 4
        %s148 = scalar_lea.vmem %s1, %s147
      $region16: #{two_stream_forward.19} parent=11 // pred_fallthru
        _
      // Predicated region
      $region17: #{two_stream_forward.19} parent=11 // pred_check
        %p149 = pneg %p99
      $region18: #{two_stream_forward.19} parent=11 // pred_check_branch
        %151 = sbr.rel (%p149) target = $region20
      $region19: #{two_stream_forward.19} parent=11 // pred_region
        %p152 = scmp.lt.s32.totalorder %s19, 0
        %s153 = scalar_select %p152, %s19, 0
        %s154 = smul.addr %s153, 2
        %s155 = scalar_lea.vmem %s2, %s154
      $region20: #{two_stream_forward.19} parent=11 // pred_fallthru
        _
    $region12: #{two_stream_forward.19} parent=5 // pred_fallthru
      _
    %p156 = scmp.lt.s32.totalorder %s9, 2
    // Predicated region
    $region21: #{two_stream_forward.19} parent=5 // pred_check
      %p157 = pneg %p156
    $region22: #{two_stream_forward.19} parent=5 // pred_check_branch
      %159 = sbr.rel (%p157) target = $region24
    $region23: #{two_stream_forward.19} parent=5 // pred_region
      // Predicated region
      $region25: #{two_stream_forward.19} parent=23 // pred_check
        %p160 = pneg %p41
      $region26: #{two_stream_forward.19} parent=23 // pred_check_branch
        %162 = sbr.rel (%p160) target = $region28
      $region27: #{two_stream_forward.19} parent=23 // pred_region
        %s163 = smul.u32 2, %s16
        %p164 = scmp.lt.s32.totalorder %s163, 3
        %s165 = scalar_select %p164, %s163, 3
        %s166 = smul.addr %s165, 4
        %s167 = scalar_lea.vmem %s0, %s166
        %s168 = smul.u32 2, %s16
      $region28: #{two_stream_forward.19} parent=23 // pred_fallthru
        _
    $region24: #{two_stream_forward.19} parent=5 // pred_fallthru
      _
    %p169 = scmp.le.s32.totalorder 1, %s9
    %p170 = scmp.lt.s32.totalorder %s9, 3
    %p171 = pnand %p169, %p170
    %p172 = pneg %p171
    // Predicated region
    $region29: #{two_stream_forward.19} parent=5 // pred_check
      _
    $region30: #{two_stream_forward.19} parent=5 // pred_check_branch
      %174 = sbr.rel (%p171) target = $region32
    $region31: #{two_stream_forward.19} parent=5 // pred_region
      %s175 = ssub.s32 %s9, 1
      %s176 = smul.u32 2, %s18
      %p177 = scmp.lt.s32.totalorder %s176, 3
      %s178 = scalar_select %p177, %s176, 3
      %s179 = smul.addr %s178, 4
      %s180 = scalar_lea.vmem %s0, %s179
      %p181 = pneg %p47
      %p182 = pneg %p44
      %p183 = scmp.lt.s32.totalorder %s19, 0
      %s184 = scalar_select %p183, %s19, 0
      %s185 = smul.addr %s184, 4
      %s186 = scalar_lea.vmem %s1, %s185
      %p187 = pneg %p73
      %p188 = pneg %p70
      %p189 = scmp.lt.s32.totalorder %s19, 0
      %s190 = scalar_select %p189, %s19, 0
      %s191 = smul.addr %s190, 2
      %s192 = scalar_lea.vmem %s2, %s191
      %p193 = pneg %p99
      %p194 = pneg %p96
      %p195 = pneg %p127
      %p196 = pneg %p124
      %s197 = smul.u32 2, %s18
      %p198 = scmp.lt.s32.totalorder %s197, 3
      %s199 = scalar_select %p198, %s197, 3
      %p200 = scmp.lt.s32.totalorder %s19, 0
      %s201 = scalar_select %p200, %s19, 0
      %s202 = sadd.s32 %s201, %s199
      %s203 = smul.addr %s202, 4
      %s204 = scalar_lea.vmem %s3, %s203
      %s205 = smul.u32 2, %s18
      %p206 = scmp.lt.s32.totalorder %s205, 3
      %s207 = scalar_select %p206, %s205, 3
      %s208 = smul.addr %s207, 4
      %s209 = scalar_lea.vmem %s0, %s208
      %s210 = smul.u32 2, %s18
      %p211 = scmp.lt.s32.totalorder %s19, 0
      %s212 = scalar_select %p211, %s19, 0
      %s213 = smul.addr %s212, 4
      %s214 = scalar_lea.vmem %s1, %s213
      %p215 = scmp.lt.s32.totalorder %s19, 0
      %s216 = scalar_select %p215, %s19, 0
      %s217 = smul.addr %s216, 2
      %s218 = scalar_lea.vmem %s2, %s217
      %s219 = smul.u32 2, %s18
      %p220 = scmp.lt.s32.totalorder %s219, 3
      %s221 = scalar_select %p220, %s219, 3
      %p222 = scmp.lt.s32.totalorder %s19, 0
      %s223 = scalar_select %p222, %s19, 0
      %s224 = sadd.s32 %s223, %s221
      %s225 = smul.addr %s224, 4
      %s226 = scalar_lea.vmem %s3, %s225
      %s227 = smul.u32 2, %s18
      %v229 = vld [vmem:[%s209] sm:$0xf]
      %v230 = vld [vmem:[%s209 + $0x4] sm:$0xf]
      %v231 = vld [vmem:[%s214] sm:$0xf]
      %v232 = vld [vmem:[%s214 + $0x4] sm:$0xf]
      %v233 = vld [vmem:[%s214 + $0x8] sm:$0xf]
      %v234 = vld [vmem:[%s214 + $0xc] sm:$0xf]
      %v235 = vld [vmem:[%s214 + $0x10] sm:$0xf]
      %v236 = vld [vmem:[%s214 + $0x14] sm:$0xf]
      %v237 = vld [vmem:[%s214 + $0x18] sm:$0xf]
      %v238 = vld [vmem:[%s214 + $0x1c] sm:$0xf]
      %v239 = vld [vmem:[%s214 + $0x20] sm:$0xf]
      %v240 = vld [vmem:[%s214 + $0x24] sm:$0xf]
      %v241 = vld [vmem:[%s214 + $0x28] sm:$0xf]
      %v242 = vld [vmem:[%s214 + $0x2c] sm:$0xf]
      %v243 = vld [vmem:[%s214 + $0x30] sm:$0xf]
      %v244 = vld [vmem:[%s214 + $0x34] sm:$0xf]
      %v245 = vld [vmem:[%s214 + $0x38] sm:$0xf]
      %v246 = vld [vmem:[%s214 + $0x3c] sm:$0xf]
      %v249 = vunpack.c.l.b16 %v229
      %v250 = vunpack.c.l.b16 %v230
      %v251 = vpack.c.b16 %v250, %v249
      %v269 = vunpack.c.l.b16 %v231
      %v270 = vunpack.c.l.b16 %v232
      %v271 = vunpack.c.l.b16 %v233
      %v272 = vunpack.c.l.b16 %v234
      %v273 = vunpack.c.l.b16 %v235
      %v274 = vunpack.c.l.b16 %v236
      %v275 = vunpack.c.l.b16 %v237
      %v276 = vunpack.c.l.b16 %v238
      %v277 = vunpack.c.l.b16 %v239
      %v278 = vunpack.c.l.b16 %v240
      %v279 = vunpack.c.l.b16 %v241
      %v280 = vunpack.c.l.b16 %v242
      %v281 = vunpack.c.l.b16 %v243
      %v282 = vunpack.c.l.b16 %v244
      %v283 = vunpack.c.l.b16 %v245
      %v284 = vunpack.c.l.b16 %v246
      %v285 = vpack.c.b16 %v270, %v269
      %v286 = vpack.c.b16 %v272, %v271
      %v287 = vpack.c.b16 %v274, %v273
      %v288 = vpack.c.b16 %v276, %v275
      %v289 = vpack.c.b16 %v278, %v277
      %v290 = vpack.c.b16 %v280, %v279
      %v291 = vpack.c.b16 %v282, %v281
      %v292 = vpack.c.b16 %v284, %v283
      %301 = vmatprep.subr.bf16.mxu0 0
      %302 = vmatpush1.bf16.msra.mxu0 %v285
      %303 = vmatprep.subr.bf16.mxu0 0
      %304 = vmatpush1.bf16.msra.mxu0 %v286
      %305 = vmatprep.subr.bf16.mxu0 0
      %306 = vmatpush1.bf16.msra.mxu0 %v287
      %307 = vmatprep.subr.bf16.mxu0 0
      %308 = vmatpush1.bf16.msra.mxu0 %v288
      %309 = vmatprep.subr.bf16.mxu0 0
      %310 = vmatpush1.bf16.msra.mxu0 %v289
      %311 = vmatprep.subr.bf16.mxu0 0
      %312 = vmatpush1.bf16.msra.mxu0 %v290
      %313 = vmatprep.subr.bf16.mxu0 0
      %314 = vmatpush1.bf16.msra.mxu0 %v291
      %315 = vmatprep.subr.bf16.mxu0 0
      %316 = vmatpush1.bf16.msra.mxu0 %v292
      %317 = vmatprep.subr.bf16.mxu0 0
      %318 = vmatpush1.bf16.msra.mxu0 0
      %319 = vmatprep.subr.bf16.mxu0 0
      %320 = vmatpush1.bf16.msra.mxu0 0
      %321 = vmatprep.subr.bf16.mxu0 0
      %322 = vmatpush1.bf16.msra.mxu0 0
      %323 = vmatprep.subr.bf16.mxu0 0
      %324 = vmatpush1.bf16.msra.mxu0 0
      %325 = vmatprep.subr.bf16.mxu0 0
      %326 = vmatpush1.bf16.msra.mxu0 0
      %327 = vmatprep.subr.bf16.mxu0 0
      %328 = vmatpush1.bf16.msra.mxu0 0
      %329 = vmatprep.subr.bf16.mxu0 0
      %330 = vmatpush1.bf16.msra.mxu0 0
      %331 = vmatprep.subr.bf16.mxu0 0
      %332 = vmatpush1.bf16.msra.mxu0 0
      %333 = vmatprep.mubr.bf16.mxu0 0
      %334 = vmatmul.mubr.bf16.gmra.mrb[0].mxu0 %v251
      %v335 = vpop.f32.mrb[0].mxu0
      %v336 = vadd.f32 0.0, %v335
      %v337 = vpop.f32.mrb[0].mxu0
      %v338 = vpop.f32.mrb[0].mxu0
      %v339 = vadd.f32 0.0, %v338
      %v340 = vpop.f32.mrb[0].mxu0
      %341 = vdwg.mxu0
      %v342 = vld [vmem:[%s218] sm:$0x1]
      %v343 = vlaneseq
      %v344 = vshrl.u32 %v343, 7
      %v345 = vsub.s32 0, %v344
      %v346 = vrot.slane %v342, %v345
      %v347 = vmul.f32 %v336, %v346
      %v348 = vmul.f32 %v339, %v346
      %v349 = vld [vmem:[%s218 + $0x1] sm:$0x1]
      %v350 = vlaneseq
      %v351 = vshrl.u32 %v350, 7
      %v352 = vsub.s32 0, %v351
      %v353 = vrot.slane %v349, %v352
      %v354 = vadd.f32 %v347, %v353
      %v355 = vadd.f32 %v348, %v353
      %v356 = vpack.c.bf16 %v355, %v354
      %v358 = vunpack.c.l.b16 %v356
      %v359 = vunpack.c.h.b16 %v356
      %v360 = vpack.c.b16 %v358, %v358
      %v361 = vpack.c.b16 %v359, %v359
      %364 = vst [vmem:[%s226] sm:$0xf] %v360
      %365 = vst [vmem:[%s226 + $0x4] sm:$0xf] %v361
      %s366 = smul.u32 2, %s18
      %p367 = scmp.lt.s32.totalorder %s366, 3
      %s368 = scalar_select %p367, %s366, 3
      %p369 = scmp.lt.s32.totalorder %s19, 0
      %s370 = scalar_select %p369, %s19, 0
      %s371 = sadd.s32 %s370, %s368
      %s372 = smul.addr %s371, 4
      %s373 = scalar_lea.vmem %s3, %s372
      // Predicated region
      $region33: #{two_stream_forward.19} parent=31 // pred_check
        %p374 = pneg %p124
      $region34: #{two_stream_forward.19} parent=31 // pred_check_branch
        %376 = sbr.rel (%p374) target = $region36
      $region35: #{two_stream_forward.19} parent=31 // pred_region
        %s377 = smul.u32 2, %s18
      $region36: #{two_stream_forward.19} parent=31 // pred_fallthru
        _
    $region32: #{two_stream_forward.19} parent=5 // pred_fallthru
      _
    %p378 = scmp.le.s32.totalorder 2, %s9
    // Predicated region
    $region37: #{two_stream_forward.19} parent=5 // pred_check
      %p379 = pneg %p378
    $region38: #{two_stream_forward.19} parent=5 // pred_check_branch
      %381 = sbr.rel (%p379) target = $region40
    $region39: #{two_stream_forward.19} parent=5 // pred_region
      %s382 = ssub.s32 %s9, 2
      // Predicated region
      $region41: #{two_stream_forward.19} parent=39 // pred_check
        %p383 = pneg %p130
      $region42: #{two_stream_forward.19} parent=39 // pred_check_branch
        %385 = sbr.rel (%p383) target = $region44
      $region43: #{two_stream_forward.19} parent=39 // pred_region
        %s386 = smul.u32 2, %s20
        %p387 = scmp.lt.s32.totalorder %s386, 3
        %s388 = scalar_select %p387, %s386, 3
        %p389 = scmp.lt.s32.totalorder %s21, 0
        %s390 = scalar_select %p389, %s21, 0
        %s391 = sadd.s32 %s390, %s388
        %s392 = smul.addr %s391, 4
        %s393 = scalar_lea.vmem %s3, %s392
      $region44: #{two_stream_forward.19} parent=39 // pred_fallthru
        _
    $region40: #{two_stream_forward.19} parent=5 // pred_fallthru
      _
  $region6: #{two_stream_forward.19} parent=0 // loop_footer
    %s13 = sadd.s32 1, %s9
  $region7: #{two_stream_forward.19} parent=0 // loop_footer_branch
    %8 = sbr.rel target = $region3
  $region8: #{two_stream_forward.19} parent=0 // loop_exit
    _

// kernel: two_stream_forward.20
$region0: #{two_stream_forward.20}
  #allocation0 [shape = 'u32[]', space=smem, size = 0x4, offset = 0x4, fixed_abs, tag = 'smem constant byte address 0x4 - core index']
  #allocation1 [shape = 'u32[144,128]{1,0:T(1,128)}', space=vmem, size = 0x12000, scoped, tag = 'internal scratch']
  %s0 = inlined_call_operand.vmem [shape: bf16[32,128], index: 0, kind: input, shape index: {}]
  %s1 = inlined_call_operand.vmem [shape: bf16[128,128], index: 1, kind: input, shape index: {}]
  %s2 = inlined_call_operand.vmem [shape: f32[2,128], index: 2, kind: input, shape index: {}]
  %s3 = inlined_call_operand.vmem [shape: bf16[32,128], index: 3, kind: output, shape index: {}]
  %s4 = sld [smem:[#allocation0]]
  $region45: #{two_stream_forward.20} parent=0
    _
  %s6 = ssub.s32 1, %s4
  %s7 = scalar_select 0, %s6, %s4
  loop: start=0, step=1, limit=4
  $region2: #{two_stream_forward.20} parent=0 // loop_pre_header
    _
  $region3: #{two_stream_forward.20} parent=0 // loop_header
    %s9 = sphi 0, %s13
    %p10 = scmp.ge.s32.totalorder %s9, 4
    %s16 = sphi 0, %s28
    %s17 = sphi 0, %s24
    %s18 = sphi 0, %s16
    %s19 = sphi 0, %s17
    %s20 = sphi 0, %s18
    %s21 = sphi 0, %s19
    %s31 = sphi 0, %s33
    %s34 = sphi 0, %s31
    %s35 = sphi 0, %s34
    %s51 = sphi 0, %s35
    %s57 = sphi 0, %s59
    %s60 = sphi 0, %s57
    %s61 = sphi 0, %s60
    %s77 = sphi 0, %s61
    %s83 = sphi 0, %s85
    %s86 = sphi 0, %s83
    %s87 = sphi 0, %s86
    %s103 = sphi 0, %s87
    %s111 = sphi 0, %s113
    %s114 = sphi 0, %s111
    %s115 = sphi 0, %s114
    %s131 = sphi 0, %s115
  $region4: #{two_stream_forward.20} parent=0 // loop_header_branch
    %12 = sbr.rel (%p10) target = $region8
  $region5: #{two_stream_forward.20} parent=0 // loop_body
    %s14 = ssub.s32 %s9, 1
    %s15 = ssub.s32 %s9, 2
    %s22 = sadd.s32 1, %s17
    %p23 = scmp.ge.s32.totalorder %s22, 1
    %s24 = scalar_select %p23, 0, %s22
    %s25 = sadd.s32 1, %s16
    %s26 = scalar_select %p23, %s25, %s16
    %p27 = scmp.ge.s32.totalorder %s26, 2
    %s28 = scalar_select %p27, 0, %s26
    %s29 = ssub.s32 %s16, %s28
    %p30 = scmp.eq.s32.totalorder %s29, 0
    %s32 = sadd.s32 %s31, 1
    %s33 = scalar_select %p30, %s31, %s32
    %p36 = pneg %p30
    %p37 = scmp.eq.s32.totalorder %s9, 1
    %p38 = por %p36, %p37
    %p39 = scmp.ne.s32.totalorder %s31, %s34
    %p40 = scmp.eq.s32.totalorder %s9, 0
    %p41 = por %p39, %p40
    %p42 = scmp.ne.s32.totalorder %s31, %s34
    %p43 = scmp.eq.s32.totalorder %s14, 1
    %p44 = por %p42, %p43
    %p45 = scmp.ne.s32.totalorder %s34, %s35
    %p46 = scmp.eq.s32.totalorder %s14, 0
    %p47 = por %p45, %p46
    %p48 = scmp.ne.s32.totalorder %s34, %s35
    %p49 = scmp.eq.s32.totalorder %s15, 1
    %p50 = por %p48, %p49
    %p52 = scmp.ne.s32.totalorder %s35, %s51
    %p53 = scmp.eq.s32.totalorder %s15, 0
    %p54 = por %p52, %p53
    %s55 = ssub.s32 %s17, %s24
    %p56 = scmp.eq.s32.totalorder %s55, 0
    %s58 = sadd.s32 %s57, 1
    %s59 = scalar_select %p56, %s57, %s58
    %p62 = pneg %p56
    %p63 = scmp.eq.s32.totalorder %s9, 1
    %p64 = por %p62, %p63
    %p65 = scmp.ne.s32.totalorder %s57, %s60
    %p66 = scmp.eq.s32.totalorder %s9, 0
    %p67 = por %p65, %p66
    %p68 = scmp.ne.s32.totalorder %s57, %s60
    %p69 = scmp.eq.s32.totalorder %s14, 1
    %p70 = por %p68, %p69
    %p71 = scmp.ne.s32.totalorder %s60, %s61
    %p72 = scmp.eq.s32.totalorder %s14, 0
    %p73 = por %p71, %p72
    %p74 = scmp.ne.s32.totalorder %s60, %s61
    %p75 = scmp.eq.s32.totalorder %s15, 1
    %p76 = por %p74, %p75
    %p78 = scmp.ne.s32.totalorder %s61, %s77
    %p79 = scmp.eq.s32.totalorder %s15, 0
    %p80 = por %p78, %p79
    %s81 = ssub.s32 %s17, %s24
    %p82 = scmp.eq.s32.totalorder %s81, 0
    %s84 = sadd.s32 %s83, 1
    %s85 = scalar_select %p82, %s83, %s84
    %p88 = pneg %p82
    %p89 = scmp.eq.s32.totalorder %s9, 1
    %p90 = por %p88, %p89
    %p91 = scmp.ne.s32.totalorder %s83, %s86
    %p92 = scmp.eq.s32.totalorder %s9, 0
    %p93 = por %p91, %p92
    %p94 = scmp.ne.s32.totalorder %s83, %s86
    %p95 = scmp.eq.s32.totalorder %s14, 1
    %p96 = por %p94, %p95
    %p97 = scmp.ne.s32.totalorder %s86, %s87
    %p98 = scmp.eq.s32.totalorder %s14, 0
    %p99 = por %p97, %p98
    %p100 = scmp.ne.s32.totalorder %s86, %s87
    %p101 = scmp.eq.s32.totalorder %s15, 1
    %p102 = por %p100, %p101
    %p104 = scmp.ne.s32.totalorder %s87, %s103
    %p105 = scmp.eq.s32.totalorder %s15, 0
    %p106 = por %p104, %p105
    %s107 = ssub.s32 %s16, %s28
    %s108 = ssub.s32 %s17, %s24
    %s109 = sor.u32 %s107, %s108
    %p110 = scmp.eq.s32.totalorder %s109, 0
    %s112 = sadd.s32 %s111, 1
    %s113 = scalar_select %p110, %s111, %s112
    %p116 = pneg %p110
    %p117 = scmp.eq.s32.totalorder %s9, 1
    %p118 = por %p116, %p117
    %p119 = scmp.ne.s32.totalorder %s111, %s114
    %p120 = scmp.eq.s32.totalorder %s9, 0
    %p121 = por %p119, %p120
    %p122 = scmp.ne.s32.totalorder %s111, %s114
    %p123 = scmp.eq.s32.totalorder %s14, 1
    %p124 = por %p122, %p123
    %p125 = scmp.ne.s32.totalorder %s114, %s115
    %p126 = scmp.eq.s32.totalorder %s14, 0
    %p127 = por %p125, %p126
    %p128 = scmp.ne.s32.totalorder %s114, %s115
    %p129 = scmp.eq.s32.totalorder %s15, 1
    %p130 = por %p128, %p129
    %p132 = scmp.ne.s32.totalorder %s115, %s131
    %p133 = scmp.eq.s32.totalorder %s15, 0
    %p134 = por %p132, %p133
    %p135 = scmp.le.s32.totalorder 1, %s9
    %p136 = scmp.lt.s32.totalorder %s9, 3
    %p137 = pnand %p135, %p136
    %p138 = pneg %p137
    // Predicated region
    $region9: #{two_stream_forward.20} parent=5 // pred_check
      _
    $region10: #{two_stream_forward.20} parent=5 // pred_check_branch
      %140 = sbr.rel (%p137) target = $region12
    $region11: #{two_stream_forward.20} parent=5 // pred_region
      %s141 = ssub.s32 %s9, 1
      // Predicated region
      $region13: #{two_stream_forward.20} parent=11 // pred_check
        %p142 = pneg %p73
      $region14: #{two_stream_forward.20} parent=11 // pred_check_branch
        %144 = sbr.rel (%p142) target = $region16
      $region15: #{two_stream_forward.20} parent=11 // pred_region
        %p145 = scmp.lt.s32.totalorder %s19, 0
        %s146 = scalar_select %p145, %s19, 0
        %s147 = smul.addr %s146, 4
        %s148 = scalar_lea.vmem %s1, %s147
      $region16: #{two_stream_forward.20} parent=11 // pred_fallthru
        _
      // Predicated region
      $region17: #{two_stream_forward.20} parent=11 // pred_check
        %p149 = pneg %p99
      $region18: #{two_stream_forward.20} parent=11 // pred_check_branch
        %151 = sbr.rel (%p149) target = $region20
      $region19: #{two_stream_forward.20} parent=11 // pred_region
        %p152 = scmp.lt.s32.totalorder %s19, 0
        %s153 = scalar_select %p152, %s19, 0
        %s154 = smul.addr %s153, 2
        %s155 = scalar_lea.vmem %s2, %s154
      $region20: #{two_stream_forward.20} parent=11 // pred_fallthru
        _
    $region12: #{two_stream_forward.20} parent=5 // pred_fallthru
      _
    %p156 = scmp.lt.s32.totalorder %s9, 2
    // Predicated region
    $region21: #{two_stream_forward.20} parent=5 // pred_check
      %p157 = pneg %p156
    $region22: #{two_stream_forward.20} parent=5 // pred_check_branch
      %159 = sbr.rel (%p157) target = $region24
    $region23: #{two_stream_forward.20} parent=5 // pred_region
      // Predicated region
      $region25: #{two_stream_forward.20} parent=23 // pred_check
        %p160 = pneg %p41
      $region26: #{two_stream_forward.20} parent=23 // pred_check_branch
        %162 = sbr.rel (%p160) target = $region28
      $region27: #{two_stream_forward.20} parent=23 // pred_region
        %s163 = smul.u32 2, %s16
        %p164 = scmp.lt.s32.totalorder %s163, 3
        %s165 = scalar_select %p164, %s163, 3
        %s166 = smul.addr %s165, 4
        %s167 = scalar_lea.vmem %s0, %s166
        %s168 = smul.u32 2, %s16
      $region28: #{two_stream_forward.20} parent=23 // pred_fallthru
        _
    $region24: #{two_stream_forward.20} parent=5 // pred_fallthru
      _
    %p169 = scmp.le.s32.totalorder 1, %s9
    %p170 = scmp.lt.s32.totalorder %s9, 3
    %p171 = pnand %p169, %p170
    %p172 = pneg %p171
    // Predicated region
    $region29: #{two_stream_forward.20} parent=5 // pred_check
      _
    $region30: #{two_stream_forward.20} parent=5 // pred_check_branch
      %174 = sbr.rel (%p171) target = $region32
    $region31: #{two_stream_forward.20} parent=5 // pred_region
      %s175 = ssub.s32 %s9, 1
      %s176 = smul.u32 2, %s18
      %p177 = scmp.lt.s32.totalorder %s176, 3
      %s178 = scalar_select %p177, %s176, 3
      %s179 = smul.addr %s178, 4
      %s180 = scalar_lea.vmem %s0, %s179
      %p181 = pneg %p47
      %p182 = pneg %p44
      %p183 = scmp.lt.s32.totalorder %s19, 0
      %s184 = scalar_select %p183, %s19, 0
      %s185 = smul.addr %s184, 4
      %s186 = scalar_lea.vmem %s1, %s185
      %p187 = pneg %p73
      %p188 = pneg %p70
      %p189 = scmp.lt.s32.totalorder %s19, 0
      %s190 = scalar_select %p189, %s19, 0
      %s191 = smul.addr %s190, 2
      %s192 = scalar_lea.vmem %s2, %s191
      %p193 = pneg %p99
      %p194 = pneg %p96
      %p195 = pneg %p127
      %p196 = pneg %p124
      %s197 = smul.u32 2, %s18
      %p198 = scmp.lt.s32.totalorder %s197, 3
      %s199 = scalar_select %p198, %s197, 3
      %p200 = scmp.lt.s32.totalorder %s19, 0
      %s201 = scalar_select %p200, %s19, 0
      %s202 = sadd.s32 %s201, %s199
      %s203 = smul.addr %s202, 4
      %s204 = scalar_lea.vmem %s3, %s203
      %s205 = smul.u32 2, %s18
      %p206 = scmp.lt.s32.totalorder %s205, 3
      %s207 = scalar_select %p206, %s205, 3
      %s208 = smul.addr %s207, 4
      %s209 = scalar_lea.vmem %s0, %s208
      %s210 = smul.u32 2, %s18
      %p211 = scmp.lt.s32.totalorder %s19, 0
      %s212 = scalar_select %p211, %s19, 0
      %s213 = smul.addr %s212, 4
      %s214 = scalar_lea.vmem %s1, %s213
      %p215 = scmp.lt.s32.totalorder %s19, 0
      %s216 = scalar_select %p215, %s19, 0
      %s217 = smul.addr %s216, 2
      %s218 = scalar_lea.vmem %s2, %s217
      %s219 = smul.u32 2, %s18
      %p220 = scmp.lt.s32.totalorder %s219, 3
      %s221 = scalar_select %p220, %s219, 3
      %p222 = scmp.lt.s32.totalorder %s19, 0
      %s223 = scalar_select %p222, %s19, 0
      %s224 = sadd.s32 %s223, %s221
      %s225 = smul.addr %s224, 4
      %s226 = scalar_lea.vmem %s3, %s225
      %s227 = smul.u32 2, %s18
      %v229 = vld [vmem:[%s209] sm:$0xf]
      %v230 = vld [vmem:[%s209 + $0x4] sm:$0xf]
      %v231 = vld [vmem:[%s214] sm:$0xf]
      %v232 = vld [vmem:[%s214 + $0x4] sm:$0xf]
      %v233 = vld [vmem:[%s214 + $0x8] sm:$0xf]
      %v234 = vld [vmem:[%s214 + $0xc] sm:$0xf]
      %v235 = vld [vmem:[%s214 + $0x10] sm:$0xf]
      %v236 = vld [vmem:[%s214 + $0x14] sm:$0xf]
      %v237 = vld [vmem:[%s214 + $0x18] sm:$0xf]
      %v238 = vld [vmem:[%s214 + $0x1c] sm:$0xf]
      %v239 = vld [vmem:[%s214 + $0x20] sm:$0xf]
      %v240 = vld [vmem:[%s214 + $0x24] sm:$0xf]
      %v241 = vld [vmem:[%s214 + $0x28] sm:$0xf]
      %v242 = vld [vmem:[%s214 + $0x2c] sm:$0xf]
      %v243 = vld [vmem:[%s214 + $0x30] sm:$0xf]
      %v244 = vld [vmem:[%s214 + $0x34] sm:$0xf]
      %v245 = vld [vmem:[%s214 + $0x38] sm:$0xf]
      %v246 = vld [vmem:[%s214 + $0x3c] sm:$0xf]
      %v249 = vunpack.c.l.b16 %v229
      %v250 = vunpack.c.l.b16 %v230
      %v251 = vpack.c.b16 %v250, %v249
      %v269 = vunpack.c.l.b16 %v231
      %v270 = vunpack.c.l.b16 %v232
      %v271 = vunpack.c.l.b16 %v233
      %v272 = vunpack.c.l.b16 %v234
      %v273 = vunpack.c.l.b16 %v235
      %v274 = vunpack.c.l.b16 %v236
      %v275 = vunpack.c.l.b16 %v237
      %v276 = vunpack.c.l.b16 %v238
      %v277 = vunpack.c.l.b16 %v239
      %v278 = vunpack.c.l.b16 %v240
      %v279 = vunpack.c.l.b16 %v241
      %v280 = vunpack.c.l.b16 %v242
      %v281 = vunpack.c.l.b16 %v243
      %v282 = vunpack.c.l.b16 %v244
      %v283 = vunpack.c.l.b16 %v245
      %v284 = vunpack.c.l.b16 %v246
      %v285 = vpack.c.b16 %v270, %v269
      %v286 = vpack.c.b16 %v272, %v271
      %v287 = vpack.c.b16 %v274, %v273
      %v288 = vpack.c.b16 %v276, %v275
      %v289 = vpack.c.b16 %v278, %v277
      %v290 = vpack.c.b16 %v280, %v279
      %v291 = vpack.c.b16 %v282, %v281
      %v292 = vpack.c.b16 %v284, %v283
      %301 = vmatprep.subr.bf16.mxu0 0
      %302 = vmatpush1.bf16.msra.mxu0 %v285
      %303 = vmatprep.subr.bf16.mxu0 0
      %304 = vmatpush1.bf16.msra.mxu0 %v286
      %305 = vmatprep.subr.bf16.mxu0 0
      %306 = vmatpush1.bf16.msra.mxu0 %v287
      %307 = vmatprep.subr.bf16.mxu0 0
      %308 = vmatpush1.bf16.msra.mxu0 %v288
      %309 = vmatprep.subr.bf16.mxu0 0
      %310 = vmatpush1.bf16.msra.mxu0 %v289
      %311 = vmatprep.subr.bf16.mxu0 0
      %312 = vmatpush1.bf16.msra.mxu0 %v290
      %313 = vmatprep.subr.bf16.mxu0 0
      %314 = vmatpush1.bf16.msra.mxu0 %v291
      %315 = vmatprep.subr.bf16.mxu0 0
      %316 = vmatpush1.bf16.msra.mxu0 %v292
      %317 = vmatprep.subr.bf16.mxu0 0
      %318 = vmatpush1.bf16.msra.mxu0 0
      %319 = vmatprep.subr.bf16.mxu0 0
      %320 = vmatpush1.bf16.msra.mxu0 0
      %321 = vmatprep.subr.bf16.mxu0 0
      %322 = vmatpush1.bf16.msra.mxu0 0
      %323 = vmatprep.subr.bf16.mxu0 0
      %324 = vmatpush1.bf16.msra.mxu0 0
      %325 = vmatprep.subr.bf16.mxu0 0
      %326 = vmatpush1.bf16.msra.mxu0 0
      %327 = vmatprep.subr.bf16.mxu0 0
      %328 = vmatpush1.bf16.msra.mxu0 0
      %329 = vmatprep.subr.bf16.mxu0 0
      %330 = vmatpush1.bf16.msra.mxu0 0
      %331 = vmatprep.subr.bf16.mxu0 0
      %332 = vmatpush1.bf16.msra.mxu0 0
      %333 = vmatprep.mubr.bf16.mxu0 0
      %334 = vmatmul.mubr.bf16.gmra.mrb[0].mxu0 %v251
      %v335 = vpop.f32.mrb[0].mxu0
      %v336 = vadd.f32 0.0, %v335
      %v337 = vpop.f32.mrb[0].mxu0
      %v338 = vpop.f32.mrb[0].mxu0
      %v339 = vadd.f32 0.0, %v338
      %v340 = vpop.f32.mrb[0].mxu0
      %341 = vdwg.mxu0
      %v342 = vld [vmem:[%s218] sm:$0x1]
      %v343 = vlaneseq
      %v344 = vshrl.u32 %v343, 7
      %v345 = vsub.s32 0, %v344
      %v346 = vrot.slane %v342, %v345
      %v347 = vmul.f32 %v336, %v346
      %v348 = vmul.f32 %v339, %v346
      %v349 = vld [vmem:[%s218 + $0x1] sm:$0x1]
      %v350 = vlaneseq
      %v351 = vshrl.u32 %v350, 7
      %v352 = vsub.s32 0, %v351
      %v353 = vrot.slane %v349, %v352
      %v354 = vadd.f32 %v347, %v353
      %v355 = vadd.f32 %v348, %v353
      %v356 = vmax.f32 %v354, 0.0
      %v357 = vmax.f32 %v355, 0.0
      %v358 = vpack.c.bf16 %v357, %v356
      %v360 = vunpack.c.l.b16 %v358
      %v361 = vunpack.c.h.b16 %v358
      %v362 = vpack.c.b16 %v360, %v360
      %v363 = vpack.c.b16 %v361, %v361
      %366 = vst [vmem:[%s226] sm:$0xf] %v362
      %367 = vst [vmem:[%s226 + $0x4] sm:$0xf] %v363
      %s368 = smul.u32 2, %s18
      %p369 = scmp.lt.s32.totalorder %s368, 3
      %s370 = scalar_select %p369, %s368, 3
      %p371 = scmp.lt.s32.totalorder %s19, 0
      %s372 = scalar_select %p371, %s19, 0
      %s373 = sadd.s32 %s372, %s370
      %s374 = smul.addr %s373, 4
      %s375 = scalar_lea.vmem %s3, %s374
      // Predicated region
      $region33: #{two_stream_forward.20} parent=31 // pred_check
        %p376 = pneg %p124
      $region34: #{two_stream_forward.20} parent=31 // pred_check_branch
        %378 = sbr.rel (%p376) target = $region36
      $region35: #{two_stream_forward.20} parent=31 // pred_region
        %s379 = smul.u32 2, %s18
      $region36: #{two_stream_forward.20} parent=31 // pred_fallthru
        _
    $region32: #{two_stream_forward.20} parent=5 // pred_fallthru
      _
    %p380 = scmp.le.s32.totalorder 2, %s9
    // Predicated region
    $region37: #{two_stream_forward.20} parent=5 // pred_check
      %p381 = pneg %p380
    $region38: #{two_stream_forward.20} parent=5 // pred_check_branch
      %383 = sbr.rel (%p381) target = $region40
    $region39: #{two_stream_forward.20} parent=5 // pred_region
      %s384 = ssub.s32 %s9, 2
      // Predicated region
      $region41: #{two_stream_forward.20} parent=39 // pred_check
        %p385 = pneg %p130
      $region42: #{two_stream_forward.20} parent=39 // pred_check_branch
        %387 = sbr.rel (%p385) target = $region44
      $region43: #{two_stream_forward.20} parent=39 // pred_region
        %s388 = smul.u32 2, %s20
        %p389 = scmp.lt.s32.totalorder %s388, 3
        %s390 = scalar_select %p389, %s388, 3
        %p391 = scmp.lt.s32.totalorder %s21, 0
        %s392 = scalar_select %p391, %s21, 0
        %s393 = sadd.s32 %s392, %s390
        %s394 = smul.addr %s393, 4
        %s395 = scalar_lea.vmem %s3, %s394
      $region44: #{two_stream_forward.20} parent=39 // pred_fallthru
        _
    $region40: #{two_stream_forward.20} parent=5 // pred_fallthru
      _
  $region6: #{two_stream_forward.20} parent=0 // loop_footer
    %s13 = sadd.s32 1, %s9
  $region7: #{two_stream_forward.20} parent=0 // loop_footer_branch
    %8 = sbr.rel target = $region3
  $region8: #{two_stream_forward.20} parent=0 // loop_exit
    _

// kernel: two_stream_forward.22
$region0: #{two_stream_forward.22}
  #allocation0 [shape = 'u32[]', space=smem, size = 0x4, offset = 0x4, fixed_abs, tag = 'smem constant byte address 0x4 - core index']
  #allocation1 [shape = 'u32[144,128]{1,0:T(1,128)}', space=vmem, size = 0x12000, scoped, tag = 'internal scratch']
  %s0 = inlined_call_operand.vmem [shape: bf16[32,128], index: 0, kind: input, shape index: {}]
  %s1 = inlined_call_operand.vmem [shape: bf16[128,128], index: 1, kind: input, shape index: {}]
  %s2 = inlined_call_operand.vmem [shape: f32[2,128], index: 2, kind: input, shape index: {}]
  %s3 = inlined_call_operand.vmem [shape: bf16[32,128], index: 3, kind: input, shape index: {}]
  %s4 = inlined_call_operand.vmem [shape: bf16[32,128], index: 4, kind: output, shape index: {}]
  %s5 = sld [smem:[#allocation0]]
  $region49: #{two_stream_forward.22} parent=0
    _
  %s7 = ssub.s32 1, %s5
  %s8 = scalar_select 0, %s7, %s5
  loop: start=0, step=1, limit=4
  $region2: #{two_stream_forward.22} parent=0 // loop_pre_header
    _
  $region3: #{two_stream_forward.22} parent=0 // loop_header
    %s10 = sphi 0, %s14
    %p11 = scmp.ge.s32.totalorder %s10, 4
    %s17 = sphi 0, %s29
    %s18 = sphi 0, %s25
    %s19 = sphi 0, %s17
    %s20 = sphi 0, %s18
    %s21 = sphi 0, %s19
    %s22 = sphi 0, %s20
    %s32 = sphi 0, %s34
    %s35 = sphi 0, %s32
    %s36 = sphi 0, %s35
    %s52 = sphi 0, %s36
    %s58 = sphi 0, %s60
    %s61 = sphi 0, %s58
    %s62 = sphi 0, %s61
    %s78 = sphi 0, %s62
    %s84 = sphi 0, %s86
    %s87 = sphi 0, %s84
    %s88 = sphi 0, %s87
    %s104 = sphi 0, %s88
    %s112 = sphi 0, %s114
    %s115 = sphi 0, %s112
    %s116 = sphi 0, %s115
    %s132 = sphi 0, %s116
    %s140 = sphi 0, %s142
    %s143 = sphi 0, %s140
    %s144 = sphi 0, %s143
    %s160 = sphi 0, %s144
  $region4: #{two_stream_forward.22} parent=0 // loop_header_branch
    %13 = sbr.rel (%p11) target = $region8
  $region5: #{two_stream_forward.22} parent=0 // loop_body
    %s15 = ssub.s32 %s10, 1
    %s16 = ssub.s32 %s10, 2
    %s23 = sadd.s32 1, %s18
    %p24 = scmp.ge.s32.totalorder %s23, 1
    %s25 = scalar_select %p24, 0, %s23
    %s26 = sadd.s32 1, %s17
    %s27 = scalar_select %p24, %s26, %s17
    %p28 = scmp.ge.s32.totalorder %s27, 2
    %s29 = scalar_select %p28, 0, %s27
    %s30 = ssub.s32 %s17, %s29
    %p31 = scmp.eq.s32.totalorder %s30, 0
    %s33 = sadd.s32 %s32, 1
    %s34 = scalar_select %p31, %s32, %s33
    %p37 = pneg %p31
    %p38 = scmp.eq.s32.totalorder %s10, 1
    %p39 = por %p37, %p38
    %p40 = scmp.ne.s32.totalorder %s32, %s35
    %p41 = scmp.eq.s32.totalorder %s10, 0
    %p42 = por %p40, %p41
    %p43 = scmp.ne.s32.totalorder %s32, %s35
    %p44 = scmp.eq.s32.totalorder %s15, 1
    %p45 = por %p43, %p44
    %p46 = scmp.ne.s32.totalorder %s35, %s36
    %p47 = scmp.eq.s32.totalorder %s15, 0
    %p48 = por %p46, %p47
    %p49 = scmp.ne.s32.totalorder %s35, %s36
    %p50 = scmp.eq.s32.totalorder %s16, 1
    %p51 = por %p49, %p50
    %p53 = scmp.ne.s32.totalorder %s36, %s52
    %p54 = scmp.eq.s32.totalorder %s16, 0
    %p55 = por %p53, %p54
    %s56 = ssub.s32 %s18, %s25
    %p57 = scmp.eq.s32.totalorder %s56, 0
    %s59 = sadd.s32 %s58, 1
    %s60 = scalar_select %p57, %s58, %s59
    %p63 = pneg %p57
    %p64 = scmp.eq.s32.totalorder %s10, 1
    %p65 = por %p63, %p64
    %p66 = scmp.ne.s32.totalorder %s58, %s61
    %p67 = scmp.eq.s32.totalorder %s10, 0
    %p68 = por %p66, %p67
    %p69 = scmp.ne.s32.totalorder %s58, %s61
    %p70 = scmp.eq.s32.totalorder %s15, 1
    %p71 = por %p69, %p70
    %p72 = scmp.ne.s32.totalorder %s61, %s62
    %p73 = scmp.eq.s32.totalorder %s15, 0
    %p74 = por %p72, %p73
    %p75 = scmp.ne.s32.totalorder %s61, %s62
    %p76 = scmp.eq.s32.totalorder %s16, 1
    %p77 = por %p75, %p76
    %p79 = scmp.ne.s32.totalorder %s62, %s78
    %p80 = scmp.eq.s32.totalorder %s16, 0
    %p81 = por %p79, %p80
    %s82 = ssub.s32 %s18, %s25
    %p83 = scmp.eq.s32.totalorder %s82, 0
    %s85 = sadd.s32 %s84, 1
    %s86 = scalar_select %p83, %s84, %s85
    %p89 = pneg %p83
    %p90 = scmp.eq.s32.totalorder %s10, 1
    %p91 = por %p89, %p90
    %p92 = scmp.ne.s32.totalorder %s84, %s87
    %p93 = scmp.eq.s32.totalorder %s10, 0
    %p94 = por %p92, %p93
    %p95 = scmp.ne.s32.totalorder %s84, %s87
    %p96 = scmp.eq.s32.totalorder %s15, 1
    %p97 = por %p95, %p96
    %p98 = scmp.ne.s32.totalorder %s87, %s88
    %p99 = scmp.eq.s32.totalorder %s15, 0
    %p100 = por %p98, %p99
    %p101 = scmp.ne.s32.totalorder %s87, %s88
    %p102 = scmp.eq.s32.totalorder %s16, 1
    %p103 = por %p101, %p102
    %p105 = scmp.ne.s32.totalorder %s88, %s104
    %p106 = scmp.eq.s32.totalorder %s16, 0
    %p107 = por %p105, %p106
    %s108 = ssub.s32 %s17, %s29
    %s109 = ssub.s32 %s18, %s25
    %s110 = sor.u32 %s108, %s109
    %p111 = scmp.eq.s32.totalorder %s110, 0
    %s113 = sadd.s32 %s112, 1
    %s114 = scalar_select %p111, %s112, %s113
    %p117 = pneg %p111
    %p118 = scmp.eq.s32.totalorder %s10, 1
    %p119 = por %p117, %p118
    %p120 = scmp.ne.s32.totalorder %s112, %s115
    %p121 = scmp.eq.s32.totalorder %s10, 0
    %p122 = por %p120, %p121
    %p123 = scmp.ne.s32.totalorder %s112, %s115
    %p124 = scmp.eq.s32.totalorder %s15, 1
    %p125 = por %p123, %p124
    %p126 = scmp.ne.s32.totalorder %s115, %s116
    %p127 = scmp.eq.s32.totalorder %s15, 0
    %p128 = por %p126, %p127
    %p129 = scmp.ne.s32.totalorder %s115, %s116
    %p130 = scmp.eq.s32.totalorder %s16, 1
    %p131 = por %p129, %p130
    %p133 = scmp.ne.s32.totalorder %s116, %s132
    %p134 = scmp.eq.s32.totalorder %s16, 0
    %p135 = por %p133, %p134
    %s136 = ssub.s32 %s17, %s29
    %s137 = ssub.s32 %s18, %s25
    %s138 = sor.u32 %s136, %s137
    %p139 = scmp.eq.s32.totalorder %s138, 0
    %s141 = sadd.s32 %s140, 1
    %s142 = scalar_select %p139, %s140, %s141
    %p145 = pneg %p139
    %p146 = scmp.eq.s32.totalorder %s10, 1
    %p147 = por %p145, %p146
    %p148 = scmp.ne.s32.totalorder %s140, %s143
    %p149 = scmp.eq.s32.totalorder %s10, 0
    %p150 = por %p148, %p149
    %p151 = scmp.ne.s32.totalorder %s140, %s143
    %p152 = scmp.eq.s32.totalorder %s15, 1
    %p153 = por %p151, %p152
    %p154 = scmp.ne.s32.totalorder %s143, %s144
    %p155 = scmp.eq.s32.totalorder %s15, 0
    %p156 = por %p154, %p155
    %p157 = scmp.ne.s32.totalorder %s143, %s144
    %p158 = scmp.eq.s32.totalorder %s16, 1
    %p159 = por %p157, %p158
    %p161 = scmp.ne.s32.totalorder %s144, %s160
    %p162 = scmp.eq.s32.totalorder %s16, 0
    %p163 = por %p161, %p162
    %p164 = scmp.le.s32.totalorder 1, %s10
    %p165 = scmp.lt.s32.totalorder %s10, 3
    %p166 = pnand %p164, %p165
    %p167 = pneg %p166
    // Predicated region
    $region9: #{two_stream_forward.22} parent=5 // pred_check
      _
    $region10: #{two_stream_forward.22} parent=5 // pred_check_branch
      %169 = sbr.rel (%p166) target = $region12
    $region11: #{two_stream_forward.22} parent=5 // pred_region
      %s170 = ssub.s32 %s10, 1
      // Predicated region
      $region13: #{two_stream_forward.22} parent=11 // pred_check
        %p171 = pneg %p74
      $region14: #{two_stream_forward.22} parent=11 // pred_check_branch
        %173 = sbr.rel (%p171) target = $region16
      $region15: #{two_stream_forward.22} parent=11 // pred_region
        %p174 = scmp.lt.s32.totalorder %s20, 0
        %s175 = scalar_select %p174, %s20, 0
        %s176 = smul.addr %s175, 4
        %s177 = scalar_lea.vmem %s1, %s176
      $region16: #{two_stream_forward.22} parent=11 // pred_fallthru
        _
      // Predicated region
      $region17: #{two_stream_forward.22} parent=11 // pred_check
        %p178 = pneg %p100
      $region18: #{two_stream_forward.22} parent=11 // pred_check_branch
        %180 = sbr.rel (%p178) target = $region20
      $region19: #{two_stream_forward.22} parent=11 // pred_region
        %p181 = scmp.lt.s32.totalorder %s20, 0
        %s182 = scalar_select %p181, %s20, 0
        %s183 = smul.addr %s182, 2
        %s184 = scalar_lea.vmem %s2, %s183
      $region20: #{two_stream_forward.22} parent=11 // pred_fallthru
        _
    $region12: #{two_stream_forward.22} parent=5 // pred_fallthru
      _
    %p185 = scmp.lt.s32.totalorder %s10, 2
    // Predicated region
    $region21: #{two_stream_forward.22} parent=5 // pred_check
      %p186 = pneg %p185
    $region22: #{two_stream_forward.22} parent=5 // pred_check_branch
      %188 = sbr.rel (%p186) target = $region24
    $region23: #{two_stream_forward.22} parent=5 // pred_region
      // Predicated region
      $region25: #{two_stream_forward.22} parent=23 // pred_check
        %p189 = pneg %p42
      $region26: #{two_stream_forward.22} parent=23 // pred_check_branch
        %191 = sbr.rel (%p189) target = $region28
      $region27: #{two_stream_forward.22} parent=23 // pred_region
        %s192 = smul.u32 2, %s17
        %p193 = scmp.lt.s32.totalorder %s192, 3
        %s194 = scalar_select %p193, %s192, 3
        %s195 = smul.addr %s194, 4
        %s196 = scalar_lea.vmem %s0, %s195
        %s197 = smul.u32 2, %s17
      $region28: #{two_stream_forward.22} parent=23 // pred_fallthru
        _
      // Predicated region
      $region29: #{two_stream_forward.22} parent=23 // pred_check
        %p198 = pneg %p122
      $region30: #{two_stream_forward.22} parent=23 // pred_check_branch
        %200 = sbr.rel (%p198) target = $region32
      $region31: #{two_stream_forward.22} parent=23 // pred_region
        %s201 = smul.u32 2, %s17
        %p202 = scmp.lt.s32.totalorder %s201, 3
        %s203 = scalar_select %p202, %s201, 3
        %p204 = scmp.lt.s32.totalorder %s18, 0
        %s205 = scalar_select %p204, %s18, 0
        %s206 = sadd.s32 %s205, %s203
        %s207 = smul.addr %s206, 4
        %s208 = scalar_lea.vmem %s3, %s207
        %s209 = smul.u32 2, %s17
      $region32: #{two_stream_forward.22} parent=23 // pred_fallthru
        _
    $region24: #{two_stream_forward.22} parent=5 // pred_fallthru
      _
    %p210 = scmp.le.s32.totalorder 1, %s10
    %p211 = scmp.lt.s32.totalorder %s10, 3
    %p212 = pnand %p210, %p211
    %p213 = pneg %p212
    // Predicated region
    $region33: #{two_stream_forward.22} parent=5 // pred_check
      _
    $region34: #{two_stream_forward.22} parent=5 // pred_check_branch
      %215 = sbr.rel (%p212) target = $region36
    $region35: #{two_stream_forward.22} parent=5 // pred_region
      %s216 = ssub.s32 %s10, 1
      %s217 = smul.u32 2, %s19
      %p218 = scmp.lt.s32.totalorder %s217, 3
      %s219 = scalar_select %p218, %s217, 3
      %s220 = smul.addr %s219, 4
      %s221 = scalar_lea.vmem %s0, %s220
      %p222 = pneg %p48
      %p223 = pneg %p45
      %p224 = scmp.lt.s32.totalorder %s20, 0
      %s225 = scalar_select %p224, %s20, 0
      %s226 = smul.addr %s225, 4
      %s227 = scalar_lea.vmem %s1, %s226
      %p228 = pneg %p74
      %p229 = pneg %p71
      %p230 = scmp.lt.s32.totalorder %s20, 0
      %s231 = scalar_select %p230, %s20, 0
      %s232 = smul.addr %s231, 2
      %s233 = scalar_lea.vmem %s2, %s232
      %p234 = pneg %p100
      %p235 = pneg %p97
      %s236 = smul.u32 2, %s19
      %p237 = scmp.lt.s32.totalorder %s236, 3
      %s238 = scalar_select %p237, %s236, 3
      %p239 = scmp.lt.s32.totalorder %s20, 0
      %s240 = scalar_select %p239, %s20, 0
      %s241 = sadd.s32 %s240, %s238
      %s242 = smul.addr %s241, 4
      %s243 = scalar_lea.vmem %s3, %s242
      %p244 = pneg %p128
      %p245 = pneg %p125
      %p246 = pneg %p156
      %p247 = pneg %p153
      %s248 = smul.u32 2, %s19
      %p249 = scmp.lt.s32.totalorder %s248, 3
      %s250 = scalar_select %p249, %s248, 3
      %p251 = scmp.lt.s32.totalorder %s20, 0
      %s252 = scalar_select %p251, %s20, 0
      %s253 = sadd.s32 %s252, %s250
      %s254 = smul.addr %s253, 4
      %s255 = scalar_lea.vmem %s4, %s254
      %s256 = smul.u32 2, %s19
      %p257 = scmp.lt.s32.totalorder %s256, 3
      %s258 = scalar_select %p257, %s256, 3
      %s259 = smul.addr %s258, 4
      %s260 = scalar_lea.vmem %s0, %s259
      %s261 = smul.u32 2, %s19
      %p262 = scmp.lt.s32.totalorder %s20, 0
      %s263 = scalar_select %p262, %s20, 0
      %s264 = smul.addr %s263, 4
      %s265 = scalar_lea.vmem %s1, %s264
      %p266 = scmp.lt.s32.totalorder %s20, 0
      %s267 = scalar_select %p266, %s20, 0
      %s268 = smul.addr %s267, 2
      %s269 = scalar_lea.vmem %s2, %s268
      %s270 = smul.u32 2, %s19
      %p271 = scmp.lt.s32.totalorder %s270, 3
      %s272 = scalar_select %p271, %s270, 3
      %p273 = scmp.lt.s32.totalorder %s20, 0
      %s274 = scalar_select %p273, %s20, 0
      %s275 = sadd.s32 %s274, %s272
      %s276 = smul.addr %s275, 4
      %s277 = scalar_lea.vmem %s3, %s276
      %s278 = smul.u32 2, %s19
      %s279 = smul.u32 2, %s19
      %p280 = scmp.lt.s32.totalorder %s279, 3
      %s281 = scalar_select %p280, %s279, 3
      %p282 = scmp.lt.s32.totalorder %s20, 0
      %s283 = scalar_select %p282, %s20, 0
      %s284 = sadd.s32 %s283, %s281
      %s285 = smul.addr %s284, 4
      %s286 = scalar_lea.vmem %s4, %s285
      %s287 = smul.u32 2, %s19
      %v289 = vld [vmem:[%s260] sm:$0xf]
      %v290 = vld [vmem:[%s260 + $0x4] sm:$0xf]
      %v291 = vld [vmem:[%s265] sm:$0xf]
      %v292 = vld [vmem:[%s265 + $0x4] sm:$0xf]
      %v293 = vld [vmem:[%s265 + $0x8] sm:$0xf]
      %v294 = vld [vmem:[%s265 + $0xc] sm:$0xf]
      %v295 = vld [vmem:[%s265 + $0x10] sm:$0xf]
      %v296 = vld [vmem:[%s265 + $0x14] sm:$0xf]
      %v297 = vld [vmem:[%s265 + $0x18] sm:$0xf]
      %v298 = vld [vmem:[%s265 + $0x1c] sm:$0xf]
      %v299 = vld [vmem:[%s265 + $0x20] sm:$0xf]
      %v300 = vld [vmem:[%s265 + $0x24] sm:$0xf]
      %v301 = vld [vmem:[%s265 + $0x28] sm:$0xf]
      %v302 = vld [vmem:[%s265 + $0x2c] sm:$0xf]
      %v303 = vld [vmem:[%s265 + $0x30] sm:$0xf]
      %v304 = vld [vmem:[%s265 + $0x34] sm:$0xf]
      %v305 = vld [vmem:[%s265 + $0x38] sm:$0xf]
      %v306 = vld [vmem:[%s265 + $0x3c] sm:$0xf]
      %v309 = vunpack.c.l.b16 %v289
      %v310 = vunpack.c.l.b16 %v290
      %v311 = vpack.c.b16 %v310, %v309
      %v329 = vunpack.c.l.b16 %v291
      %v330 = vunpack.c.l.b16 %v292
      %v331 = vunpack.c.l.b16 %v293
      %v332 = vunpack.c.l.b16 %v294
      %v333 = vunpack.c.l.b16 %v295
      %v334 = vunpack.c.l.b16 %v296
      %v335 = vunpack.c.l.b16 %v297
      %v336 = vunpack.c.l.b16 %v298
      %v337 = vunpack.c.l.b16 %v299
      %v338 = vunpack.c.l.b16 %v300
      %v339 = vunpack.c.l.b16 %v301
      %v340 = vunpack.c.l.b16 %v302
      %v341 = vunpack.c.l.b16 %v303
      %v342 = vunpack.c.l.b16 %v304
      %v343 = vunpack.c.l.b16 %v305
      %v344 = vunpack.c.l.b16 %v306
      %v345 = vpack.c.b16 %v330, %v329
      %v346 = vpack.c.b16 %v332, %v331
      %v347 = vpack.c.b16 %v334, %v333
      %v348 = vpack.c.b16 %v336, %v335
      %v349 = vpack.c.b16 %v338, %v337
      %v350 = vpack.c.b16 %v340, %v339
      %v351 = vpack.c.b16 %v342, %v341
      %v352 = vpack.c.b16 %v344, %v343
      %361 = vmatprep.subr.bf16.mxu0 0
      %362 = vmatpush1.bf16.msra.mxu0 %v345
      %363 = vmatprep.subr.bf16.mxu0 0
      %364 = vmatpush1.bf16.msra.mxu0 %v346
      %365 = vmatprep.subr.bf16.mxu0 0
      %366 = vmatpush1.bf16.msra.mxu0 %v347
      %367 = vmatprep.subr.bf16.mxu0 0
      %368 = vmatpush1.bf16.msra.mxu0 %v348
      %369 = vmatprep.subr.bf16.mxu0 0
      %370 = vmatpush1.bf16.msra.mxu0 %v349
      %371 = vmatprep.subr.bf16.mxu0 0
      %372 = vmatpush1.bf16.msra.mxu0 %v350
      %373 = vmatprep.subr.bf16.mxu0 0
      %374 = vmatpush1.bf16.msra.mxu0 %v351
      %375 = vmatprep.subr.bf16.mxu0 0
      %376 = vmatpush1.bf16.msra.mxu0 %v352
      %377 = vmatprep.subr.bf16.mxu0 0
      %378 = vmatpush1.bf16.msra.mxu0 0
      %379 = vmatprep.subr.bf16.mxu0 0
      %380 = vmatpush1.bf16.msra.mxu0 0
      %381 = vmatprep.subr.bf16.mxu0 0
      %382 = vmatpush1.bf16.msra.mxu0 0
      %383 = vmatprep.subr.bf16.mxu0 0
      %384 = vmatpush1.bf16.msra.mxu0 0
      %385 = vmatprep.subr.bf16.mxu0 0
      %386 = vmatpush1.bf16.msra.mxu0 0
      %387 = vmatprep.subr.bf16.mxu0 0
      %388 = vmatpush1.bf16.msra.mxu0 0
      %389 = vmatprep.subr.bf16.mxu0 0
      %390 = vmatpush1.bf16.msra.mxu0 0
      %391 = vmatprep.subr.bf16.mxu0 0
      %392 = vmatpush1.bf16.msra.mxu0 0
      %393 = vmatprep.mubr.bf16.mxu0 0
      %394 = vmatmul.mubr.bf16.gmra.mrb[0].mxu0 %v311
      %v395 = vpop.f32.mrb[0].mxu0
      %v396 = vadd.f32 0.0, %v395
      %v397 = vpop.f32.mrb[0].mxu0
      %v398 = vpop.f32.mrb[0].mxu0
      %v399 = vadd.f32 0.0, %v398
      %v400 = vpop.f32.mrb[0].mxu0
      %401 = vdwg.mxu0
      %v402 = vld [vmem:[%s269] sm:$0x1]
      %v403 = vlaneseq
      %v404 = vshrl.u32 %v403, 7
      %v405 = vsub.s32 0, %v404
      %v406 = vrot.slane %v402, %v405
      %v407 = vmul.f32 %v396, %v406
      %v408 = vmul.f32 %v399, %v406
      %v409 = vld [vmem:[%s269 + $0x1] sm:$0x1]
      %v410 = vlaneseq
      %v411 = vshrl.u32 %v410, 7
      %v412 = vsub.s32 0, %v411
      %v413 = vrot.slane %v409, %v412
      %v414 = vadd.f32 %v407, %v413
      %v415 = vadd.f32 %v408, %v413
      %v416 = vld [vmem:[%s277] sm:$0xf]
      %v417 = vld [vmem:[%s277 + $0x4] sm:$0xf]
      %v418 = vunpack.c.l.bf16 %v416
      %v419 = vunpack.c.l.bf16 %v417
      %v420 = vadd.f32 %v414, %v418
      %v421 = vadd.f32 %v415, %v419
      %v422 = vmax.f32 %v420, 0.0
      %v423 = vmax.f32 %v421, 0.0
      %v424 = vpack.c.bf16 %v423, %v422
      %v426 = vunpack.c.l.b16 %v424
      %v427 = vunpack.c.h.b16 %v424
      %v428 = vpack.c.b16 %v426, %v426
      %v429 = vpack.c.b16 %v427, %v427
      %432 = vst [vmem:[%s286] sm:$0xf] %v428
      %433 = vst [vmem:[%s286 + $0x4] sm:$0xf] %v429
      %s434 = smul.u32 2, %s19
      %p435 = scmp.lt.s32.totalorder %s434, 3
      %s436 = scalar_select %p435, %s434, 3
      %p437 = scmp.lt.s32.totalorder %s20, 0
      %s438 = scalar_select %p437, %s20, 0
      %s439 = sadd.s32 %s438, %s436
      %s440 = smul.addr %s439, 4
      %s441 = scalar_lea.vmem %s4, %s440
      // Predicated region
      $region37: #{two_stream_forward.22} parent=35 // pred_check
        %p442 = pneg %p153
      $region38: #{two_stream_forward.22} parent=35 // pred_check_branch
        %444 = sbr.rel (%p442) target = $region40
      $region39: #{two_stream_forward.22} parent=35 // pred_region
        %s445 = smul.u32 2, %s19
      $region40: #{two_stream_forward.22} parent=35 // pred_fallthru
        _
    $region36: #{two_stream_forward.22} parent=5 // pred_fallthru
      _
    %p446 = scmp.le.s32.totalorder 2, %s10
    // Predicated region
    $region41: #{two_stream_forward.22} parent=5 // pred_check
      %p447 = pneg %p446
    $region42: #{two_stream_forward.22} parent=5 // pred_check_branch
      %449 = sbr.rel (%p447) target = $region44
    $region43: #{two_stream_forward.22} parent=5 // pred_region
      %s450 = ssub.s32 %s10, 2
      // Predicated region
      $region45: #{two_stream_forward.22} parent=43 // pred_check
        %p451 = pneg %p159
      $region46: #{two_stream_forward.22} parent=43 // pred_check_branch
        %453 = sbr.rel (%p451) target = $region48
      $region47: #{two_stream_forward.22} parent=43 // pred_region
        %s454 = smul.u32 2, %s21
        %p455 = scmp.lt.s32.totalorder %s454, 3
        %s456 = scalar_select %p455, %s454, 3
        %p457 = scmp.lt.s32.totalorder %s22, 0
        %s458 = scalar_select %p457, %s22, 0
        %s459 = sadd.s32 %s458, %s456
        %s460 = smul.addr %s459, 4
        %s461 = scalar_lea.vmem %s4, %s460
      $region48: #{two_stream_forward.22} parent=43 // pred_fallthru
        _
    $region44: #{two_stream_forward.22} parent=5 // pred_fallthru
      _
  $region6: #{two_stream_forward.22} parent=0 // loop_footer
    %s14 = sadd.s32 1, %s10
  $region7: #{two_stream_forward.22} parent=0 // loop_footer_branch
    %9 = sbr.rel target = $region3
  $region8: #{two_stream_forward.22} parent=0 // loop_exit
    _

// kernel: two_stream_forward.31
$region0: #{two_stream_forward.31}
  #allocation0 [shape = 'u32[]', space=smem, size = 0x4, offset = 0x4, fixed_abs, tag = 'smem constant byte address 0x4 - core index']
  #allocation1 [shape = 'u32[144,128]{1,0:T(1,128)}', space=vmem, size = 0x12000, scoped, tag = 'internal scratch']
  %s0 = inlined_call_operand.vmem [shape: bf16[8,128], index: 0, kind: input, shape index: {}]
  %s1 = inlined_call_operand.vmem [shape: bf16[128,128], index: 1, kind: input, shape index: {}]
  %s2 = inlined_call_operand.vmem [shape: f32[2,128], index: 2, kind: input, shape index: {}]
  %s3 = inlined_call_operand.vmem [shape: f32[8,128], index: 3, kind: output, shape index: {}]
  %s4 = sld [smem:[#allocation0]]
  $region22: #{two_stream_forward.31} parent=0
    _
  %s6 = ssub.s32 1, %s4
  %s7 = scalar_select 0, %s6, %s4
  // Predicated region
  $region2: #{two_stream_forward.31} parent=0 // pred_check
    _
  $region3: #{two_stream_forward.31} parent=0 // pred_check_branch
    %9 = sbr.rel (0) target = $region5
  $region4: #{two_stream_forward.31} parent=0 // pred_region
    _
  $region5: #{two_stream_forward.31} parent=0 // pred_fallthru
    _
  // Predicated region
  $region6: #{two_stream_forward.31} parent=0 // pred_check
    _
  $region7: #{two_stream_forward.31} parent=0 // pred_check_branch
    %11 = sbr.rel (0) target = $region9
  $region8: #{two_stream_forward.31} parent=0 // pred_region
    _
  $region9: #{two_stream_forward.31} parent=0 // pred_fallthru
    _
  // Predicated region
  $region10: #{two_stream_forward.31} parent=0 // pred_check
    _
  $region11: #{two_stream_forward.31} parent=0 // pred_check_branch
    %13 = sbr.rel (0) target = $region13
  $region12: #{two_stream_forward.31} parent=0 // pred_region
    _
  $region13: #{two_stream_forward.31} parent=0 // pred_fallthru
    _
  %v15 = vld [vmem:[%s0] sm:$0xf]
  %v16 = vld [vmem:[%s1] sm:$0xf]
  %v17 = vld [vmem:[%s1 + $0x4] sm:$0xf]
  %v18 = vld [vmem:[%s1 + $0x8] sm:$0xf]
  %v19 = vld [vmem:[%s1 + $0xc] sm:$0xf]
  %v20 = vld [vmem:[%s1 + $0x10] sm:$0xf]
  %v21 = vld [vmem:[%s1 + $0x14] sm:$0xf]
  %v22 = vld [vmem:[%s1 + $0x18] sm:$0xf]
  %v23 = vld [vmem:[%s1 + $0x1c] sm:$0xf]
  %v24 = vld [vmem:[%s1 + $0x20] sm:$0xf]
  %v25 = vld [vmem:[%s1 + $0x24] sm:$0xf]
  %v26 = vld [vmem:[%s1 + $0x28] sm:$0xf]
  %v27 = vld [vmem:[%s1 + $0x2c] sm:$0xf]
  %v28 = vld [vmem:[%s1 + $0x30] sm:$0xf]
  %v29 = vld [vmem:[%s1 + $0x34] sm:$0xf]
  %v30 = vld [vmem:[%s1 + $0x38] sm:$0xf]
  %v31 = vld [vmem:[%s1 + $0x3c] sm:$0xf]
  %v48 = vunpack.c.l.b16 %v16
  %v49 = vunpack.c.l.b16 %v17
  %v50 = vunpack.c.l.b16 %v18
  %v51 = vunpack.c.l.b16 %v19
  %v52 = vunpack.c.l.b16 %v20
  %v53 = vunpack.c.l.b16 %v21
  %v54 = vunpack.c.l.b16 %v22
  %v55 = vunpack.c.l.b16 %v23
  %v56 = vunpack.c.l.b16 %v24
  %v57 = vunpack.c.l.b16 %v25
  %v58 = vunpack.c.l.b16 %v26
  %v59 = vunpack.c.l.b16 %v27
  %v60 = vunpack.c.l.b16 %v28
  %v61 = vunpack.c.l.b16 %v29
  %v62 = vunpack.c.l.b16 %v30
  %v63 = vunpack.c.l.b16 %v31
  %v64 = vpack.c.b16 %v49, %v48
  %v65 = vpack.c.b16 %v51, %v50
  %v66 = vpack.c.b16 %v53, %v52
  %v67 = vpack.c.b16 %v55, %v54
  %v68 = vpack.c.b16 %v57, %v56
  %v69 = vpack.c.b16 %v59, %v58
  %v70 = vpack.c.b16 %v61, %v60
  %v71 = vpack.c.b16 %v63, %v62
  %80 = vmatprep.subr.bf16.mxu0 0
  %81 = vmatpush1.bf16.msra.mxu0 %v64
  %82 = vmatprep.subr.bf16.mxu0 0
  %83 = vmatpush1.bf16.msra.mxu0 %v65
  %84 = vmatprep.subr.bf16.mxu0 0
  %85 = vmatpush1.bf16.msra.mxu0 %v66
  %86 = vmatprep.subr.bf16.mxu0 0
  %87 = vmatpush1.bf16.msra.mxu0 %v67
  %88 = vmatprep.subr.bf16.mxu0 0
  %89 = vmatpush1.bf16.msra.mxu0 %v68
  %90 = vmatprep.subr.bf16.mxu0 0
  %91 = vmatpush1.bf16.msra.mxu0 %v69
  %92 = vmatprep.subr.bf16.mxu0 0
  %93 = vmatpush1.bf16.msra.mxu0 %v70
  %94 = vmatprep.subr.bf16.mxu0 0
  %95 = vmatpush1.bf16.msra.mxu0 %v71
  %96 = vmatprep.subr.bf16.mxu0 0
  %97 = vmatpush1.bf16.msra.mxu0 0
  %98 = vmatprep.subr.bf16.mxu0 0
  %99 = vmatpush1.bf16.msra.mxu0 0
  %100 = vmatprep.subr.bf16.mxu0 0
  %101 = vmatpush1.bf16.msra.mxu0 0
  %102 = vmatprep.subr.bf16.mxu0 0
  %103 = vmatpush1.bf16.msra.mxu0 0
  %104 = vmatprep.subr.bf16.mxu0 0
  %105 = vmatpush1.bf16.msra.mxu0 0
  %106 = vmatprep.subr.bf16.mxu0 0
  %107 = vmatpush1.bf16.msra.mxu0 0
  %108 = vmatprep.subr.bf16.mxu0 0
  %109 = vmatpush1.bf16.msra.mxu0 0
  %110 = vmatprep.subr.bf16.mxu0 0
  %111 = vmatpush1.bf16.msra.mxu0 0
  %112 = vmatprep.mubr.bf16.mxu0 0
  %113 = vmatmul.mubr.bf16.gmra.mrb[0].mxu0 %v15
  %v114 = vpop.f32.mrb[0].mxu0
  %v115 = vadd.f32 0.0, %v114
  %v116 = vpop.f32.mrb[0].mxu0
  %v117 = vpop.f32.mrb[0].mxu0
  %v118 = vpop.f32.mrb[0].mxu0
  %119 = vdwg.mxu0
  %v120 = vld [vmem:[%s2] sm:$0x1]
  %v121 = vlaneseq
  %v122 = vshrl.u32 %v121, 7
  %v123 = vsub.s32 0, %v122
  %v124 = vrot.slane %v120, %v123
  %v125 = vmul.f32 %v115, %v124
  %v126 = vld [vmem:[%s2 + $0x1] sm:$0x1]
  %v127 = vlaneseq
  %v128 = vshrl.u32 %v127, 7
  %v129 = vsub.s32 0, %v128
  %v130 = vrot.slane %v126, %v129
  %v131 = vadd.f32 %v125, %v130
  %132 = vst [vmem:[%s3] sm:$0xff] %v131
  // Predicated region
  $region14: #{two_stream_forward.31} parent=0 // pred_check
    _
  $region15: #{two_stream_forward.31} parent=0 // pred_check_branch
    %134 = sbr.rel (0) target = $region17
  $region16: #{two_stream_forward.31} parent=0 // pred_region
    _
  $region17: #{two_stream_forward.31} parent=0 // pred_fallthru
    _
  // Predicated region
  $region18: #{two_stream_forward.31} parent=0 // pred_check
    _
  $region19: #{two_stream_forward.31} parent=0 // pred_check_branch
    %136 = sbr.rel (0) target = $region21
  $region20: #{two_stream_forward.31} parent=0 // pred_region
    _
  $region21: #{two_stream_forward.31} parent=0 // pred_fallthru
    _

// kernel: two_stream_forward.28
$region0: #{two_stream_forward.28}
  #allocation0 [shape = 'u32[]', space=smem, size = 0x4, offset = 0x4, fixed_abs, tag = 'smem constant byte address 0x4 - core index']
  #allocation1 [shape = 'u32[144,128]{1,0:T(1,128)}', space=vmem, size = 0x12000, scoped, tag = 'internal scratch']
  #allocation2 [shape = 'f32[1]{0:T(128)S(6)}', space=smem, size = 0x200, scoped, tag = 'scoped memory for two_stream_forward.28']
  %s0 = inlined_call_operand.vmem [shape: bf16[2,16,128], index: 0, kind: input, shape index: {}]
  %s1 = inlined_call_operand.<no memory space> [shape: f32[1], index: 1, kind: input, shape index: {}]
  %s2 = inlined_call_operand.vmem [shape: bf16[2,16,128], index: 2, kind: output, shape index: {}]
  %s3 = sld [smem:[#allocation0]]
  $region41: #{two_stream_forward.28} parent=0
    _
  %s5 = ssub.s32 1, %s3
  %s6 = scalar_select 0, %s5, %s3
  %7 = sst [smem:[#allocation2]] %s1
  loop: start=0, step=1, limit=4
  $region2: #{two_stream_forward.28} parent=0 // loop_pre_header
    _
  $region3: #{two_stream_forward.28} parent=0 // loop_header
    %s9 = sphi 0, %s13
    %p10 = scmp.ge.s32.totalorder %s9, 4
    %s19 = sphi 0, %s21
    %s22 = sphi 0, %s19
    %s23 = sphi 0, %s22
    %s39 = sphi 0, %s23
    %s43 = sphi 0, %s43
    %s45 = sphi 0, %s43
    %s46 = sphi 0, %s45
    %s60 = sphi 0, %s46
    %s66 = sphi 0, %s68
    %s69 = sphi 0, %s66
    %s70 = sphi 0, %s69
    %s86 = sphi 0, %s70
  $region4: #{two_stream_forward.28} parent=0 // loop_header_branch
    %12 = sbr.rel (%p10) target = $region8
  $region5: #{two_stream_forward.28} parent=0 // loop_body
    %s14 = ssub.s32 %s9, 1
    %s15 = ssub.s32 %s9, 2
    %s16 = sadd.s32 %s9, 1
    %s17 = ssub.s32 %s9, %s16
    %p18 = scmp.eq.s32.totalorder %s17, 0
    %s20 = sadd.s32 %s19, 1
    %s21 = scalar_select %p18, %s19, %s20
    %p24 = pneg %p18
    %p25 = scmp.eq.s32.totalorder %s9, 1
    %p26 = por %p24, %p25
    %p27 = scmp.ne.s32.totalorder %s19, %s22
    %p28 = scmp.eq.s32.totalorder %s9, 0
    %p29 = por %p27, %p28
    %p30 = scmp.ne.s32.totalorder %s19, %s22
    %p31 = scmp.eq.s32.totalorder %s14, 1
    %p32 = por %p30, %p31
    %p33 = scmp.ne.s32.totalorder %s22, %s23
    %p34 = scmp.eq.s32.totalorder %s14, 0
    %p35 = por %p33, %p34
    %p36 = scmp.ne.s32.totalorder %s22, %s23
    %p37 = scmp.eq.s32.totalorder %s15, 1
    %p38 = por %p36, %p37
    %p40 = scmp.ne.s32.totalorder %s23, %s39
    %p41 = scmp.eq.s32.totalorder %s15, 0
    %p42 = por %p40, %p41
    %s44 = sadd.s32 %s43, 1
    %p47 = scmp.eq.s32.totalorder %s9, 1
    %p48 = scmp.ne.s32.totalorder %s43, %s45
    %p49 = scmp.eq.s32.totalorder %s9, 0
    %p50 = por %p48, %p49
    %p51 = scmp.ne.s32.totalorder %s43, %s45
    %p52 = scmp.eq.s32.totalorder %s14, 1
    %p53 = por %p51, %p52
    %p54 = scmp.ne.s32.totalorder %s45, %s46
    %p55 = scmp.eq.s32.totalorder %s14, 0
    %p56 = por %p54, %p55
    %p57 = scmp.ne.s32.totalorder %s45, %s46
    %p58 = scmp.eq.s32.totalorder %s15, 1
    %p59 = por %p57, %p58
    %p61 = scmp.ne.s32.totalorder %s46, %s60
    %p62 = scmp.eq.s32.totalorder %s15, 0
    %p63 = por %p61, %p62
    %s64 = ssub.s32 %s9, %s16
    %p65 = scmp.eq.s32.totalorder %s64, 0
    %s67 = sadd.s32 %s66, 1
    %s68 = scalar_select %p65, %s66, %s67
    %p71 = pneg %p65
    %p72 = scmp.eq.s32.totalorder %s9, 1
    %p73 = por %p71, %p72
    %p74 = scmp.ne.s32.totalorder %s66, %s69
    %p75 = scmp.eq.s32.totalorder %s9, 0
    %p76 = por %p74, %p75
    %p77 = scmp.ne.s32.totalorder %s66, %s69
    %p78 = scmp.eq.s32.totalorder %s14, 1
    %p79 = por %p77, %p78
    %p80 = scmp.ne.s32.totalorder %s69, %s70
    %p81 = scmp.eq.s32.totalorder %s14, 0
    %p82 = por %p80, %p81
    %p83 = scmp.ne.s32.totalorder %s69, %s70
    %p84 = scmp.eq.s32.totalorder %s15, 1
    %p85 = por %p83, %p84
    %p87 = scmp.ne.s32.totalorder %s70, %s86
    %p88 = scmp.eq.s32.totalorder %s15, 0
    %p89 = por %p87, %p88
    %p90 = scmp.le.s32.totalorder 1, %s9
    %p91 = scmp.lt.s32.totalorder %s9, 3
    %p92 = pnand %p90, %p91
    %p93 = pneg %p92
    // Predicated region
    $region9: #{two_stream_forward.28} parent=5 // pred_check
      _
    $region10: #{two_stream_forward.28} parent=5 // pred_check_branch
      %95 = sbr.rel (%p92) target = $region12
    $region11: #{two_stream_forward.28} parent=5 // pred_region
      %s96 = ssub.s32 %s9, 1
      // Predicated region
      $region13: #{two_stream_forward.28} parent=11 // pred_check
        %p97 = pneg %p56
      $region14: #{two_stream_forward.28} parent=11 // pred_check_branch
        %99 = sbr.rel (%p97) target = $region16
      $region15: #{two_stream_forward.28} parent=11 // pred_region
        _
      $region16: #{two_stream_forward.28} parent=11 // pred_fallthru
        _
    $region12: #{two_stream_forward.28} parent=5 // pred_fallthru
      _
    %p100 = scmp.lt.s32.totalorder %s9, 2
    // Predicated region
    $region17: #{two_stream_forward.28} parent=5 // pred_check
      %p101 = pneg %p100
    $region18: #{two_stream_forward.28} parent=5 // pred_check_branch
      %103 = sbr.rel (%p101) target = $region20
    $region19: #{two_stream_forward.28} parent=5 // pred_region
      // Predicated region
      $region21: #{two_stream_forward.28} parent=19 // pred_check
        %p104 = pneg %p29
      $region22: #{two_stream_forward.28} parent=19 // pred_check_branch
        %106 = sbr.rel (%p104) target = $region24
      $region23: #{two_stream_forward.28} parent=19 // pred_region
        %p107 = scmp.lt.s32.totalorder %s9, 1
        %s108 = scalar_select %p107, %s9, 1
        %s109 = smul.addr %s108, 2
        %s110 = smul.addr %s109, 4
        %s111 = scalar_lea.vmem %s0, %s110
      $region24: #{two_stream_forward.28} parent=19 // pred_fallthru
        _
    $region20: #{two_stream_forward.28} parent=5 // pred_fallthru
      _
    %p112 = scmp.le.s32.totalorder 1, %s9
    %p113 = scmp.lt.s32.totalorder %s9, 3
    %p114 = pnand %p112, %p113
    %p115 = pneg %p114
    // Predicated region
    $region25: #{two_stream_forward.28} parent=5 // pred_check
      _
    $region26: #{two_stream_forward.28} parent=5 // pred_check_branch
      %117 = sbr.rel (%p114) target = $region28
    $region27: #{two_stream_forward.28} parent=5 // pred_region
      %s118 = ssub.s32 %s9, 1
      %p119 = scmp.lt.s32.totalorder %s14, 1
      %s120 = scalar_select %p119, %s14, 1
      %s121 = smul.addr %s120, 2
      %s122 = smul.addr %s121, 4
      %s123 = scalar_lea.vmem %s0, %s122
      %p124 = pneg %p35
      %p125 = pneg %p32
      %p126 = pneg %p56
      %p127 = pneg %p53
      %p128 = pneg %p82
      %p129 = pneg %p79
      %p130 = scmp.lt.s32.totalorder %s14, 1
      %s131 = scalar_select %p130, %s14, 1
      %s132 = smul.addr %s131, 2
      %s133 = smul.addr %s132, 4
      %s134 = scalar_lea.vmem %s2, %s133
      %p135 = scmp.lt.s32.totalorder %s14, 1
      %s136 = scalar_select %p135, %s14, 1
      %s137 = smul.addr %s136, 2
      %s138 = smul.addr %s137, 4
      %s139 = scalar_lea.vmem %s0, %s138
      %p140 = scmp.lt.s32.totalorder %s14, 1
      %s141 = scalar_select %p140, %s14, 1
      %s142 = smul.addr %s141, 2
      %s143 = smul.addr %s142, 4
      %s144 = scalar_lea.vmem %s2, %s143
      %v145 = vld [vmem:[%s139] sm:$0xf]
      %v146 = vld [vmem:[%s139 + $0x4] sm:$0xf]
      %v147 = vunpack.c.l.bf16 %v145
      %v148 = vunpack.c.l.bf16 %v146
      %149 = vxpose.xlu0.b32.start [1/16] %v147, 128
      %150 = vxpose.xlu0.b32.cont [2/16] %v148, 128
      %151 = vxpose.xlu0.b32.cont [3/16] 0.0, 128
      %152 = vxpose.xlu0.b32.cont [4/16] 0.0, 128
      %153 = vxpose.xlu0.b32.cont [5/16] 0.0, 128
      %154 = vxpose.xlu0.b32.cont [6/16] 0.0, 128
      %155 = vxpose.xlu0.b32.cont [7/16] 0.0, 128
      %156 = vxpose.xlu0.b32.cont [8/16] 0.0, 128
      %157 = vxpose.xlu0.b32.cont [9/16] 0.0, 128
      %158 = vxpose.xlu0.b32.cont [10/16] 0.0, 128
      %159 = vxpose.xlu0.b32.cont [11/16] 0.0, 128
      %160 = vxpose.xlu0.b32.cont [12/16] 0.0, 128
      %161 = vxpose.xlu0.b32.cont [13/16] 0.0, 128
      %162 = vxpose.xlu0.b32.cont [14/16] 0.0, 128
      %163 = vxpose.xlu0.b32.cont [15/16] 0.0, 128
      %164 = vxpose.xlu0.b32.end [16/16] 0.0, 128
      %v165 = vpop.trf.xlu0
      %v166 = vpop.trf.xlu0
      %v167 = vpop.trf.xlu0
      %v168 = vpop.trf.xlu0
      %v169 = vpop.trf.xlu0
      %v170 = vpop.trf.xlu0
      %v171 = vpop.trf.xlu0
      %v172 = vpop.trf.xlu0
      %v173 = vpop.trf.xlu0
      %v174 = vpop.trf.xlu0
      %v175 = vpop.trf.xlu0
      %v176 = vpop.trf.xlu0
      %v177 = vpop.trf.xlu0
      %v178 = vpop.trf.xlu0
      %v179 = vpop.trf.xlu0
      %v180 = vpop.trf.xlu0
      %vm181 = vcmask 130048
      %v183 = vsel %vm181, %v165, 0
      %v186 = vsel %vm181, %v166, 0
      %v189 = vsel %vm181, %v167, 0
      %v192 = vsel %vm181, %v168, 0
      %v195 = vsel %vm181, %v169, 0
      %v198 = vsel %vm181, %v170, 0
      %v201 = vsel %vm181, %v171, 0
      %v204 = vsel %vm181, %v172, 0
      %v207 = vsel %vm181, %v173, 0
      %v210 = vsel %vm181, %v174, 0
      %v213 = vsel %vm181, %v175, 0
      %v216 = vsel %vm181, %v176, 0
      %v219 = vsel %vm181, %v177, 0
      %v222 = vsel %vm181, %v178, 0
      %v225 = vsel %vm181, %v179, 0
      %v228 = vsel %vm181, %v180, 0
      %230 = vmatprep.subr.mxu0 0.0
      %231 = vmatpush1.msra.mxu0 %v147
      %232 = vmatprep.subr.mxu0 0.0
      %233 = vmatpush1.msra.mxu0 %v148
      %234 = vmatprep.subr.mxu0 0.0
      %235 = vmatpush1.msra.mxu0 0.0
      %236 = vmatprep.subr.mxu0 0.0
      %237 = vmatpush1.msra.mxu0 0.0
      %238 = vmatprep.subr.mxu0 0.0
      %239 = vmatpush1.msra.mxu0 0.0
      %240 = vmatprep.subr.mxu0 0.0
      %241 = vmatpush1.msra.mxu0 0.0
      %242 = vmatprep.subr.mxu0 0.0
      %243 = vmatpush1.msra.mxu0 0.0
      %244 = vmatprep.subr.mxu0 0.0
      %245 = vmatpush1.msra.mxu0 0.0
      %246 = vmatprep.subr.mxu0 0.0
      %247 = vmatpush1.msra.mxu0 0.0
      %248 = vmatprep.subr.mxu0 0.0
      %249 = vmatpush1.msra.mxu0 0.0
      %250 = vmatprep.subr.mxu0 0.0
      %251 = vmatpush1.msra.mxu0 0.0
      %252 = vmatprep.subr.mxu0 0.0
      %253 = vmatpush1.msra.mxu0 0.0
      %254 = vmatprep.subr.mxu0 0.0
      %255 = vmatpush1.msra.mxu0 0.0
      %256 = vmatprep.subr.mxu0 0.0
      %257 = vmatpush1.msra.mxu0 0.0
      %258 = vmatprep.subr.mxu0 0.0
      %259 = vmatpush1.msra.mxu0 0.0
      %260 = vmatprep.subr.mxu0 0.0
      %261 = vmatpush1.msra.mxu0 0.0
      %262 = vmatprep.subr.mxu0 0.0
      %263 = vmatpush1.msra.mxu0 0.0
      %264 = vmatprep.subr.mxu0 0.0
      %265 = vmatpush1.msra.mxu0 0.0
      %266 = vmatprep.subr.mxu0 0.0
      %267 = vmatpush1.msra.mxu0 0.0
      %268 = vmatprep.subr.mxu0 0.0
      %269 = vmatpush1.msra.mxu0 0.0
      %270 = vmatprep.subr.mxu0 0.0
      %271 = vmatpush1.msra.mxu0 0.0
      %272 = vmatprep.subr.mxu0 0.0
      %273 = vmatpush1.msra.mxu0 0.0
      %274 = vmatprep.subr.mxu0 0.0
      %275 = vmatpush1.msra.mxu0 0.0
      %276 = vmatprep.subr.mxu0 0.0
      %277 = vmatpush1.msra.mxu0 0.0
      %278 = vmatprep.subr.mxu0 0.0
      %279 = vmatpush1.msra.mxu0 0.0
      %280 = vmatprep.subr.mxu0 0.0
      %281 = vmatpush1.msra.mxu0 0.0
      %282 = vmatprep.subr.mxu0 0.0
      %283 = vmatpush1.msra.mxu0 0.0
      %284 = vmatprep.subr.mxu0 0.0
      %285 = vmatpush1.msra.mxu0 0.0
      %286 = vmatprep.subr.mxu0 0.0
      %287 = vmatpush1.msra.mxu0 0.0
      %288 = vmatprep.subr.mxu0 0.0
      %289 = vmatpush1.msra.mxu0 0.0
      %290 = vmatprep.subr.mxu0 0.0
      %291 = vmatpush1.msra.mxu0 0.0
      %292 = vmatprep.subr.mxu0 0.0
      %293 = vmatpush1.msra.mxu0 0.0
      %294 = vmatprep.mubr.f32.mxu0 0.0
      %295 = vmatmul.mubr.f32.gmra.mrb[0].mxu0 %v183
      %v296 = vpop.f32.mrb[0].mxu0
      %v297 = vadd.f32 0.0, %v296
      %v298 = vpop.f32.mrb[0].mxu0
      %299 = vmatprep.mubr.f32.mxu0 0.0
      %300 = vmatmul.mubr.f32.gmra.mrb[0].mxu0 %v186
      %v301 = vpop.f32.mrb[0].mxu0
      %v302 = vadd.f32 0.0, %v301
      %v303 = vpop.f32.mrb[0].mxu0
      %304 = vmatprep.mubr.f32.mxu0 0.0
      %305 = vmatmul.mubr.f32.gmra.mrb[0].mxu0 %v189
      %v306 = vpop.f32.mrb[0].mxu0
      %v307 = vadd.f32 0.0, %v306
      %v308 = vpop.f32.mrb[0].mxu0
      %309 = vmatprep.mubr.f32.mxu0 0.0
      %310 = vmatmul.mubr.f32.gmra.mrb[0].mxu0 %v192
      %v311 = vpop.f32.mrb[0].mxu0
      %v312 = vadd.f32 0.0, %v311
      %v313 = vpop.f32.mrb[0].mxu0
      %314 = vmatprep.mubr.f32.mxu0 0.0
      %315 = vmatmul.mubr.f32.gmra.mrb[0].mxu0 %v195
      %v316 = vpop.f32.mrb[0].mxu0
      %v317 = vadd.f32 0.0, %v316
      %v318 = vpop.f32.mrb[0].mxu0
      %319 = vmatprep.mubr.f32.mxu0 0.0
      %320 = vmatmul.mubr.f32.gmra.mrb[0].mxu0 %v198
      %v321 = vpop.f32.mrb[0].mxu0
      %v322 = vadd.f32 0.0, %v321
      %v323 = vpop.f32.mrb[0].mxu0
      %324 = vmatprep.mubr.f32.mxu0 0.0
      %325 = vmatmul.mubr.f32.gmra.mrb[0].mxu0 %v201
      %v326 = vpop.f32.mrb[0].mxu0
      %v327 = vadd.f32 0.0, %v326
      %v328 = vpop.f32.mrb[0].mxu0
      %329 = vmatprep.mubr.f32.mxu0 0.0
      %330 = vmatmul.mubr.f32.gmra.mrb[0].mxu0 %v204
      %v331 = vpop.f32.mrb[0].mxu0
      %v332 = vadd.f32 0.0, %v331
      %v333 = vpop.f32.mrb[0].mxu0
      %334 = vmatprep.mubr.f32.mxu0 0.0
      %335 = vmatmul.mubr.f32.gmra.mrb[0].mxu0 %v207
      %v336 = vpop.f32.mrb[0].mxu0
      %v337 = vadd.f32 0.0, %v336
      %v338 = vpop.f32.mrb[0].mxu0
      %339 = vmatprep.mubr.f32.mxu0 0.0
      %340 = vmatmul.mubr.f32.gmra.mrb[0].mxu0 %v210
      %v341 = vpop.f32.mrb[0].mxu0
      %v342 = vadd.f32 0.0, %v341
      %v343 = vpop.f32.mrb[0].mxu0
      %344 = vmatprep.mubr.f32.mxu0 0.0
      %345 = vmatmul.mubr.f32.gmra.mrb[0].mxu0 %v213
      %v346 = vpop.f32.mrb[0].mxu0
      %v347 = vadd.f32 0.0, %v346
      %v348 = vpop.f32.mrb[0].mxu0
      %349 = vmatprep.mubr.f32.mxu0 0.0
      %350 = vmatmul.mubr.f32.gmra.mrb[0].mxu0 %v216
      %v351 = vpop.f32.mrb[0].mxu0
      %v352 = vadd.f32 0.0, %v351
      %v353 = vpop.f32.mrb[0].mxu0
      %354 = vmatprep.mubr.f32.mxu0 0.0
      %355 = vmatmul.mubr.f32.gmra.mrb[0].mxu0 %v219
      %v356 = vpop.f32.mrb[0].mxu0
      %v357 = vadd.f32 0.0, %v356
      %v358 = vpop.f32.mrb[0].mxu0
      %359 = vmatprep.mubr.f32.mxu0 0.0
      %360 = vmatmul.mubr.f32.gmra.mrb[0].mxu0 %v222
      %v361 = vpop.f32.mrb[0].mxu0
      %v362 = vadd.f32 0.0, %v361
      %v363 = vpop.f32.mrb[0].mxu0
      %364 = vmatprep.mubr.f32.mxu0 0.0
      %365 = vmatmul.mubr.f32.gmra.mrb[0].mxu0 %v225
      %v366 = vpop.f32.mrb[0].mxu0
      %v367 = vadd.f32 0.0, %v366
      %v368 = vpop.f32.mrb[0].mxu0
      %369 = vmatprep.mubr.f32.mxu0 0.0
      %370 = vmatmul.mubr.f32.gmra.mrb[0].mxu0 %v228
      %v371 = vpop.f32.mrb[0].mxu0
      %v372 = vadd.f32 0.0, %v371
      %v373 = vpop.f32.mrb[0].mxu0
      %374 = vdwg.mxu0
      %v375 = vlaneseq
      %v376 = vand.u32 %v375, 127
      %377 = vmax.xlane.f32.xlu0 %v297
      %v378 = vpop.xlane.xlu0 %377
      %379 = vmax.xlane.f32.xlu0 %v302
      %v380 = vpop.xlane.xlu0 %379
      %381 = vmax.xlane.f32.xlu0 %v307
      %v382 = vpop.xlane.xlu0 %381
      %383 = vmax.xlane.f32.xlu0 %v312
      %v384 = vpop.xlane.xlu0 %383
      %385 = vmax.xlane.f32.xlu0 %v317
      %v386 = vpop.xlane.xlu0 %385
      %387 = vmax.xlane.f32.xlu0 %v322
      %v388 = vpop.xlane.xlu0 %387
      %389 = vmax.xlane.f32.xlu0 %v327
      %v390 = vpop.xlane.xlu0 %389
      %391 = vmax.xlane.f32.xlu0 %v332
      %v392 = vpop.xlane.xlu0 %391
      %393 = vmax.xlane.f32.xlu0 %v337
      %v394 = vpop.xlane.xlu0 %393
      %395 = vmax.xlane.f32.xlu0 %v342
      %v396 = vpop.xlane.xlu0 %395
      %397 = vmax.xlane.f32.xlu0 %v347
      %v398 = vpop.xlane.xlu0 %397
      %399 = vmax.xlane.f32.xlu0 %v352
      %v400 = vpop.xlane.xlu0 %399
      %401 = vmax.xlane.f32.xlu0 %v357
      %v402 = vpop.xlane.xlu0 %401
      %403 = vmax.xlane.f32.xlu0 %v362
      %v404 = vpop.xlane.xlu0 %403
      %405 = vmax.xlane.f32.xlu0 %v367
      %v406 = vpop.xlane.xlu0 %405
      %407 = vmax.xlane.f32.xlu0 %v372
      %v408 = vpop.xlane.xlu0 %407
      %v409 = vsub.f32 %v378, %v297
      %v410 = vsub.f32 %v380, %v302
      %v411 = vsub.f32 %v382, %v307
      %v412 = vsub.f32 %v384, %v312
      %v413 = vsub.f32 %v386, %v317
      %v414 = vsub.f32 %v388, %v322
      %v415 = vsub.f32 %v390, %v327
      %v416 = vsub.f32 %v392, %v332
      %v417 = vsub.f32 %v394, %v337
      %v418 = vsub.f32 %v396, %v342
      %v419 = vsub.f32 %v398, %v347
      %v420 = vsub.f32 %v400, %v352
      %v421 = vsub.f32 %v402, %v357
      %v422 = vsub.f32 %v404, %v362
      %v423 = vsub.f32 %v406, %v367
      %v424 = vsub.f32 %v408, %v372
      %vm425 = vcmp.lt.s32.totalorder %v376, 64
      %v426 = vsel %vm425, %v409, -1e+30
      %v427 = vsel %vm425, %v410, -1e+30
      %v428 = vsel %vm425, %v411, -1e+30
      %v429 = vsel %vm425, %v412, -1e+30
      %v430 = vsel %vm425, %v413, -1e+30
      %v431 = vsel %vm425, %v414, -1e+30
      %v432 = vsel %vm425, %v415, -1e+30
      %v433 = vsel %vm425, %v416, -1e+30
      %v434 = vsel %vm425, %v417, -1e+30
      %v435 = vsel %vm425, %v418, -1e+30
      %v436 = vsel %vm425, %v419, -1e+30
      %v437 = vsel %vm425, %v420, -1e+30
      %v438 = vsel %vm425, %v421, -1e+30
      %v439 = vsel %vm425, %v422, -1e+30
      %v440 = vsel %vm425, %v423, -1e+30
      %v441 = vsel %vm425, %v424, -1e+30
      %442 = vmax.xlane.f32.xlu0 %v426
      %v443 = vpop.xlane.xlu0 %442
      %444 = vmax.xlane.f32.xlu0 %v427
      %v445 = vpop.xlane.xlu0 %444
      %446 = vmax.xlane.f32.xlu0 %v428
      %v447 = vpop.xlane.xlu0 %446
      %448 = vmax.xlane.f32.xlu0 %v429
      %v449 = vpop.xlane.xlu0 %448
      %450 = vmax.xlane.f32.xlu0 %v430
      %v451 = vpop.xlane.xlu0 %450
      %452 = vmax.xlane.f32.xlu0 %v431
      %v453 = vpop.xlane.xlu0 %452
      %454 = vmax.xlane.f32.xlu0 %v432
      %v455 = vpop.xlane.xlu0 %454
      %456 = vmax.xlane.f32.xlu0 %v433
      %v457 = vpop.xlane.xlu0 %456
      %458 = vmax.xlane.f32.xlu0 %v434
      %v459 = vpop.xlane.xlu0 %458
      %460 = vmax.xlane.f32.xlu0 %v435
      %v461 = vpop.xlane.xlu0 %460
      %462 = vmax.xlane.f32.xlu0 %v436
      %v463 = vpop.xlane.xlu0 %462
      %464 = vmax.xlane.f32.xlu0 %v437
      %v465 = vpop.xlane.xlu0 %464
      %466 = vmax.xlane.f32.xlu0 %v438
      %v467 = vpop.xlane.xlu0 %466
      %468 = vmax.xlane.f32.xlu0 %v439
      %v469 = vpop.xlane.xlu0 %468
      %470 = vmax.xlane.f32.xlu0 %v440
      %v471 = vpop.xlane.xlu0 %470
      %472 = vmax.xlane.f32.xlu0 %v441
      %v473 = vpop.xlane.xlu0 %472
      %v474 = vsub.f32 %v426, %v443
      %v475 = vsub.f32 %v427, %v445
      %v476 = vsub.f32 %v428, %v447
      %v477 = vsub.f32 %v429, %v449
      %v478 = vsub.f32 %v430, %v451
      %v479 = vsub.f32 %v431, %v453
      %v480 = vsub.f32 %v432, %v455
      %v481 = vsub.f32 %v433, %v457
      %v482 = vsub.f32 %v434, %v459
      %v483 = vsub.f32 %v435, %v461
      %v484 = vsub.f32 %v436, %v463
      %v485 = vsub.f32 %v437, %v465
      %v486 = vsub.f32 %v438, %v467
      %v487 = vsub.f32 %v439, %v469
      %v488 = vsub.f32 %v440, %v471
      %v489 = vsub.f32 %v441, %v473
      %v490 = vmul.f32 %v474, 1.442695
      %v491 = vpow.pop %v490
      %v492 = vmul.f32 %v475, 1.442695
      %v493 = vpow.pop %v492
      %v494 = vmul.f32 %v476, 1.442695
      %v495 = vpow.pop %v494
      %v496 = vmul.f32 %v477, 1.442695
      %v497 = vpow.pop %v496
      %v498 = vmul.f32 %v478, 1.442695
      %v499 = vpow.pop %v498
      %v500 = vmul.f32 %v479, 1.442695
      %v501 = vpow.pop %v500
      %v502 = vmul.f32 %v480, 1.442695
      %v503 = vpow.pop %v502
      %v504 = vmul.f32 %v481, 1.442695
      %v505 = vpow.pop %v504
      %v506 = vmul.f32 %v482, 1.442695
      %v507 = vpow.pop %v506
      %v508 = vmul.f32 %v483, 1.442695
      %v509 = vpow.pop %v508
      %v510 = vmul.f32 %v484, 1.442695
      %v511 = vpow.pop %v510
      %v512 = vmul.f32 %v485, 1.442695
      %v513 = vpow.pop %v512
      %v514 = vmul.f32 %v486, 1.442695
      %v515 = vpow.pop %v514
      %v516 = vmul.f32 %v487, 1.442695
      %v517 = vpow.pop %v516
      %v518 = vmul.f32 %v488, 1.442695
      %v519 = vpow.pop %v518
      %v520 = vmul.f32 %v489, 1.442695
      %v521 = vpow.pop %v520
      %522 = vadd.xlane.f32.xlu0 %v491
      %v523 = vpop.xlane.xlu0 %522
      %524 = vadd.xlane.f32.xlu0 %v493
      %v525 = vpop.xlane.xlu0 %524
      %526 = vadd.xlane.f32.xlu0 %v495
      %v527 = vpop.xlane.xlu0 %526
      %528 = vadd.xlane.f32.xlu0 %v497
      %v529 = vpop.xlane.xlu0 %528
      %530 = vadd.xlane.f32.xlu0 %v499
      %v531 = vpop.xlane.xlu0 %530
      %532 = vadd.xlane.f32.xlu0 %v501
      %v533 = vpop.xlane.xlu0 %532
      %534 = vadd.xlane.f32.xlu0 %v503
      %v535 = vpop.xlane.xlu0 %534
      %536 = vadd.xlane.f32.xlu0 %v505
      %v537 = vpop.xlane.xlu0 %536
      %538 = vadd.xlane.f32.xlu0 %v507
      %v539 = vpop.xlane.xlu0 %538
      %540 = vadd.xlane.f32.xlu0 %v509
      %v541 = vpop.xlane.xlu0 %540
      %542 = vadd.xlane.f32.xlu0 %v511
      %v543 = vpop.xlane.xlu0 %542
      %544 = vadd.xlane.f32.xlu0 %v513
      %v545 = vpop.xlane.xlu0 %544
      %546 = vadd.xlane.f32.xlu0 %v515
      %v547 = vpop.xlane.xlu0 %546
      %548 = vadd.xlane.f32.xlu0 %v517
      %v549 = vpop.xlane.xlu0 %548
      %550 = vadd.xlane.f32.xlu0 %v519
      %v551 = vpop.xlane.xlu0 %550
      %552 = vadd.xlane.f32.xlu0 %v521
      %v553 = vpop.xlane.xlu0 %552
      %v554 = vrcp.pop %v523
      %v555 = vrcp.pop %v525
      %v556 = vrcp.pop %v527
      %v557 = vrcp.pop %v529
      %v558 = vrcp.pop %v531
      %v559 = vrcp.pop %v533
      %v560 = vrcp.pop %v535
      %v561 = vrcp.pop %v537
      %v562 = vrcp.pop %v539
      %v563 = vrcp.pop %v541
      %v564 = vrcp.pop %v543
      %v565 = vrcp.pop %v545
      %v566 = vrcp.pop %v547
      %v567 = vrcp.pop %v549
      %v568 = vrcp.pop %v551
      %v569 = vrcp.pop %v553
      %v570 = vmul.f32 %v491, %v554
      %v571 = vmul.f32 %v493, %v555
      %v572 = vmul.f32 %v495, %v556
      %v573 = vmul.f32 %v497, %v557
      %v574 = vmul.f32 %v499, %v558
      %v575 = vmul.f32 %v501, %v559
      %v576 = vmul.f32 %v503, %v560
      %v577 = vmul.f32 %v505, %v561
      %v578 = vmul.f32 %v507, %v562
      %v579 = vmul.f32 %v509, %v563
      %v580 = vmul.f32 %v511, %v564
      %v581 = vmul.f32 %v513, %v565
      %v582 = vmul.f32 %v515, %v566
      %v583 = vmul.f32 %v517, %v567
      %v584 = vmul.f32 %v519, %v568
      %v585 = vmul.f32 %v521, %v569
      %586 = vmatprep.subr.mxu0 0.0
      %587 = vmatpush1.msra.mxu0 %v165
      %588 = vmatprep.subr.mxu0 0.0
      %589 = vmatpush1.msra.mxu0 %v166
      %590 = vmatprep.subr.mxu0 0.0
      %591 = vmatpush1.msra.mxu0 %v167
      %592 = vmatprep.subr.mxu0 0.0
      %593 = vmatpush1.msra.mxu0 %v168
      %594 = vmatprep.subr.mxu0 0.0
      %595 = vmatpush1.msra.mxu0 %v169
      %596 = vmatprep.subr.mxu0 0.0
      %597 = vmatpush1.msra.mxu0 %v170
      %598 = vmatprep.subr.mxu0 0.0
      %599 = vmatpush1.msra.mxu0 %v171
      %600 = vmatprep.subr.mxu0 0.0
      %601 = vmatpush1.msra.mxu0 %v172
      %602 = vmatprep.subr.mxu0 0.0
      %603 = vmatpush1.msra.mxu0 %v173
      %604 = vmatprep.subr.mxu0 0.0
      %605 = vmatpush1.msra.mxu0 %v174
      %606 = vmatprep.subr.mxu0 0.0
      %607 = vmatpush1.msra.mxu0 %v175
      %608 = vmatprep.subr.mxu0 0.0
      %609 = vmatpush1.msra.mxu0 %v176
      %610 = vmatprep.subr.mxu0 0.0
      %611 = vmatpush1.msra.mxu0 %v177
      %612 = vmatprep.subr.mxu0 0.0
      %613 = vmatpush1.msra.mxu0 %v178
      %614 = vmatprep.subr.mxu0 0.0
      %615 = vmatpush1.msra.mxu0 %v179
      %616 = vmatprep.subr.mxu0 0.0
      %617 = vmatpush1.msra.mxu0 %v180
      %618 = vmatprep.subr.mxu0 0.0
      %619 = vmatpush1.msra.mxu0 0.0
      %620 = vmatprep.subr.mxu0 0.0
      %621 = vmatpush1.msra.mxu0 0.0
      %622 = vmatprep.subr.mxu0 0.0
      %623 = vmatpush1.msra.mxu0 0.0
      %624 = vmatprep.subr.mxu0 0.0
      %625 = vmatpush1.msra.mxu0 0.0
      %626 = vmatprep.subr.mxu0 0.0
      %627 = vmatpush1.msra.mxu0 0.0
      %628 = vmatprep.subr.mxu0 0.0
      %629 = vmatpush1.msra.mxu0 0.0
      %630 = vmatprep.subr.mxu0 0.0
      %631 = vmatpush1.msra.mxu0 0.0
      %632 = vmatprep.subr.mxu0 0.0
      %633 = vmatpush1.msra.mxu0 0.0
      %634 = vmatprep.subr.mxu0 0.0
      %635 = vmatpush1.msra.mxu0 0.0
      %636 = vmatprep.subr.mxu0 0.0
      %637 = vmatpush1.msra.mxu0 0.0
      %638 = vmatprep.subr.mxu0 0.0
      %639 = vmatpush1.msra.mxu0 0.0
      %640 = vmatprep.subr.mxu0 0.0
      %641 = vmatpush1.msra.mxu0 0.0
      %642 = vmatprep.subr.mxu0 0.0
      %643 = vmatpush1.msra.mxu0 0.0
      %644 = vmatprep.subr.mxu0 0.0
      %645 = vmatpush1.msra.mxu0 0.0
      %646 = vmatprep.subr.mxu0 0.0
      %647 = vmatpush1.msra.mxu0 0.0
      %648 = vmatprep.subr.mxu0 0.0
      %649 = vmatpush1.msra.mxu0 0.0
      %650 = vmatprep.mubr.f32.mxu0 0.0
      %651 = vmatmul.mubr.f32.gmra.mrb[0].mxu0 %v570
      %v652 = vpop.f32.mrb[0].mxu0
      %v653 = vadd.f32 0.0, %v652
      %v654 = vpop.f32.mrb[0].mxu0
      %655 = vmatprep.mubr.f32.mxu0 0.0
      %656 = vmatmul.mubr.f32.gmra.mrb[0].mxu0 %v571
      %v657 = vpop.f32.mrb[0].mxu0
      %v658 = vadd.f32 0.0, %v657
      %v659 = vpop.f32.mrb[0].mxu0
      %660 = vmatprep.mubr.f32.mxu0 0.0
      %661 = vmatmul.mubr.f32.gmra.mrb[0].mxu0 %v572
      %v662 = vpop.f32.mrb[0].mxu0
      %v663 = vadd.f32 0.0, %v662
      %v664 = vpop.f32.mrb[0].mxu0
      %665 = vmatprep.mubr.f32.mxu0 0.0
      %666 = vmatmul.mubr.f32.gmra.mrb[0].mxu0 %v573
      %v667 = vpop.f32.mrb[0].mxu0
      %v668 = vadd.f32 0.0, %v667
      %v669 = vpop.f32.mrb[0].mxu0
      %670 = vmatprep.mubr.f32.mxu0 0.0
      %671 = vmatmul.mubr.f32.gmra.mrb[0].mxu0 %v574
      %v672 = vpop.f32.mrb[0].mxu0
      %v673 = vadd.f32 0.0, %v672
      %v674 = vpop.f32.mrb[0].mxu0
      %675 = vmatprep.mubr.f32.mxu0 0.0
      %676 = vmatmul.mubr.f32.gmra.mrb[0].mxu0 %v575
      %v677 = vpop.f32.mrb[0].mxu0
      %v678 = vadd.f32 0.0, %v677
      %v679 = vpop.f32.mrb[0].mxu0
      %680 = vmatprep.mubr.f32.mxu0 0.0
      %681 = vmatmul.mubr.f32.gmra.mrb[0].mxu0 %v576
      %v682 = vpop.f32.mrb[0].mxu0
      %v683 = vadd.f32 0.0, %v682
      %v684 = vpop.f32.mrb[0].mxu0
      %685 = vmatprep.mubr.f32.mxu0 0.0
      %686 = vmatmul.mubr.f32.gmra.mrb[0].mxu0 %v577
      %v687 = vpop.f32.mrb[0].mxu0
      %v688 = vadd.f32 0.0, %v687
      %v689 = vpop.f32.mrb[0].mxu0
      %690 = vmatprep.mubr.f32.mxu0 0.0
      %691 = vmatmul.mubr.f32.gmra.mrb[0].mxu0 %v578
      %v692 = vpop.f32.mrb[0].mxu0
      %v693 = vadd.f32 0.0, %v692
      %v694 = vpop.f32.mrb[0].mxu0
      %695 = vmatprep.mubr.f32.mxu0 0.0
      %696 = vmatmul.mubr.f32.gmra.mrb[0].mxu0 %v579
      %v697 = vpop.f32.mrb[0].mxu0
      %v698 = vadd.f32 0.0, %v697
      %v699 = vpop.f32.mrb[0].mxu0
      %700 = vmatprep.mubr.f32.mxu0 0.0
      %701 = vmatmul.mubr.f32.gmra.mrb[0].mxu0 %v580
      %v702 = vpop.f32.mrb[0].mxu0
      %v703 = vadd.f32 0.0, %v702
      %v704 = vpop.f32.mrb[0].mxu0
      %705 = vmatprep.mubr.f32.mxu0 0.0
      %706 = vmatmul.mubr.f32.gmra.mrb[0].mxu0 %v581
      %v707 = vpop.f32.mrb[0].mxu0
      %v708 = vadd.f32 0.0, %v707
      %v709 = vpop.f32.mrb[0].mxu0
      %710 = vmatprep.mubr.f32.mxu0 0.0
      %711 = vmatmul.mubr.f32.gmra.mrb[0].mxu0 %v582
      %v712 = vpop.f32.mrb[0].mxu0
      %v713 = vadd.f32 0.0, %v712
      %v714 = vpop.f32.mrb[0].mxu0
      %715 = vmatprep.mubr.f32.mxu0 0.0
      %716 = vmatmul.mubr.f32.gmra.mrb[0].mxu0 %v583
      %v717 = vpop.f32.mrb[0].mxu0
      %v718 = vadd.f32 0.0, %v717
      %v719 = vpop.f32.mrb[0].mxu0
      %720 = vmatprep.mubr.f32.mxu0 0.0
      %721 = vmatmul.mubr.f32.gmra.mrb[0].mxu0 %v584
      %v722 = vpop.f32.mrb[0].mxu0
      %v723 = vadd.f32 0.0, %v722
      %v724 = vpop.f32.mrb[0].mxu0
      %725 = vmatprep.mubr.f32.mxu0 0.0
      %726 = vmatmul.mubr.f32.gmra.mrb[0].mxu0 %v585
      %v727 = vpop.f32.mrb[0].mxu0
      %v728 = vadd.f32 0.0, %v727
      %v729 = vpop.f32.mrb[0].mxu0
      %730 = vdwg.mxu0
      %731 = vxpose.xlu0.b32.start [1/16] %v653, 128
      %732 = vxpose.xlu0.b32.cont [2/16] %v658, 128
      %733 = vxpose.xlu0.b32.cont [3/16] %v663, 128
      %734 = vxpose.xlu0.b32.cont [4/16] %v668, 128
      %735 = vxpose.xlu0.b32.cont [5/16] %v673, 128
      %736 = vxpose.xlu0.b32.cont [6/16] %v678, 128
      %737 = vxpose.xlu0.b32.cont [7/16] %v683, 128
      %738 = vxpose.xlu0.b32.cont [8/16] %v688, 128
      %739 = vxpose.xlu0.b32.cont [9/16] %v693, 128
      %740 = vxpose.xlu0.b32.cont [10/16] %v698, 128
      %741 = vxpose.xlu0.b32.cont [11/16] %v703, 128
      %742 = vxpose.xlu0.b32.cont [12/16] %v708, 128
      %743 = vxpose.xlu0.b32.cont [13/16] %v713, 128
      %744 = vxpose.xlu0.b32.cont [14/16] %v718, 128
      %745 = vxpose.xlu0.b32.cont [15/16] %v723, 128
      %746 = vxpose.xlu0.b32.end [16/16] %v728, 128
      %v747 = vpop.trf.xlu0
      %v748 = vpop.trf.xlu0
      %v749 = vpop.trf.xlu0
      %v750 = vpop.trf.xlu0
      %v751 = vpop.trf.xlu0
      %v752 = vpop.trf.xlu0
      %v753 = vpop.trf.xlu0
      %v754 = vpop.trf.xlu0
      %v755 = vpop.trf.xlu0
      %v756 = vpop.trf.xlu0
      %v757 = vpop.trf.xlu0
      %v758 = vpop.trf.xlu0
      %v759 = vpop.trf.xlu0
      %v760 = vpop.trf.xlu0
      %v761 = vpop.trf.xlu0
      %v762 = vpop.trf.xlu0
      %v763 = vsel %vm425, %v747, 0.0
      %v764 = vsel %vm425, %v748, 0.0
      %s765 = sld [smem:[#allocation2]]
      %v766 = vstv %s765
      %v767 = vmul.f32 %v766, %v763
      %v768 = vmul.f32 %v766, %v764
      %v769 = vadd.f32 %v147, %v767
      %v770 = vadd.f32 %v148, %v768
      %v771 = vpack.c.bf16 %v770, %v769
      %v773 = vunpack.c.l.b16 %v771
      %v774 = vunpack.c.h.b16 %v771
      %v775 = vpack.c.b16 %v773, %v773
      %v776 = vpack.c.b16 %v774, %v774
      %779 = vst [vmem:[%s144] sm:$0xf] %v775
      %780 = vst [vmem:[%s144 + $0x4] sm:$0xf] %v776
      %p781 = scmp.lt.s32.totalorder %s14, 1
      %s782 = scalar_select %p781, %s14, 1
      %s783 = smul.addr %s782, 2
      %s784 = smul.addr %s783, 4
      %s785 = scalar_lea.vmem %s2, %s784
      // Predicated region
      $region29: #{two_stream_forward.28} parent=27 // pred_check
        %p786 = pneg %p79
      $region30: #{two_stream_forward.28} parent=27 // pred_check_branch
        %788 = sbr.rel (%p786) target = $region32
      $region31: #{two_stream_forward.28} parent=27 // pred_region
        _
      $region32: #{two_stream_forward.28} parent=27 // pred_fallthru
        _
    $region28: #{two_stream_forward.28} parent=5 // pred_fallthru
      _
    %p789 = scmp.le.s32.totalorder 2, %s9
    // Predicated region
    $region33: #{two_stream_forward.28} parent=5 // pred_check
      %p790 = pneg %p789
    $region34: #{two_stream_forward.28} parent=5 // pred_check_branch
      %792 = sbr.rel (%p790) target = $region36
    $region35: #{two_stream_forward.28} parent=5 // pred_region
      %s793 = ssub.s32 %s9, 2
      // Predicated region
      $region37: #{two_stream_forward.28} parent=35 // pred_check
        %p794 = pneg %p85
      $region38: #{two_stream_forward.28} parent=35 // pred_check_branch
        %796 = sbr.rel (%p794) target = $region40
      $region39: #{two_stream_forward.28} parent=35 // pred_region
        %p797 = scmp.lt.s32.totalorder %s15, 1
        %s798 = scalar_select %p797, %s15, 1
        %s799 = smul.addr %s798, 2
        %s800 = smul.addr %s799, 4
        %s801 = scalar_lea.vmem %s2, %s800
      $region40: #{two_stream_forward.28} parent=35 // pred_fallthru
        _
    $region36: #{two_stream_forward.28} parent=5 // pred_fallthru
      _
  $region6: #{two_stream_forward.28} parent=0 // loop_footer
    %s13 = sadd.s32 1, %s9
  $region7: #{two_stream_forward.28} parent=0 // loop_footer_branch
    %8 = sbr.rel target = $region3
  $region8: #{two_stream_forward.28} parent=0 // loop_exit
    _

// kernel: two_stream_forward.21
$region0: #{two_stream_forward.21}
  #allocation0 [shape = 'u32[]', space=smem, size = 0x4, offset = 0x4, fixed_abs, tag = 'smem constant byte address 0x4 - core index']
  #allocation1 [shape = 'u32[144,128]{1,0:T(1,128)}', space=vmem, size = 0x12000, scoped, tag = 'internal scratch']
  %s0 = inlined_call_operand.vmem [shape: bf16[2,56,128], index: 0, kind: input, shape index: {}]
  %s1 = inlined_call_operand.vmem [shape: bf16[9,128,128], index: 1, kind: input, shape index: {}]
  %s2 = inlined_call_operand.vmem [shape: f32[2,128], index: 2, kind: input, shape index: {}]
  %s3 = inlined_call_operand.vmem [shape: bf16[2,40,128], index: 3, kind: output, shape index: {}]
  %s4 = sld [smem:[#allocation0]]
  $region45: #{two_stream_forward.21} parent=0
    _
  %s6 = ssub.s32 1, %s4
  %s7 = scalar_select 0, %s6, %s4
  loop: start=0, step=1, limit=4
  $region2: #{two_stream_forward.21} parent=0 // loop_pre_header
    _
  $region3: #{two_stream_forward.21} parent=0 // loop_header
    %s9 = sphi 0, %s13
    %p10 = scmp.ge.s32.totalorder %s9, 4
    %s19 = sphi 0, %s21
    %s22 = sphi 0, %s19
    %s23 = sphi 0, %s22
    %s39 = sphi 0, %s23
    %s43 = sphi 0, %s43
    %s45 = sphi 0, %s43
    %s46 = sphi 0, %s45
    %s60 = sphi 0, %s46
    %s64 = sphi 0, %s64
    %s66 = sphi 0, %s64
    %s67 = sphi 0, %s66
    %s81 = sphi 0, %s67
    %s87 = sphi 0, %s89
    %s90 = sphi 0, %s87
    %s91 = sphi 0, %s90
    %s107 = sphi 0, %s91
  $region4: #{two_stream_forward.21} parent=0 // loop_header_branch
    %12 = sbr.rel (%p10) target = $region8
  $region5: #{two_stream_forward.21} parent=0 // loop_body
    %s14 = ssub.s32 %s9, 1
    %s15 = ssub.s32 %s9, 2
    %s16 = sadd.s32 %s9, 1
    %s17 = ssub.s32 %s9, %s16
    %p18 = scmp.eq.s32.totalorder %s17, 0
    %s20 = sadd.s32 %s19, 1
    %s21 = scalar_select %p18, %s19, %s20
    %p24 = pneg %p18
    %p25 = scmp.eq.s32.totalorder %s9, 1
    %p26 = por %p24, %p25
    %p27 = scmp.ne.s32.totalorder %s19, %s22
    %p28 = scmp.eq.s32.totalorder %s9, 0
    %p29 = por %p27, %p28
    %p30 = scmp.ne.s32.totalorder %s19, %s22
    %p31 = scmp.eq.s32.totalorder %s14, 1
    %p32 = por %p30, %p31
    %p33 = scmp.ne.s32.totalorder %s22, %s23
    %p34 = scmp.eq.s32.totalorder %s14, 0
    %p35 = por %p33, %p34
    %p36 = scmp.ne.s32.totalorder %s22, %s23
    %p37 = scmp.eq.s32.totalorder %s15, 1
    %p38 = por %p36, %p37
    %p40 = scmp.ne.s32.totalorder %s23, %s39
    %p41 = scmp.eq.s32.totalorder %s15, 0
    %p42 = por %p40, %p41
    %s44 = sadd.s32 %s43, 1
    %p47 = scmp.eq.s32.totalorder %s9, 1
    %p48 = scmp.ne.s32.totalorder %s43, %s45
    %p49 = scmp.eq.s32.totalorder %s9, 0
    %p50 = por %p48, %p49
    %p51 = scmp.ne.s32.totalorder %s43, %s45
    %p52 = scmp.eq.s32.totalorder %s14, 1
    %p53 = por %p51, %p52
    %p54 = scmp.ne.s32.totalorder %s45, %s46
    %p55 = scmp.eq.s32.totalorder %s14, 0
    %p56 = por %p54, %p55
    %p57 = scmp.ne.s32.totalorder %s45, %s46
    %p58 = scmp.eq.s32.totalorder %s15, 1
    %p59 = por %p57, %p58
    %p61 = scmp.ne.s32.totalorder %s46, %s60
    %p62 = scmp.eq.s32.totalorder %s15, 0
    %p63 = por %p61, %p62
    %s65 = sadd.s32 %s64, 1
    %p68 = scmp.eq.s32.totalorder %s9, 1
    %p69 = scmp.ne.s32.totalorder %s64, %s66
    %p70 = scmp.eq.s32.totalorder %s9, 0
    %p71 = por %p69, %p70
    %p72 = scmp.ne.s32.totalorder %s64, %s66
    %p73 = scmp.eq.s32.totalorder %s14, 1
    %p74 = por %p72, %p73
    %p75 = scmp.ne.s32.totalorder %s66, %s67
    %p76 = scmp.eq.s32.totalorder %s14, 0
    %p77 = por %p75, %p76
    %p78 = scmp.ne.s32.totalorder %s66, %s67
    %p79 = scmp.eq.s32.totalorder %s15, 1
    %p80 = por %p78, %p79
    %p82 = scmp.ne.s32.totalorder %s67, %s81
    %p83 = scmp.eq.s32.totalorder %s15, 0
    %p84 = por %p82, %p83
    %s85 = ssub.s32 %s9, %s16
    %p86 = scmp.eq.s32.totalorder %s85, 0
    %s88 = sadd.s32 %s87, 1
    %s89 = scalar_select %p86, %s87, %s88
    %p92 = pneg %p86
    %p93 = scmp.eq.s32.totalorder %s9, 1
    %p94 = por %p92, %p93
    %p95 = scmp.ne.s32.totalorder %s87, %s90
    %p96 = scmp.eq.s32.totalorder %s9, 0
    %p97 = por %p95, %p96
    %p98 = scmp.ne.s32.totalorder %s87, %s90
    %p99 = scmp.eq.s32.totalorder %s14, 1
    %p100 = por %p98, %p99
    %p101 = scmp.ne.s32.totalorder %s90, %s91
    %p102 = scmp.eq.s32.totalorder %s14, 0
    %p103 = por %p101, %p102
    %p104 = scmp.ne.s32.totalorder %s90, %s91
    %p105 = scmp.eq.s32.totalorder %s15, 1
    %p106 = por %p104, %p105
    %p108 = scmp.ne.s32.totalorder %s91, %s107
    %p109 = scmp.eq.s32.totalorder %s15, 0
    %p110 = por %p108, %p109
    %p111 = scmp.le.s32.totalorder 1, %s9
    %p112 = scmp.lt.s32.totalorder %s9, 3
    %p113 = pnand %p111, %p112
    %p114 = pneg %p113
    // Predicated region
    $region9: #{two_stream_forward.21} parent=5 // pred_check
      _
    $region10: #{two_stream_forward.21} parent=5 // pred_check_branch
      %116 = sbr.rel (%p113) target = $region12
    $region11: #{two_stream_forward.21} parent=5 // pred_region
      %s117 = ssub.s32 %s9, 1
      // Predicated region
      $region13: #{two_stream_forward.21} parent=11 // pred_check
        %p118 = pneg %p56
      $region14: #{two_stream_forward.21} parent=11 // pred_check_branch
        %120 = sbr.rel (%p118) target = $region16
      $region15: #{two_stream_forward.21} parent=11 // pred_region
        _
      $region16: #{two_stream_forward.21} parent=11 // pred_fallthru
        _
      // Predicated region
      $region17: #{two_stream_forward.21} parent=11 // pred_check
        %p121 = pneg %p77
      $region18: #{two_stream_forward.21} parent=11 // pred_check_branch
        %123 = sbr.rel (%p121) target = $region20
      $region19: #{two_stream_forward.21} parent=11 // pred_region
        _
      $region20: #{two_stream_forward.21} parent=11 // pred_fallthru
        _
    $region12: #{two_stream_forward.21} parent=5 // pred_fallthru
      _
    %p124 = scmp.lt.s32.totalorder %s9, 2
    // Predicated region
    $region21: #{two_stream_forward.21} parent=5 // pred_check
      %p125 = pneg %p124
    $region22: #{two_stream_forward.21} parent=5 // pred_check_branch
      %127 = sbr.rel (%p125) target = $region24
    $region23: #{two_stream_forward.21} parent=5 // pred_region
      // Predicated region
      $region25: #{two_stream_forward.21} parent=23 // pred_check
        %p128 = pneg %p29
      $region26: #{two_stream_forward.21} parent=23 // pred_check_branch
        %130 = sbr.rel (%p128) target = $region28
      $region27: #{two_stream_forward.21} parent=23 // pred_region
        %p131 = scmp.lt.s32.totalorder %s9, 1
        %s132 = scalar_select %p131, %s9, 1
        %s133 = smul.addr %s132, 7
        %s134 = smul.addr %s133, 4
        %s135 = scalar_lea.vmem %s0, %s134
      $region28: #{two_stream_forward.21} parent=23 // pred_fallthru
        _
    $region24: #{two_stream_forward.21} parent=5 // pred_fallthru
      _
    %p136 = scmp.le.s32.totalorder 1, %s9
    %p137 = scmp.lt.s32.totalorder %s9, 3
    %p138 = pnand %p136, %p137
    %p139 = pneg %p138
    // Predicated region
    $region29: #{two_stream_forward.21} parent=5 // pred_check
      _
    $region30: #{two_stream_forward.21} parent=5 // pred_check_branch
      %141 = sbr.rel (%p138) target = $region32
    $region31: #{two_stream_forward.21} parent=5 // pred_region
      %s142 = ssub.s32 %s9, 1
      %p143 = scmp.lt.s32.totalorder %s14, 1
      %s144 = scalar_select %p143, %s14, 1
      %s145 = smul.addr %s144, 7
      %s146 = smul.addr %s145, 4
      %s147 = scalar_lea.vmem %s0, %s146
      %p148 = pneg %p35
      %p149 = pneg %p32
      %p150 = pneg %p56
      %p151 = pneg %p53
      %p152 = pneg %p77
      %p153 = pneg %p74
      %p154 = pneg %p103
      %p155 = pneg %p100
      %p156 = scmp.lt.s32.totalorder %s14, 1
      %s157 = scalar_select %p156, %s14, 1
      %s158 = smul.addr %s157, 5
      %s159 = smul.addr %s158, 4
      %s160 = scalar_lea.vmem %s3, %s159
      %p161 = scmp.lt.s32.totalorder %s14, 1
      %s162 = scalar_select %p161, %s14, 1
      %s163 = smul.addr %s162, 7
      %s164 = smul.addr %s163, 4
      %s165 = scalar_lea.vmem %s0, %s164
      %p166 = scmp.lt.s32.totalorder %s14, 1
      %s167 = scalar_select %p166, %s14, 1
      %s168 = smul.addr %s167, 5
      %s169 = smul.addr %s168, 4
      %s170 = scalar_lea.vmem %s3, %s169
      %v172 = vld [vmem:[%s165] sm:$0xf]
      %v173 = vld [vmem:[%s165 + $0x4] sm:$0xf]
      %v174 = vld [vmem:[%s165 + $0x8] sm:$0xf]
      %v175 = vld [vmem:[%s165 + $0xc] sm:$0xf]
      %v176 = vld [vmem:[%s165 + $0x10] sm:$0xf]
      %v177 = vld [vmem:[%s165 + $0x14] sm:$0xf]
      %v178 = vld [vmem:[%s165 + $0x18] sm:$0xf]
      %v179 = vld [vmem:[%s1] sm:$0xf]
      %v180 = vld [vmem:[%s1 + $0x4] sm:$0xf]
      %v181 = vld [vmem:[%s1 + $0x8] sm:$0xf]
      %v182 = vld [vmem:[%s1 + $0xc] sm:$0xf]
      %v183 = vld [vmem:[%s1 + $0x10] sm:$0xf]
      %v184 = vld [vmem:[%s1 + $0x14] sm:$0xf]
      %v185 = vld [vmem:[%s1 + $0x18] sm:$0xf]
      %v186 = vld [vmem:[%s1 + $0x1c] sm:$0xf]
      %v187 = vld [vmem:[%s1 + $0x20] sm:$0xf]
      %v188 = vld [vmem:[%s1 + $0x24] sm:$0xf]
      %v189 = vld [vmem:[%s1 + $0x28] sm:$0xf]
      %v190 = vld [vmem:[%s1 + $0x2c] sm:$0xf]
      %v191 = vld [vmem:[%s1 + $0x30] sm:$0xf]
      %v192 = vld [vmem:[%s1 + $0x34] sm:$0xf]
      %v193 = vld [vmem:[%s1 + $0x38] sm:$0xf]
      %v194 = vld [vmem:[%s1 + $0x3c] sm:$0xf]
      %s195 = scalar_lea.vmem %s1, 64
      %v196 = vld [vmem:[%s195] sm:$0xf]
      %v197 = vld [vmem:[%s195 + $0x4] sm:$0xf]
      %v198 = vld [vmem:[%s195 + $0x8] sm:$0xf]
      %v199 = vld [vmem:[%s195 + $0xc] sm:$0xf]
      %v200 = vld [vmem:[%s195 + $0x10] sm:$0xf]
      %v201 = vld [vmem:[%s195 + $0x14] sm:$0xf]
      %v202 = vld [vmem:[%s195 + $0x18] sm:$0xf]
      %v203 = vld [vmem:[%s195 + $0x1c] sm:$0xf]
      %v204 = vld [vmem:[%s195 + $0x20] sm:$0xf]
      %v205 = vld [vmem:[%s195 + $0x24] sm:$0xf]
      %v206 = vld [vmem:[%s195 + $0x28] sm:$0xf]
      %v207 = vld [vmem:[%s195 + $0x2c] sm:$0xf]
      %v208 = vld [vmem:[%s195 + $0x30] sm:$0xf]
      %v209 = vld [vmem:[%s195 + $0x34] sm:$0xf]
      %v210 = vld [vmem:[%s195 + $0x38] sm:$0xf]
      %v211 = vld [vmem:[%s195 + $0x3c] sm:$0xf]
      %v218 = vunpack.c.l.b16 %v172
      %v219 = vunpack.c.l.b16 %v173
      %v220 = vunpack.c.l.b16 %v174
      %v221 = vunpack.c.l.b16 %v175
      %v222 = vunpack.c.l.b16 %v176
      %v223 = vunpack.c.l.b16 %v177
      %v224 = vpack.c.b16 %v219, %v218
      %v225 = vpack.c.b16 %v221, %v220
      %v226 = vpack.c.b16 %v223, %v222
      %vm227 = vsmask.f32 7424
      %v229 = vshrl.u32 %v224, 16
      %v231 = vshll.u32 %v224, 16
      %v233 = vrot.slane %v231, 1
      %v234 = vor.u32 %v229, %v233
      %v236 = vshll.u32 %v225, 16
      %v238 = vrot.slane %v236, 1
      %v239 = vsel %vm227, %v234, %v238
      %v240 = vshrl.u32 %v225, 16
      %v242 = vor.u32 %v240, %v238
      %v244 = vshll.u32 %v226, 16
      %v246 = vrot.slane %v244, 1
      %v247 = vsel %vm227, %v242, %v246
      %v248 = vshrl.u32 %v226, 16
      %v250 = vor.u32 %v248, %v246
      %v270 = vunpack.c.l.b16 %v196
      %v271 = vunpack.c.l.b16 %v197
      %v272 = vunpack.c.l.b16 %v198
      %v273 = vunpack.c.l.b16 %v199
      %v274 = vunpack.c.l.b16 %v200
      %v275 = vunpack.c.l.b16 %v201
      %v276 = vunpack.c.l.b16 %v202
      %v277 = vunpack.c.l.b16 %v203
      %v278 = vunpack.c.l.b16 %v204
      %v279 = vunpack.c.l.b16 %v205
      %v280 = vunpack.c.l.b16 %v206
      %v281 = vunpack.c.l.b16 %v207
      %v282 = vunpack.c.l.b16 %v208
      %v283 = vunpack.c.l.b16 %v209
      %v284 = vunpack.c.l.b16 %v210
      %v285 = vunpack.c.l.b16 %v211
      %v286 = vpack.c.b16 %v271, %v270
      %v287 = vpack.c.b16 %v273, %v272
      %v288 = vpack.c.b16 %v275, %v274
      %v289 = vpack.c.b16 %v277, %v276
      %v290 = vpack.c.b16 %v279, %v278
      %v291 = vpack.c.b16 %v281, %v280
      %v292 = vpack.c.b16 %v283, %v282
      %v293 = vpack.c.b16 %v285, %v284
      %302 = vmatprep.subr.bf16.mxu0 0
      %303 = vmatpush1.bf16.msra.mxu0 %v286
      %304 = vmatprep.subr.bf16.mxu0 0
      %305 = vmatpush1.bf16.msra.mxu0 %v287
      %306 = vmatprep.subr.bf16.mxu0 0
      %307 = vmatpush1.bf16.msra.mxu0 %v288
      %308 = vmatprep.subr.bf16.mxu0 0
      %309 = vmatpush1.bf16.msra.mxu0 %v289
      %310 = vmatprep.subr.bf16.mxu0 0
      %311 = vmatpush1.bf16.msra.mxu0 %v290
      %312 = vmatprep.subr.bf16.mxu0 0
      %313 = vmatpush1.bf16.msra.mxu0 %v291
      %314 = vmatprep.subr.bf16.mxu0 0
      %315 = vmatpush1.bf16.msra.mxu0 %v292
      %316 = vmatprep.subr.bf16.mxu0 0
      %317 = vmatpush1.bf16.msra.mxu0 %v293
      %318 = vmatprep.subr.bf16.mxu0 0
      %319 = vmatpush1.bf16.msra.mxu0 0
      %320 = vmatprep.subr.bf16.mxu0 0
      %321 = vmatpush1.bf16.msra.mxu0 0
      %322 = vmatprep.subr.bf16.mxu0 0
      %323 = vmatpush1.bf16.msra.mxu0 0
      %324 = vmatprep.subr.bf16.mxu0 0
      %325 = vmatpush1.bf16.msra.mxu0 0
      %326 = vmatprep.subr.bf16.mxu0 0
      %327 = vmatpush1.bf16.msra.mxu0 0
      %328 = vmatprep.subr.bf16.mxu0 0
      %329 = vmatpush1.bf16.msra.mxu0 0
      %330 = vmatprep.subr.bf16.mxu0 0
      %331 = vmatpush1.bf16.msra.mxu0 0
      %332 = vmatprep.subr.bf16.mxu0 0
      %333 = vmatpush1.bf16.msra.mxu0 0
      %334 = vmatprep.mubr.bf16.mxu0 0
      %335 = vmatmul.mubr.bf16.gmra.mrb[0].mxu0 %v239
      %v336 = vpop.f32.mrb[0].mxu0
      %v337 = vadd.f32 0.0, %v336
      %v338 = vpop.f32.mrb[0].mxu0
      %v339 = vpop.f32.mrb[0].mxu0
      %v340 = vadd.f32 0.0, %v339
      %v341 = vpop.f32.mrb[0].mxu0
      %342 = vmatprep.mubr.bf16.mxu0 0
      %343 = vmatmul.mubr.bf16.gmra.mrb[0].mxu0 %v247
      %v344 = vpop.f32.mrb[0].mxu0
      %v345 = vadd.f32 0.0, %v344
      %v346 = vpop.f32.mrb[0].mxu0
      %v347 = vpop.f32.mrb[0].mxu0
      %v348 = vadd.f32 0.0, %v347
      %v349 = vpop.f32.mrb[0].mxu0
      %350 = vmatprep.mubr.bf16.mxu0 0
      %351 = vmatmul.mubr.bf16.gmra.mrb[0].mxu0 %v250
      %v352 = vpop.f32.mrb[0].mxu0
      %v353 = vadd.f32 0.0, %v352
      %v354 = vpop.f32.mrb[0].mxu0
      %v355 = vpop.f32.mrb[0].mxu0
      %v356 = vpop.f32.mrb[0].mxu0
      %357 = vdwg.mxu0
      %v358 = vpack.c.b16 %v222, %v222
      %v378 = vunpack.c.l.b16 %v179
      %v379 = vunpack.c.l.b16 %v180
      %v380 = vunpack.c.l.b16 %v181
      %v381 = vunpack.c.l.b16 %v182
      %v382 = vunpack.c.l.b16 %v183
      %v383 = vunpack.c.l.b16 %v184
      %v384 = vunpack.c.l.b16 %v185
      %v385 = vunpack.c.l.b16 %v186
      %v386 = vunpack.c.l.b16 %v187
      %v387 = vunpack.c.l.b16 %v188
      %v388 = vunpack.c.l.b16 %v189
      %v389 = vunpack.c.l.b16 %v190
      %v390 = vunpack.c.l.b16 %v191
      %v391 = vunpack.c.l.b16 %v192
      %v392 = vunpack.c.l.b16 %v193
      %v393 = vunpack.c.l.b16 %v194
      %v394 = vpack.c.b16 %v379, %v378
      %v395 = vpack.c.b16 %v381, %v380
      %v396 = vpack.c.b16 %v383, %v382
      %v397 = vpack.c.b16 %v385, %v384
      %v398 = vpack.c.b16 %v387, %v386
      %v399 = vpack.c.b16 %v389, %v388
      %v400 = vpack.c.b16 %v391, %v390
      %v401 = vpack.c.b16 %v393, %v392
      %410 = vmatprep.subr.bf16.mxu0 0
      %411 = vmatpush1.bf16.msra.mxu0 %v394
      %412 = vmatprep.subr.bf16.mxu0 0
      %413 = vmatpush1.bf16.msra.mxu0 %v395
      %414 = vmatprep.subr.bf16.mxu0 0
      %415 = vmatpush1.bf16.msra.mxu0 %v396
      %416 = vmatprep.subr.bf16.mxu0 0
      %417 = vmatpush1.bf16.msra.mxu0 %v397
      %418 = vmatprep.subr.bf16.mxu0 0
      %419 = vmatpush1.bf16.msra.mxu0 %v398
      %420 = vmatprep.subr.bf16.mxu0 0
      %421 = vmatpush1.bf16.msra.mxu0 %v399
      %422 = vmatprep.subr.bf16.mxu0 0
      %423 = vmatpush1.bf16.msra.mxu0 %v400
      %424 = vmatprep.subr.bf16.mxu0 0
      %425 = vmatpush1.bf16.msra.mxu0 %v401
      %426 = vmatprep.subr.bf16.mxu0 0
      %427 = vmatpush1.bf16.msra.mxu0 0
      %428 = vmatprep.subr.bf16.mxu0 0
      %429 = vmatpush1.bf16.msra.mxu0 0
      %430 = vmatprep.subr.bf16.mxu0 0
      %431 = vmatpush1.bf16.msra.mxu0 0
      %432 = vmatprep.subr.bf16.mxu0 0
      %433 = vmatpush1.bf16.msra.mxu0 0
      %434 = vmatprep.subr.bf16.mxu0 0
      %435 = vmatpush1.bf16.msra.mxu0 0
      %436 = vmatprep.subr.bf16.mxu0 0
      %437 = vmatpush1.bf16.msra.mxu0 0
      %438 = vmatprep.subr.bf16.mxu0 0
      %439 = vmatpush1.bf16.msra.mxu0 0
      %440 = vmatprep.subr.bf16.mxu0 0
      %441 = vmatpush1.bf16.msra.mxu0 0
      %442 = vmatprep.mubr.bf16.mxu0 0
      %443 = vmatmul.mubr.bf16.gmra.mrb[0].mxu0 %v224
      %v444 = vpop.f32.mrb[0].mxu0
      %v445 = vadd.f32 %v337, %v444
      %v446 = vpop.f32.mrb[0].mxu0
      %v447 = vpop.f32.mrb[0].mxu0
      %v448 = vadd.f32 %v340, %v447
      %v449 = vpop.f32.mrb[0].mxu0
      %450 = vmatprep.mubr.bf16.mxu0 0
      %451 = vmatmul.mubr.bf16.gmra.mrb[0].mxu0 %v225
      %v452 = vpop.f32.mrb[0].mxu0
      %v453 = vadd.f32 %v345, %v452
      %v454 = vpop.f32.mrb[0].mxu0
      %v455 = vpop.f32.mrb[0].mxu0
      %v456 = vadd.f32 %v348, %v455
      %v457 = vpop.f32.mrb[0].mxu0
      %458 = vmatprep.mubr.bf16.mxu0 0
      %459 = vmatmul.mubr.bf16.gmra.mrb[0].mxu0 %v358
      %v460 = vpop.f32.mrb[0].mxu0
      %v461 = vadd.f32 %v353, %v460
      %v462 = vpop.f32.mrb[0].mxu0
      %v463 = vpop.f32.mrb[0].mxu0
      %v464 = vpop.f32.mrb[0].mxu0
      %465 = vdwg.mxu0
      %s466 = scalar_lea.vmem %s1, 128
      %v467 = vld [vmem:[%s466] sm:$0xf]
      %v468 = vld [vmem:[%s466 + $0x4] sm:$0xf]
      %v469 = vld [vmem:[%s466 + $0x8] sm:$0xf]
      %v470 = vld [vmem:[%s466 + $0xc] sm:$0xf]
      %v471 = vld [vmem:[%s466 + $0x10] sm:$0xf]
      %v472 = vld [vmem:[%s466 + $0x14] sm:$0xf]
      %v473 = vld [vmem:[%s466 + $0x18] sm:$0xf]
      %v474 = vld [vmem:[%s466 + $0x1c] sm:$0xf]
      %v475 = vld [vmem:[%s466 + $0x20] sm:$0xf]
      %v476 = vld [vmem:[%s466 + $0x24] sm:$0xf]
      %v477 = vld [vmem:[%s466 + $0x28] sm:$0xf]
      %v478 = vld [vmem:[%s466 + $0x2c] sm:$0xf]
      %v479 = vld [vmem:[%s466 + $0x30] sm:$0xf]
      %v480 = vld [vmem:[%s466 + $0x34] sm:$0xf]
      %v481 = vld [vmem:[%s466 + $0x38] sm:$0xf]
      %v482 = vld [vmem:[%s466 + $0x3c] sm:$0xf]
      %vm483 = vcmask 1046528
      %v484 = vrot.slane %v224, 1
      %v485 = vrot.slane %v225, 1
      %v486 = vsel %vm483, %v484, %v485
      %v487 = vrot.slane %v226, 1
      %v488 = vsel %vm483, %v485, %v487
      %v508 = vunpack.c.l.b16 %v467
      %v509 = vunpack.c.l.b16 %v468
      %v510 = vunpack.c.l.b16 %v469
      %v511 = vunpack.c.l.b16 %v470
      %v512 = vunpack.c.l.b16 %v471
      %v513 = vunpack.c.l.b16 %v472
      %v514 = vunpack.c.l.b16 %v473
      %v515 = vunpack.c.l.b16 %v474
      %v516 = vunpack.c.l.b16 %v475
      %v517 = vunpack.c.l.b16 %v476
      %v518 = vunpack.c.l.b16 %v477
      %v519 = vunpack.c.l.b16 %v478
      %v520 = vunpack.c.l.b16 %v479
      %v521 = vunpack.c.l.b16 %v480
      %v522 = vunpack.c.l.b16 %v481
      %v523 = vunpack.c.l.b16 %v482
      %v524 = vpack.c.b16 %v509, %v508
      %v525 = vpack.c.b16 %v511, %v510
      %v526 = vpack.c.b16 %v513, %v512
      %v527 = vpack.c.b16 %v515, %v514
      %v528 = vpack.c.b16 %v517, %v516
      %v529 = vpack.c.b16 %v519, %v518
      %v530 = vpack.c.b16 %v521, %v520
      %v531 = vpack.c.b16 %v523, %v522
      %540 = vmatprep.subr.bf16.mxu0 0
      %541 = vmatpush1.bf16.msra.mxu0 %v524
      %542 = vmatprep.subr.bf16.mxu0 0
      %543 = vmatpush1.bf16.msra.mxu0 %v525
      %544 = vmatprep.subr.bf16.mxu0 0
      %545 = vmatpush1.bf16.msra.mxu0 %v526
      %546 = vmatprep.subr.bf16.mxu0 0
      %547 = vmatpush1.bf16.msra.mxu0 %v527
      %548 = vmatprep.subr.bf16.mxu0 0
      %549 = vmatpush1.bf16.msra.mxu0 %v528
      %550 = vmatprep.subr.bf16.mxu0 0
      %551 = vmatpush1.bf16.msra.mxu0 %v529
      %552 = vmatprep.subr.bf16.mxu0 0
      %553 = vmatpush1.bf16.msra.mxu0 %v530
      %554 = vmatprep.subr.bf16.mxu0 0
      %555 = vmatpush1.bf16.msra.mxu0 %v531
      %556 = vmatprep.subr.bf16.mxu0 0
      %557 = vmatpush1.bf16.msra.mxu0 0
      %558 = vmatprep.subr.bf16.mxu0 0
      %559 = vmatpush1.bf16.msra.mxu0 0
      %560 = vmatprep.subr.bf16.mxu0 0
      %561 = vmatpush1.bf16.msra.mxu0 0
      %562 = vmatprep.subr.bf16.mxu0 0
      %563 = vmatpush1.bf16.msra.mxu0 0
      %564 = vmatprep.subr.bf16.mxu0 0
      %565 = vmatpush1.bf16.msra.mxu0 0
      %566 = vmatprep.subr.bf16.mxu0 0
      %567 = vmatpush1.bf16.msra.mxu0 0
      %568 = vmatprep.subr.bf16.mxu0 0
      %569 = vmatpush1.bf16.msra.mxu0 0
      %570 = vmatprep.subr.bf16.mxu0 0
      %571 = vmatpush1.bf16.msra.mxu0 0
      %572 = vmatprep.mubr.bf16.mxu0 0
      %573 = vmatmul.mubr.bf16.gmra.mrb[0].mxu0 %v486
      %v574 = vpop.f32.mrb[0].mxu0
      %v575 = vadd.f32 0.0, %v574
      %v576 = vpop.f32.mrb[0].mxu0
      %v577 = vpop.f32.mrb[0].mxu0
      %v578 = vadd.f32 0.0, %v577
      %v579 = vpop.f32.mrb[0].mxu0
      %580 = vmatprep.mubr.bf16.mxu0 0
      %581 = vmatmul.mubr.bf16.gmra.mrb[0].mxu0 %v488
      %v582 = vpop.f32.mrb[0].mxu0
      %v583 = vadd.f32 0.0, %v582
      %v584 = vpop.f32.mrb[0].mxu0
      %v585 = vpop.f32.mrb[0].mxu0
      %v586 = vadd.f32 0.0, %v585
      %v587 = vpop.f32.mrb[0].mxu0
      %588 = vmatprep.mubr.bf16.mxu0 0
      %589 = vmatmul.mubr.bf16.gmra.mrb[0].mxu0 %v487
      %v590 = vpop.f32.mrb[0].mxu0
      %v591 = vadd.f32 0.0, %v590
      %v592 = vpop.f32.mrb[0].mxu0
      %v593 = vpop.f32.mrb[0].mxu0
      %v594 = vpop.f32.mrb[0].mxu0
      %595 = vdwg.mxu0
      %v596 = vadd.f32 %v445, %v575
      %v597 = vadd.f32 %v448, %v578
      %v598 = vadd.f32 %v453, %v583
      %v599 = vadd.f32 %v456, %v586
      %v600 = vadd.f32 %v461, %v591
      %s601 = scalar_lea.vmem %s1, 192
      %v602 = vld [vmem:[%s601] sm:$0xf]
      %v603 = vld [vmem:[%s601 + $0x4] sm:$0xf]
      %v604 = vld [vmem:[%s601 + $0x8] sm:$0xf]
      %v605 = vld [vmem:[%s601 + $0xc] sm:$0xf]
      %v606 = vld [vmem:[%s601 + $0x10] sm:$0xf]
      %v607 = vld [vmem:[%s601 + $0x14] sm:$0xf]
      %v608 = vld [vmem:[%s601 + $0x18] sm:$0xf]
      %v609 = vld [vmem:[%s601 + $0x1c] sm:$0xf]
      %v610 = vld [vmem:[%s601 + $0x20] sm:$0xf]
      %v611 = vld [vmem:[%s601 + $0x24] sm:$0xf]
      %v612 = vld [vmem:[%s601 + $0x28] sm:$0xf]
      %v613 = vld [vmem:[%s601 + $0x2c] sm:$0xf]
      %v614 = vld [vmem:[%s601 + $0x30] sm:$0xf]
      %v615 = vld [vmem:[%s601 + $0x34] sm:$0xf]
      %v616 = vld [vmem:[%s601 + $0x38] sm:$0xf]
      %v617 = vld [vmem:[%s601 + $0x3c] sm:$0xf]
      %vm618 = vcmask 1044480
      %v619 = vrot.slane %v224, 3
      %v620 = vrot.slane %v225, 3
      %v621 = vsel %vm618, %v619, %v620
      %v622 = vrot.slane %v226, 3
      %v623 = vsel %vm618, %v620, %v622
      %v643 = vunpack.c.l.b16 %v602
      %v644 = vunpack.c.l.b16 %v603
      %v645 = vunpack.c.l.b16 %v604
      %v646 = vunpack.c.l.b16 %v605
      %v647 = vunpack.c.l.b16 %v606
      %v648 = vunpack.c.l.b16 %v607
      %v649 = vunpack.c.l.b16 %v608
      %v650 = vunpack.c.l.b16 %v609
      %v651 = vunpack.c.l.b16 %v610
      %v652 = vunpack.c.l.b16 %v611
      %v653 = vunpack.c.l.b16 %v612
      %v654 = vunpack.c.l.b16 %v613
      %v655 = vunpack.c.l.b16 %v614
      %v656 = vunpack.c.l.b16 %v615
      %v657 = vunpack.c.l.b16 %v616
      %v658 = vunpack.c.l.b16 %v617
      %v659 = vpack.c.b16 %v644, %v643
      %v660 = vpack.c.b16 %v646, %v645
      %v661 = vpack.c.b16 %v648, %v647
      %v662 = vpack.c.b16 %v650, %v649
      %v663 = vpack.c.b16 %v652, %v651
      %v664 = vpack.c.b16 %v654, %v653
      %v665 = vpack.c.b16 %v656, %v655
      %v666 = vpack.c.b16 %v658, %v657
      %675 = vmatprep.subr.bf16.mxu0 0
      %676 = vmatpush1.bf16.msra.mxu0 %v659
      %677 = vmatprep.subr.bf16.mxu0 0
      %678 = vmatpush1.bf16.msra.mxu0 %v660
      %679 = vmatprep.subr.bf16.mxu0 0
      %680 = vmatpush1.bf16.msra.mxu0 %v661
      %681 = vmatprep.subr.bf16.mxu0 0
      %682 = vmatpush1.bf16.msra.mxu0 %v662
      %683 = vmatprep.subr.bf16.mxu0 0
      %684 = vmatpush1.bf16.msra.mxu0 %v663
      %685 = vmatprep.subr.bf16.mxu0 0
      %686 = vmatpush1.bf16.msra.mxu0 %v664
      %687 = vmatprep.subr.bf16.mxu0 0
      %688 = vmatpush1.bf16.msra.mxu0 %v665
      %689 = vmatprep.subr.bf16.mxu0 0
      %690 = vmatpush1.bf16.msra.mxu0 %v666
      %691 = vmatprep.subr.bf16.mxu0 0
      %692 = vmatpush1.bf16.msra.mxu0 0
      %693 = vmatprep.subr.bf16.mxu0 0
      %694 = vmatpush1.bf16.msra.mxu0 0
      %695 = vmatprep.subr.bf16.mxu0 0
      %696 = vmatpush1.bf16.msra.mxu0 0
      %697 = vmatprep.subr.bf16.mxu0 0
      %698 = vmatpush1.bf16.msra.mxu0 0
      %699 = vmatprep.subr.bf16.mxu0 0
      %700 = vmatpush1.bf16.msra.mxu0 0
      %701 = vmatprep.subr.bf16.mxu0 0
      %702 = vmatpush1.bf16.msra.mxu0 0
      %703 = vmatprep.subr.bf16.mxu0 0
      %704 = vmatpush1.bf16.msra.mxu0 0
      %705 = vmatprep.subr.bf16.mxu0 0
      %706 = vmatpush1.bf16.msra.mxu0 0
      %707 = vmatprep.mubr.bf16.mxu0 0
      %708 = vmatmul.mubr.bf16.gmra.mrb[0].mxu0 %v621
      %v709 = vpop.f32.mrb[0].mxu0
      %v710 = vadd.f32 0.0, %v709
      %v711 = vpop.f32.mrb[0].mxu0
      %v712 = vpop.f32.mrb[0].mxu0
      %v713 = vadd.f32 0.0, %v712
      %v714 = vpop.f32.mrb[0].mxu0
      %715 = vmatprep.mubr.bf16.mxu0 0
      %716 = vmatmul.mubr.bf16.gmra.mrb[0].mxu0 %v623
      %v717 = vpop.f32.mrb[0].mxu0
      %v718 = vadd.f32 0.0, %v717
      %v719 = vpop.f32.mrb[0].mxu0
      %v720 = vpop.f32.mrb[0].mxu0
      %v721 = vadd.f32 0.0, %v720
      %v722 = vpop.f32.mrb[0].mxu0
      %723 = vmatprep.mubr.bf16.mxu0 0
      %724 = vmatmul.mubr.bf16.gmra.mrb[0].mxu0 %v622
      %v725 = vpop.f32.mrb[0].mxu0
      %v726 = vadd.f32 0.0, %v725
      %v727 = vpop.f32.mrb[0].mxu0
      %v728 = vpop.f32.mrb[0].mxu0
      %v729 = vpop.f32.mrb[0].mxu0
      %730 = vdwg.mxu0
      %v731 = vadd.f32 %v596, %v710
      %v732 = vadd.f32 %v597, %v713
      %v733 = vadd.f32 %v598, %v718
      %v734 = vadd.f32 %v599, %v721
      %v735 = vadd.f32 %v600, %v726
      %s736 = scalar_lea.vmem %s1, 256
      %v737 = vld [vmem:[%s736] sm:$0xf]
      %v738 = vld [vmem:[%s736 + $0x4] sm:$0xf]
      %v739 = vld [vmem:[%s736 + $0x8] sm:$0xf]
      %v740 = vld [vmem:[%s736 + $0xc] sm:$0xf]
      %v741 = vld [vmem:[%s736 + $0x10] sm:$0xf]
      %v742 = vld [vmem:[%s736 + $0x14] sm:$0xf]
      %v743 = vld [vmem:[%s736 + $0x18] sm:$0xf]
      %v744 = vld [vmem:[%s736 + $0x1c] sm:$0xf]
      %v745 = vld [vmem:[%s736 + $0x20] sm:$0xf]
      %v746 = vld [vmem:[%s736 + $0x24] sm:$0xf]
      %v747 = vld [vmem:[%s736 + $0x28] sm:$0xf]
      %v748 = vld [vmem:[%s736 + $0x2c] sm:$0xf]
      %v749 = vld [vmem:[%s736 + $0x30] sm:$0xf]
      %v750 = vld [vmem:[%s736 + $0x34] sm:$0xf]
      %v751 = vld [vmem:[%s736 + $0x38] sm:$0xf]
      %v752 = vld [vmem:[%s736 + $0x3c] sm:$0xf]
      %vm753 = vsmask.f32 4352
      %v754 = vrot.slane %v229, 3
      %v755 = vrot.slane %v231, 4
      %v756 = vor.u32 %v754, %v755
      %v757 = vrot.slane %v240, 3
      %v758 = vrot.slane %v236, 4
      %v759 = vor.u32 %v757, %v758
      %v760 = vsel %vm753, %v756, %v759
      %v761 = vrot.slane %v248, 3
      %v762 = vrot.slane %v244, 4
      %v763 = vor.u32 %v761, %v762
      %v764 = vsel %vm753, %v759, %v763
      %v784 = vunpack.c.l.b16 %v737
      %v785 = vunpack.c.l.b16 %v738
      %v786 = vunpack.c.l.b16 %v739
      %v787 = vunpack.c.l.b16 %v740
      %v788 = vunpack.c.l.b16 %v741
      %v789 = vunpack.c.l.b16 %v742
      %v790 = vunpack.c.l.b16 %v743
      %v791 = vunpack.c.l.b16 %v744
      %v792 = vunpack.c.l.b16 %v745
      %v793 = vunpack.c.l.b16 %v746
      %v794 = vunpack.c.l.b16 %v747
      %v795 = vunpack.c.l.b16 %v748
      %v796 = vunpack.c.l.b16 %v749
      %v797 = vunpack.c.l.b16 %v750
      %v798 = vunpack.c.l.b16 %v751
      %v799 = vunpack.c.l.b16 %v752
      %v800 = vpack.c.b16 %v785, %v784
      %v801 = vpack.c.b16 %v787, %v786
      %v802 = vpack.c.b16 %v789, %v788
      %v803 = vpack.c.b16 %v791, %v790
      %v804 = vpack.c.b16 %v793, %v792
      %v805 = vpack.c.b16 %v795, %v794
      %v806 = vpack.c.b16 %v797, %v796
      %v807 = vpack.c.b16 %v799, %v798
      %816 = vmatprep.subr.bf16.mxu0 0
      %817 = vmatpush1.bf16.msra.mxu0 %v800
      %818 = vmatprep.subr.bf16.mxu0 0
      %819 = vmatpush1.bf16.msra.mxu0 %v801
      %820 = vmatprep.subr.bf16.mxu0 0
      %821 = vmatpush1.bf16.msra.mxu0 %v802
      %822 = vmatprep.subr.bf16.mxu0 0
      %823 = vmatpush1.bf16.msra.mxu0 %v803
      %824 = vmatprep.subr.bf16.mxu0 0
      %825 = vmatpush1.bf16.msra.mxu0 %v804
      %826 = vmatprep.subr.bf16.mxu0 0
      %827 = vmatpush1.bf16.msra.mxu0 %v805
      %828 = vmatprep.subr.bf16.mxu0 0
      %829 = vmatpush1.bf16.msra.mxu0 %v806
      %830 = vmatprep.subr.bf16.mxu0 0
      %831 = vmatpush1.bf16.msra.mxu0 %v807
      %832 = vmatprep.subr.bf16.mxu0 0
      %833 = vmatpush1.bf16.msra.mxu0 0
      %834 = vmatprep.subr.bf16.mxu0 0
      %835 = vmatpush1.bf16.msra.mxu0 0
      %836 = vmatprep.subr.bf16.mxu0 0
      %837 = vmatpush1.bf16.msra.mxu0 0
      %838 = vmatprep.subr.bf16.mxu0 0
      %839 = vmatpush1.bf16.msra.mxu0 0
      %840 = vmatprep.subr.bf16.mxu0 0
      %841 = vmatpush1.bf16.msra.mxu0 0
      %842 = vmatprep.subr.bf16.mxu0 0
      %843 = vmatpush1.bf16.msra.mxu0 0
      %844 = vmatprep.subr.bf16.mxu0 0
      %845 = vmatpush1.bf16.msra.mxu0 0
      %846 = vmatprep.subr.bf16.mxu0 0
      %847 = vmatpush1.bf16.msra.mxu0 0
      %848 = vmatprep.mubr.bf16.mxu0 0
      %849 = vmatmul.mubr.bf16.gmra.mrb[0].mxu0 %v760
      %v850 = vpop.f32.mrb[0].mxu0
      %v851 = vadd.f32 0.0, %v850
      %v852 = vpop.f32.mrb[0].mxu0
      %v853 = vpop.f32.mrb[0].mxu0
      %v854 = vadd.f32 0.0, %v853
      %v855 = vpop.f32.mrb[0].mxu0
      %856 = vmatprep.mubr.bf16.mxu0 0
      %857 = vmatmul.mubr.bf16.gmra.mrb[0].mxu0 %v764
      %v858 = vpop.f32.mrb[0].mxu0
      %v859 = vadd.f32 0.0, %v858
      %v860 = vpop.f32.mrb[0].mxu0
      %v861 = vpop.f32.mrb[0].mxu0
      %v862 = vadd.f32 0.0, %v861
      %v863 = vpop.f32.mrb[0].mxu0
      %864 = vmatprep.mubr.bf16.mxu0 0
      %865 = vmatmul.mubr.bf16.gmra.mrb[0].mxu0 %v763
      %v866 = vpop.f32.mrb[0].mxu0
      %v867 = vadd.f32 0.0, %v866
      %v868 = vpop.f32.mrb[0].mxu0
      %v869 = vpop.f32.mrb[0].mxu0
      %v870 = vpop.f32.mrb[0].mxu0
      %871 = vdwg.mxu0
      %v872 = vadd.f32 %v731, %v851
      %v873 = vadd.f32 %v732, %v854
      %v874 = vadd.f32 %v733, %v859
      %v875 = vadd.f32 %v734, %v862
      %v876 = vadd.f32 %v735, %v867
      %s877 = scalar_lea.vmem %s1, 320
      %v878 = vld [vmem:[%s877] sm:$0xf]
      %v879 = vld [vmem:[%s877 + $0x4] sm:$0xf]
      %v880 = vld [vmem:[%s877 + $0x8] sm:$0xf]
      %v881 = vld [vmem:[%s877 + $0xc] sm:$0xf]
      %v882 = vld [vmem:[%s877 + $0x10] sm:$0xf]
      %v883 = vld [vmem:[%s877 + $0x14] sm:$0xf]
      %v884 = vld [vmem:[%s877 + $0x18] sm:$0xf]
      %v885 = vld [vmem:[%s877 + $0x1c] sm:$0xf]
      %v886 = vld [vmem:[%s877 + $0x20] sm:$0xf]
      %v887 = vld [vmem:[%s877 + $0x24] sm:$0xf]
      %v888 = vld [vmem:[%s877 + $0x28] sm:$0xf]
      %v889 = vld [vmem:[%s877 + $0x2c] sm:$0xf]
      %v890 = vld [vmem:[%s877 + $0x30] sm:$0xf]
      %v891 = vld [vmem:[%s877 + $0x34] sm:$0xf]
      %v892 = vld [vmem:[%s877 + $0x38] sm:$0xf]
      %v893 = vld [vmem:[%s877 + $0x3c] sm:$0xf]
      %v894 = vpack.c.b16 %v220, %v219
      %v895 = vpack.c.b16 %v222, %v221
      %v896 = vpack.c.b16 %v223, %v223
      %v916 = vunpack.c.l.b16 %v878
      %v917 = vunpack.c.l.b16 %v879
      %v918 = vunpack.c.l.b16 %v880
      %v919 = vunpack.c.l.b16 %v881
      %v920 = vunpack.c.l.b16 %v882
      %v921 = vunpack.c.l.b16 %v883
      %v922 = vunpack.c.l.b16 %v884
      %v923 = vunpack.c.l.b16 %v885
      %v924 = vunpack.c.l.b16 %v886
      %v925 = vunpack.c.l.b16 %v887
      %v926 = vunpack.c.l.b16 %v888
      %v927 = vunpack.c.l.b16 %v889
      %v928 = vunpack.c.l.b16 %v890
      %v929 = vunpack.c.l.b16 %v891
      %v930 = vunpack.c.l.b16 %v892
      %v931 = vunpack.c.l.b16 %v893
      %v932 = vpack.c.b16 %v917, %v916
      %v933 = vpack.c.b16 %v919, %v918
      %v934 = vpack.c.b16 %v921, %v920
      %v935 = vpack.c.b16 %v923, %v922
      %v936 = vpack.c.b16 %v925, %v924
      %v937 = vpack.c.b16 %v927, %v926
      %v938 = vpack.c.b16 %v929, %v928
      %v939 = vpack.c.b16 %v931, %v930
      %948 = vmatprep.subr.bf16.mxu0 0
      %949 = vmatpush1.bf16.msra.mxu0 %v932
      %950 = vmatprep.subr.bf16.mxu0 0
      %951 = vmatpush1.bf16.msra.mxu0 %v933
      %952 = vmatprep.subr.bf16.mxu0 0
      %953 = vmatpush1.bf16.msra.mxu0 %v934
      %954 = vmatprep.subr.bf16.mxu0 0
      %955 = vmatpush1.bf16.msra.mxu0 %v935
      %956 = vmatprep.subr.bf16.mxu0 0
      %957 = vmatpush1.bf16.msra.mxu0 %v936
      %958 = vmatprep.subr.bf16.mxu0 0
      %959 = vmatpush1.bf16.msra.mxu0 %v937
      %960 = vmatprep.subr.bf16.mxu0 0
      %961 = vmatpush1.bf16.msra.mxu0 %v938
      %962 = vmatprep.subr.bf16.mxu0 0
      %963 = vmatpush1.bf16.msra.mxu0 %v939
      %964 = vmatprep.subr.bf16.mxu0 0
      %965 = vmatpush1.bf16.msra.mxu0 0
      %966 = vmatprep.subr.bf16.mxu0 0
      %967 = vmatpush1.bf16.msra.mxu0 0
      %968 = vmatprep.subr.bf16.mxu0 0
      %969 = vmatpush1.bf16.msra.mxu0 0
      %970 = vmatprep.subr.bf16.mxu0 0
      %971 = vmatpush1.bf16.msra.mxu0 0
      %972 = vmatprep.subr.bf16.mxu0 0
      %973 = vmatpush1.bf16.msra.mxu0 0
      %974 = vmatprep.subr.bf16.mxu0 0
      %975 = vmatpush1.bf16.msra.mxu0 0
      %976 = vmatprep.subr.bf16.mxu0 0
      %977 = vmatpush1.bf16.msra.mxu0 0
      %978 = vmatprep.subr.bf16.mxu0 0
      %979 = vmatpush1.bf16.msra.mxu0 0
      %980 = vmatprep.mubr.bf16.mxu0 0
      %981 = vmatmul.mubr.bf16.gmra.mrb[0].mxu0 %v894
      %v982 = vpop.f32.mrb[0].mxu0
      %v983 = vadd.f32 0.0, %v982
      %v984 = vpop.f32.mrb[0].mxu0
      %v985 = vpop.f32.mrb[0].mxu0
      %v986 = vadd.f32 0.0, %v985
      %v987 = vpop.f32.mrb[0].mxu0
      %988 = vmatprep.mubr.bf16.mxu0 0
      %989 = vmatmul.mubr.bf16.gmra.mrb[0].mxu0 %v895
      %v990 = vpop.f32.mrb[0].mxu0
      %v991 = vadd.f32 0.0, %v990
      %v992 = vpop.f32.mrb[0].mxu0
      %v993 = vpop.f32.mrb[0].mxu0
      %v994 = vadd.f32 0.0, %v993
      %v995 = vpop.f32.mrb[0].mxu0
      %996 = vmatprep.mubr.bf16.mxu0 0
      %997 = vmatmul.mubr.bf16.gmra.mrb[0].mxu0 %v896
      %v998 = vpop.f32.mrb[0].mxu0
      %v999 = vadd.f32 0.0, %v998
      %v1000 = vpop.f32.mrb[0].mxu0
      %v1001 = vpop.f32.mrb[0].mxu0
      %v1002 = vpop.f32.mrb[0].mxu0
      %1003 = vdwg.mxu0
      %v1004 = vadd.f32 %v872, %v983
      %v1005 = vadd.f32 %v873, %v986
      %v1006 = vadd.f32 %v874, %v991
      %v1007 = vadd.f32 %v875, %v994
      %v1008 = vadd.f32 %v876, %v999
      %s1009 = scalar_lea.vmem %s1, 384
      %v1010 = vld [vmem:[%s1009] sm:$0xf]
      %v1011 = vld [vmem:[%s1009 + $0x4] sm:$0xf]
      %v1012 = vld [vmem:[%s1009 + $0x8] sm:$0xf]
      %v1013 = vld [vmem:[%s1009 + $0xc] sm:$0xf]
      %v1014 = vld [vmem:[%s1009 + $0x10] sm:$0xf]
      %v1015 = vld [vmem:[%s1009 + $0x14] sm:$0xf]
      %v1016 = vld [vmem:[%s1009 + $0x18] sm:$0xf]
      %v1017 = vld [vmem:[%s1009 + $0x1c] sm:$0xf]
      %v1018 = vld [vmem:[%s1009 + $0x20] sm:$0xf]
      %v1019 = vld [vmem:[%s1009 + $0x24] sm:$0xf]
      %v1020 = vld [vmem:[%s1009 + $0x28] sm:$0xf]
      %v1021 = vld [vmem:[%s1009 + $0x2c] sm:$0xf]
      %v1022 = vld [vmem:[%s1009 + $0x30] sm:$0xf]
      %v1023 = vld [vmem:[%s1009 + $0x34] sm:$0xf]
      %v1024 = vld [vmem:[%s1009 + $0x38] sm:$0xf]
      %v1025 = vld [vmem:[%s1009 + $0x3c] sm:$0xf]
      %v1027 = vunpack.c.l.b16 %v178
      %v1028 = vpack.c.b16 %v1027, %v223
      %vm1029 = vcmask 1045504
      %v1030 = vrot.slane %v894, 2
      %v1031 = vrot.slane %v895, 2
      %v1032 = vsel %vm1029, %v1030, %v1031
      %v1033 = vrot.slane %v1028, 2
      %v1034 = vsel %vm1029, %v1031, %v1033
      %v1054 = vunpack.c.l.b16 %v1010
      %v1055 = vunpack.c.l.b16 %v1011
      %v1056 = vunpack.c.l.b16 %v1012
      %v1057 = vunpack.c.l.b16 %v1013
      %v1058 = vunpack.c.l.b16 %v1014
      %v1059 = vunpack.c.l.b16 %v1015
      %v1060 = vunpack.c.l.b16 %v1016
      %v1061 = vunpack.c.l.b16 %v1017
      %v1062 = vunpack.c.l.b16 %v1018
      %v1063 = vunpack.c.l.b16 %v1019
      %v1064 = vunpack.c.l.b16 %v1020
      %v1065 = vunpack.c.l.b16 %v1021
      %v1066 = vunpack.c.l.b16 %v1022
      %v1067 = vunpack.c.l.b16 %v1023
      %v1068 = vunpack.c.l.b16 %v1024
      %v1069 = vunpack.c.l.b16 %v1025
      %v1070 = vpack.c.b16 %v1055, %v1054
      %v1071 = vpack.c.b16 %v1057, %v1056
      %v1072 = vpack.c.b16 %v1059, %v1058
      %v1073 = vpack.c.b16 %v1061, %v1060
      %v1074 = vpack.c.b16 %v1063, %v1062
      %v1075 = vpack.c.b16 %v1065, %v1064
      %v1076 = vpack.c.b16 %v1067, %v1066
      %v1077 = vpack.c.b16 %v1069, %v1068
      %1086 = vmatprep.subr.bf16.mxu0 0
      %1087 = vmatpush1.bf16.msra.mxu0 %v1070
      %1088 = vmatprep.subr.bf16.mxu0 0
      %1089 = vmatpush1.bf16.msra.mxu0 %v1071
      %1090 = vmatprep.subr.bf16.mxu0 0
      %1091 = vmatpush1.bf16.msra.mxu0 %v1072
      %1092 = vmatprep.subr.bf16.mxu0 0
      %1093 = vmatpush1.bf16.msra.mxu0 %v1073
      %1094 = vmatprep.subr.bf16.mxu0 0
      %1095 = vmatpush1.bf16.msra.mxu0 %v1074
      %1096 = vmatprep.subr.bf16.mxu0 0
      %1097 = vmatpush1.bf16.msra.mxu0 %v1075
      %1098 = vmatprep.subr.bf16.mxu0 0
      %1099 = vmatpush1.bf16.msra.mxu0 %v1076
      %1100 = vmatprep.subr.bf16.mxu0 0
      %1101 = vmatpush1.bf16.msra.mxu0 %v1077
      %1102 = vmatprep.subr.bf16.mxu0 0
      %1103 = vmatpush1.bf16.msra.mxu0 0
      %1104 = vmatprep.subr.bf16.mxu0 0
      %1105 = vmatpush1.bf16.msra.mxu0 0
      %1106 = vmatprep.subr.bf16.mxu0 0
      %1107 = vmatpush1.bf16.msra.mxu0 0
      %1108 = vmatprep.subr.bf16.mxu0 0
      %1109 = vmatpush1.bf16.msra.mxu0 0
      %1110 = vmatprep.subr.bf16.mxu0 0
      %1111 = vmatpush1.bf16.msra.mxu0 0
      %1112 = vmatprep.subr.bf16.mxu0 0
      %1113 = vmatpush1.bf16.msra.mxu0 0
      %1114 = vmatprep.subr.bf16.mxu0 0
      %1115 = vmatpush1.bf16.msra.mxu0 0
      %1116 = vmatprep.subr.bf16.mxu0 0
      %1117 = vmatpush1.bf16.msra.mxu0 0
      %1118 = vmatprep.mubr.bf16.mxu0 0
      %1119 = vmatmul.mubr.bf16.gmra.mrb[0].mxu0 %v1032
      %v1120 = vpop.f32.mrb[0].mxu0
      %v1121 = vadd.f32 0.0, %v1120
      %v1122 = vpop.f32.mrb[0].mxu0
      %v1123 = vpop.f32.mrb[0].mxu0
      %v1124 = vadd.f32 0.0, %v1123
      %v1125 = vpop.f32.mrb[0].mxu0
      %1126 = vmatprep.mubr.bf16.mxu0 0
      %1127 = vmatmul.mubr.bf16.gmra.mrb[0].mxu0 %v1034
      %v1128 = vpop.f32.mrb[0].mxu0
      %v1129 = vadd.f32 0.0, %v1128
      %v1130 = vpop.f32.mrb[0].mxu0
      %v1131 = vpop.f32.mrb[0].mxu0
      %v1132 = vadd.f32 0.0, %v1131
      %v1133 = vpop.f32.mrb[0].mxu0
      %1134 = vmatprep.mubr.bf16.mxu0 0
      %1135 = vmatmul.mubr.bf16.gmra.mrb[0].mxu0 %v1033
      %v1136 = vpop.f32.mrb[0].mxu0
      %v1137 = vadd.f32 0.0, %v1136
      %v1138 = vpop.f32.mrb[0].mxu0
      %v1139 = vpop.f32.mrb[0].mxu0
      %v1140 = vpop.f32.mrb[0].mxu0
      %1141 = vdwg.mxu0
      %v1142 = vadd.f32 %v1004, %v1121
      %v1143 = vadd.f32 %v1005, %v1124
      %v1144 = vadd.f32 %v1006, %v1129
      %v1145 = vadd.f32 %v1007, %v1132
      %v1146 = vadd.f32 %v1008, %v1137
      %s1147 = scalar_lea.vmem %s1, 448
      %v1148 = vld [vmem:[%s1147] sm:$0xf]
      %v1149 = vld [vmem:[%s1147 + $0x4] sm:$0xf]
      %v1150 = vld [vmem:[%s1147 + $0x8] sm:$0xf]
      %v1151 = vld [vmem:[%s1147 + $0xc] sm:$0xf]
      %v1152 = vld [vmem:[%s1147 + $0x10] sm:$0xf]
      %v1153 = vld [vmem:[%s1147 + $0x14] sm:$0xf]
      %v1154 = vld [vmem:[%s1147 + $0x18] sm:$0xf]
      %v1155 = vld [vmem:[%s1147 + $0x1c] sm:$0xf]
      %v1156 = vld [vmem:[%s1147 + $0x20] sm:$0xf]
      %v1157 = vld [vmem:[%s1147 + $0x24] sm:$0xf]
      %v1158 = vld [vmem:[%s1147 + $0x28] sm:$0xf]
      %v1159 = vld [vmem:[%s1147 + $0x2c] sm:$0xf]
      %v1160 = vld [vmem:[%s1147 + $0x30] sm:$0xf]
      %v1161 = vld [vmem:[%s1147 + $0x34] sm:$0xf]
      %v1162 = vld [vmem:[%s1147 + $0x38] sm:$0xf]
      %v1163 = vld [vmem:[%s1147 + $0x3c] sm:$0xf]
      %vm1164 = vsmask.f32 5376
      %v1166 = vshrl.u32 %v894, 16
      %v1168 = vrot.slane %v1166, 2
      %v1169 = vshll.u32 %v894, 16
      %v1171 = vrot.slane %v1169, 3
      %v1172 = vor.u32 %v1168, %v1171
      %v1174 = vshrl.u32 %v895, 16
      %v1176 = vrot.slane %v1174, 2
      %v1177 = vshll.u32 %v895, 16
      %v1179 = vrot.slane %v1177, 3
      %v1180 = vor.u32 %v1176, %v1179
      %v1181 = vsel %vm1164, %v1172, %v1180
      %v1183 = vshrl.u32 %v1028, 16
      %v1185 = vrot.slane %v1183, 2
      %v1186 = vshll.u32 %v1028, 16
      %v1188 = vrot.slane %v1186, 3
      %v1189 = vor.u32 %v1185, %v1188
      %v1190 = vsel %vm1164, %v1180, %v1189
      %v1210 = vunpack.c.l.b16 %v1148
      %v1211 = vunpack.c.l.b16 %v1149
      %v1212 = vunpack.c.l.b16 %v1150
      %v1213 = vunpack.c.l.b16 %v1151
      %v1214 = vunpack.c.l.b16 %v1152
      %v1215 = vunpack.c.l.b16 %v1153
      %v1216 = vunpack.c.l.b16 %v1154
      %v1217 = vunpack.c.l.b16 %v1155
      %v1218 = vunpack.c.l.b16 %v1156
      %v1219 = vunpack.c.l.b16 %v1157
      %v1220 = vunpack.c.l.b16 %v1158
      %v1221 = vunpack.c.l.b16 %v1159
      %v1222 = vunpack.c.l.b16 %v1160
      %v1223 = vunpack.c.l.b16 %v1161
      %v1224 = vunpack.c.l.b16 %v1162
      %v1225 = vunpack.c.l.b16 %v1163
      %v1226 = vpack.c.b16 %v1211, %v1210
      %v1227 = vpack.c.b16 %v1213, %v1212
      %v1228 = vpack.c.b16 %v1215, %v1214
      %v1229 = vpack.c.b16 %v1217, %v1216
      %v1230 = vpack.c.b16 %v1219, %v1218
      %v1231 = vpack.c.b16 %v1221, %v1220
      %v1232 = vpack.c.b16 %v1223, %v1222
      %v1233 = vpack.c.b16 %v1225, %v1224
      %1242 = vmatprep.subr.bf16.mxu0 0
      %1243 = vmatpush1.bf16.msra.mxu0 %v1226
      %1244 = vmatprep.subr.bf16.mxu0 0
      %1245 = vmatpush1.bf16.msra.mxu0 %v1227
      %1246 = vmatprep.subr.bf16.mxu0 0
      %1247 = vmatpush1.bf16.msra.mxu0 %v1228
      %1248 = vmatprep.subr.bf16.mxu0 0
      %1249 = vmatpush1.bf16.msra.mxu0 %v1229
      %1250 = vmatprep.subr.bf16.mxu0 0
      %1251 = vmatpush1.bf16.msra.mxu0 %v1230
      %1252 = vmatprep.subr.bf16.mxu0 0
      %1253 = vmatpush1.bf16.msra.mxu0 %v1231
      %1254 = vmatprep.subr.bf16.mxu0 0
      %1255 = vmatpush1.bf16.msra.mxu0 %v1232
      %1256 = vmatprep.subr.bf16.mxu0 0
      %1257 = vmatpush1.bf16.msra.mxu0 %v1233
      %1258 = vmatprep.subr.bf16.mxu0 0
      %1259 = vmatpush1.bf16.msra.mxu0 0
      %1260 = vmatprep.subr.bf16.mxu0 0
      %1261 = vmatpush1.bf16.msra.mxu0 0
      %1262 = vmatprep.subr.bf16.mxu0 0
      %1263 = vmatpush1.bf16.msra.mxu0 0
      %1264 = vmatprep.subr.bf16.mxu0 0
      %1265 = vmatpush1.bf16.msra.mxu0 0
      %1266 = vmatprep.subr.bf16.mxu0 0
      %1267 = vmatpush1.bf16.msra.mxu0 0
      %1268 = vmatprep.subr.bf16.mxu0 0
      %1269 = vmatpush1.bf16.msra.mxu0 0
      %1270 = vmatprep.subr.bf16.mxu0 0
      %1271 = vmatpush1.bf16.msra.mxu0 0
      %1272 = vmatprep.subr.bf16.mxu0 0
      %1273 = vmatpush1.bf16.msra.mxu0 0
      %1274 = vmatprep.mubr.bf16.mxu0 0
      %1275 = vmatmul.mubr.bf16.gmra.mrb[0].mxu0 %v1181
      %v1276 = vpop.f32.mrb[0].mxu0
      %v1277 = vadd.f32 0.0, %v1276
      %v1278 = vpop.f32.mrb[0].mxu0
      %v1279 = vpop.f32.mrb[0].mxu0
      %v1280 = vadd.f32 0.0, %v1279
      %v1281 = vpop.f32.mrb[0].mxu0
      %1282 = vmatprep.mubr.bf16.mxu0 0
      %1283 = vmatmul.mubr.bf16.gmra.mrb[0].mxu0 %v1190
      %v1284 = vpop.f32.mrb[0].mxu0
      %v1285 = vadd.f32 0.0, %v1284
      %v1286 = vpop.f32.mrb[0].mxu0
      %v1287 = vpop.f32.mrb[0].mxu0
      %v1288 = vadd.f32 0.0, %v1287
      %v1289 = vpop.f32.mrb[0].mxu0
      %1290 = vmatprep.mubr.bf16.mxu0 0
      %1291 = vmatmul.mubr.bf16.gmra.mrb[0].mxu0 %v1189
      %v1292 = vpop.f32.mrb[0].mxu0
      %v1293 = vadd.f32 0.0, %v1292
      %v1294 = vpop.f32.mrb[0].mxu0
      %v1295 = vpop.f32.mrb[0].mxu0
      %v1296 = vpop.f32.mrb[0].mxu0
      %1297 = vdwg.mxu0
      %v1298 = vadd.f32 %v1142, %v1277
      %v1299 = vadd.f32 %v1143, %v1280
      %v1300 = vadd.f32 %v1144, %v1285
      %v1301 = vadd.f32 %v1145, %v1288
      %v1302 = vadd.f32 %v1146, %v1293
      %s1303 = scalar_lea.vmem %s1, 512
      %v1304 = vld [vmem:[%s1303] sm:$0xf]
      %v1305 = vld [vmem:[%s1303 + $0x4] sm:$0xf]
      %v1306 = vld [vmem:[%s1303 + $0x8] sm:$0xf]
      %v1307 = vld [vmem:[%s1303 + $0xc] sm:$0xf]
      %v1308 = vld [vmem:[%s1303 + $0x10] sm:$0xf]
      %v1309 = vld [vmem:[%s1303 + $0x14] sm:$0xf]
      %v1310 = vld [vmem:[%s1303 + $0x18] sm:$0xf]
      %v1311 = vld [vmem:[%s1303 + $0x1c] sm:$0xf]
      %v1312 = vld [vmem:[%s1303 + $0x20] sm:$0xf]
      %v1313 = vld [vmem:[%s1303 + $0x24] sm:$0xf]
      %v1314 = vld [vmem:[%s1303 + $0x28] sm:$0xf]
      %v1315 = vld [vmem:[%s1303 + $0x2c] sm:$0xf]
      %v1316 = vld [vmem:[%s1303 + $0x30] sm:$0xf]
      %v1317 = vld [vmem:[%s1303 + $0x34] sm:$0xf]
      %v1318 = vld [vmem:[%s1303 + $0x38] sm:$0xf]
      %v1319 = vld [vmem:[%s1303 + $0x3c] sm:$0xf]
      %v1320 = vrot.slane %v894, 3
      %v1321 = vrot.slane %v895, 3
      %v1322 = vsel %vm618, %v1320, %v1321
      %v1323 = vrot.slane %v1028, 3
      %v1324 = vsel %vm618, %v1321, %v1323
      %v1344 = vunpack.c.l.b16 %v1304
      %v1345 = vunpack.c.l.b16 %v1305
      %v1346 = vunpack.c.l.b16 %v1306
      %v1347 = vunpack.c.l.b16 %v1307
      %v1348 = vunpack.c.l.b16 %v1308
      %v1349 = vunpack.c.l.b16 %v1309
      %v1350 = vunpack.c.l.b16 %v1310
      %v1351 = vunpack.c.l.b16 %v1311
      %v1352 = vunpack.c.l.b16 %v1312
      %v1353 = vunpack.c.l.b16 %v1313
      %v1354 = vunpack.c.l.b16 %v1314
      %v1355 = vunpack.c.l.b16 %v1315
      %v1356 = vunpack.c.l.b16 %v1316
      %v1357 = vunpack.c.l.b16 %v1317
      %v1358 = vunpack.c.l.b16 %v1318
      %v1359 = vunpack.c.l.b16 %v1319
      %v1360 = vpack.c.b16 %v1345, %v1344
      %v1361 = vpack.c.b16 %v1347, %v1346
      %v1362 = vpack.c.b16 %v1349, %v1348
      %v1363 = vpack.c.b16 %v1351, %v1350
      %v1364 = vpack.c.b16 %v1353, %v1352
      %v1365 = vpack.c.b16 %v1355, %v1354
      %v1366 = vpack.c.b16 %v1357, %v1356
      %v1367 = vpack.c.b16 %v1359, %v1358
      %1376 = vmatprep.subr.bf16.mxu0 0
      %1377 = vmatpush1.bf16.msra.mxu0 %v1360
      %1378 = vmatprep.subr.bf16.mxu0 0
      %1379 = vmatpush1.bf16.msra.mxu0 %v1361
      %1380 = vmatprep.subr.bf16.mxu0 0
      %1381 = vmatpush1.bf16.msra.mxu0 %v1362
      %1382 = vmatprep.subr.bf16.mxu0 0
      %1383 = vmatpush1.bf16.msra.mxu0 %v1363
      %1384 = vmatprep.subr.bf16.mxu0 0
      %1385 = vmatpush1.bf16.msra.mxu0 %v1364
      %1386 = vmatprep.subr.bf16.mxu0 0
      %1387 = vmatpush1.bf16.msra.mxu0 %v1365
      %1388 = vmatprep.subr.bf16.mxu0 0
      %1389 = vmatpush1.bf16.msra.mxu0 %v1366
      %1390 = vmatprep.subr.bf16.mxu0 0
      %1391 = vmatpush1.bf16.msra.mxu0 %v1367
      %1392 = vmatprep.subr.bf16.mxu0 0
      %1393 = vmatpush1.bf16.msra.mxu0 0
      %1394 = vmatprep.subr.bf16.mxu0 0
      %1395 = vmatpush1.bf16.msra.mxu0 0
      %1396 = vmatprep.subr.bf16.mxu0 0
      %1397 = vmatpush1.bf16.msra.mxu0 0
      %1398 = vmatprep.subr.bf16.mxu0 0
      %1399 = vmatpush1.bf16.msra.mxu0 0
      %1400 = vmatprep.subr.bf16.mxu0 0
      %1401 = vmatpush1.bf16.msra.mxu0 0
      %1402 = vmatprep.subr.bf16.mxu0 0
      %1403 = vmatpush1.bf16.msra.mxu0 0
      %1404 = vmatprep.subr.bf16.mxu0 0
      %1405 = vmatpush1.bf16.msra.mxu0 0
      %1406 = vmatprep.subr.bf16.mxu0 0
      %1407 = vmatpush1.bf16.msra.mxu0 0
      %1408 = vmatprep.mubr.bf16.mxu0 0
      %1409 = vmatmul.mubr.bf16.gmra.mrb[0].mxu0 %v1322
      %v1410 = vpop.f32.mrb[0].mxu0
      %v1411 = vadd.f32 0.0, %v1410
      %v1412 = vpop.f32.mrb[0].mxu0
      %v1413 = vpop.f32.mrb[0].mxu0
      %v1414 = vadd.f32 0.0, %v1413
      %v1415 = vpop.f32.mrb[0].mxu0
      %1416 = vmatprep.mubr.bf16.mxu0 0
      %1417 = vmatmul.mubr.bf16.gmra.mrb[0].mxu0 %v1324
      %v1418 = vpop.f32.mrb[0].mxu0
      %v1419 = vadd.f32 0.0, %v1418
      %v1420 = vpop.f32.mrb[0].mxu0
      %v1421 = vpop.f32.mrb[0].mxu0
      %v1422 = vadd.f32 0.0, %v1421
      %v1423 = vpop.f32.mrb[0].mxu0
      %1424 = vmatprep.mubr.bf16.mxu0 0
      %1425 = vmatmul.mubr.bf16.gmra.mrb[0].mxu0 %v1323
      %v1426 = vpop.f32.mrb[0].mxu0
      %v1427 = vadd.f32 0.0, %v1426
      %v1428 = vpop.f32.mrb[0].mxu0
      %v1429 = vpop.f32.mrb[0].mxu0
      %v1430 = vpop.f32.mrb[0].mxu0
      %1431 = vdwg.mxu0
      %v1432 = vadd.f32 %v1298, %v1411
      %v1433 = vadd.f32 %v1299, %v1414
      %v1434 = vadd.f32 %v1300, %v1419
      %v1435 = vadd.f32 %v1301, %v1422
      %v1436 = vadd.f32 %v1302, %v1427
      %v1437 = vld [vmem:[%s2] sm:$0x1]
      %v1438 = vlaneseq
      %v1439 = vshrl.u32 %v1438, 7
      %v1440 = vsub.s32 0, %v1439
      %v1441 = vrot.slane %v1437, %v1440
      %v1442 = vmul.f32 %v1432, %v1441
      %v1443 = vmul.f32 %v1433, %v1441
      %v1444 = vmul.f32 %v1434, %v1441
      %v1445 = vmul.f32 %v1435, %v1441
      %v1446 = vmul.f32 %v1436, %v1441
      %v1447 = vld [vmem:[%s2 + $0x1] sm:$0x1]
      %v1448 = vlaneseq
      %v1449 = vshrl.u32 %v1448, 7
      %v1450 = vsub.s32 0, %v1449
      %v1451 = vrot.slane %v1447, %v1450
      %v1452 = vadd.f32 %v1442, %v1451
      %v1453 = vadd.f32 %v1443, %v1451
      %v1454 = vadd.f32 %v1444, %v1451
      %v1455 = vadd.f32 %v1445, %v1451
      %v1456 = vadd.f32 %v1446, %v1451
      %v1457 = vmax.f32 %v1452, 0.0
      %v1458 = vmax.f32 %v1453, 0.0
      %v1459 = vmax.f32 %v1454, 0.0
      %v1460 = vmax.f32 %v1455, 0.0
      %v1461 = vmax.f32 %v1456, 0.0
      %v1462 = vpack.c.bf16 %v1458, %v1457
      %v1463 = vpack.c.bf16 %v1460, %v1459
      %v1464 = vpack.c.bf16 %v1461, %v1461
      %v1468 = vunpack.c.l.b16 %v1462
      %v1469 = vunpack.c.h.b16 %v1462
      %v1470 = vunpack.c.l.b16 %v1463
      %v1471 = vunpack.c.h.b16 %v1463
      %v1472 = vunpack.c.l.b16 %v1464
      %v1473 = vpack.c.b16 %v1468, %v1468
      %v1474 = vpack.c.b16 %v1469, %v1469
      %v1475 = vpack.c.b16 %v1470, %v1470
      %v1476 = vpack.c.b16 %v1471, %v1471
      %v1477 = vpack.c.b16 %v1472, %v1472
      %1483 = vst [vmem:[%s170] sm:$0xf] %v1473
      %1484 = vst [vmem:[%s170 + $0x4] sm:$0xf] %v1474
      %1485 = vst [vmem:[%s170 + $0x8] sm:$0xf] %v1475
      %1486 = vst [vmem:[%s170 + $0xc] sm:$0xf] %v1476
      %1487 = vst [vmem:[%s170 + $0x10] sm:$0xf] %v1477
      %p1488 = scmp.lt.s32.totalorder %s14, 1
      %s1489 = scalar_select %p1488, %s14, 1
      %s1490 = smul.addr %s1489, 5
      %s1491 = smul.addr %s1490, 4
      %s1492 = scalar_lea.vmem %s3, %s1491
      // Predicated region
      $region33: #{two_stream_forward.21} parent=31 // pred_check
        %p1493 = pneg %p100
      $region34: #{two_stream_forward.21} parent=31 // pred_check_branch
        %1495 = sbr.rel (%p1493) target = $region36
      $region35: #{two_stream_forward.21} parent=31 // pred_region
        _
      $region36: #{two_stream_forward.21} parent=31 // pred_fallthru
        _
    $region32: #{two_stream_forward.21} parent=5 // pred_fallthru
      _
    %p1496 = scmp.le.s32.totalorder 2, %s9
    // Predicated region
    $region37: #{two_stream_forward.21} parent=5 // pred_check
      %p1497 = pneg %p1496
    $region38: #{two_stream_forward.21} parent=5 // pred_check_branch
      %1499 = sbr.rel (%p1497) target = $region40
    $region39: #{two_stream_forward.21} parent=5 // pred_region
      %s1500 = ssub.s32 %s9, 2
      // Predicated region
      $region41: #{two_stream_forward.21} parent=39 // pred_check
        %p1501 = pneg %p106
      $region42: #{two_stream_forward.21} parent=39 // pred_check_branch
        %1503 = sbr.rel (%p1501) target = $region44
      $region43: #{two_stream_forward.21} parent=39 // pred_region
        %p1504 = scmp.lt.s32.totalorder %s15, 1
        %s1505 = scalar_select %p1504, %s15, 1
        %s1506 = smul.addr %s1505, 5
        %s1507 = smul.addr %s1506, 4
        %s1508 = scalar_lea.vmem %s3, %s1507
      $region44: #{two_stream_forward.21} parent=39 // pred_fallthru
        _
    $region40: #{two_stream_forward.21} parent=5 // pred_fallthru
      _
  $region6: #{two_stream_forward.21} parent=0 // loop_footer
    %s13 = sadd.s32 1, %s9
  $region7: #{two_stream_forward.21} parent=0 // loop_footer_branch
    %8 = sbr.rel target = $region3
  $region8: #{two_stream_forward.21} parent=0 // loop_exit
    _

</llo_original>
